<compile_context>
chip_gen: v7x
topology: tpu7x:2x2x1
jax: 0.10.0
libtpu: 0.0.40
codegen_flags: <defaults>
</compile_context>

<pallas_src>
import jax
import jax.numpy as jnp
from jax.experimental import pallas as pl
from jax.experimental.pallas import tpu as pltpu


HIDDEN = 50      # true hidden width (Linear(2,50) / Linear(50,50))
H_PAD = 64       # hidden width padded for layout hygiene
OUT = 2          # true output width (Linear(50,2))
OUT_PAD = 128    # lane-dense output width (multiple of 128)
TB_MAX = 512     # default rows per grid step (f32 sublane multiple of 8)


def _round_up(n, m):
    return ((n + m - 1) // m) * m


def qnet_kernel(x_ref, w1_ref, b1_ref, w2_ref, b2_ref, w3_ref, b3_ref, o_ref):
    # x tile: (TB, 1)
    x = x_ref[...]

    # feat = cat(sin(x), cos(x)); fc1(feat) = sin(x)*W1[0] + cos(x)*W1[1] + b1.
    # Single raw feature => broadcasted elementwise math, no K=1 matmul/concat.
    h1_pre = (jnp.sin(x) * w1_ref[0:1, :]
              + jnp.cos(x) * w1_ref[1:2, :]
              + b1_ref[...])                                  # (TB, H_PAD)
    h1 = jnp.cos(h1_pre)

    # fc2 + cos  (MXU matmul, f32 accumulate)
    h2 = jnp.cos(
        jnp.dot(h1, w2_ref[...], preferred_element_type=jnp.float32)
        + b2_ref[...]
    )                                                         # (TB, H_PAD)

    # fc3 (no activation), lane-dense 128-wide unmasked store
    o_ref[...] = (
        jnp.dot(h2, w3_ref[...], preferred_element_type=jnp.float32)
        + b3_ref[...]
    )                                                         # (TB, OUT_PAD)


def pad_qnet_params(params):
    """Zero-pad natural-shape params to the padded kernel layout (exact)."""
    w1, b1, w2, b2, w3, b3 = params
    f32 = jnp.float32
    w1p = jnp.zeros((2, H_PAD), f32).at[:, :HIDDEN].set(w1)
    b1p = jnp.zeros((1, H_PAD), f32).at[:, :HIDDEN].set(b1.reshape(1, -1))
    # Rows HIDDEN..H_PAD-1 of w2p/w3p stay zero so the padded (cos(0)=1)
    # hidden lanes contribute nothing.
    w2p = jnp.zeros((H_PAD, H_PAD), f32).at[:HIDDEN, :HIDDEN].set(w2)
    b2p = jnp.zeros((1, H_PAD), f32).at[:, :HIDDEN].set(b2.reshape(1, -1))
    w3p = jnp.zeros((H_PAD, OUT_PAD), f32).at[:HIDDEN, :OUT].set(w3)
    b3p = jnp.zeros((1, OUT_PAD), f32).at[:, :OUT].set(b3.reshape(1, -1))
    return (w1p, b1p, w2p, b2p, w3p, b3p)


def q_net_forward(x, padded_params, tb_max=TB_MAX):
    """x: (B, 1) float32; padded_params from pad_qnet_params. Returns (B, 2)."""
    w1, b1, w2, b2, w3, b3 = padded_params
    B = x.shape[0]

    # Row tile: as large as tb_max, but never bigger than the (8-rounded) batch.
    tb = min(tb_max, _round_up(max(B, 1), 8))
    Bp = _round_up(B, tb)
    if Bp != B:
        x = jnp.pad(x, ((0, Bp - B), (0, 0)))   # zero rows -> harmless, sliced off

    const = lambda i: (0, 0)   # weights/biases: same block every step -> VMEM-resident
    out = pl.pallas_call(
        qnet_kernel,
        out_shape=jax.ShapeDtypeStruct((Bp, OUT_PAD), jnp.float32),
        grid=(Bp // tb,),
        in_specs=[
            pl.BlockSpec((tb, 1), lambda i: (i, 0)),       # x rows streamed
            pl.BlockSpec((2, H_PAD), const),               # w1
            pl.BlockSpec((1, H_PAD), const),               # b1
            pl.BlockSpec((H_PAD, H_PAD), const),           # w2
            pl.BlockSpec((1, H_PAD), const),               # b2
            pl.BlockSpec((H_PAD, OUT_PAD), const),         # w3 (lane-dense)
            pl.BlockSpec((1, OUT_PAD), const),             # b3 (lane-dense)
        ],
        out_specs=pl.BlockSpec((tb, OUT_PAD), lambda i: (i, 0)),
        compiler_params=pltpu.CompilerParams(
            dimension_semantics=("parallel",),             # v7x: shard over 2 TCs
        ),
    )(x, w1, b1, w2, b2, w3, b3)

    return out[:B, :OUT]


def init_q_net_params(key):
    # Mirrors nn.init.normal_ on both weights and biases (std normal).
    k1, k2, k3, k4, k5, k6 = jax.random.split(key, 6)
    w1 = jax.random.normal(k1, (2, HIDDEN), jnp.float32)        # fc1: Linear(2, 50)
    b1 = jax.random.normal(k2, (1, HIDDEN), jnp.float32)
    w2 = jax.random.normal(k3, (HIDDEN, HIDDEN), jnp.float32)   # fc2: Linear(50, 50)
    b2 = jax.random.normal(k4, (1, HIDDEN), jnp.float32)
    w3 = jax.random.normal(k5, (HIDDEN, OUT), jnp.float32)      # fc3: Linear(50, 2)
    b3 = jax.random.normal(k6, (1, OUT), jnp.float32)
    return (w1, b1, w2, b2, w3, b3)


def q_net_ref(x, params):
    # Pure-JAX reference for correctness checking (natural, unpadded params).
    w1, b1, w2, b2, w3, b3 = params
    feat = jnp.concatenate([jnp.sin(x), jnp.cos(x)], axis=1)
    h1 = jnp.cos(feat @ w1 + b1)
    h2 = jnp.cos(h1 @ w2 + b2)
    return h2 @ w3 + b3


if __name__ == "__main__":
    key = jax.random.PRNGKey(0)
    kx, kp = jax.random.split(key)

    # Small batch that still exercises multi-step gridding (2 x 128-row tiles)
    # and the non-multiple-of-tile tail-padding path.
    B = 200
    x = jax.random.normal(kx, (B, 1), jnp.float32)   # Q_Net expects 1 raw feature
    params = init_q_net_params(kp)
    padded_params = pad_qnet_params(params)

    out = q_net_forward(x, padded_params, tb_max=128)
    out = jax.block_until_ready(out)

    ref = q_net_ref(x, params)
    assert out.shape == (B, OUT)
    assert jnp.allclose(out, ref, atol=1e-3, rtol=1e-3), (
        f"max abs err {jnp.max(jnp.abs(out - ref))}"
    )

    print("KERNEL_OK")
</pallas_src>

<mosaic_0001>
module attributes {stable_mosaic.version = 11 : i64} {
  func.func @qnet_kernel(%arg0: i32, %arg1: memref<128x1xf32, #tpu.memory_space<vmem>>, %arg2: memref<2x64xf32, #tpu.memory_space<vmem>>, %arg3: memref<1x64xf32, #tpu.memory_space<vmem>>, %arg4: memref<64x64xf32, #tpu.memory_space<vmem>>, %arg5: memref<1x64xf32, #tpu.memory_space<vmem>>, %arg6: memref<64x128xf32, #tpu.memory_space<vmem>>, %arg7: memref<1x128xf32, #tpu.memory_space<vmem>>, %arg8: memref<128x128xf32, #tpu.memory_space<vmem>>) attributes {dimension_semantics = [#tpu.dimension_semantics<parallel>], iteration_bounds = array<i64: 2>, scalar_prefetch = 0 : i64, scratch_operands = 0 : i64, tpu.core_type = #tpu.core_type<tc>, window_params = [{transform_indices = @transform_0, window_bounds = array<i64: 128, 1>}, {pipeline_mode = #tpu.pipeline_mode<synchronous>, transform_indices = @transform_1, window_bounds = array<i64: 2, 64>}, {pipeline_mode = #tpu.pipeline_mode<synchronous>, transform_indices = @transform_2, window_bounds = array<i64: 1, 64>}, {pipeline_mode = #tpu.pipeline_mode<synchronous>, transform_indices = @transform_3, window_bounds = array<i64: 64, 64>}, {pipeline_mode = #tpu.pipeline_mode<synchronous>, transform_indices = @transform_4, window_bounds = array<i64: 1, 64>}, {pipeline_mode = #tpu.pipeline_mode<synchronous>, transform_indices = @transform_5, window_bounds = array<i64: 64, 128>}, {pipeline_mode = #tpu.pipeline_mode<synchronous>, transform_indices = @transform_6, window_bounds = array<i64: 1, 128>}, {transform_indices = @transform_7, window_bounds = array<i64: 128, 128>}]} {
    %c0 = arith.constant 0 : index
    %c0_0 = arith.constant 0 : index
    %0 = vector.load %arg1[%c0, %c0_0] : memref<128x1xf32, #tpu.memory_space<vmem>>, vector<128x1xf32>
    %1 = math.sin %0 : vector<128x1xf32>
    %c0_1 = arith.constant 0 : index
    %c0_2 = arith.constant 0 : index
    %2 = vector.load %arg2[%c0_1, %c0_2] : memref<2x64xf32, #tpu.memory_space<vmem>>, vector<1x64xf32>
    %3 = vector.broadcast %1 : vector<128x1xf32> to vector<128x64xf32>
    %4 = vector.broadcast %2 : vector<1x64xf32> to vector<128x64xf32>
    %5 = arith.mulf %3, %4 : vector<128x64xf32>
    %6 = math.cos %0 : vector<128x1xf32>
    %c1 = arith.constant 1 : index
    %c0_3 = arith.constant 0 : index
    %7 = vector.load %arg2[%c1, %c0_3] : memref<2x64xf32, #tpu.memory_space<vmem>>, vector<1x64xf32>
    %8 = vector.broadcast %6 : vector<128x1xf32> to vector<128x64xf32>
    %9 = vector.broadcast %7 : vector<1x64xf32> to vector<128x64xf32>
    %10 = arith.mulf %8, %9 : vector<128x64xf32>
    %11 = arith.addf %5, %10 : vector<128x64xf32>
    %c0_4 = arith.constant 0 : index
    %c0_5 = arith.constant 0 : index
    %12 = vector.load %arg3[%c0_4, %c0_5] : memref<1x64xf32, #tpu.memory_space<vmem>>, vector<1x64xf32>
    %13 = vector.broadcast %12 : vector<1x64xf32> to vector<128x64xf32>
    %14 = arith.addf %11, %13 : vector<128x64xf32>
    %15 = math.cos %14 : vector<128x64xf32>
    %c0_6 = arith.constant 0 : index
    %c0_7 = arith.constant 0 : index
    %16 = vector.load %arg4[%c0_6, %c0_7] : memref<64x64xf32, #tpu.memory_space<vmem>>, vector<64x64xf32>
    %cst = arith.constant dense<0.000000e+00> : vector<128x64xf32>
    %17 = tpu.matmul %15, %16, %cst {dimension_numbers = #tpu.dot_dimension_numbers<[1], [0], [0], [1], [0, 0, 1, 1], [], []>} : vector<128x64xf32>, vector<64x64xf32>, vector<128x64xf32> -> vector<128x64xf32>
    %c0_8 = arith.constant 0 : index
    %c0_9 = arith.constant 0 : index
    %18 = vector.load %arg5[%c0_8, %c0_9] : memref<1x64xf32, #tpu.memory_space<vmem>>, vector<1x64xf32>
    %19 = vector.broadcast %18 : vector<1x64xf32> to vector<128x64xf32>
    %20 = arith.addf %17, %19 : vector<128x64xf32>
    %21 = math.cos %20 : vector<128x64xf32>
    %c0_10 = arith.constant 0 : index
    %c0_11 = arith.constant 0 : index
    %22 = vector.load %arg6[%c0_10, %c0_11] : memref<64x128xf32, #tpu.memory_space<vmem>>, vector<64x128xf32>
    %cst_12 = arith.constant dense<0.000000e+00> : vector<128x128xf32>
    %23 = tpu.matmul %21, %22, %cst_12 {dimension_numbers = #tpu.dot_dimension_numbers<[1], [0], [0], [1], [0, 0, 1, 1], [], []>} : vector<128x64xf32>, vector<64x128xf32>, vector<128x128xf32> -> vector<128x128xf32>
    %c0_13 = arith.constant 0 : index
    %c0_14 = arith.constant 0 : index
    %24 = vector.load %arg7[%c0_13, %c0_14] : memref<1x128xf32, #tpu.memory_space<vmem>>, vector<1x128xf32>
    %25 = vector.broadcast %24 : vector<1x128xf32> to vector<128x128xf32>
    %26 = arith.addf %23, %25 : vector<128x128xf32>
    %c0_15 = arith.constant 0 : index
    %c0_16 = arith.constant 0 : index
    %27 = vector.load %arg8[%c0_15, %c0_16] : memref<128x128xf32, #tpu.memory_space<vmem>>, vector<128x128xf32>
    tpu.vector_store %arg8[%c0_15, %c0_16], %26 {strides = array<i32>} : memref<128x128xf32, #tpu.memory_space<vmem>>, vector<128x128xf32>,
    return
  }
  func.func @transform_0(%arg0: i32) -> (i32, i32) {
    %c0_i32 = arith.constant 0 : i32
    %c0_i32_0 = arith.constant 0 : i32
    return %arg0, %c0_i32 : i32, i32
  }
  func.func @transform_1(%arg0: i32) -> (i32, i32) {
    %c0_i32 = arith.constant 0 : i32
    %c0_i32_0 = arith.constant 0 : i32
    %c0_i32_1 = arith.constant 0 : i32
    return %c0_i32, %c0_i32_0 : i32, i32
  }
  func.func @transform_2(%arg0: i32) -> (i32, i32) {
    %c0_i32 = arith.constant 0 : i32
    %c0_i32_0 = arith.constant 0 : i32
    %c0_i32_1 = arith.constant 0 : i32
    return %c0_i32, %c0_i32_0 : i32, i32
  }
  func.func @transform_3(%arg0: i32) -> (i32, i32) {
    %c0_i32 = arith.constant 0 : i32
    %c0_i32_0 = arith.constant 0 : i32
    %c0_i32_1 = arith.constant 0 : i32
    return %c0_i32, %c0_i32_0 : i32, i32
  }
  func.func @transform_4(%arg0: i32) -> (i32, i32) {
    %c0_i32 = arith.constant 0 : i32
    %c0_i32_0 = arith.constant 0 : i32
    %c0_i32_1 = arith.constant 0 : i32
    return %c0_i32, %c0_i32_0 : i32, i32
  }
  func.func @transform_5(%arg0: i32) -> (i32, i32) {
    %c0_i32 = arith.constant 0 : i32
    %c0_i32_0 = arith.constant 0 : i32
    %c0_i32_1 = arith.constant 0 : i32
    return %c0_i32, %c0_i32_0 : i32, i32
  }
  func.func @transform_6(%arg0: i32) -> (i32, i32) {
    %c0_i32 = arith.constant 0 : i32
    %c0_i32_0 = arith.constant 0 : i32
    %c0_i32_1 = arith.constant 0 : i32
    return %c0_i32, %c0_i32_0 : i32, i32
  }
  func.func @transform_7(%arg0: i32) -> (i32, i32) {
    %c0_i32 = arith.constant 0 : i32
    %c0_i32_0 = arith.constant 0 : i32
    return %arg0, %c0_i32 : i32, i32
  }
}

</mosaic_0001>

<llo_original>
// kernel: tpu_custom_call.1
$region0: #{tpu_custom_call.1}
  #allocation0 [shape = 'u32[]', space=smem, size = 0x4, offset = 0x4, fixed_abs, tag = 'smem constant byte address 0x4 - core index']
  #allocation1 [shape = 'u32[144,128]{1,0:T(1,128)}', space=vmem, size = 0x12000, scoped, tag = 'internal scratch']
  %s0 = inlined_call_operand.vmem [shape: f32[256,1], index: 0, kind: input, shape index: {}]
  %s1 = inlined_call_operand.vmem [shape: f32[2,64], index: 1, kind: input, shape index: {}]
  %s2 = inlined_call_operand.vmem [shape: f32[1,64], index: 2, kind: input, shape index: {}]
  %s3 = inlined_call_operand.vmem [shape: f32[64,64], index: 3, kind: input, shape index: {}]
  %s4 = inlined_call_operand.vmem [shape: f32[1,64], index: 4, kind: input, shape index: {}]
  %s5 = inlined_call_operand.vmem [shape: f32[64,128], index: 5, kind: input, shape index: {}]
  %s6 = inlined_call_operand.vmem [shape: f32[1,128], index: 6, kind: input, shape index: {}]
  %s7 = inlined_call_operand.hbm [shape: f32[256,128], index: 7, kind: output, shape index: {}]
  %s8 = sld [smem:[#allocation0]]
  $region61: #{tpu_custom_call.1} parent=0
    _
  %s10 = ssub.s32 1, %s8
  %s11 = scalar_select 0, %s10, %s8
  $region1: #{tpu_custom_call.1} parent=0
    #allocation2 [shape = 'u8[131072]{0}', space=vmem, size = 0x20000, scoped, tag = 'output window, operand 0']
    #allocation3 [shape = 's32[2]{0}', space=sflag, size = 0x8, scoped, tag = 'scoped memory for tpu_custom_call.1']
    %12 = vsyncpa [#allocation3], 0
    %s13 = scalar_lea.sflag [#allocation3], 1
    %14 = vsyncpa %s13, 0
    loop: start=0, step=1, limit=4
    $region2: #{tpu_custom_call.1} parent=1 // loop_pre_header
      _
    $region3: #{tpu_custom_call.1} parent=1 // loop_header
      %s16 = sphi 0, %s20
      %p17 = scmp.ge.s32.totalorder %s16, 4
      %s26 = sphi 0, %s28
      %s29 = sphi 0, %s26
      %s30 = sphi 0, %s29
      %s46 = sphi 0, %s30
      %s50 = sphi 0, %s50
      %s52 = sphi 0, %s50
      %s53 = sphi 0, %s52
      %s67 = sphi 0, %s53
      %s71 = sphi 0, %s71
      %s73 = sphi 0, %s71
      %s74 = sphi 0, %s73
      %s88 = sphi 0, %s74
      %s92 = sphi 0, %s92
      %s94 = sphi 0, %s92
      %s95 = sphi 0, %s94
      %s109 = sphi 0, %s95
      %s113 = sphi 0, %s113
      %s115 = sphi 0, %s113
      %s116 = sphi 0, %s115
      %s130 = sphi 0, %s116
      %s134 = sphi 0, %s134
      %s136 = sphi 0, %s134
      %s137 = sphi 0, %s136
      %s151 = sphi 0, %s137
      %s155 = sphi 0, %s155
      %s157 = sphi 0, %s155
      %s158 = sphi 0, %s157
      %s172 = sphi 0, %s158
      %s178 = sphi 0, %s180
      %s181 = sphi 0, %s178
      %s182 = sphi 0, %s181
      %s198 = sphi 0, %s182
    $region4: #{tpu_custom_call.1} parent=1 // loop_header_branch
      %19 = sbr.rel (%p17) target = $region8
    $region5: #{tpu_custom_call.1} parent=1 // loop_body
      %s21 = ssub.s32 %s16, 1
      %s22 = ssub.s32 %s16, 2
      %s23 = sadd.s32 %s16, 1
      %s24 = ssub.s32 %s16, %s23
      %p25 = scmp.eq.s32.totalorder %s24, 0
      %s27 = sadd.s32 %s26, 1
      %s28 = scalar_select %p25, %s26, %s27
      %p31 = pneg %p25
      %p32 = scmp.eq.s32.totalorder %s16, 1
      %p33 = por %p31, %p32
      %p34 = scmp.ne.s32.totalorder %s26, %s29
      %p35 = scmp.eq.s32.totalorder %s16, 0
      %p36 = por %p34, %p35
      %p37 = scmp.ne.s32.totalorder %s26, %s29
      %p38 = scmp.eq.s32.totalorder %s21, 1
      %p39 = por %p37, %p38
      %p40 = scmp.ne.s32.totalorder %s29, %s30
      %p41 = scmp.eq.s32.totalorder %s21, 0
      %p42 = por %p40, %p41
      %p43 = scmp.ne.s32.totalorder %s29, %s30
      %p44 = scmp.eq.s32.totalorder %s22, 1
      %p45 = por %p43, %p44
      %p47 = scmp.ne.s32.totalorder %s30, %s46
      %p48 = scmp.eq.s32.totalorder %s22, 0
      %p49 = por %p47, %p48
      %s51 = sadd.s32 %s50, 1
      %p54 = scmp.eq.s32.totalorder %s16, 1
      %p55 = scmp.ne.s32.totalorder %s50, %s52
      %p56 = scmp.eq.s32.totalorder %s16, 0
      %p57 = por %p55, %p56
      %p58 = scmp.ne.s32.totalorder %s50, %s52
      %p59 = scmp.eq.s32.totalorder %s21, 1
      %p60 = por %p58, %p59
      %p61 = scmp.ne.s32.totalorder %s52, %s53
      %p62 = scmp.eq.s32.totalorder %s21, 0
      %p63 = por %p61, %p62
      %p64 = scmp.ne.s32.totalorder %s52, %s53
      %p65 = scmp.eq.s32.totalorder %s22, 1
      %p66 = por %p64, %p65
      %p68 = scmp.ne.s32.totalorder %s53, %s67
      %p69 = scmp.eq.s32.totalorder %s22, 0
      %p70 = por %p68, %p69
      %s72 = sadd.s32 %s71, 1
      %p75 = scmp.eq.s32.totalorder %s16, 1
      %p76 = scmp.ne.s32.totalorder %s71, %s73
      %p77 = scmp.eq.s32.totalorder %s16, 0
      %p78 = por %p76, %p77
      %p79 = scmp.ne.s32.totalorder %s71, %s73
      %p80 = scmp.eq.s32.totalorder %s21, 1
      %p81 = por %p79, %p80
      %p82 = scmp.ne.s32.totalorder %s73, %s74
      %p83 = scmp.eq.s32.totalorder %s21, 0
      %p84 = por %p82, %p83
      %p85 = scmp.ne.s32.totalorder %s73, %s74
      %p86 = scmp.eq.s32.totalorder %s22, 1
      %p87 = por %p85, %p86
      %p89 = scmp.ne.s32.totalorder %s74, %s88
      %p90 = scmp.eq.s32.totalorder %s22, 0
      %p91 = por %p89, %p90
      %s93 = sadd.s32 %s92, 1
      %p96 = scmp.eq.s32.totalorder %s16, 1
      %p97 = scmp.ne.s32.totalorder %s92, %s94
      %p98 = scmp.eq.s32.totalorder %s16, 0
      %p99 = por %p97, %p98
      %p100 = scmp.ne.s32.totalorder %s92, %s94
      %p101 = scmp.eq.s32.totalorder %s21, 1
      %p102 = por %p100, %p101
      %p103 = scmp.ne.s32.totalorder %s94, %s95
      %p104 = scmp.eq.s32.totalorder %s21, 0
      %p105 = por %p103, %p104
      %p106 = scmp.ne.s32.totalorder %s94, %s95
      %p107 = scmp.eq.s32.totalorder %s22, 1
      %p108 = por %p106, %p107
      %p110 = scmp.ne.s32.totalorder %s95, %s109
      %p111 = scmp.eq.s32.totalorder %s22, 0
      %p112 = por %p110, %p111
      %s114 = sadd.s32 %s113, 1
      %p117 = scmp.eq.s32.totalorder %s16, 1
      %p118 = scmp.ne.s32.totalorder %s113, %s115
      %p119 = scmp.eq.s32.totalorder %s16, 0
      %p120 = por %p118, %p119
      %p121 = scmp.ne.s32.totalorder %s113, %s115
      %p122 = scmp.eq.s32.totalorder %s21, 1
      %p123 = por %p121, %p122
      %p124 = scmp.ne.s32.totalorder %s115, %s116
      %p125 = scmp.eq.s32.totalorder %s21, 0
      %p126 = por %p124, %p125
      %p127 = scmp.ne.s32.totalorder %s115, %s116
      %p128 = scmp.eq.s32.totalorder %s22, 1
      %p129 = por %p127, %p128
      %p131 = scmp.ne.s32.totalorder %s116, %s130
      %p132 = scmp.eq.s32.totalorder %s22, 0
      %p133 = por %p131, %p132
      %s135 = sadd.s32 %s134, 1
      %p138 = scmp.eq.s32.totalorder %s16, 1
      %p139 = scmp.ne.s32.totalorder %s134, %s136
      %p140 = scmp.eq.s32.totalorder %s16, 0
      %p141 = por %p139, %p140
      %p142 = scmp.ne.s32.totalorder %s134, %s136
      %p143 = scmp.eq.s32.totalorder %s21, 1
      %p144 = por %p142, %p143
      %p145 = scmp.ne.s32.totalorder %s136, %s137
      %p146 = scmp.eq.s32.totalorder %s21, 0
      %p147 = por %p145, %p146
      %p148 = scmp.ne.s32.totalorder %s136, %s137
      %p149 = scmp.eq.s32.totalorder %s22, 1
      %p150 = por %p148, %p149
      %p152 = scmp.ne.s32.totalorder %s137, %s151
      %p153 = scmp.eq.s32.totalorder %s22, 0
      %p154 = por %p152, %p153
      %s156 = sadd.s32 %s155, 1
      %p159 = scmp.eq.s32.totalorder %s16, 1
      %p160 = scmp.ne.s32.totalorder %s155, %s157
      %p161 = scmp.eq.s32.totalorder %s16, 0
      %p162 = por %p160, %p161
      %p163 = scmp.ne.s32.totalorder %s155, %s157
      %p164 = scmp.eq.s32.totalorder %s21, 1
      %p165 = por %p163, %p164
      %p166 = scmp.ne.s32.totalorder %s157, %s158
      %p167 = scmp.eq.s32.totalorder %s21, 0
      %p168 = por %p166, %p167
      %p169 = scmp.ne.s32.totalorder %s157, %s158
      %p170 = scmp.eq.s32.totalorder %s22, 1
      %p171 = por %p169, %p170
      %p173 = scmp.ne.s32.totalorder %s158, %s172
      %p174 = scmp.eq.s32.totalorder %s22, 0
      %p175 = por %p173, %p174
      %s176 = ssub.s32 %s16, %s23
      %p177 = scmp.eq.s32.totalorder %s176, 0
      %s179 = sadd.s32 %s178, 1
      %s180 = scalar_select %p177, %s178, %s179
      %p183 = pneg %p177
      %p184 = scmp.eq.s32.totalorder %s16, 1
      %p185 = por %p183, %p184
      %p186 = scmp.ne.s32.totalorder %s178, %s181
      %p187 = scmp.eq.s32.totalorder %s16, 0
      %p188 = por %p186, %p187
      %p189 = scmp.ne.s32.totalorder %s178, %s181
      %p190 = scmp.eq.s32.totalorder %s21, 1
      %p191 = por %p189, %p190
      %p192 = scmp.ne.s32.totalorder %s181, %s182
      %p193 = scmp.eq.s32.totalorder %s21, 0
      %p194 = por %p192, %p193
      %p195 = scmp.ne.s32.totalorder %s181, %s182
      %p196 = scmp.eq.s32.totalorder %s22, 1
      %p197 = por %p195, %p196
      %p199 = scmp.ne.s32.totalorder %s182, %s198
      %p200 = scmp.eq.s32.totalorder %s22, 0
      %p201 = por %p199, %p200
      %p202 = scmp.le.s32.totalorder 1, %s16
      %p203 = scmp.lt.s32.totalorder %s16, 3
      %p204 = pnand %p202, %p203
      %p205 = pneg %p204
      // Predicated region
      $region9: #{tpu_custom_call.1} parent=5 // pred_check
        _
      $region10: #{tpu_custom_call.1} parent=5 // pred_check_branch
        %207 = sbr.rel (%p204) target = $region12
      $region11: #{tpu_custom_call.1} parent=5 // pred_region
        %s208 = ssub.s32 %s16, 1
        // Predicated region
        $region13: #{tpu_custom_call.1} parent=11 // pred_check
          %p209 = pneg %p63
        $region14: #{tpu_custom_call.1} parent=11 // pred_check_branch
          %211 = sbr.rel (%p209) target = $region16
        $region15: #{tpu_custom_call.1} parent=11 // pred_region
          _
        $region16: #{tpu_custom_call.1} parent=11 // pred_fallthru
          _
        // Predicated region
        $region17: #{tpu_custom_call.1} parent=11 // pred_check
          %p212 = pneg %p84
        $region18: #{tpu_custom_call.1} parent=11 // pred_check_branch
          %214 = sbr.rel (%p212) target = $region20
        $region19: #{tpu_custom_call.1} parent=11 // pred_region
          _
        $region20: #{tpu_custom_call.1} parent=11 // pred_fallthru
          _
        // Predicated region
        $region21: #{tpu_custom_call.1} parent=11 // pred_check
          %p215 = pneg %p105
        $region22: #{tpu_custom_call.1} parent=11 // pred_check_branch
          %217 = sbr.rel (%p215) target = $region24
        $region23: #{tpu_custom_call.1} parent=11 // pred_region
          _
        $region24: #{tpu_custom_call.1} parent=11 // pred_fallthru
          _
        // Predicated region
        $region25: #{tpu_custom_call.1} parent=11 // pred_check
          %p218 = pneg %p126
        $region26: #{tpu_custom_call.1} parent=11 // pred_check_branch
          %220 = sbr.rel (%p218) target = $region28
        $region27: #{tpu_custom_call.1} parent=11 // pred_region
          _
        $region28: #{tpu_custom_call.1} parent=11 // pred_fallthru
          _
        // Predicated region
        $region29: #{tpu_custom_call.1} parent=11 // pred_check
          %p221 = pneg %p147
        $region30: #{tpu_custom_call.1} parent=11 // pred_check_branch
          %223 = sbr.rel (%p221) target = $region32
        $region31: #{tpu_custom_call.1} parent=11 // pred_region
          _
        $region32: #{tpu_custom_call.1} parent=11 // pred_fallthru
          _
        // Predicated region
        $region33: #{tpu_custom_call.1} parent=11 // pred_check
          %p224 = pneg %p168
        $region34: #{tpu_custom_call.1} parent=11 // pred_check_branch
          %226 = sbr.rel (%p224) target = $region36
        $region35: #{tpu_custom_call.1} parent=11 // pred_region
          _
        $region36: #{tpu_custom_call.1} parent=11 // pred_fallthru
          _
      $region12: #{tpu_custom_call.1} parent=5 // pred_fallthru
        _
      %p227 = scmp.lt.s32.totalorder %s16, 2
      // Predicated region
      $region37: #{tpu_custom_call.1} parent=5 // pred_check
        %p228 = pneg %p227
      $region38: #{tpu_custom_call.1} parent=5 // pred_check_branch
        %230 = sbr.rel (%p228) target = $region40
      $region39: #{tpu_custom_call.1} parent=5 // pred_region
        // Predicated region
        $region41: #{tpu_custom_call.1} parent=39 // pred_check
          %p231 = pneg %p36
        $region42: #{tpu_custom_call.1} parent=39 // pred_check_branch
          %233 = sbr.rel (%p231) target = $region44
        $region43: #{tpu_custom_call.1} parent=39 // pred_region
          %s234 = smul.u32 16, %s16
          %p235 = scmp.lt.s32.totalorder %s234, 31
          %s236 = scalar_select %p235, %s234, 31
          %s237 = smul.addr %s236, 8
          %s238 = scalar_lea.vmem %s0, %s237
          %s239 = smul.u32 16, %s16
        $region44: #{tpu_custom_call.1} parent=39 // pred_fallthru
          _
      $region40: #{tpu_custom_call.1} parent=5 // pred_fallthru
        _
      %p240 = scmp.le.s32.totalorder 1, %s16
      %p241 = scmp.lt.s32.totalorder %s16, 3
      %p242 = pnand %p240, %p241
      %p243 = pneg %p242
      // Predicated region
      $region45: #{tpu_custom_call.1} parent=5 // pred_check
        _
      $region46: #{tpu_custom_call.1} parent=5 // pred_check_branch
        %245 = sbr.rel (%p242) target = $region48
      $region47: #{tpu_custom_call.1} parent=5 // pred_region
        %s246 = ssub.s32 %s16, 1
        %s247 = smul.u32 16, %s21
        %p248 = scmp.lt.s32.totalorder %s247, 31
        %s249 = scalar_select %p248, %s247, 31
        %s250 = smul.addr %s249, 8
        %s251 = scalar_lea.vmem %s0, %s250
        %p252 = pneg %p42
        %p253 = pneg %p39
        %p254 = pneg %p63
        %p255 = pneg %p60
        %p256 = pneg %p84
        %p257 = pneg %p81
        %p258 = pneg %p105
        %p259 = pneg %p102
        %p260 = pneg %p126
        %p261 = pneg %p123
        %p262 = pneg %p147
        %p263 = pneg %p144
        %p264 = pneg %p168
        %p265 = pneg %p165
        %p266 = pneg %p194
        %p267 = pneg %p191
        %s268 = sand.u32 %s181, 1
        %s269 = scalar_lea.sflag [#allocation3], %s268
        %s270 = sand.u32 %s181, 1
        %s271 = smul.addr %s270, 128
        %s272 = scalar_lea.vmem [#allocation2], %s271
        %s273 = smul.u32 16, %s21
        %p274 = scmp.lt.s32.totalorder %s273, 31
        %s275 = scalar_select %p274, %s273, 31
        %s276 = smul.addr %s275, 8
        %s277 = scalar_lea.vmem %s0, %s276
        %s278 = smul.u32 16, %s21
        %s279 = smul.u32 16, %s21
        %v280 = vld [vmem:[%s277] sm:$0xff]
        %v281 = vld [vmem:[%s277 + $0x8] sm:$0xff]
        %v282 = vld [vmem:[%s277 + $0x10] sm:$0xff]
        %v283 = vld [vmem:[%s277 + $0x18] sm:$0xff]
        %v284 = vld [vmem:[%s277 + $0x20] sm:$0xff]
        %v285 = vld [vmem:[%s277 + $0x28] sm:$0xff]
        %v286 = vld [vmem:[%s277 + $0x30] sm:$0xff]
        %v287 = vld [vmem:[%s277 + $0x38] sm:$0xff]
        %v288 = vld [vmem:[%s277 + $0x40] sm:$0xff]
        %v289 = vld [vmem:[%s277 + $0x48] sm:$0xff]
        %v290 = vld [vmem:[%s277 + $0x50] sm:$0xff]
        %v291 = vld [vmem:[%s277 + $0x58] sm:$0xff]
        %v292 = vld [vmem:[%s277 + $0x60] sm:$0xff]
        %v293 = vld [vmem:[%s277 + $0x68] sm:$0xff]
        %v294 = vld [vmem:[%s277 + $0x70] sm:$0xff]
        %v295 = vld [vmem:[%s277 + $0x78] sm:$0xff]
        %v296 = vand.u32 2147483647, %v280
        %vm297 = vcmp.le.f32.partialorder %v296, 0.7853982
        %vm298 = vcmp.lt.s32.totalorder %v280, 0
        %v299 = vand.u32 %v280, 2139095040
        %v300 = vshrl.u32 %v299, 23
        %v301 = vsub.s32 %v300, 127
        %v302 = vand.u32 2147483647, %v280
        %v303 = vand.u32 %v302, 8388607
        %v304 = vor.u32 %v303, 8388608
        %v305 = vsub.s32 0, %v304
        %v306 = vadd.s32 %v301, 1
        %vm307 = vcmp.gt.s32.totalorder %v306, 0
        %v308 = vsel %vm307, %v306, 0
        %v309 = vshrl.u32 %v308, 5
        %v310 = vand.u32 %v308, 31
        %v311 = vsub.s32 32, %v310
        %v312 = vshrl.u32 683565275, %v311
        %v313 = vshll.u32 683565275, %v310
        %v314 = vshrl.u32 2475754826, %v311
        %v315 = vor.u32 %v313, %v314
        %v316 = vshll.u32 2475754826, %v310
        %v317 = vshrl.u32 2131351028, %v311
        %v318 = vor.u32 %v316, %v317
        %v319 = vshll.u32 2131351028, %v310
        %v320 = vshrl.u32 2102212464, %v311
        %v321 = vor.u32 %v319, %v320
        %v322 = vshll.u32 2102212464, %v310
        %v323 = vshrl.u32 920167782, %v311
        %v324 = vor.u32 %v322, %v323
        %v325 = vshll.u32 920167782, %v310
        %v326 = vshrl.u32 1326507024, %v311
        %v327 = vor.u32 %v325, %v326
        %vm328 = vcmp.lt.s32.totalorder %v309, 1
        %vm329 = vcmp.lt.s32.totalorder %v309, 2
        %vm330 = vcmp.lt.s32.totalorder %v309, 3
        %vm331 = vcmp.lt.s32.totalorder %v309, 4
        %v332 = vsel %vm328, %v312, %v315
        %v333 = vsel %vm331, %v321, 2102212464
        %v334 = vsel %vm330, %v318, %v333
        %v335 = vsel %vm329, %v332, %v334
        %v336 = vsel %vm328, %v315, %v318
        %v337 = vsel %vm331, %v324, 920167782
        %v338 = vsel %vm330, %v321, %v337
        %v339 = vsel %vm329, %v336, %v338
        %v340 = vsel %vm328, %v318, %v321
        %v341 = vsel %vm331, %v327, 1326507024
        %v342 = vsel %vm330, %v324, %v341
        %v343 = vsel %vm329, %v340, %v342
        %v344 = vshll.u32 %v304, 8
        %v345 = vmul.u32.u64.compose %v344, %v343
        %v346 = vextract.low.u32 %v345
        %v347 = vextract.high.u32 %v345
        %v348 = vmul.u32.u64.compose %v344, %v339
        %v349 = vextract.low.u32 %v348
        %v350 = vextract.high.u32 %v348
        %v351 = vmul.u32 %v344, %v335
        %v352 = vadd.s32 %v347, %v349
        %vm353 = vc.u32 %v347, %v349
        %v354 = vadd.s32 %v350, 1
        %v355 = vsel %vm353, %v354, %v350
        %v356 = vadd.s32 %v351, %v355
        %v357 = vadd.s32 %v356, 536870912
        %v358 = vshrl.u32 %v357, 30
        %v359 = vshll.u32 %v358, 30
        %v360 = vsub.s32 %v356, %v359
        %vm361 = vcmp.lt.s32.totalorder %v360, 0
        %v362 = vsub.s32 0, %v360
        %v363 = vsel %vm361, %v362, %v360
        %v364 = vclz %v363
        %v365 = vsub.s32 %v364, 2
        %vm366 = vcmp.gt.s32.totalorder 0, %v365
        %v367 = vsel %vm366, 0, %v365
        %v368 = vsub.s32 32, %v367
        %v369 = vshll.u32 %v360, %v367
        %v370 = vshrl.u32 %v352, %v368
        %v371 = vor.u32 %v369, %v370
        %v372 = vsub.s32 4294967266, %v367
        %v373 = vadd.s32 %v372, 127
        %v374 = vshll.u32 %v373, 23
        %v375 = vor.u32 4788187, %v374
        %v376 = vand.u32 2147483647, %v375
        %v378 = vcvt.s32.f32 %v371
        %v379 = vmul.f32 %v378, %v376
        %v380 = vxor.u32 %v379, 2147483648
        %v381 = vsel %vm298, %v380, %v379
        %v382 = vsub.s32 4, %v358
        %v383 = vsel %vm298, %v382, %v358
        %v384 = vsel %vm297, %v280, %v381
        %v385 = vsel %vm297, 0, %v383
        %v386 = vcosq.f32.pop %v384
        %v387 = vsinq.f32.pop %v384
        %vm388 = vweird.f32 %v280
        %v389 = vadd.s32 %v385, 3
        %v390 = vand.u32 %v389, 3
        %vm391 = vcmp.lt.s32.totalorder %v390, 2
        %vm392 = vcmp.eq.s32.totalorder %v390, 0
        %v393 = vxor.u32 %v387, 2147483648
        %v394 = vsel %vm392, %v386, %v393
        %vm395 = vcmp.eq.s32.totalorder %v390, 2
        %v396 = vxor.u32 %v386, 2147483648
        %v397 = vsel %vm395, %v396, %v387
        %v398 = vsel %vm391, %v394, %v397
        %v399 = vsel %vm388, nan, %v398
        %v400 = vand.u32 2147483647, %v281
        %vm401 = vcmp.le.f32.partialorder %v400, 0.7853982
        %vm402 = vcmp.lt.s32.totalorder %v281, 0
        %v403 = vand.u32 %v281, 2139095040
        %v404 = vshrl.u32 %v403, 23
        %v405 = vsub.s32 %v404, 127
        %v406 = vand.u32 2147483647, %v281
        %v407 = vand.u32 %v406, 8388607
        %v408 = vor.u32 %v407, 8388608
        %v409 = vsub.s32 0, %v408
        %v410 = vadd.s32 %v405, 1
        %vm411 = vcmp.gt.s32.totalorder %v410, 0
        %v412 = vsel %vm411, %v410, 0
        %v413 = vshrl.u32 %v412, 5
        %v414 = vand.u32 %v412, 31
        %v415 = vsub.s32 32, %v414
        %v416 = vshrl.u32 683565275, %v415
        %v417 = vshll.u32 683565275, %v414
        %v418 = vshrl.u32 2475754826, %v415
        %v419 = vor.u32 %v417, %v418
        %v420 = vshll.u32 2475754826, %v414
        %v421 = vshrl.u32 2131351028, %v415
        %v422 = vor.u32 %v420, %v421
        %v423 = vshll.u32 2131351028, %v414
        %v424 = vshrl.u32 2102212464, %v415
        %v425 = vor.u32 %v423, %v424
        %v426 = vshll.u32 2102212464, %v414
        %v427 = vshrl.u32 920167782, %v415
        %v428 = vor.u32 %v426, %v427
        %v429 = vshll.u32 920167782, %v414
        %v430 = vshrl.u32 1326507024, %v415
        %v431 = vor.u32 %v429, %v430
        %vm432 = vcmp.lt.s32.totalorder %v413, 1
        %vm433 = vcmp.lt.s32.totalorder %v413, 2
        %vm434 = vcmp.lt.s32.totalorder %v413, 3
        %vm435 = vcmp.lt.s32.totalorder %v413, 4
        %v436 = vsel %vm432, %v416, %v419
        %v437 = vsel %vm435, %v425, 2102212464
        %v438 = vsel %vm434, %v422, %v437
        %v439 = vsel %vm433, %v436, %v438
        %v440 = vsel %vm432, %v419, %v422
        %v441 = vsel %vm435, %v428, 920167782
        %v442 = vsel %vm434, %v425, %v441
        %v443 = vsel %vm433, %v440, %v442
        %v444 = vsel %vm432, %v422, %v425
        %v445 = vsel %vm435, %v431, 1326507024
        %v446 = vsel %vm434, %v428, %v445
        %v447 = vsel %vm433, %v444, %v446
        %v448 = vshll.u32 %v408, 8
        %v449 = vmul.u32.u64.compose %v448, %v447
        %v450 = vextract.low.u32 %v449
        %v451 = vextract.high.u32 %v449
        %v452 = vmul.u32.u64.compose %v448, %v443
        %v453 = vextract.low.u32 %v452
        %v454 = vextract.high.u32 %v452
        %v455 = vmul.u32 %v448, %v439
        %v456 = vadd.s32 %v451, %v453
        %vm457 = vc.u32 %v451, %v453
        %v458 = vadd.s32 %v454, 1
        %v459 = vsel %vm457, %v458, %v454
        %v460 = vadd.s32 %v455, %v459
        %v461 = vadd.s32 %v460, 536870912
        %v462 = vshrl.u32 %v461, 30
        %v463 = vshll.u32 %v462, 30
        %v464 = vsub.s32 %v460, %v463
        %vm465 = vcmp.lt.s32.totalorder %v464, 0
        %v466 = vsub.s32 0, %v464
        %v467 = vsel %vm465, %v466, %v464
        %v468 = vclz %v467
        %v469 = vsub.s32 %v468, 2
        %vm470 = vcmp.gt.s32.totalorder 0, %v469
        %v471 = vsel %vm470, 0, %v469
        %v472 = vsub.s32 32, %v471
        %v473 = vshll.u32 %v464, %v471
        %v474 = vshrl.u32 %v456, %v472
        %v475 = vor.u32 %v473, %v474
        %v476 = vsub.s32 4294967266, %v471
        %v477 = vadd.s32 %v476, 127
        %v478 = vshll.u32 %v477, 23
        %v479 = vor.u32 4788187, %v478
        %v480 = vand.u32 2147483647, %v479
        %v482 = vcvt.s32.f32 %v475
        %v483 = vmul.f32 %v482, %v480
        %v484 = vxor.u32 %v483, 2147483648
        %v485 = vsel %vm402, %v484, %v483
        %v486 = vsub.s32 4, %v462
        %v487 = vsel %vm402, %v486, %v462
        %v488 = vsel %vm401, %v281, %v485
        %v489 = vsel %vm401, 0, %v487
        %v490 = vcosq.f32.pop %v488
        %v491 = vsinq.f32.pop %v488
        %vm492 = vweird.f32 %v281
        %v493 = vadd.s32 %v489, 3
        %v494 = vand.u32 %v493, 3
        %vm495 = vcmp.lt.s32.totalorder %v494, 2
        %vm496 = vcmp.eq.s32.totalorder %v494, 0
        %v497 = vxor.u32 %v491, 2147483648
        %v498 = vsel %vm496, %v490, %v497
        %vm499 = vcmp.eq.s32.totalorder %v494, 2
        %v500 = vxor.u32 %v490, 2147483648
        %v501 = vsel %vm499, %v500, %v491
        %v502 = vsel %vm495, %v498, %v501
        %v503 = vsel %vm492, nan, %v502
        %v504 = vand.u32 2147483647, %v282
        %vm505 = vcmp.le.f32.partialorder %v504, 0.7853982
        %vm506 = vcmp.lt.s32.totalorder %v282, 0
        %v507 = vand.u32 %v282, 2139095040
        %v508 = vshrl.u32 %v507, 23
        %v509 = vsub.s32 %v508, 127
        %v510 = vand.u32 2147483647, %v282
        %v511 = vand.u32 %v510, 8388607
        %v512 = vor.u32 %v511, 8388608
        %v513 = vsub.s32 0, %v512
        %v514 = vadd.s32 %v509, 1
        %vm515 = vcmp.gt.s32.totalorder %v514, 0
        %v516 = vsel %vm515, %v514, 0
        %v517 = vshrl.u32 %v516, 5
        %v518 = vand.u32 %v516, 31
        %v519 = vsub.s32 32, %v518
        %v520 = vshrl.u32 683565275, %v519
        %v521 = vshll.u32 683565275, %v518
        %v522 = vshrl.u32 2475754826, %v519
        %v523 = vor.u32 %v521, %v522
        %v524 = vshll.u32 2475754826, %v518
        %v525 = vshrl.u32 2131351028, %v519
        %v526 = vor.u32 %v524, %v525
        %v527 = vshll.u32 2131351028, %v518
        %v528 = vshrl.u32 2102212464, %v519
        %v529 = vor.u32 %v527, %v528
        %v530 = vshll.u32 2102212464, %v518
        %v531 = vshrl.u32 920167782, %v519
        %v532 = vor.u32 %v530, %v531
        %v533 = vshll.u32 920167782, %v518
        %v534 = vshrl.u32 1326507024, %v519
        %v535 = vor.u32 %v533, %v534
        %vm536 = vcmp.lt.s32.totalorder %v517, 1
        %vm537 = vcmp.lt.s32.totalorder %v517, 2
        %vm538 = vcmp.lt.s32.totalorder %v517, 3
        %vm539 = vcmp.lt.s32.totalorder %v517, 4
        %v540 = vsel %vm536, %v520, %v523
        %v541 = vsel %vm539, %v529, 2102212464
        %v542 = vsel %vm538, %v526, %v541
        %v543 = vsel %vm537, %v540, %v542
        %v544 = vsel %vm536, %v523, %v526
        %v545 = vsel %vm539, %v532, 920167782
        %v546 = vsel %vm538, %v529, %v545
        %v547 = vsel %vm537, %v544, %v546
        %v548 = vsel %vm536, %v526, %v529
        %v549 = vsel %vm539, %v535, 1326507024
        %v550 = vsel %vm538, %v532, %v549
        %v551 = vsel %vm537, %v548, %v550
        %v552 = vshll.u32 %v512, 8
        %v553 = vmul.u32.u64.compose %v552, %v551
        %v554 = vextract.low.u32 %v553
        %v555 = vextract.high.u32 %v553
        %v556 = vmul.u32.u64.compose %v552, %v547
        %v557 = vextract.low.u32 %v556
        %v558 = vextract.high.u32 %v556
        %v559 = vmul.u32 %v552, %v543
        %v560 = vadd.s32 %v555, %v557
        %vm561 = vc.u32 %v555, %v557
        %v562 = vadd.s32 %v558, 1
        %v563 = vsel %vm561, %v562, %v558
        %v564 = vadd.s32 %v559, %v563
        %v565 = vadd.s32 %v564, 536870912
        %v566 = vshrl.u32 %v565, 30
        %v567 = vshll.u32 %v566, 30
        %v568 = vsub.s32 %v564, %v567
        %vm569 = vcmp.lt.s32.totalorder %v568, 0
        %v570 = vsub.s32 0, %v568
        %v571 = vsel %vm569, %v570, %v568
        %v572 = vclz %v571
        %v573 = vsub.s32 %v572, 2
        %vm574 = vcmp.gt.s32.totalorder 0, %v573
        %v575 = vsel %vm574, 0, %v573
        %v576 = vsub.s32 32, %v575
        %v577 = vshll.u32 %v568, %v575
        %v578 = vshrl.u32 %v560, %v576
        %v579 = vor.u32 %v577, %v578
        %v580 = vsub.s32 4294967266, %v575
        %v581 = vadd.s32 %v580, 127
        %v582 = vshll.u32 %v581, 23
        %v583 = vor.u32 4788187, %v582
        %v584 = vand.u32 2147483647, %v583
        %v586 = vcvt.s32.f32 %v579
        %v587 = vmul.f32 %v586, %v584
        %v588 = vxor.u32 %v587, 2147483648
        %v589 = vsel %vm506, %v588, %v587
        %v590 = vsub.s32 4, %v566
        %v591 = vsel %vm506, %v590, %v566
        %v592 = vsel %vm505, %v282, %v589
        %v593 = vsel %vm505, 0, %v591
        %v594 = vcosq.f32.pop %v592
        %v595 = vsinq.f32.pop %v592
        %vm596 = vweird.f32 %v282
        %v597 = vadd.s32 %v593, 3
        %v598 = vand.u32 %v597, 3
        %vm599 = vcmp.lt.s32.totalorder %v598, 2
        %vm600 = vcmp.eq.s32.totalorder %v598, 0
        %v601 = vxor.u32 %v595, 2147483648
        %v602 = vsel %vm600, %v594, %v601
        %vm603 = vcmp.eq.s32.totalorder %v598, 2
        %v604 = vxor.u32 %v594, 2147483648
        %v605 = vsel %vm603, %v604, %v595
        %v606 = vsel %vm599, %v602, %v605
        %v607 = vsel %vm596, nan, %v606
        %v608 = vand.u32 2147483647, %v283
        %vm609 = vcmp.le.f32.partialorder %v608, 0.7853982
        %vm610 = vcmp.lt.s32.totalorder %v283, 0
        %v611 = vand.u32 %v283, 2139095040
        %v612 = vshrl.u32 %v611, 23
        %v613 = vsub.s32 %v612, 127
        %v614 = vand.u32 2147483647, %v283
        %v615 = vand.u32 %v614, 8388607
        %v616 = vor.u32 %v615, 8388608
        %v617 = vsub.s32 0, %v616
        %v618 = vadd.s32 %v613, 1
        %vm619 = vcmp.gt.s32.totalorder %v618, 0
        %v620 = vsel %vm619, %v618, 0
        %v621 = vshrl.u32 %v620, 5
        %v622 = vand.u32 %v620, 31
        %v623 = vsub.s32 32, %v622
        %v624 = vshrl.u32 683565275, %v623
        %v625 = vshll.u32 683565275, %v622
        %v626 = vshrl.u32 2475754826, %v623
        %v627 = vor.u32 %v625, %v626
        %v628 = vshll.u32 2475754826, %v622
        %v629 = vshrl.u32 2131351028, %v623
        %v630 = vor.u32 %v628, %v629
        %v631 = vshll.u32 2131351028, %v622
        %v632 = vshrl.u32 2102212464, %v623
        %v633 = vor.u32 %v631, %v632
        %v634 = vshll.u32 2102212464, %v622
        %v635 = vshrl.u32 920167782, %v623
        %v636 = vor.u32 %v634, %v635
        %v637 = vshll.u32 920167782, %v622
        %v638 = vshrl.u32 1326507024, %v623
        %v639 = vor.u32 %v637, %v638
        %vm640 = vcmp.lt.s32.totalorder %v621, 1
        %vm641 = vcmp.lt.s32.totalorder %v621, 2
        %vm642 = vcmp.lt.s32.totalorder %v621, 3
        %vm643 = vcmp.lt.s32.totalorder %v621, 4
        %v644 = vsel %vm640, %v624, %v627
        %v645 = vsel %vm643, %v633, 2102212464
        %v646 = vsel %vm642, %v630, %v645
        %v647 = vsel %vm641, %v644, %v646
        %v648 = vsel %vm640, %v627, %v630
        %v649 = vsel %vm643, %v636, 920167782
        %v650 = vsel %vm642, %v633, %v649
        %v651 = vsel %vm641, %v648, %v650
        %v652 = vsel %vm640, %v630, %v633
        %v653 = vsel %vm643, %v639, 1326507024
        %v654 = vsel %vm642, %v636, %v653
        %v655 = vsel %vm641, %v652, %v654
        %v656 = vshll.u32 %v616, 8
        %v657 = vmul.u32.u64.compose %v656, %v655
        %v658 = vextract.low.u32 %v657
        %v659 = vextract.high.u32 %v657
        %v660 = vmul.u32.u64.compose %v656, %v651
        %v661 = vextract.low.u32 %v660
        %v662 = vextract.high.u32 %v660
        %v663 = vmul.u32 %v656, %v647
        %v664 = vadd.s32 %v659, %v661
        %vm665 = vc.u32 %v659, %v661
        %v666 = vadd.s32 %v662, 1
        %v667 = vsel %vm665, %v666, %v662
        %v668 = vadd.s32 %v663, %v667
        %v669 = vadd.s32 %v668, 536870912
        %v670 = vshrl.u32 %v669, 30
        %v671 = vshll.u32 %v670, 30
        %v672 = vsub.s32 %v668, %v671
        %vm673 = vcmp.lt.s32.totalorder %v672, 0
        %v674 = vsub.s32 0, %v672
        %v675 = vsel %vm673, %v674, %v672
        %v676 = vclz %v675
        %v677 = vsub.s32 %v676, 2
        %vm678 = vcmp.gt.s32.totalorder 0, %v677
        %v679 = vsel %vm678, 0, %v677
        %v680 = vsub.s32 32, %v679
        %v681 = vshll.u32 %v672, %v679
        %v682 = vshrl.u32 %v664, %v680
        %v683 = vor.u32 %v681, %v682
        %v684 = vsub.s32 4294967266, %v679
        %v685 = vadd.s32 %v684, 127
        %v686 = vshll.u32 %v685, 23
        %v687 = vor.u32 4788187, %v686
        %v688 = vand.u32 2147483647, %v687
        %v690 = vcvt.s32.f32 %v683
        %v691 = vmul.f32 %v690, %v688
        %v692 = vxor.u32 %v691, 2147483648
        %v693 = vsel %vm610, %v692, %v691
        %v694 = vsub.s32 4, %v670
        %v695 = vsel %vm610, %v694, %v670
        %v696 = vsel %vm609, %v283, %v693
        %v697 = vsel %vm609, 0, %v695
        %v698 = vcosq.f32.pop %v696
        %v699 = vsinq.f32.pop %v696
        %vm700 = vweird.f32 %v283
        %v701 = vadd.s32 %v697, 3
        %v702 = vand.u32 %v701, 3
        %vm703 = vcmp.lt.s32.totalorder %v702, 2
        %vm704 = vcmp.eq.s32.totalorder %v702, 0
        %v705 = vxor.u32 %v699, 2147483648
        %v706 = vsel %vm704, %v698, %v705
        %vm707 = vcmp.eq.s32.totalorder %v702, 2
        %v708 = vxor.u32 %v698, 2147483648
        %v709 = vsel %vm707, %v708, %v699
        %v710 = vsel %vm703, %v706, %v709
        %v711 = vsel %vm700, nan, %v710
        %v712 = vand.u32 2147483647, %v284
        %vm713 = vcmp.le.f32.partialorder %v712, 0.7853982
        %vm714 = vcmp.lt.s32.totalorder %v284, 0
        %v715 = vand.u32 %v284, 2139095040
        %v716 = vshrl.u32 %v715, 23
        %v717 = vsub.s32 %v716, 127
        %v718 = vand.u32 2147483647, %v284
        %v719 = vand.u32 %v718, 8388607
        %v720 = vor.u32 %v719, 8388608
        %v721 = vsub.s32 0, %v720
        %v722 = vadd.s32 %v717, 1
        %vm723 = vcmp.gt.s32.totalorder %v722, 0
        %v724 = vsel %vm723, %v722, 0
        %v725 = vshrl.u32 %v724, 5
        %v726 = vand.u32 %v724, 31
        %v727 = vsub.s32 32, %v726
        %v728 = vshrl.u32 683565275, %v727
        %v729 = vshll.u32 683565275, %v726
        %v730 = vshrl.u32 2475754826, %v727
        %v731 = vor.u32 %v729, %v730
        %v732 = vshll.u32 2475754826, %v726
        %v733 = vshrl.u32 2131351028, %v727
        %v734 = vor.u32 %v732, %v733
        %v735 = vshll.u32 2131351028, %v726
        %v736 = vshrl.u32 2102212464, %v727
        %v737 = vor.u32 %v735, %v736
        %v738 = vshll.u32 2102212464, %v726
        %v739 = vshrl.u32 920167782, %v727
        %v740 = vor.u32 %v738, %v739
        %v741 = vshll.u32 920167782, %v726
        %v742 = vshrl.u32 1326507024, %v727
        %v743 = vor.u32 %v741, %v742
        %vm744 = vcmp.lt.s32.totalorder %v725, 1
        %vm745 = vcmp.lt.s32.totalorder %v725, 2
        %vm746 = vcmp.lt.s32.totalorder %v725, 3
        %vm747 = vcmp.lt.s32.totalorder %v725, 4
        %v748 = vsel %vm744, %v728, %v731
        %v749 = vsel %vm747, %v737, 2102212464
        %v750 = vsel %vm746, %v734, %v749
        %v751 = vsel %vm745, %v748, %v750
        %v752 = vsel %vm744, %v731, %v734
        %v753 = vsel %vm747, %v740, 920167782
        %v754 = vsel %vm746, %v737, %v753
        %v755 = vsel %vm745, %v752, %v754
        %v756 = vsel %vm744, %v734, %v737
        %v757 = vsel %vm747, %v743, 1326507024
        %v758 = vsel %vm746, %v740, %v757
        %v759 = vsel %vm745, %v756, %v758
        %v760 = vshll.u32 %v720, 8
        %v761 = vmul.u32.u64.compose %v760, %v759
        %v762 = vextract.low.u32 %v761
        %v763 = vextract.high.u32 %v761
        %v764 = vmul.u32.u64.compose %v760, %v755
        %v765 = vextract.low.u32 %v764
        %v766 = vextract.high.u32 %v764
        %v767 = vmul.u32 %v760, %v751
        %v768 = vadd.s32 %v763, %v765
        %vm769 = vc.u32 %v763, %v765
        %v770 = vadd.s32 %v766, 1
        %v771 = vsel %vm769, %v770, %v766
        %v772 = vadd.s32 %v767, %v771
        %v773 = vadd.s32 %v772, 536870912
        %v774 = vshrl.u32 %v773, 30
        %v775 = vshll.u32 %v774, 30
        %v776 = vsub.s32 %v772, %v775
        %vm777 = vcmp.lt.s32.totalorder %v776, 0
        %v778 = vsub.s32 0, %v776
        %v779 = vsel %vm777, %v778, %v776
        %v780 = vclz %v779
        %v781 = vsub.s32 %v780, 2
        %vm782 = vcmp.gt.s32.totalorder 0, %v781
        %v783 = vsel %vm782, 0, %v781
        %v784 = vsub.s32 32, %v783
        %v785 = vshll.u32 %v776, %v783
        %v786 = vshrl.u32 %v768, %v784
        %v787 = vor.u32 %v785, %v786
        %v788 = vsub.s32 4294967266, %v783
        %v789 = vadd.s32 %v788, 127
        %v790 = vshll.u32 %v789, 23
        %v791 = vor.u32 4788187, %v790
        %v792 = vand.u32 2147483647, %v791
        %v794 = vcvt.s32.f32 %v787
        %v795 = vmul.f32 %v794, %v792
        %v796 = vxor.u32 %v795, 2147483648
        %v797 = vsel %vm714, %v796, %v795
        %v798 = vsub.s32 4, %v774
        %v799 = vsel %vm714, %v798, %v774
        %v800 = vsel %vm713, %v284, %v797
        %v801 = vsel %vm713, 0, %v799
        %v802 = vcosq.f32.pop %v800
        %v803 = vsinq.f32.pop %v800
        %vm804 = vweird.f32 %v284
        %v805 = vadd.s32 %v801, 3
        %v806 = vand.u32 %v805, 3
        %vm807 = vcmp.lt.s32.totalorder %v806, 2
        %vm808 = vcmp.eq.s32.totalorder %v806, 0
        %v809 = vxor.u32 %v803, 2147483648
        %v810 = vsel %vm808, %v802, %v809
        %vm811 = vcmp.eq.s32.totalorder %v806, 2
        %v812 = vxor.u32 %v802, 2147483648
        %v813 = vsel %vm811, %v812, %v803
        %v814 = vsel %vm807, %v810, %v813
        %v815 = vsel %vm804, nan, %v814
        %v816 = vand.u32 2147483647, %v285
        %vm817 = vcmp.le.f32.partialorder %v816, 0.7853982
        %vm818 = vcmp.lt.s32.totalorder %v285, 0
        %v819 = vand.u32 %v285, 2139095040
        %v820 = vshrl.u32 %v819, 23
        %v821 = vsub.s32 %v820, 127
        %v822 = vand.u32 2147483647, %v285
        %v823 = vand.u32 %v822, 8388607
        %v824 = vor.u32 %v823, 8388608
        %v825 = vsub.s32 0, %v824
        %v826 = vadd.s32 %v821, 1
        %vm827 = vcmp.gt.s32.totalorder %v826, 0
        %v828 = vsel %vm827, %v826, 0
        %v829 = vshrl.u32 %v828, 5
        %v830 = vand.u32 %v828, 31
        %v831 = vsub.s32 32, %v830
        %v832 = vshrl.u32 683565275, %v831
        %v833 = vshll.u32 683565275, %v830
        %v834 = vshrl.u32 2475754826, %v831
        %v835 = vor.u32 %v833, %v834
        %v836 = vshll.u32 2475754826, %v830
        %v837 = vshrl.u32 2131351028, %v831
        %v838 = vor.u32 %v836, %v837
        %v839 = vshll.u32 2131351028, %v830
        %v840 = vshrl.u32 2102212464, %v831
        %v841 = vor.u32 %v839, %v840
        %v842 = vshll.u32 2102212464, %v830
        %v843 = vshrl.u32 920167782, %v831
        %v844 = vor.u32 %v842, %v843
        %v845 = vshll.u32 920167782, %v830
        %v846 = vshrl.u32 1326507024, %v831
        %v847 = vor.u32 %v845, %v846
        %vm848 = vcmp.lt.s32.totalorder %v829, 1
        %vm849 = vcmp.lt.s32.totalorder %v829, 2
        %vm850 = vcmp.lt.s32.totalorder %v829, 3
        %vm851 = vcmp.lt.s32.totalorder %v829, 4
        %v852 = vsel %vm848, %v832, %v835
        %v853 = vsel %vm851, %v841, 2102212464
        %v854 = vsel %vm850, %v838, %v853
        %v855 = vsel %vm849, %v852, %v854
        %v856 = vsel %vm848, %v835, %v838
        %v857 = vsel %vm851, %v844, 920167782
        %v858 = vsel %vm850, %v841, %v857
        %v859 = vsel %vm849, %v856, %v858
        %v860 = vsel %vm848, %v838, %v841
        %v861 = vsel %vm851, %v847, 1326507024
        %v862 = vsel %vm850, %v844, %v861
        %v863 = vsel %vm849, %v860, %v862
        %v864 = vshll.u32 %v824, 8
        %v865 = vmul.u32.u64.compose %v864, %v863
        %v866 = vextract.low.u32 %v865
        %v867 = vextract.high.u32 %v865
        %v868 = vmul.u32.u64.compose %v864, %v859
        %v869 = vextract.low.u32 %v868
        %v870 = vextract.high.u32 %v868
        %v871 = vmul.u32 %v864, %v855
        %v872 = vadd.s32 %v867, %v869
        %vm873 = vc.u32 %v867, %v869
        %v874 = vadd.s32 %v870, 1
        %v875 = vsel %vm873, %v874, %v870
        %v876 = vadd.s32 %v871, %v875
        %v877 = vadd.s32 %v876, 536870912
        %v878 = vshrl.u32 %v877, 30
        %v879 = vshll.u32 %v878, 30
        %v880 = vsub.s32 %v876, %v879
        %vm881 = vcmp.lt.s32.totalorder %v880, 0
        %v882 = vsub.s32 0, %v880
        %v883 = vsel %vm881, %v882, %v880
        %v884 = vclz %v883
        %v885 = vsub.s32 %v884, 2
        %vm886 = vcmp.gt.s32.totalorder 0, %v885
        %v887 = vsel %vm886, 0, %v885
        %v888 = vsub.s32 32, %v887
        %v889 = vshll.u32 %v880, %v887
        %v890 = vshrl.u32 %v872, %v888
        %v891 = vor.u32 %v889, %v890
        %v892 = vsub.s32 4294967266, %v887
        %v893 = vadd.s32 %v892, 127
        %v894 = vshll.u32 %v893, 23
        %v895 = vor.u32 4788187, %v894
        %v896 = vand.u32 2147483647, %v895
        %v898 = vcvt.s32.f32 %v891
        %v899 = vmul.f32 %v898, %v896
        %v900 = vxor.u32 %v899, 2147483648
        %v901 = vsel %vm818, %v900, %v899
        %v902 = vsub.s32 4, %v878
        %v903 = vsel %vm818, %v902, %v878
        %v904 = vsel %vm817, %v285, %v901
        %v905 = vsel %vm817, 0, %v903
        %v906 = vcosq.f32.pop %v904
        %v907 = vsinq.f32.pop %v904
        %vm908 = vweird.f32 %v285
        %v909 = vadd.s32 %v905, 3
        %v910 = vand.u32 %v909, 3
        %vm911 = vcmp.lt.s32.totalorder %v910, 2
        %vm912 = vcmp.eq.s32.totalorder %v910, 0
        %v913 = vxor.u32 %v907, 2147483648
        %v914 = vsel %vm912, %v906, %v913
        %vm915 = vcmp.eq.s32.totalorder %v910, 2
        %v916 = vxor.u32 %v906, 2147483648
        %v917 = vsel %vm915, %v916, %v907
        %v918 = vsel %vm911, %v914, %v917
        %v919 = vsel %vm908, nan, %v918
        %v920 = vand.u32 2147483647, %v286
        %vm921 = vcmp.le.f32.partialorder %v920, 0.7853982
        %vm922 = vcmp.lt.s32.totalorder %v286, 0
        %v923 = vand.u32 %v286, 2139095040
        %v924 = vshrl.u32 %v923, 23
        %v925 = vsub.s32 %v924, 127
        %v926 = vand.u32 2147483647, %v286
        %v927 = vand.u32 %v926, 8388607
        %v928 = vor.u32 %v927, 8388608
        %v929 = vsub.s32 0, %v928
        %v930 = vadd.s32 %v925, 1
        %vm931 = vcmp.gt.s32.totalorder %v930, 0
        %v932 = vsel %vm931, %v930, 0
        %v933 = vshrl.u32 %v932, 5
        %v934 = vand.u32 %v932, 31
        %v935 = vsub.s32 32, %v934
        %v936 = vshrl.u32 683565275, %v935
        %v937 = vshll.u32 683565275, %v934
        %v938 = vshrl.u32 2475754826, %v935
        %v939 = vor.u32 %v937, %v938
        %v940 = vshll.u32 2475754826, %v934
        %v941 = vshrl.u32 2131351028, %v935
        %v942 = vor.u32 %v940, %v941
        %v943 = vshll.u32 2131351028, %v934
        %v944 = vshrl.u32 2102212464, %v935
        %v945 = vor.u32 %v943, %v944
        %v946 = vshll.u32 2102212464, %v934
        %v947 = vshrl.u32 920167782, %v935
        %v948 = vor.u32 %v946, %v947
        %v949 = vshll.u32 920167782, %v934
        %v950 = vshrl.u32 1326507024, %v935
        %v951 = vor.u32 %v949, %v950
        %vm952 = vcmp.lt.s32.totalorder %v933, 1
        %vm953 = vcmp.lt.s32.totalorder %v933, 2
        %vm954 = vcmp.lt.s32.totalorder %v933, 3
        %vm955 = vcmp.lt.s32.totalorder %v933, 4
        %v956 = vsel %vm952, %v936, %v939
        %v957 = vsel %vm955, %v945, 2102212464
        %v958 = vsel %vm954, %v942, %v957
        %v959 = vsel %vm953, %v956, %v958
        %v960 = vsel %vm952, %v939, %v942
        %v961 = vsel %vm955, %v948, 920167782
        %v962 = vsel %vm954, %v945, %v961
        %v963 = vsel %vm953, %v960, %v962
        %v964 = vsel %vm952, %v942, %v945
        %v965 = vsel %vm955, %v951, 1326507024
        %v966 = vsel %vm954, %v948, %v965
        %v967 = vsel %vm953, %v964, %v966
        %v968 = vshll.u32 %v928, 8
        %v969 = vmul.u32.u64.compose %v968, %v967
        %v970 = vextract.low.u32 %v969
        %v971 = vextract.high.u32 %v969
        %v972 = vmul.u32.u64.compose %v968, %v963
        %v973 = vextract.low.u32 %v972
        %v974 = vextract.high.u32 %v972
        %v975 = vmul.u32 %v968, %v959
        %v976 = vadd.s32 %v971, %v973
        %vm977 = vc.u32 %v971, %v973
        %v978 = vadd.s32 %v974, 1
        %v979 = vsel %vm977, %v978, %v974
        %v980 = vadd.s32 %v975, %v979
        %v981 = vadd.s32 %v980, 536870912
        %v982 = vshrl.u32 %v981, 30
        %v983 = vshll.u32 %v982, 30
        %v984 = vsub.s32 %v980, %v983
        %vm985 = vcmp.lt.s32.totalorder %v984, 0
        %v986 = vsub.s32 0, %v984
        %v987 = vsel %vm985, %v986, %v984
        %v988 = vclz %v987
        %v989 = vsub.s32 %v988, 2
        %vm990 = vcmp.gt.s32.totalorder 0, %v989
        %v991 = vsel %vm990, 0, %v989
        %v992 = vsub.s32 32, %v991
        %v993 = vshll.u32 %v984, %v991
        %v994 = vshrl.u32 %v976, %v992
        %v995 = vor.u32 %v993, %v994
        %v996 = vsub.s32 4294967266, %v991
        %v997 = vadd.s32 %v996, 127
        %v998 = vshll.u32 %v997, 23
        %v999 = vor.u32 4788187, %v998
        %v1000 = vand.u32 2147483647, %v999
        %v1002 = vcvt.s32.f32 %v995
        %v1003 = vmul.f32 %v1002, %v1000
        %v1004 = vxor.u32 %v1003, 2147483648
        %v1005 = vsel %vm922, %v1004, %v1003
        %v1006 = vsub.s32 4, %v982
        %v1007 = vsel %vm922, %v1006, %v982
        %v1008 = vsel %vm921, %v286, %v1005
        %v1009 = vsel %vm921, 0, %v1007
        %v1010 = vcosq.f32.pop %v1008
        %v1011 = vsinq.f32.pop %v1008
        %vm1012 = vweird.f32 %v286
        %v1013 = vadd.s32 %v1009, 3
        %v1014 = vand.u32 %v1013, 3
        %vm1015 = vcmp.lt.s32.totalorder %v1014, 2
        %vm1016 = vcmp.eq.s32.totalorder %v1014, 0
        %v1017 = vxor.u32 %v1011, 2147483648
        %v1018 = vsel %vm1016, %v1010, %v1017
        %vm1019 = vcmp.eq.s32.totalorder %v1014, 2
        %v1020 = vxor.u32 %v1010, 2147483648
        %v1021 = vsel %vm1019, %v1020, %v1011
        %v1022 = vsel %vm1015, %v1018, %v1021
        %v1023 = vsel %vm1012, nan, %v1022
        %v1024 = vand.u32 2147483647, %v287
        %vm1025 = vcmp.le.f32.partialorder %v1024, 0.7853982
        %vm1026 = vcmp.lt.s32.totalorder %v287, 0
        %v1027 = vand.u32 %v287, 2139095040
        %v1028 = vshrl.u32 %v1027, 23
        %v1029 = vsub.s32 %v1028, 127
        %v1030 = vand.u32 2147483647, %v287
        %v1031 = vand.u32 %v1030, 8388607
        %v1032 = vor.u32 %v1031, 8388608
        %v1033 = vsub.s32 0, %v1032
        %v1034 = vadd.s32 %v1029, 1
        %vm1035 = vcmp.gt.s32.totalorder %v1034, 0
        %v1036 = vsel %vm1035, %v1034, 0
        %v1037 = vshrl.u32 %v1036, 5
        %v1038 = vand.u32 %v1036, 31
        %v1039 = vsub.s32 32, %v1038
        %v1040 = vshrl.u32 683565275, %v1039
        %v1041 = vshll.u32 683565275, %v1038
        %v1042 = vshrl.u32 2475754826, %v1039
        %v1043 = vor.u32 %v1041, %v1042
        %v1044 = vshll.u32 2475754826, %v1038
        %v1045 = vshrl.u32 2131351028, %v1039
        %v1046 = vor.u32 %v1044, %v1045
        %v1047 = vshll.u32 2131351028, %v1038
        %v1048 = vshrl.u32 2102212464, %v1039
        %v1049 = vor.u32 %v1047, %v1048
        %v1050 = vshll.u32 2102212464, %v1038
        %v1051 = vshrl.u32 920167782, %v1039
        %v1052 = vor.u32 %v1050, %v1051
        %v1053 = vshll.u32 920167782, %v1038
        %v1054 = vshrl.u32 1326507024, %v1039
        %v1055 = vor.u32 %v1053, %v1054
        %vm1056 = vcmp.lt.s32.totalorder %v1037, 1
        %vm1057 = vcmp.lt.s32.totalorder %v1037, 2
        %vm1058 = vcmp.lt.s32.totalorder %v1037, 3
        %vm1059 = vcmp.lt.s32.totalorder %v1037, 4
        %v1060 = vsel %vm1056, %v1040, %v1043
        %v1061 = vsel %vm1059, %v1049, 2102212464
        %v1062 = vsel %vm1058, %v1046, %v1061
        %v1063 = vsel %vm1057, %v1060, %v1062
        %v1064 = vsel %vm1056, %v1043, %v1046
        %v1065 = vsel %vm1059, %v1052, 920167782
        %v1066 = vsel %vm1058, %v1049, %v1065
        %v1067 = vsel %vm1057, %v1064, %v1066
        %v1068 = vsel %vm1056, %v1046, %v1049
        %v1069 = vsel %vm1059, %v1055, 1326507024
        %v1070 = vsel %vm1058, %v1052, %v1069
        %v1071 = vsel %vm1057, %v1068, %v1070
        %v1072 = vshll.u32 %v1032, 8
        %v1073 = vmul.u32.u64.compose %v1072, %v1071
        %v1074 = vextract.low.u32 %v1073
        %v1075 = vextract.high.u32 %v1073
        %v1076 = vmul.u32.u64.compose %v1072, %v1067
        %v1077 = vextract.low.u32 %v1076
        %v1078 = vextract.high.u32 %v1076
        %v1079 = vmul.u32 %v1072, %v1063
        %v1080 = vadd.s32 %v1075, %v1077
        %vm1081 = vc.u32 %v1075, %v1077
        %v1082 = vadd.s32 %v1078, 1
        %v1083 = vsel %vm1081, %v1082, %v1078
        %v1084 = vadd.s32 %v1079, %v1083
        %v1085 = vadd.s32 %v1084, 536870912
        %v1086 = vshrl.u32 %v1085, 30
        %v1087 = vshll.u32 %v1086, 30
        %v1088 = vsub.s32 %v1084, %v1087
        %vm1089 = vcmp.lt.s32.totalorder %v1088, 0
        %v1090 = vsub.s32 0, %v1088
        %v1091 = vsel %vm1089, %v1090, %v1088
        %v1092 = vclz %v1091
        %v1093 = vsub.s32 %v1092, 2
        %vm1094 = vcmp.gt.s32.totalorder 0, %v1093
        %v1095 = vsel %vm1094, 0, %v1093
        %v1096 = vsub.s32 32, %v1095
        %v1097 = vshll.u32 %v1088, %v1095
        %v1098 = vshrl.u32 %v1080, %v1096
        %v1099 = vor.u32 %v1097, %v1098
        %v1100 = vsub.s32 4294967266, %v1095
        %v1101 = vadd.s32 %v1100, 127
        %v1102 = vshll.u32 %v1101, 23
        %v1103 = vor.u32 4788187, %v1102
        %v1104 = vand.u32 2147483647, %v1103
        %v1106 = vcvt.s32.f32 %v1099
        %v1107 = vmul.f32 %v1106, %v1104
        %v1108 = vxor.u32 %v1107, 2147483648
        %v1109 = vsel %vm1026, %v1108, %v1107
        %v1110 = vsub.s32 4, %v1086
        %v1111 = vsel %vm1026, %v1110, %v1086
        %v1112 = vsel %vm1025, %v287, %v1109
        %v1113 = vsel %vm1025, 0, %v1111
        %v1114 = vcosq.f32.pop %v1112
        %v1115 = vsinq.f32.pop %v1112
        %vm1116 = vweird.f32 %v287
        %v1117 = vadd.s32 %v1113, 3
        %v1118 = vand.u32 %v1117, 3
        %vm1119 = vcmp.lt.s32.totalorder %v1118, 2
        %vm1120 = vcmp.eq.s32.totalorder %v1118, 0
        %v1121 = vxor.u32 %v1115, 2147483648
        %v1122 = vsel %vm1120, %v1114, %v1121
        %vm1123 = vcmp.eq.s32.totalorder %v1118, 2
        %v1124 = vxor.u32 %v1114, 2147483648
        %v1125 = vsel %vm1123, %v1124, %v1115
        %v1126 = vsel %vm1119, %v1122, %v1125
        %v1127 = vsel %vm1116, nan, %v1126
        %v1128 = vand.u32 2147483647, %v288
        %vm1129 = vcmp.le.f32.partialorder %v1128, 0.7853982
        %vm1130 = vcmp.lt.s32.totalorder %v288, 0
        %v1131 = vand.u32 %v288, 2139095040
        %v1132 = vshrl.u32 %v1131, 23
        %v1133 = vsub.s32 %v1132, 127
        %v1134 = vand.u32 2147483647, %v288
        %v1135 = vand.u32 %v1134, 8388607
        %v1136 = vor.u32 %v1135, 8388608
        %v1137 = vsub.s32 0, %v1136
        %v1138 = vadd.s32 %v1133, 1
        %vm1139 = vcmp.gt.s32.totalorder %v1138, 0
        %v1140 = vsel %vm1139, %v1138, 0
        %v1141 = vshrl.u32 %v1140, 5
        %v1142 = vand.u32 %v1140, 31
        %v1143 = vsub.s32 32, %v1142
        %v1144 = vshrl.u32 683565275, %v1143
        %v1145 = vshll.u32 683565275, %v1142
        %v1146 = vshrl.u32 2475754826, %v1143
        %v1147 = vor.u32 %v1145, %v1146
        %v1148 = vshll.u32 2475754826, %v1142
        %v1149 = vshrl.u32 2131351028, %v1143
        %v1150 = vor.u32 %v1148, %v1149
        %v1151 = vshll.u32 2131351028, %v1142
        %v1152 = vshrl.u32 2102212464, %v1143
        %v1153 = vor.u32 %v1151, %v1152
        %v1154 = vshll.u32 2102212464, %v1142
        %v1155 = vshrl.u32 920167782, %v1143
        %v1156 = vor.u32 %v1154, %v1155
        %v1157 = vshll.u32 920167782, %v1142
        %v1158 = vshrl.u32 1326507024, %v1143
        %v1159 = vor.u32 %v1157, %v1158
        %vm1160 = vcmp.lt.s32.totalorder %v1141, 1
        %vm1161 = vcmp.lt.s32.totalorder %v1141, 2
        %vm1162 = vcmp.lt.s32.totalorder %v1141, 3
        %vm1163 = vcmp.lt.s32.totalorder %v1141, 4
        %v1164 = vsel %vm1160, %v1144, %v1147
        %v1165 = vsel %vm1163, %v1153, 2102212464
        %v1166 = vsel %vm1162, %v1150, %v1165
        %v1167 = vsel %vm1161, %v1164, %v1166
        %v1168 = vsel %vm1160, %v1147, %v1150
        %v1169 = vsel %vm1163, %v1156, 920167782
        %v1170 = vsel %vm1162, %v1153, %v1169
        %v1171 = vsel %vm1161, %v1168, %v1170
        %v1172 = vsel %vm1160, %v1150, %v1153
        %v1173 = vsel %vm1163, %v1159, 1326507024
        %v1174 = vsel %vm1162, %v1156, %v1173
        %v1175 = vsel %vm1161, %v1172, %v1174
        %v1176 = vshll.u32 %v1136, 8
        %v1177 = vmul.u32.u64.compose %v1176, %v1175
        %v1178 = vextract.low.u32 %v1177
        %v1179 = vextract.high.u32 %v1177
        %v1180 = vmul.u32.u64.compose %v1176, %v1171
        %v1181 = vextract.low.u32 %v1180
        %v1182 = vextract.high.u32 %v1180
        %v1183 = vmul.u32 %v1176, %v1167
        %v1184 = vadd.s32 %v1179, %v1181
        %vm1185 = vc.u32 %v1179, %v1181
        %v1186 = vadd.s32 %v1182, 1
        %v1187 = vsel %vm1185, %v1186, %v1182
        %v1188 = vadd.s32 %v1183, %v1187
        %v1189 = vadd.s32 %v1188, 536870912
        %v1190 = vshrl.u32 %v1189, 30
        %v1191 = vshll.u32 %v1190, 30
        %v1192 = vsub.s32 %v1188, %v1191
        %vm1193 = vcmp.lt.s32.totalorder %v1192, 0
        %v1194 = vsub.s32 0, %v1192
        %v1195 = vsel %vm1193, %v1194, %v1192
        %v1196 = vclz %v1195
        %v1197 = vsub.s32 %v1196, 2
        %vm1198 = vcmp.gt.s32.totalorder 0, %v1197
        %v1199 = vsel %vm1198, 0, %v1197
        %v1200 = vsub.s32 32, %v1199
        %v1201 = vshll.u32 %v1192, %v1199
        %v1202 = vshrl.u32 %v1184, %v1200
        %v1203 = vor.u32 %v1201, %v1202
        %v1204 = vsub.s32 4294967266, %v1199
        %v1205 = vadd.s32 %v1204, 127
        %v1206 = vshll.u32 %v1205, 23
        %v1207 = vor.u32 4788187, %v1206
        %v1208 = vand.u32 2147483647, %v1207
        %v1210 = vcvt.s32.f32 %v1203
        %v1211 = vmul.f32 %v1210, %v1208
        %v1212 = vxor.u32 %v1211, 2147483648
        %v1213 = vsel %vm1130, %v1212, %v1211
        %v1214 = vsub.s32 4, %v1190
        %v1215 = vsel %vm1130, %v1214, %v1190
        %v1216 = vsel %vm1129, %v288, %v1213
        %v1217 = vsel %vm1129, 0, %v1215
        %v1218 = vcosq.f32.pop %v1216
        %v1219 = vsinq.f32.pop %v1216
        %vm1220 = vweird.f32 %v288
        %v1221 = vadd.s32 %v1217, 3
        %v1222 = vand.u32 %v1221, 3
        %vm1223 = vcmp.lt.s32.totalorder %v1222, 2
        %vm1224 = vcmp.eq.s32.totalorder %v1222, 0
        %v1225 = vxor.u32 %v1219, 2147483648
        %v1226 = vsel %vm1224, %v1218, %v1225
        %vm1227 = vcmp.eq.s32.totalorder %v1222, 2
        %v1228 = vxor.u32 %v1218, 2147483648
        %v1229 = vsel %vm1227, %v1228, %v1219
        %v1230 = vsel %vm1223, %v1226, %v1229
        %v1231 = vsel %vm1220, nan, %v1230
        %v1232 = vand.u32 2147483647, %v289
        %vm1233 = vcmp.le.f32.partialorder %v1232, 0.7853982
        %vm1234 = vcmp.lt.s32.totalorder %v289, 0
        %v1235 = vand.u32 %v289, 2139095040
        %v1236 = vshrl.u32 %v1235, 23
        %v1237 = vsub.s32 %v1236, 127
        %v1238 = vand.u32 2147483647, %v289
        %v1239 = vand.u32 %v1238, 8388607
        %v1240 = vor.u32 %v1239, 8388608
        %v1241 = vsub.s32 0, %v1240
        %v1242 = vadd.s32 %v1237, 1
        %vm1243 = vcmp.gt.s32.totalorder %v1242, 0
        %v1244 = vsel %vm1243, %v1242, 0
        %v1245 = vshrl.u32 %v1244, 5
        %v1246 = vand.u32 %v1244, 31
        %v1247 = vsub.s32 32, %v1246
        %v1248 = vshrl.u32 683565275, %v1247
        %v1249 = vshll.u32 683565275, %v1246
        %v1250 = vshrl.u32 2475754826, %v1247
        %v1251 = vor.u32 %v1249, %v1250
        %v1252 = vshll.u32 2475754826, %v1246
        %v1253 = vshrl.u32 2131351028, %v1247
        %v1254 = vor.u32 %v1252, %v1253
        %v1255 = vshll.u32 2131351028, %v1246
        %v1256 = vshrl.u32 2102212464, %v1247
        %v1257 = vor.u32 %v1255, %v1256
        %v1258 = vshll.u32 2102212464, %v1246
        %v1259 = vshrl.u32 920167782, %v1247
        %v1260 = vor.u32 %v1258, %v1259
        %v1261 = vshll.u32 920167782, %v1246
        %v1262 = vshrl.u32 1326507024, %v1247
        %v1263 = vor.u32 %v1261, %v1262
        %vm1264 = vcmp.lt.s32.totalorder %v1245, 1
        %vm1265 = vcmp.lt.s32.totalorder %v1245, 2
        %vm1266 = vcmp.lt.s32.totalorder %v1245, 3
        %vm1267 = vcmp.lt.s32.totalorder %v1245, 4
        %v1268 = vsel %vm1264, %v1248, %v1251
        %v1269 = vsel %vm1267, %v1257, 2102212464
        %v1270 = vsel %vm1266, %v1254, %v1269
        %v1271 = vsel %vm1265, %v1268, %v1270
        %v1272 = vsel %vm1264, %v1251, %v1254
        %v1273 = vsel %vm1267, %v1260, 920167782
        %v1274 = vsel %vm1266, %v1257, %v1273
        %v1275 = vsel %vm1265, %v1272, %v1274
        %v1276 = vsel %vm1264, %v1254, %v1257
        %v1277 = vsel %vm1267, %v1263, 1326507024
        %v1278 = vsel %vm1266, %v1260, %v1277
        %v1279 = vsel %vm1265, %v1276, %v1278
        %v1280 = vshll.u32 %v1240, 8
        %v1281 = vmul.u32.u64.compose %v1280, %v1279
        %v1282 = vextract.low.u32 %v1281
        %v1283 = vextract.high.u32 %v1281
        %v1284 = vmul.u32.u64.compose %v1280, %v1275
        %v1285 = vextract.low.u32 %v1284
        %v1286 = vextract.high.u32 %v1284
        %v1287 = vmul.u32 %v1280, %v1271
        %v1288 = vadd.s32 %v1283, %v1285
        %vm1289 = vc.u32 %v1283, %v1285
        %v1290 = vadd.s32 %v1286, 1
        %v1291 = vsel %vm1289, %v1290, %v1286
        %v1292 = vadd.s32 %v1287, %v1291
        %v1293 = vadd.s32 %v1292, 536870912
        %v1294 = vshrl.u32 %v1293, 30
        %v1295 = vshll.u32 %v1294, 30
        %v1296 = vsub.s32 %v1292, %v1295
        %vm1297 = vcmp.lt.s32.totalorder %v1296, 0
        %v1298 = vsub.s32 0, %v1296
        %v1299 = vsel %vm1297, %v1298, %v1296
        %v1300 = vclz %v1299
        %v1301 = vsub.s32 %v1300, 2
        %vm1302 = vcmp.gt.s32.totalorder 0, %v1301
        %v1303 = vsel %vm1302, 0, %v1301
        %v1304 = vsub.s32 32, %v1303
        %v1305 = vshll.u32 %v1296, %v1303
        %v1306 = vshrl.u32 %v1288, %v1304
        %v1307 = vor.u32 %v1305, %v1306
        %v1308 = vsub.s32 4294967266, %v1303
        %v1309 = vadd.s32 %v1308, 127
        %v1310 = vshll.u32 %v1309, 23
        %v1311 = vor.u32 4788187, %v1310
        %v1312 = vand.u32 2147483647, %v1311
        %v1314 = vcvt.s32.f32 %v1307
        %v1315 = vmul.f32 %v1314, %v1312
        %v1316 = vxor.u32 %v1315, 2147483648
        %v1317 = vsel %vm1234, %v1316, %v1315
        %v1318 = vsub.s32 4, %v1294
        %v1319 = vsel %vm1234, %v1318, %v1294
        %v1320 = vsel %vm1233, %v289, %v1317
        %v1321 = vsel %vm1233, 0, %v1319
        %v1322 = vcosq.f32.pop %v1320
        %v1323 = vsinq.f32.pop %v1320
        %vm1324 = vweird.f32 %v289
        %v1325 = vadd.s32 %v1321, 3
        %v1326 = vand.u32 %v1325, 3
        %vm1327 = vcmp.lt.s32.totalorder %v1326, 2
        %vm1328 = vcmp.eq.s32.totalorder %v1326, 0
        %v1329 = vxor.u32 %v1323, 2147483648
        %v1330 = vsel %vm1328, %v1322, %v1329
        %vm1331 = vcmp.eq.s32.totalorder %v1326, 2
        %v1332 = vxor.u32 %v1322, 2147483648
        %v1333 = vsel %vm1331, %v1332, %v1323
        %v1334 = vsel %vm1327, %v1330, %v1333
        %v1335 = vsel %vm1324, nan, %v1334
        %v1336 = vand.u32 2147483647, %v290
        %vm1337 = vcmp.le.f32.partialorder %v1336, 0.7853982
        %vm1338 = vcmp.lt.s32.totalorder %v290, 0
        %v1339 = vand.u32 %v290, 2139095040
        %v1340 = vshrl.u32 %v1339, 23
        %v1341 = vsub.s32 %v1340, 127
        %v1342 = vand.u32 2147483647, %v290
        %v1343 = vand.u32 %v1342, 8388607
        %v1344 = vor.u32 %v1343, 8388608
        %v1345 = vsub.s32 0, %v1344
        %v1346 = vadd.s32 %v1341, 1
        %vm1347 = vcmp.gt.s32.totalorder %v1346, 0
        %v1348 = vsel %vm1347, %v1346, 0
        %v1349 = vshrl.u32 %v1348, 5
        %v1350 = vand.u32 %v1348, 31
        %v1351 = vsub.s32 32, %v1350
        %v1352 = vshrl.u32 683565275, %v1351
        %v1353 = vshll.u32 683565275, %v1350
        %v1354 = vshrl.u32 2475754826, %v1351
        %v1355 = vor.u32 %v1353, %v1354
        %v1356 = vshll.u32 2475754826, %v1350
        %v1357 = vshrl.u32 2131351028, %v1351
        %v1358 = vor.u32 %v1356, %v1357
        %v1359 = vshll.u32 2131351028, %v1350
        %v1360 = vshrl.u32 2102212464, %v1351
        %v1361 = vor.u32 %v1359, %v1360
        %v1362 = vshll.u32 2102212464, %v1350
        %v1363 = vshrl.u32 920167782, %v1351
        %v1364 = vor.u32 %v1362, %v1363
        %v1365 = vshll.u32 920167782, %v1350
        %v1366 = vshrl.u32 1326507024, %v1351
        %v1367 = vor.u32 %v1365, %v1366
        %vm1368 = vcmp.lt.s32.totalorder %v1349, 1
        %vm1369 = vcmp.lt.s32.totalorder %v1349, 2
        %vm1370 = vcmp.lt.s32.totalorder %v1349, 3
        %vm1371 = vcmp.lt.s32.totalorder %v1349, 4
        %v1372 = vsel %vm1368, %v1352, %v1355
        %v1373 = vsel %vm1371, %v1361, 2102212464
        %v1374 = vsel %vm1370, %v1358, %v1373
        %v1375 = vsel %vm1369, %v1372, %v1374
        %v1376 = vsel %vm1368, %v1355, %v1358
        %v1377 = vsel %vm1371, %v1364, 920167782
        %v1378 = vsel %vm1370, %v1361, %v1377
        %v1379 = vsel %vm1369, %v1376, %v1378
        %v1380 = vsel %vm1368, %v1358, %v1361
        %v1381 = vsel %vm1371, %v1367, 1326507024
        %v1382 = vsel %vm1370, %v1364, %v1381
        %v1383 = vsel %vm1369, %v1380, %v1382
        %v1384 = vshll.u32 %v1344, 8
        %v1385 = vmul.u32.u64.compose %v1384, %v1383
        %v1386 = vextract.low.u32 %v1385
        %v1387 = vextract.high.u32 %v1385
        %v1388 = vmul.u32.u64.compose %v1384, %v1379
        %v1389 = vextract.low.u32 %v1388
        %v1390 = vextract.high.u32 %v1388
        %v1391 = vmul.u32 %v1384, %v1375
        %v1392 = vadd.s32 %v1387, %v1389
        %vm1393 = vc.u32 %v1387, %v1389
        %v1394 = vadd.s32 %v1390, 1
        %v1395 = vsel %vm1393, %v1394, %v1390
        %v1396 = vadd.s32 %v1391, %v1395
        %v1397 = vadd.s32 %v1396, 536870912
        %v1398 = vshrl.u32 %v1397, 30
        %v1399 = vshll.u32 %v1398, 30
        %v1400 = vsub.s32 %v1396, %v1399
        %vm1401 = vcmp.lt.s32.totalorder %v1400, 0
        %v1402 = vsub.s32 0, %v1400
        %v1403 = vsel %vm1401, %v1402, %v1400
        %v1404 = vclz %v1403
        %v1405 = vsub.s32 %v1404, 2
        %vm1406 = vcmp.gt.s32.totalorder 0, %v1405
        %v1407 = vsel %vm1406, 0, %v1405
        %v1408 = vsub.s32 32, %v1407
        %v1409 = vshll.u32 %v1400, %v1407
        %v1410 = vshrl.u32 %v1392, %v1408
        %v1411 = vor.u32 %v1409, %v1410
        %v1412 = vsub.s32 4294967266, %v1407
        %v1413 = vadd.s32 %v1412, 127
        %v1414 = vshll.u32 %v1413, 23
        %v1415 = vor.u32 4788187, %v1414
        %v1416 = vand.u32 2147483647, %v1415
        %v1418 = vcvt.s32.f32 %v1411
        %v1419 = vmul.f32 %v1418, %v1416
        %v1420 = vxor.u32 %v1419, 2147483648
        %v1421 = vsel %vm1338, %v1420, %v1419
        %v1422 = vsub.s32 4, %v1398
        %v1423 = vsel %vm1338, %v1422, %v1398
        %v1424 = vsel %vm1337, %v290, %v1421
        %v1425 = vsel %vm1337, 0, %v1423
        %v1426 = vcosq.f32.pop %v1424
        %v1427 = vsinq.f32.pop %v1424
        %vm1428 = vweird.f32 %v290
        %v1429 = vadd.s32 %v1425, 3
        %v1430 = vand.u32 %v1429, 3
        %vm1431 = vcmp.lt.s32.totalorder %v1430, 2
        %vm1432 = vcmp.eq.s32.totalorder %v1430, 0
        %v1433 = vxor.u32 %v1427, 2147483648
        %v1434 = vsel %vm1432, %v1426, %v1433
        %vm1435 = vcmp.eq.s32.totalorder %v1430, 2
        %v1436 = vxor.u32 %v1426, 2147483648
        %v1437 = vsel %vm1435, %v1436, %v1427
        %v1438 = vsel %vm1431, %v1434, %v1437
        %v1439 = vsel %vm1428, nan, %v1438
        %v1440 = vand.u32 2147483647, %v291
        %vm1441 = vcmp.le.f32.partialorder %v1440, 0.7853982
        %vm1442 = vcmp.lt.s32.totalorder %v291, 0
        %v1443 = vand.u32 %v291, 2139095040
        %v1444 = vshrl.u32 %v1443, 23
        %v1445 = vsub.s32 %v1444, 127
        %v1446 = vand.u32 2147483647, %v291
        %v1447 = vand.u32 %v1446, 8388607
        %v1448 = vor.u32 %v1447, 8388608
        %v1449 = vsub.s32 0, %v1448
        %v1450 = vadd.s32 %v1445, 1
        %vm1451 = vcmp.gt.s32.totalorder %v1450, 0
        %v1452 = vsel %vm1451, %v1450, 0
        %v1453 = vshrl.u32 %v1452, 5
        %v1454 = vand.u32 %v1452, 31
        %v1455 = vsub.s32 32, %v1454
        %v1456 = vshrl.u32 683565275, %v1455
        %v1457 = vshll.u32 683565275, %v1454
        %v1458 = vshrl.u32 2475754826, %v1455
        %v1459 = vor.u32 %v1457, %v1458
        %v1460 = vshll.u32 2475754826, %v1454
        %v1461 = vshrl.u32 2131351028, %v1455
        %v1462 = vor.u32 %v1460, %v1461
        %v1463 = vshll.u32 2131351028, %v1454
        %v1464 = vshrl.u32 2102212464, %v1455
        %v1465 = vor.u32 %v1463, %v1464
        %v1466 = vshll.u32 2102212464, %v1454
        %v1467 = vshrl.u32 920167782, %v1455
        %v1468 = vor.u32 %v1466, %v1467
        %v1469 = vshll.u32 920167782, %v1454
        %v1470 = vshrl.u32 1326507024, %v1455
        %v1471 = vor.u32 %v1469, %v1470
        %vm1472 = vcmp.lt.s32.totalorder %v1453, 1
        %vm1473 = vcmp.lt.s32.totalorder %v1453, 2
        %vm1474 = vcmp.lt.s32.totalorder %v1453, 3
        %vm1475 = vcmp.lt.s32.totalorder %v1453, 4
        %v1476 = vsel %vm1472, %v1456, %v1459
        %v1477 = vsel %vm1475, %v1465, 2102212464
        %v1478 = vsel %vm1474, %v1462, %v1477
        %v1479 = vsel %vm1473, %v1476, %v1478
        %v1480 = vsel %vm1472, %v1459, %v1462
        %v1481 = vsel %vm1475, %v1468, 920167782
        %v1482 = vsel %vm1474, %v1465, %v1481
        %v1483 = vsel %vm1473, %v1480, %v1482
        %v1484 = vsel %vm1472, %v1462, %v1465
        %v1485 = vsel %vm1475, %v1471, 1326507024
        %v1486 = vsel %vm1474, %v1468, %v1485
        %v1487 = vsel %vm1473, %v1484, %v1486
        %v1488 = vshll.u32 %v1448, 8
        %v1489 = vmul.u32.u64.compose %v1488, %v1487
        %v1490 = vextract.low.u32 %v1489
        %v1491 = vextract.high.u32 %v1489
        %v1492 = vmul.u32.u64.compose %v1488, %v1483
        %v1493 = vextract.low.u32 %v1492
        %v1494 = vextract.high.u32 %v1492
        %v1495 = vmul.u32 %v1488, %v1479
        %v1496 = vadd.s32 %v1491, %v1493
        %vm1497 = vc.u32 %v1491, %v1493
        %v1498 = vadd.s32 %v1494, 1
        %v1499 = vsel %vm1497, %v1498, %v1494
        %v1500 = vadd.s32 %v1495, %v1499
        %v1501 = vadd.s32 %v1500, 536870912
        %v1502 = vshrl.u32 %v1501, 30
        %v1503 = vshll.u32 %v1502, 30
        %v1504 = vsub.s32 %v1500, %v1503
        %vm1505 = vcmp.lt.s32.totalorder %v1504, 0
        %v1506 = vsub.s32 0, %v1504
        %v1507 = vsel %vm1505, %v1506, %v1504
        %v1508 = vclz %v1507
        %v1509 = vsub.s32 %v1508, 2
        %vm1510 = vcmp.gt.s32.totalorder 0, %v1509
        %v1511 = vsel %vm1510, 0, %v1509
        %v1512 = vsub.s32 32, %v1511
        %v1513 = vshll.u32 %v1504, %v1511
        %v1514 = vshrl.u32 %v1496, %v1512
        %v1515 = vor.u32 %v1513, %v1514
        %v1516 = vsub.s32 4294967266, %v1511
        %v1517 = vadd.s32 %v1516, 127
        %v1518 = vshll.u32 %v1517, 23
        %v1519 = vor.u32 4788187, %v1518
        %v1520 = vand.u32 2147483647, %v1519
        %v1522 = vcvt.s32.f32 %v1515
        %v1523 = vmul.f32 %v1522, %v1520
        %v1524 = vxor.u32 %v1523, 2147483648
        %v1525 = vsel %vm1442, %v1524, %v1523
        %v1526 = vsub.s32 4, %v1502
        %v1527 = vsel %vm1442, %v1526, %v1502
        %v1528 = vsel %vm1441, %v291, %v1525
        %v1529 = vsel %vm1441, 0, %v1527
        %v1530 = vcosq.f32.pop %v1528
        %v1531 = vsinq.f32.pop %v1528
        %vm1532 = vweird.f32 %v291
        %v1533 = vadd.s32 %v1529, 3
        %v1534 = vand.u32 %v1533, 3
        %vm1535 = vcmp.lt.s32.totalorder %v1534, 2
        %vm1536 = vcmp.eq.s32.totalorder %v1534, 0
        %v1537 = vxor.u32 %v1531, 2147483648
        %v1538 = vsel %vm1536, %v1530, %v1537
        %vm1539 = vcmp.eq.s32.totalorder %v1534, 2
        %v1540 = vxor.u32 %v1530, 2147483648
        %v1541 = vsel %vm1539, %v1540, %v1531
        %v1542 = vsel %vm1535, %v1538, %v1541
        %v1543 = vsel %vm1532, nan, %v1542
        %v1544 = vand.u32 2147483647, %v292
        %vm1545 = vcmp.le.f32.partialorder %v1544, 0.7853982
        %vm1546 = vcmp.lt.s32.totalorder %v292, 0
        %v1547 = vand.u32 %v292, 2139095040
        %v1548 = vshrl.u32 %v1547, 23
        %v1549 = vsub.s32 %v1548, 127
        %v1550 = vand.u32 2147483647, %v292
        %v1551 = vand.u32 %v1550, 8388607
        %v1552 = vor.u32 %v1551, 8388608
        %v1553 = vsub.s32 0, %v1552
        %v1554 = vadd.s32 %v1549, 1
        %vm1555 = vcmp.gt.s32.totalorder %v1554, 0
        %v1556 = vsel %vm1555, %v1554, 0
        %v1557 = vshrl.u32 %v1556, 5
        %v1558 = vand.u32 %v1556, 31
        %v1559 = vsub.s32 32, %v1558
        %v1560 = vshrl.u32 683565275, %v1559
        %v1561 = vshll.u32 683565275, %v1558
        %v1562 = vshrl.u32 2475754826, %v1559
        %v1563 = vor.u32 %v1561, %v1562
        %v1564 = vshll.u32 2475754826, %v1558
        %v1565 = vshrl.u32 2131351028, %v1559
        %v1566 = vor.u32 %v1564, %v1565
        %v1567 = vshll.u32 2131351028, %v1558
        %v1568 = vshrl.u32 2102212464, %v1559
        %v1569 = vor.u32 %v1567, %v1568
        %v1570 = vshll.u32 2102212464, %v1558
        %v1571 = vshrl.u32 920167782, %v1559
        %v1572 = vor.u32 %v1570, %v1571
        %v1573 = vshll.u32 920167782, %v1558
        %v1574 = vshrl.u32 1326507024, %v1559
        %v1575 = vor.u32 %v1573, %v1574
        %vm1576 = vcmp.lt.s32.totalorder %v1557, 1
        %vm1577 = vcmp.lt.s32.totalorder %v1557, 2
        %vm1578 = vcmp.lt.s32.totalorder %v1557, 3
        %vm1579 = vcmp.lt.s32.totalorder %v1557, 4
        %v1580 = vsel %vm1576, %v1560, %v1563
        %v1581 = vsel %vm1579, %v1569, 2102212464
        %v1582 = vsel %vm1578, %v1566, %v1581
        %v1583 = vsel %vm1577, %v1580, %v1582
        %v1584 = vsel %vm1576, %v1563, %v1566
        %v1585 = vsel %vm1579, %v1572, 920167782
        %v1586 = vsel %vm1578, %v1569, %v1585
        %v1587 = vsel %vm1577, %v1584, %v1586
        %v1588 = vsel %vm1576, %v1566, %v1569
        %v1589 = vsel %vm1579, %v1575, 1326507024
        %v1590 = vsel %vm1578, %v1572, %v1589
        %v1591 = vsel %vm1577, %v1588, %v1590
        %v1592 = vshll.u32 %v1552, 8
        %v1593 = vmul.u32.u64.compose %v1592, %v1591
        %v1594 = vextract.low.u32 %v1593
        %v1595 = vextract.high.u32 %v1593
        %v1596 = vmul.u32.u64.compose %v1592, %v1587
        %v1597 = vextract.low.u32 %v1596
        %v1598 = vextract.high.u32 %v1596
        %v1599 = vmul.u32 %v1592, %v1583
        %v1600 = vadd.s32 %v1595, %v1597
        %vm1601 = vc.u32 %v1595, %v1597
        %v1602 = vadd.s32 %v1598, 1
        %v1603 = vsel %vm1601, %v1602, %v1598
        %v1604 = vadd.s32 %v1599, %v1603
        %v1605 = vadd.s32 %v1604, 536870912
        %v1606 = vshrl.u32 %v1605, 30
        %v1607 = vshll.u32 %v1606, 30
        %v1608 = vsub.s32 %v1604, %v1607
        %vm1609 = vcmp.lt.s32.totalorder %v1608, 0
        %v1610 = vsub.s32 0, %v1608
        %v1611 = vsel %vm1609, %v1610, %v1608
        %v1612 = vclz %v1611
        %v1613 = vsub.s32 %v1612, 2
        %vm1614 = vcmp.gt.s32.totalorder 0, %v1613
        %v1615 = vsel %vm1614, 0, %v1613
        %v1616 = vsub.s32 32, %v1615
        %v1617 = vshll.u32 %v1608, %v1615
        %v1618 = vshrl.u32 %v1600, %v1616
        %v1619 = vor.u32 %v1617, %v1618
        %v1620 = vsub.s32 4294967266, %v1615
        %v1621 = vadd.s32 %v1620, 127
        %v1622 = vshll.u32 %v1621, 23
        %v1623 = vor.u32 4788187, %v1622
        %v1624 = vand.u32 2147483647, %v1623
        %v1626 = vcvt.s32.f32 %v1619
        %v1627 = vmul.f32 %v1626, %v1624
        %v1628 = vxor.u32 %v1627, 2147483648
        %v1629 = vsel %vm1546, %v1628, %v1627
        %v1630 = vsub.s32 4, %v1606
        %v1631 = vsel %vm1546, %v1630, %v1606
        %v1632 = vsel %vm1545, %v292, %v1629
        %v1633 = vsel %vm1545, 0, %v1631
        %v1634 = vcosq.f32.pop %v1632
        %v1635 = vsinq.f32.pop %v1632
        %vm1636 = vweird.f32 %v292
        %v1637 = vadd.s32 %v1633, 3
        %v1638 = vand.u32 %v1637, 3
        %vm1639 = vcmp.lt.s32.totalorder %v1638, 2
        %vm1640 = vcmp.eq.s32.totalorder %v1638, 0
        %v1641 = vxor.u32 %v1635, 2147483648
        %v1642 = vsel %vm1640, %v1634, %v1641
        %vm1643 = vcmp.eq.s32.totalorder %v1638, 2
        %v1644 = vxor.u32 %v1634, 2147483648
        %v1645 = vsel %vm1643, %v1644, %v1635
        %v1646 = vsel %vm1639, %v1642, %v1645
        %v1647 = vsel %vm1636, nan, %v1646
        %v1648 = vand.u32 2147483647, %v293
        %vm1649 = vcmp.le.f32.partialorder %v1648, 0.7853982
        %vm1650 = vcmp.lt.s32.totalorder %v293, 0
        %v1651 = vand.u32 %v293, 2139095040
        %v1652 = vshrl.u32 %v1651, 23
        %v1653 = vsub.s32 %v1652, 127
        %v1654 = vand.u32 2147483647, %v293
        %v1655 = vand.u32 %v1654, 8388607
        %v1656 = vor.u32 %v1655, 8388608
        %v1657 = vsub.s32 0, %v1656
        %v1658 = vadd.s32 %v1653, 1
        %vm1659 = vcmp.gt.s32.totalorder %v1658, 0
        %v1660 = vsel %vm1659, %v1658, 0
        %v1661 = vshrl.u32 %v1660, 5
        %v1662 = vand.u32 %v1660, 31
        %v1663 = vsub.s32 32, %v1662
        %v1664 = vshrl.u32 683565275, %v1663
        %v1665 = vshll.u32 683565275, %v1662
        %v1666 = vshrl.u32 2475754826, %v1663
        %v1667 = vor.u32 %v1665, %v1666
        %v1668 = vshll.u32 2475754826, %v1662
        %v1669 = vshrl.u32 2131351028, %v1663
        %v1670 = vor.u32 %v1668, %v1669
        %v1671 = vshll.u32 2131351028, %v1662
        %v1672 = vshrl.u32 2102212464, %v1663
        %v1673 = vor.u32 %v1671, %v1672
        %v1674 = vshll.u32 2102212464, %v1662
        %v1675 = vshrl.u32 920167782, %v1663
        %v1676 = vor.u32 %v1674, %v1675
        %v1677 = vshll.u32 920167782, %v1662
        %v1678 = vshrl.u32 1326507024, %v1663
        %v1679 = vor.u32 %v1677, %v1678
        %vm1680 = vcmp.lt.s32.totalorder %v1661, 1
        %vm1681 = vcmp.lt.s32.totalorder %v1661, 2
        %vm1682 = vcmp.lt.s32.totalorder %v1661, 3
        %vm1683 = vcmp.lt.s32.totalorder %v1661, 4
        %v1684 = vsel %vm1680, %v1664, %v1667
        %v1685 = vsel %vm1683, %v1673, 2102212464
        %v1686 = vsel %vm1682, %v1670, %v1685
        %v1687 = vsel %vm1681, %v1684, %v1686
        %v1688 = vsel %vm1680, %v1667, %v1670
        %v1689 = vsel %vm1683, %v1676, 920167782
        %v1690 = vsel %vm1682, %v1673, %v1689
        %v1691 = vsel %vm1681, %v1688, %v1690
        %v1692 = vsel %vm1680, %v1670, %v1673
        %v1693 = vsel %vm1683, %v1679, 1326507024
        %v1694 = vsel %vm1682, %v1676, %v1693
        %v1695 = vsel %vm1681, %v1692, %v1694
        %v1696 = vshll.u32 %v1656, 8
        %v1697 = vmul.u32.u64.compose %v1696, %v1695
        %v1698 = vextract.low.u32 %v1697
        %v1699 = vextract.high.u32 %v1697
        %v1700 = vmul.u32.u64.compose %v1696, %v1691
        %v1701 = vextract.low.u32 %v1700
        %v1702 = vextract.high.u32 %v1700
        %v1703 = vmul.u32 %v1696, %v1687
        %v1704 = vadd.s32 %v1699, %v1701
        %vm1705 = vc.u32 %v1699, %v1701
        %v1706 = vadd.s32 %v1702, 1
        %v1707 = vsel %vm1705, %v1706, %v1702
        %v1708 = vadd.s32 %v1703, %v1707
        %v1709 = vadd.s32 %v1708, 536870912
        %v1710 = vshrl.u32 %v1709, 30
        %v1711 = vshll.u32 %v1710, 30
        %v1712 = vsub.s32 %v1708, %v1711
        %vm1713 = vcmp.lt.s32.totalorder %v1712, 0
        %v1714 = vsub.s32 0, %v1712
        %v1715 = vsel %vm1713, %v1714, %v1712
        %v1716 = vclz %v1715
        %v1717 = vsub.s32 %v1716, 2
        %vm1718 = vcmp.gt.s32.totalorder 0, %v1717
        %v1719 = vsel %vm1718, 0, %v1717
        %v1720 = vsub.s32 32, %v1719
        %v1721 = vshll.u32 %v1712, %v1719
        %v1722 = vshrl.u32 %v1704, %v1720
        %v1723 = vor.u32 %v1721, %v1722
        %v1724 = vsub.s32 4294967266, %v1719
        %v1725 = vadd.s32 %v1724, 127
        %v1726 = vshll.u32 %v1725, 23
        %v1727 = vor.u32 4788187, %v1726
        %v1728 = vand.u32 2147483647, %v1727
        %v1730 = vcvt.s32.f32 %v1723
        %v1731 = vmul.f32 %v1730, %v1728
        %v1732 = vxor.u32 %v1731, 2147483648
        %v1733 = vsel %vm1650, %v1732, %v1731
        %v1734 = vsub.s32 4, %v1710
        %v1735 = vsel %vm1650, %v1734, %v1710
        %v1736 = vsel %vm1649, %v293, %v1733
        %v1737 = vsel %vm1649, 0, %v1735
        %v1738 = vcosq.f32.pop %v1736
        %v1739 = vsinq.f32.pop %v1736
        %vm1740 = vweird.f32 %v293
        %v1741 = vadd.s32 %v1737, 3
        %v1742 = vand.u32 %v1741, 3
        %vm1743 = vcmp.lt.s32.totalorder %v1742, 2
        %vm1744 = vcmp.eq.s32.totalorder %v1742, 0
        %v1745 = vxor.u32 %v1739, 2147483648
        %v1746 = vsel %vm1744, %v1738, %v1745
        %vm1747 = vcmp.eq.s32.totalorder %v1742, 2
        %v1748 = vxor.u32 %v1738, 2147483648
        %v1749 = vsel %vm1747, %v1748, %v1739
        %v1750 = vsel %vm1743, %v1746, %v1749
        %v1751 = vsel %vm1740, nan, %v1750
        %v1752 = vand.u32 2147483647, %v294
        %vm1753 = vcmp.le.f32.partialorder %v1752, 0.7853982
        %vm1754 = vcmp.lt.s32.totalorder %v294, 0
        %v1755 = vand.u32 %v294, 2139095040
        %v1756 = vshrl.u32 %v1755, 23
        %v1757 = vsub.s32 %v1756, 127
        %v1758 = vand.u32 2147483647, %v294
        %v1759 = vand.u32 %v1758, 8388607
        %v1760 = vor.u32 %v1759, 8388608
        %v1761 = vsub.s32 0, %v1760
        %v1762 = vadd.s32 %v1757, 1
        %vm1763 = vcmp.gt.s32.totalorder %v1762, 0
        %v1764 = vsel %vm1763, %v1762, 0
        %v1765 = vshrl.u32 %v1764, 5
        %v1766 = vand.u32 %v1764, 31
        %v1767 = vsub.s32 32, %v1766
        %v1768 = vshrl.u32 683565275, %v1767
        %v1769 = vshll.u32 683565275, %v1766
        %v1770 = vshrl.u32 2475754826, %v1767
        %v1771 = vor.u32 %v1769, %v1770
        %v1772 = vshll.u32 2475754826, %v1766
        %v1773 = vshrl.u32 2131351028, %v1767
        %v1774 = vor.u32 %v1772, %v1773
        %v1775 = vshll.u32 2131351028, %v1766
        %v1776 = vshrl.u32 2102212464, %v1767
        %v1777 = vor.u32 %v1775, %v1776
        %v1778 = vshll.u32 2102212464, %v1766
        %v1779 = vshrl.u32 920167782, %v1767
        %v1780 = vor.u32 %v1778, %v1779
        %v1781 = vshll.u32 920167782, %v1766
        %v1782 = vshrl.u32 1326507024, %v1767
        %v1783 = vor.u32 %v1781, %v1782
        %vm1784 = vcmp.lt.s32.totalorder %v1765, 1
        %vm1785 = vcmp.lt.s32.totalorder %v1765, 2
        %vm1786 = vcmp.lt.s32.totalorder %v1765, 3
        %vm1787 = vcmp.lt.s32.totalorder %v1765, 4
        %v1788 = vsel %vm1784, %v1768, %v1771
        %v1789 = vsel %vm1787, %v1777, 2102212464
        %v1790 = vsel %vm1786, %v1774, %v1789
        %v1791 = vsel %vm1785, %v1788, %v1790
        %v1792 = vsel %vm1784, %v1771, %v1774
        %v1793 = vsel %vm1787, %v1780, 920167782
        %v1794 = vsel %vm1786, %v1777, %v1793
        %v1795 = vsel %vm1785, %v1792, %v1794
        %v1796 = vsel %vm1784, %v1774, %v1777
        %v1797 = vsel %vm1787, %v1783, 1326507024
        %v1798 = vsel %vm1786, %v1780, %v1797
        %v1799 = vsel %vm1785, %v1796, %v1798
        %v1800 = vshll.u32 %v1760, 8
        %v1801 = vmul.u32.u64.compose %v1800, %v1799
        %v1802 = vextract.low.u32 %v1801
        %v1803 = vextract.high.u32 %v1801
        %v1804 = vmul.u32.u64.compose %v1800, %v1795
        %v1805 = vextract.low.u32 %v1804
        %v1806 = vextract.high.u32 %v1804
        %v1807 = vmul.u32 %v1800, %v1791
        %v1808 = vadd.s32 %v1803, %v1805
        %vm1809 = vc.u32 %v1803, %v1805
        %v1810 = vadd.s32 %v1806, 1
        %v1811 = vsel %vm1809, %v1810, %v1806
        %v1812 = vadd.s32 %v1807, %v1811
        %v1813 = vadd.s32 %v1812, 536870912
        %v1814 = vshrl.u32 %v1813, 30
        %v1815 = vshll.u32 %v1814, 30
        %v1816 = vsub.s32 %v1812, %v1815
        %vm1817 = vcmp.lt.s32.totalorder %v1816, 0
        %v1818 = vsub.s32 0, %v1816
        %v1819 = vsel %vm1817, %v1818, %v1816
        %v1820 = vclz %v1819
        %v1821 = vsub.s32 %v1820, 2
        %vm1822 = vcmp.gt.s32.totalorder 0, %v1821
        %v1823 = vsel %vm1822, 0, %v1821
        %v1824 = vsub.s32 32, %v1823
        %v1825 = vshll.u32 %v1816, %v1823
        %v1826 = vshrl.u32 %v1808, %v1824
        %v1827 = vor.u32 %v1825, %v1826
        %v1828 = vsub.s32 4294967266, %v1823
        %v1829 = vadd.s32 %v1828, 127
        %v1830 = vshll.u32 %v1829, 23
        %v1831 = vor.u32 4788187, %v1830
        %v1832 = vand.u32 2147483647, %v1831
        %v1834 = vcvt.s32.f32 %v1827
        %v1835 = vmul.f32 %v1834, %v1832
        %v1836 = vxor.u32 %v1835, 2147483648
        %v1837 = vsel %vm1754, %v1836, %v1835
        %v1838 = vsub.s32 4, %v1814
        %v1839 = vsel %vm1754, %v1838, %v1814
        %v1840 = vsel %vm1753, %v294, %v1837
        %v1841 = vsel %vm1753, 0, %v1839
        %v1842 = vcosq.f32.pop %v1840
        %v1843 = vsinq.f32.pop %v1840
        %vm1844 = vweird.f32 %v294
        %v1845 = vadd.s32 %v1841, 3
        %v1846 = vand.u32 %v1845, 3
        %vm1847 = vcmp.lt.s32.totalorder %v1846, 2
        %vm1848 = vcmp.eq.s32.totalorder %v1846, 0
        %v1849 = vxor.u32 %v1843, 2147483648
        %v1850 = vsel %vm1848, %v1842, %v1849
        %vm1851 = vcmp.eq.s32.totalorder %v1846, 2
        %v1852 = vxor.u32 %v1842, 2147483648
        %v1853 = vsel %vm1851, %v1852, %v1843
        %v1854 = vsel %vm1847, %v1850, %v1853
        %v1855 = vsel %vm1844, nan, %v1854
        %v1856 = vand.u32 2147483647, %v295
        %vm1857 = vcmp.le.f32.partialorder %v1856, 0.7853982
        %vm1858 = vcmp.lt.s32.totalorder %v295, 0
        %v1859 = vand.u32 %v295, 2139095040
        %v1860 = vshrl.u32 %v1859, 23
        %v1861 = vsub.s32 %v1860, 127
        %v1862 = vand.u32 2147483647, %v295
        %v1863 = vand.u32 %v1862, 8388607
        %v1864 = vor.u32 %v1863, 8388608
        %v1865 = vsub.s32 0, %v1864
        %v1866 = vadd.s32 %v1861, 1
        %vm1867 = vcmp.gt.s32.totalorder %v1866, 0
        %v1868 = vsel %vm1867, %v1866, 0
        %v1869 = vshrl.u32 %v1868, 5
        %v1870 = vand.u32 %v1868, 31
        %v1871 = vsub.s32 32, %v1870
        %v1872 = vshrl.u32 683565275, %v1871
        %v1873 = vshll.u32 683565275, %v1870
        %v1874 = vshrl.u32 2475754826, %v1871
        %v1875 = vor.u32 %v1873, %v1874
        %v1876 = vshll.u32 2475754826, %v1870
        %v1877 = vshrl.u32 2131351028, %v1871
        %v1878 = vor.u32 %v1876, %v1877
        %v1879 = vshll.u32 2131351028, %v1870
        %v1880 = vshrl.u32 2102212464, %v1871
        %v1881 = vor.u32 %v1879, %v1880
        %v1882 = vshll.u32 2102212464, %v1870
        %v1883 = vshrl.u32 920167782, %v1871
        %v1884 = vor.u32 %v1882, %v1883
        %v1885 = vshll.u32 920167782, %v1870
        %v1886 = vshrl.u32 1326507024, %v1871
        %v1887 = vor.u32 %v1885, %v1886
        %vm1888 = vcmp.lt.s32.totalorder %v1869, 1
        %vm1889 = vcmp.lt.s32.totalorder %v1869, 2
        %vm1890 = vcmp.lt.s32.totalorder %v1869, 3
        %vm1891 = vcmp.lt.s32.totalorder %v1869, 4
        %v1892 = vsel %vm1888, %v1872, %v1875
        %v1893 = vsel %vm1891, %v1881, 2102212464
        %v1894 = vsel %vm1890, %v1878, %v1893
        %v1895 = vsel %vm1889, %v1892, %v1894
        %v1896 = vsel %vm1888, %v1875, %v1878
        %v1897 = vsel %vm1891, %v1884, 920167782
        %v1898 = vsel %vm1890, %v1881, %v1897
        %v1899 = vsel %vm1889, %v1896, %v1898
        %v1900 = vsel %vm1888, %v1878, %v1881
        %v1901 = vsel %vm1891, %v1887, 1326507024
        %v1902 = vsel %vm1890, %v1884, %v1901
        %v1903 = vsel %vm1889, %v1900, %v1902
        %v1904 = vshll.u32 %v1864, 8
        %v1905 = vmul.u32.u64.compose %v1904, %v1903
        %v1906 = vextract.low.u32 %v1905
        %v1907 = vextract.high.u32 %v1905
        %v1908 = vmul.u32.u64.compose %v1904, %v1899
        %v1909 = vextract.low.u32 %v1908
        %v1910 = vextract.high.u32 %v1908
        %v1911 = vmul.u32 %v1904, %v1895
        %v1912 = vadd.s32 %v1907, %v1909
        %vm1913 = vc.u32 %v1907, %v1909
        %v1914 = vadd.s32 %v1910, 1
        %v1915 = vsel %vm1913, %v1914, %v1910
        %v1916 = vadd.s32 %v1911, %v1915
        %v1917 = vadd.s32 %v1916, 536870912
        %v1918 = vshrl.u32 %v1917, 30
        %v1919 = vshll.u32 %v1918, 30
        %v1920 = vsub.s32 %v1916, %v1919
        %vm1921 = vcmp.lt.s32.totalorder %v1920, 0
        %v1922 = vsub.s32 0, %v1920
        %v1923 = vsel %vm1921, %v1922, %v1920
        %v1924 = vclz %v1923
        %v1925 = vsub.s32 %v1924, 2
        %vm1926 = vcmp.gt.s32.totalorder 0, %v1925
        %v1927 = vsel %vm1926, 0, %v1925
        %v1928 = vsub.s32 32, %v1927
        %v1929 = vshll.u32 %v1920, %v1927
        %v1930 = vshrl.u32 %v1912, %v1928
        %v1931 = vor.u32 %v1929, %v1930
        %v1932 = vsub.s32 4294967266, %v1927
        %v1933 = vadd.s32 %v1932, 127
        %v1934 = vshll.u32 %v1933, 23
        %v1935 = vor.u32 4788187, %v1934
        %v1936 = vand.u32 2147483647, %v1935
        %v1938 = vcvt.s32.f32 %v1931
        %v1939 = vmul.f32 %v1938, %v1936
        %v1940 = vxor.u32 %v1939, 2147483648
        %v1941 = vsel %vm1858, %v1940, %v1939
        %v1942 = vsub.s32 4, %v1918
        %v1943 = vsel %vm1858, %v1942, %v1918
        %v1944 = vsel %vm1857, %v295, %v1941
        %v1945 = vsel %vm1857, 0, %v1943
        %v1946 = vcosq.f32.pop %v1944
        %v1947 = vsinq.f32.pop %v1944
        %vm1948 = vweird.f32 %v295
        %v1949 = vadd.s32 %v1945, 3
        %v1950 = vand.u32 %v1949, 3
        %vm1951 = vcmp.lt.s32.totalorder %v1950, 2
        %vm1952 = vcmp.eq.s32.totalorder %v1950, 0
        %v1953 = vxor.u32 %v1947, 2147483648
        %v1954 = vsel %vm1952, %v1946, %v1953
        %vm1955 = vcmp.eq.s32.totalorder %v1950, 2
        %v1956 = vxor.u32 %v1946, 2147483648
        %v1957 = vsel %vm1955, %v1956, %v1947
        %v1958 = vsel %vm1951, %v1954, %v1957
        %v1959 = vsel %vm1948, nan, %v1958
        %v1960 = vld [vmem:[%s1] sm:$0x1]
        %1962 = vset.pattern.permute.xlu0 0
        %1963 = vperm.xlu0 %1962, %v399
        %v1964 = vpop.permute.xlu0 %1963
        %1967 = vset.pattern.permute.xlu0 0
        %1968 = vperm.xlu0 %1967, %v503
        %v1969 = vpop.permute.xlu0 %1968
        %1972 = vset.pattern.permute.xlu0 0
        %1973 = vperm.xlu0 %1972, %v607
        %v1974 = vpop.permute.xlu0 %1973
        %1977 = vset.pattern.permute.xlu0 0
        %1978 = vperm.xlu0 %1977, %v711
        %v1979 = vpop.permute.xlu0 %1978
        %1982 = vset.pattern.permute.xlu0 0
        %1983 = vperm.xlu0 %1982, %v815
        %v1984 = vpop.permute.xlu0 %1983
        %1987 = vset.pattern.permute.xlu0 0
        %1988 = vperm.xlu0 %1987, %v919
        %v1989 = vpop.permute.xlu0 %1988
        %1992 = vset.pattern.permute.xlu0 0
        %1993 = vperm.xlu0 %1992, %v1023
        %v1994 = vpop.permute.xlu0 %1993
        %1997 = vset.pattern.permute.xlu0 0
        %1998 = vperm.xlu0 %1997, %v1127
        %v1999 = vpop.permute.xlu0 %1998
        %2002 = vset.pattern.permute.xlu0 0
        %2003 = vperm.xlu0 %2002, %v1231
        %v2004 = vpop.permute.xlu0 %2003
        %2007 = vset.pattern.permute.xlu0 0
        %2008 = vperm.xlu0 %2007, %v1335
        %v2009 = vpop.permute.xlu0 %2008
        %2012 = vset.pattern.permute.xlu0 0
        %2013 = vperm.xlu0 %2012, %v1439
        %v2014 = vpop.permute.xlu0 %2013
        %2017 = vset.pattern.permute.xlu0 0
        %2018 = vperm.xlu0 %2017, %v1543
        %v2019 = vpop.permute.xlu0 %2018
        %2022 = vset.pattern.permute.xlu0 0
        %2023 = vperm.xlu0 %2022, %v1647
        %v2024 = vpop.permute.xlu0 %2023
        %2027 = vset.pattern.permute.xlu0 0
        %2028 = vperm.xlu0 %2027, %v1751
        %v2029 = vpop.permute.xlu0 %2028
        %2032 = vset.pattern.permute.xlu0 0
        %2033 = vperm.xlu0 %2032, %v1855
        %v2034 = vpop.permute.xlu0 %2033
        %2037 = vset.pattern.permute.xlu0 0
        %2038 = vperm.xlu0 %2037, %v1959
        %v2039 = vpop.permute.xlu0 %2038
        %v2041 = vlaneseq
        %v2042 = vshrl.u32 %v2041, 7
        %v2043 = vsub.s32 0, %v2042
        %v2044 = vrot.slane %v1960, %v2043
        %v2045 = vmul.f32 %v1964, %v2044
        %v2046 = vmul.f32 %v1969, %v2044
        %v2047 = vmul.f32 %v1974, %v2044
        %v2048 = vmul.f32 %v1979, %v2044
        %v2049 = vmul.f32 %v1984, %v2044
        %v2050 = vmul.f32 %v1989, %v2044
        %v2051 = vmul.f32 %v1994, %v2044
        %v2052 = vmul.f32 %v1999, %v2044
        %v2053 = vmul.f32 %v2004, %v2044
        %v2054 = vmul.f32 %v2009, %v2044
        %v2055 = vmul.f32 %v2014, %v2044
        %v2056 = vmul.f32 %v2019, %v2044
        %v2057 = vmul.f32 %v2024, %v2044
        %v2058 = vmul.f32 %v2029, %v2044
        %v2059 = vmul.f32 %v2034, %v2044
        %v2060 = vmul.f32 %v2039, %v2044
        %v2061 = vand.u32 2147483647, %v280
        %vm2062 = vcmp.le.f32.partialorder %v2061, 0.7853982
        %vm2063 = vcmp.lt.s32.totalorder %v280, 0
        %v2064 = vand.u32 %v280, 2139095040
        %v2065 = vshrl.u32 %v2064, 23
        %v2066 = vsub.s32 %v2065, 127
        %v2067 = vand.u32 2147483647, %v280
        %v2068 = vand.u32 %v2067, 8388607
        %v2069 = vor.u32 %v2068, 8388608
        %v2070 = vsub.s32 0, %v2069
        %v2071 = vadd.s32 %v2066, 1
        %vm2072 = vcmp.gt.s32.totalorder %v2071, 0
        %v2073 = vsel %vm2072, %v2071, 0
        %v2074 = vshrl.u32 %v2073, 5
        %v2075 = vand.u32 %v2073, 31
        %v2076 = vsub.s32 32, %v2075
        %v2077 = vshrl.u32 683565275, %v2076
        %v2078 = vshll.u32 683565275, %v2075
        %v2079 = vshrl.u32 2475754826, %v2076
        %v2080 = vor.u32 %v2078, %v2079
        %v2081 = vshll.u32 2475754826, %v2075
        %v2082 = vshrl.u32 2131351028, %v2076
        %v2083 = vor.u32 %v2081, %v2082
        %v2084 = vshll.u32 2131351028, %v2075
        %v2085 = vshrl.u32 2102212464, %v2076
        %v2086 = vor.u32 %v2084, %v2085
        %v2087 = vshll.u32 2102212464, %v2075
        %v2088 = vshrl.u32 920167782, %v2076
        %v2089 = vor.u32 %v2087, %v2088
        %v2090 = vshll.u32 920167782, %v2075
        %v2091 = vshrl.u32 1326507024, %v2076
        %v2092 = vor.u32 %v2090, %v2091
        %vm2093 = vcmp.lt.s32.totalorder %v2074, 1
        %vm2094 = vcmp.lt.s32.totalorder %v2074, 2
        %vm2095 = vcmp.lt.s32.totalorder %v2074, 3
        %vm2096 = vcmp.lt.s32.totalorder %v2074, 4
        %v2097 = vsel %vm2093, %v2077, %v2080
        %v2098 = vsel %vm2096, %v2086, 2102212464
        %v2099 = vsel %vm2095, %v2083, %v2098
        %v2100 = vsel %vm2094, %v2097, %v2099
        %v2101 = vsel %vm2093, %v2080, %v2083
        %v2102 = vsel %vm2096, %v2089, 920167782
        %v2103 = vsel %vm2095, %v2086, %v2102
        %v2104 = vsel %vm2094, %v2101, %v2103
        %v2105 = vsel %vm2093, %v2083, %v2086
        %v2106 = vsel %vm2096, %v2092, 1326507024
        %v2107 = vsel %vm2095, %v2089, %v2106
        %v2108 = vsel %vm2094, %v2105, %v2107
        %v2109 = vshll.u32 %v2069, 8
        %v2110 = vmul.u32.u64.compose %v2109, %v2108
        %v2111 = vextract.low.u32 %v2110
        %v2112 = vextract.high.u32 %v2110
        %v2113 = vmul.u32.u64.compose %v2109, %v2104
        %v2114 = vextract.low.u32 %v2113
        %v2115 = vextract.high.u32 %v2113
        %v2116 = vmul.u32 %v2109, %v2100
        %v2117 = vadd.s32 %v2112, %v2114
        %vm2118 = vc.u32 %v2112, %v2114
        %v2119 = vadd.s32 %v2115, 1
        %v2120 = vsel %vm2118, %v2119, %v2115
        %v2121 = vadd.s32 %v2116, %v2120
        %v2122 = vadd.s32 %v2121, 536870912
        %v2123 = vshrl.u32 %v2122, 30
        %v2124 = vshll.u32 %v2123, 30
        %v2125 = vsub.s32 %v2121, %v2124
        %vm2126 = vcmp.lt.s32.totalorder %v2125, 0
        %v2127 = vsub.s32 0, %v2125
        %v2128 = vsel %vm2126, %v2127, %v2125
        %v2129 = vclz %v2128
        %v2130 = vsub.s32 %v2129, 2
        %vm2131 = vcmp.gt.s32.totalorder 0, %v2130
        %v2132 = vsel %vm2131, 0, %v2130
        %v2133 = vsub.s32 32, %v2132
        %v2134 = vshll.u32 %v2125, %v2132
        %v2135 = vshrl.u32 %v2117, %v2133
        %v2136 = vor.u32 %v2134, %v2135
        %v2137 = vsub.s32 4294967266, %v2132
        %v2138 = vadd.s32 %v2137, 127
        %v2139 = vshll.u32 %v2138, 23
        %v2140 = vor.u32 4788187, %v2139
        %v2141 = vand.u32 2147483647, %v2140
        %v2143 = vcvt.s32.f32 %v2136
        %v2144 = vmul.f32 %v2143, %v2141
        %v2145 = vxor.u32 %v2144, 2147483648
        %v2146 = vsel %vm2063, %v2145, %v2144
        %v2147 = vsub.s32 4, %v2123
        %v2148 = vsel %vm2063, %v2147, %v2123
        %v2149 = vsel %vm2062, %v280, %v2146
        %v2150 = vsel %vm2062, 0, %v2148
        %v2151 = vcosq.f32.pop %v2149
        %v2152 = vsinq.f32.pop %v2149
        %vm2153 = vweird.f32 %v280
        %v2154 = vand.u32 %v2150, 3
        %vm2155 = vcmp.lt.s32.totalorder %v2154, 2
        %vm2156 = vcmp.eq.s32.totalorder %v2154, 0
        %v2157 = vxor.u32 %v2152, 2147483648
        %v2158 = vsel %vm2156, %v2151, %v2157
        %vm2159 = vcmp.eq.s32.totalorder %v2154, 2
        %v2160 = vxor.u32 %v2151, 2147483648
        %v2161 = vsel %vm2159, %v2160, %v2152
        %v2162 = vsel %vm2155, %v2158, %v2161
        %v2163 = vsel %vm2153, nan, %v2162
        %v2164 = vand.u32 2147483647, %v281
        %vm2165 = vcmp.le.f32.partialorder %v2164, 0.7853982
        %vm2166 = vcmp.lt.s32.totalorder %v281, 0
        %v2167 = vand.u32 %v281, 2139095040
        %v2168 = vshrl.u32 %v2167, 23
        %v2169 = vsub.s32 %v2168, 127
        %v2170 = vand.u32 2147483647, %v281
        %v2171 = vand.u32 %v2170, 8388607
        %v2172 = vor.u32 %v2171, 8388608
        %v2173 = vsub.s32 0, %v2172
        %v2174 = vadd.s32 %v2169, 1
        %vm2175 = vcmp.gt.s32.totalorder %v2174, 0
        %v2176 = vsel %vm2175, %v2174, 0
        %v2177 = vshrl.u32 %v2176, 5
        %v2178 = vand.u32 %v2176, 31
        %v2179 = vsub.s32 32, %v2178
        %v2180 = vshrl.u32 683565275, %v2179
        %v2181 = vshll.u32 683565275, %v2178
        %v2182 = vshrl.u32 2475754826, %v2179
        %v2183 = vor.u32 %v2181, %v2182
        %v2184 = vshll.u32 2475754826, %v2178
        %v2185 = vshrl.u32 2131351028, %v2179
        %v2186 = vor.u32 %v2184, %v2185
        %v2187 = vshll.u32 2131351028, %v2178
        %v2188 = vshrl.u32 2102212464, %v2179
        %v2189 = vor.u32 %v2187, %v2188
        %v2190 = vshll.u32 2102212464, %v2178
        %v2191 = vshrl.u32 920167782, %v2179
        %v2192 = vor.u32 %v2190, %v2191
        %v2193 = vshll.u32 920167782, %v2178
        %v2194 = vshrl.u32 1326507024, %v2179
        %v2195 = vor.u32 %v2193, %v2194
        %vm2196 = vcmp.lt.s32.totalorder %v2177, 1
        %vm2197 = vcmp.lt.s32.totalorder %v2177, 2
        %vm2198 = vcmp.lt.s32.totalorder %v2177, 3
        %vm2199 = vcmp.lt.s32.totalorder %v2177, 4
        %v2200 = vsel %vm2196, %v2180, %v2183
        %v2201 = vsel %vm2199, %v2189, 2102212464
        %v2202 = vsel %vm2198, %v2186, %v2201
        %v2203 = vsel %vm2197, %v2200, %v2202
        %v2204 = vsel %vm2196, %v2183, %v2186
        %v2205 = vsel %vm2199, %v2192, 920167782
        %v2206 = vsel %vm2198, %v2189, %v2205
        %v2207 = vsel %vm2197, %v2204, %v2206
        %v2208 = vsel %vm2196, %v2186, %v2189
        %v2209 = vsel %vm2199, %v2195, 1326507024
        %v2210 = vsel %vm2198, %v2192, %v2209
        %v2211 = vsel %vm2197, %v2208, %v2210
        %v2212 = vshll.u32 %v2172, 8
        %v2213 = vmul.u32.u64.compose %v2212, %v2211
        %v2214 = vextract.low.u32 %v2213
        %v2215 = vextract.high.u32 %v2213
        %v2216 = vmul.u32.u64.compose %v2212, %v2207
        %v2217 = vextract.low.u32 %v2216
        %v2218 = vextract.high.u32 %v2216
        %v2219 = vmul.u32 %v2212, %v2203
        %v2220 = vadd.s32 %v2215, %v2217
        %vm2221 = vc.u32 %v2215, %v2217
        %v2222 = vadd.s32 %v2218, 1
        %v2223 = vsel %vm2221, %v2222, %v2218
        %v2224 = vadd.s32 %v2219, %v2223
        %v2225 = vadd.s32 %v2224, 536870912
        %v2226 = vshrl.u32 %v2225, 30
        %v2227 = vshll.u32 %v2226, 30
        %v2228 = vsub.s32 %v2224, %v2227
        %vm2229 = vcmp.lt.s32.totalorder %v2228, 0
        %v2230 = vsub.s32 0, %v2228
        %v2231 = vsel %vm2229, %v2230, %v2228
        %v2232 = vclz %v2231
        %v2233 = vsub.s32 %v2232, 2
        %vm2234 = vcmp.gt.s32.totalorder 0, %v2233
        %v2235 = vsel %vm2234, 0, %v2233
        %v2236 = vsub.s32 32, %v2235
        %v2237 = vshll.u32 %v2228, %v2235
        %v2238 = vshrl.u32 %v2220, %v2236
        %v2239 = vor.u32 %v2237, %v2238
        %v2240 = vsub.s32 4294967266, %v2235
        %v2241 = vadd.s32 %v2240, 127
        %v2242 = vshll.u32 %v2241, 23
        %v2243 = vor.u32 4788187, %v2242
        %v2244 = vand.u32 2147483647, %v2243
        %v2246 = vcvt.s32.f32 %v2239
        %v2247 = vmul.f32 %v2246, %v2244
        %v2248 = vxor.u32 %v2247, 2147483648
        %v2249 = vsel %vm2166, %v2248, %v2247
        %v2250 = vsub.s32 4, %v2226
        %v2251 = vsel %vm2166, %v2250, %v2226
        %v2252 = vsel %vm2165, %v281, %v2249
        %v2253 = vsel %vm2165, 0, %v2251
        %v2254 = vcosq.f32.pop %v2252
        %v2255 = vsinq.f32.pop %v2252
        %vm2256 = vweird.f32 %v281
        %v2257 = vand.u32 %v2253, 3
        %vm2258 = vcmp.lt.s32.totalorder %v2257, 2
        %vm2259 = vcmp.eq.s32.totalorder %v2257, 0
        %v2260 = vxor.u32 %v2255, 2147483648
        %v2261 = vsel %vm2259, %v2254, %v2260
        %vm2262 = vcmp.eq.s32.totalorder %v2257, 2
        %v2263 = vxor.u32 %v2254, 2147483648
        %v2264 = vsel %vm2262, %v2263, %v2255
        %v2265 = vsel %vm2258, %v2261, %v2264
        %v2266 = vsel %vm2256, nan, %v2265
        %v2267 = vand.u32 2147483647, %v282
        %vm2268 = vcmp.le.f32.partialorder %v2267, 0.7853982
        %vm2269 = vcmp.lt.s32.totalorder %v282, 0
        %v2270 = vand.u32 %v282, 2139095040
        %v2271 = vshrl.u32 %v2270, 23
        %v2272 = vsub.s32 %v2271, 127
        %v2273 = vand.u32 2147483647, %v282
        %v2274 = vand.u32 %v2273, 8388607
        %v2275 = vor.u32 %v2274, 8388608
        %v2276 = vsub.s32 0, %v2275
        %v2277 = vadd.s32 %v2272, 1
        %vm2278 = vcmp.gt.s32.totalorder %v2277, 0
        %v2279 = vsel %vm2278, %v2277, 0
        %v2280 = vshrl.u32 %v2279, 5
        %v2281 = vand.u32 %v2279, 31
        %v2282 = vsub.s32 32, %v2281
        %v2283 = vshrl.u32 683565275, %v2282
        %v2284 = vshll.u32 683565275, %v2281
        %v2285 = vshrl.u32 2475754826, %v2282
        %v2286 = vor.u32 %v2284, %v2285
        %v2287 = vshll.u32 2475754826, %v2281
        %v2288 = vshrl.u32 2131351028, %v2282
        %v2289 = vor.u32 %v2287, %v2288
        %v2290 = vshll.u32 2131351028, %v2281
        %v2291 = vshrl.u32 2102212464, %v2282
        %v2292 = vor.u32 %v2290, %v2291
        %v2293 = vshll.u32 2102212464, %v2281
        %v2294 = vshrl.u32 920167782, %v2282
        %v2295 = vor.u32 %v2293, %v2294
        %v2296 = vshll.u32 920167782, %v2281
        %v2297 = vshrl.u32 1326507024, %v2282
        %v2298 = vor.u32 %v2296, %v2297
        %vm2299 = vcmp.lt.s32.totalorder %v2280, 1
        %vm2300 = vcmp.lt.s32.totalorder %v2280, 2
        %vm2301 = vcmp.lt.s32.totalorder %v2280, 3
        %vm2302 = vcmp.lt.s32.totalorder %v2280, 4
        %v2303 = vsel %vm2299, %v2283, %v2286
        %v2304 = vsel %vm2302, %v2292, 2102212464
        %v2305 = vsel %vm2301, %v2289, %v2304
        %v2306 = vsel %vm2300, %v2303, %v2305
        %v2307 = vsel %vm2299, %v2286, %v2289
        %v2308 = vsel %vm2302, %v2295, 920167782
        %v2309 = vsel %vm2301, %v2292, %v2308
        %v2310 = vsel %vm2300, %v2307, %v2309
        %v2311 = vsel %vm2299, %v2289, %v2292
        %v2312 = vsel %vm2302, %v2298, 1326507024
        %v2313 = vsel %vm2301, %v2295, %v2312
        %v2314 = vsel %vm2300, %v2311, %v2313
        %v2315 = vshll.u32 %v2275, 8
        %v2316 = vmul.u32.u64.compose %v2315, %v2314
        %v2317 = vextract.low.u32 %v2316
        %v2318 = vextract.high.u32 %v2316
        %v2319 = vmul.u32.u64.compose %v2315, %v2310
        %v2320 = vextract.low.u32 %v2319
        %v2321 = vextract.high.u32 %v2319
        %v2322 = vmul.u32 %v2315, %v2306
        %v2323 = vadd.s32 %v2318, %v2320
        %vm2324 = vc.u32 %v2318, %v2320
        %v2325 = vadd.s32 %v2321, 1
        %v2326 = vsel %vm2324, %v2325, %v2321
        %v2327 = vadd.s32 %v2322, %v2326
        %v2328 = vadd.s32 %v2327, 536870912
        %v2329 = vshrl.u32 %v2328, 30
        %v2330 = vshll.u32 %v2329, 30
        %v2331 = vsub.s32 %v2327, %v2330
        %vm2332 = vcmp.lt.s32.totalorder %v2331, 0
        %v2333 = vsub.s32 0, %v2331
        %v2334 = vsel %vm2332, %v2333, %v2331
        %v2335 = vclz %v2334
        %v2336 = vsub.s32 %v2335, 2
        %vm2337 = vcmp.gt.s32.totalorder 0, %v2336
        %v2338 = vsel %vm2337, 0, %v2336
        %v2339 = vsub.s32 32, %v2338
        %v2340 = vshll.u32 %v2331, %v2338
        %v2341 = vshrl.u32 %v2323, %v2339
        %v2342 = vor.u32 %v2340, %v2341
        %v2343 = vsub.s32 4294967266, %v2338
        %v2344 = vadd.s32 %v2343, 127
        %v2345 = vshll.u32 %v2344, 23
        %v2346 = vor.u32 4788187, %v2345
        %v2347 = vand.u32 2147483647, %v2346
        %v2349 = vcvt.s32.f32 %v2342
        %v2350 = vmul.f32 %v2349, %v2347
        %v2351 = vxor.u32 %v2350, 2147483648
        %v2352 = vsel %vm2269, %v2351, %v2350
        %v2353 = vsub.s32 4, %v2329
        %v2354 = vsel %vm2269, %v2353, %v2329
        %v2355 = vsel %vm2268, %v282, %v2352
        %v2356 = vsel %vm2268, 0, %v2354
        %v2357 = vcosq.f32.pop %v2355
        %v2358 = vsinq.f32.pop %v2355
        %vm2359 = vweird.f32 %v282
        %v2360 = vand.u32 %v2356, 3
        %vm2361 = vcmp.lt.s32.totalorder %v2360, 2
        %vm2362 = vcmp.eq.s32.totalorder %v2360, 0
        %v2363 = vxor.u32 %v2358, 2147483648
        %v2364 = vsel %vm2362, %v2357, %v2363
        %vm2365 = vcmp.eq.s32.totalorder %v2360, 2
        %v2366 = vxor.u32 %v2357, 2147483648
        %v2367 = vsel %vm2365, %v2366, %v2358
        %v2368 = vsel %vm2361, %v2364, %v2367
        %v2369 = vsel %vm2359, nan, %v2368
        %v2370 = vand.u32 2147483647, %v283
        %vm2371 = vcmp.le.f32.partialorder %v2370, 0.7853982
        %vm2372 = vcmp.lt.s32.totalorder %v283, 0
        %v2373 = vand.u32 %v283, 2139095040
        %v2374 = vshrl.u32 %v2373, 23
        %v2375 = vsub.s32 %v2374, 127
        %v2376 = vand.u32 2147483647, %v283
        %v2377 = vand.u32 %v2376, 8388607
        %v2378 = vor.u32 %v2377, 8388608
        %v2379 = vsub.s32 0, %v2378
        %v2380 = vadd.s32 %v2375, 1
        %vm2381 = vcmp.gt.s32.totalorder %v2380, 0
        %v2382 = vsel %vm2381, %v2380, 0
        %v2383 = vshrl.u32 %v2382, 5
        %v2384 = vand.u32 %v2382, 31
        %v2385 = vsub.s32 32, %v2384
        %v2386 = vshrl.u32 683565275, %v2385
        %v2387 = vshll.u32 683565275, %v2384
        %v2388 = vshrl.u32 2475754826, %v2385
        %v2389 = vor.u32 %v2387, %v2388
        %v2390 = vshll.u32 2475754826, %v2384
        %v2391 = vshrl.u32 2131351028, %v2385
        %v2392 = vor.u32 %v2390, %v2391
        %v2393 = vshll.u32 2131351028, %v2384
        %v2394 = vshrl.u32 2102212464, %v2385
        %v2395 = vor.u32 %v2393, %v2394
        %v2396 = vshll.u32 2102212464, %v2384
        %v2397 = vshrl.u32 920167782, %v2385
        %v2398 = vor.u32 %v2396, %v2397
        %v2399 = vshll.u32 920167782, %v2384
        %v2400 = vshrl.u32 1326507024, %v2385
        %v2401 = vor.u32 %v2399, %v2400
        %vm2402 = vcmp.lt.s32.totalorder %v2383, 1
        %vm2403 = vcmp.lt.s32.totalorder %v2383, 2
        %vm2404 = vcmp.lt.s32.totalorder %v2383, 3
        %vm2405 = vcmp.lt.s32.totalorder %v2383, 4
        %v2406 = vsel %vm2402, %v2386, %v2389
        %v2407 = vsel %vm2405, %v2395, 2102212464
        %v2408 = vsel %vm2404, %v2392, %v2407
        %v2409 = vsel %vm2403, %v2406, %v2408
        %v2410 = vsel %vm2402, %v2389, %v2392
        %v2411 = vsel %vm2405, %v2398, 920167782
        %v2412 = vsel %vm2404, %v2395, %v2411
        %v2413 = vsel %vm2403, %v2410, %v2412
        %v2414 = vsel %vm2402, %v2392, %v2395
        %v2415 = vsel %vm2405, %v2401, 1326507024
        %v2416 = vsel %vm2404, %v2398, %v2415
        %v2417 = vsel %vm2403, %v2414, %v2416
        %v2418 = vshll.u32 %v2378, 8
        %v2419 = vmul.u32.u64.compose %v2418, %v2417
        %v2420 = vextract.low.u32 %v2419
        %v2421 = vextract.high.u32 %v2419
        %v2422 = vmul.u32.u64.compose %v2418, %v2413
        %v2423 = vextract.low.u32 %v2422
        %v2424 = vextract.high.u32 %v2422
        %v2425 = vmul.u32 %v2418, %v2409
        %v2426 = vadd.s32 %v2421, %v2423
        %vm2427 = vc.u32 %v2421, %v2423
        %v2428 = vadd.s32 %v2424, 1
        %v2429 = vsel %vm2427, %v2428, %v2424
        %v2430 = vadd.s32 %v2425, %v2429
        %v2431 = vadd.s32 %v2430, 536870912
        %v2432 = vshrl.u32 %v2431, 30
        %v2433 = vshll.u32 %v2432, 30
        %v2434 = vsub.s32 %v2430, %v2433
        %vm2435 = vcmp.lt.s32.totalorder %v2434, 0
        %v2436 = vsub.s32 0, %v2434
        %v2437 = vsel %vm2435, %v2436, %v2434
        %v2438 = vclz %v2437
        %v2439 = vsub.s32 %v2438, 2
        %vm2440 = vcmp.gt.s32.totalorder 0, %v2439
        %v2441 = vsel %vm2440, 0, %v2439
        %v2442 = vsub.s32 32, %v2441
        %v2443 = vshll.u32 %v2434, %v2441
        %v2444 = vshrl.u32 %v2426, %v2442
        %v2445 = vor.u32 %v2443, %v2444
        %v2446 = vsub.s32 4294967266, %v2441
        %v2447 = vadd.s32 %v2446, 127
        %v2448 = vshll.u32 %v2447, 23
        %v2449 = vor.u32 4788187, %v2448
        %v2450 = vand.u32 2147483647, %v2449
        %v2452 = vcvt.s32.f32 %v2445
        %v2453 = vmul.f32 %v2452, %v2450
        %v2454 = vxor.u32 %v2453, 2147483648
        %v2455 = vsel %vm2372, %v2454, %v2453
        %v2456 = vsub.s32 4, %v2432
        %v2457 = vsel %vm2372, %v2456, %v2432
        %v2458 = vsel %vm2371, %v283, %v2455
        %v2459 = vsel %vm2371, 0, %v2457
        %v2460 = vcosq.f32.pop %v2458
        %v2461 = vsinq.f32.pop %v2458
        %vm2462 = vweird.f32 %v283
        %v2463 = vand.u32 %v2459, 3
        %vm2464 = vcmp.lt.s32.totalorder %v2463, 2
        %vm2465 = vcmp.eq.s32.totalorder %v2463, 0
        %v2466 = vxor.u32 %v2461, 2147483648
        %v2467 = vsel %vm2465, %v2460, %v2466
        %vm2468 = vcmp.eq.s32.totalorder %v2463, 2
        %v2469 = vxor.u32 %v2460, 2147483648
        %v2470 = vsel %vm2468, %v2469, %v2461
        %v2471 = vsel %vm2464, %v2467, %v2470
        %v2472 = vsel %vm2462, nan, %v2471
        %v2473 = vand.u32 2147483647, %v284
        %vm2474 = vcmp.le.f32.partialorder %v2473, 0.7853982
        %vm2475 = vcmp.lt.s32.totalorder %v284, 0
        %v2476 = vand.u32 %v284, 2139095040
        %v2477 = vshrl.u32 %v2476, 23
        %v2478 = vsub.s32 %v2477, 127
        %v2479 = vand.u32 2147483647, %v284
        %v2480 = vand.u32 %v2479, 8388607
        %v2481 = vor.u32 %v2480, 8388608
        %v2482 = vsub.s32 0, %v2481
        %v2483 = vadd.s32 %v2478, 1
        %vm2484 = vcmp.gt.s32.totalorder %v2483, 0
        %v2485 = vsel %vm2484, %v2483, 0
        %v2486 = vshrl.u32 %v2485, 5
        %v2487 = vand.u32 %v2485, 31
        %v2488 = vsub.s32 32, %v2487
        %v2489 = vshrl.u32 683565275, %v2488
        %v2490 = vshll.u32 683565275, %v2487
        %v2491 = vshrl.u32 2475754826, %v2488
        %v2492 = vor.u32 %v2490, %v2491
        %v2493 = vshll.u32 2475754826, %v2487
        %v2494 = vshrl.u32 2131351028, %v2488
        %v2495 = vor.u32 %v2493, %v2494
        %v2496 = vshll.u32 2131351028, %v2487
        %v2497 = vshrl.u32 2102212464, %v2488
        %v2498 = vor.u32 %v2496, %v2497
        %v2499 = vshll.u32 2102212464, %v2487
        %v2500 = vshrl.u32 920167782, %v2488
        %v2501 = vor.u32 %v2499, %v2500
        %v2502 = vshll.u32 920167782, %v2487
        %v2503 = vshrl.u32 1326507024, %v2488
        %v2504 = vor.u32 %v2502, %v2503
        %vm2505 = vcmp.lt.s32.totalorder %v2486, 1
        %vm2506 = vcmp.lt.s32.totalorder %v2486, 2
        %vm2507 = vcmp.lt.s32.totalorder %v2486, 3
        %vm2508 = vcmp.lt.s32.totalorder %v2486, 4
        %v2509 = vsel %vm2505, %v2489, %v2492
        %v2510 = vsel %vm2508, %v2498, 2102212464
        %v2511 = vsel %vm2507, %v2495, %v2510
        %v2512 = vsel %vm2506, %v2509, %v2511
        %v2513 = vsel %vm2505, %v2492, %v2495
        %v2514 = vsel %vm2508, %v2501, 920167782
        %v2515 = vsel %vm2507, %v2498, %v2514
        %v2516 = vsel %vm2506, %v2513, %v2515
        %v2517 = vsel %vm2505, %v2495, %v2498
        %v2518 = vsel %vm2508, %v2504, 1326507024
        %v2519 = vsel %vm2507, %v2501, %v2518
        %v2520 = vsel %vm2506, %v2517, %v2519
        %v2521 = vshll.u32 %v2481, 8
        %v2522 = vmul.u32.u64.compose %v2521, %v2520
        %v2523 = vextract.low.u32 %v2522
        %v2524 = vextract.high.u32 %v2522
        %v2525 = vmul.u32.u64.compose %v2521, %v2516
        %v2526 = vextract.low.u32 %v2525
        %v2527 = vextract.high.u32 %v2525
        %v2528 = vmul.u32 %v2521, %v2512
        %v2529 = vadd.s32 %v2524, %v2526
        %vm2530 = vc.u32 %v2524, %v2526
        %v2531 = vadd.s32 %v2527, 1
        %v2532 = vsel %vm2530, %v2531, %v2527
        %v2533 = vadd.s32 %v2528, %v2532
        %v2534 = vadd.s32 %v2533, 536870912
        %v2535 = vshrl.u32 %v2534, 30
        %v2536 = vshll.u32 %v2535, 30
        %v2537 = vsub.s32 %v2533, %v2536
        %vm2538 = vcmp.lt.s32.totalorder %v2537, 0
        %v2539 = vsub.s32 0, %v2537
        %v2540 = vsel %vm2538, %v2539, %v2537
        %v2541 = vclz %v2540
        %v2542 = vsub.s32 %v2541, 2
        %vm2543 = vcmp.gt.s32.totalorder 0, %v2542
        %v2544 = vsel %vm2543, 0, %v2542
        %v2545 = vsub.s32 32, %v2544
        %v2546 = vshll.u32 %v2537, %v2544
        %v2547 = vshrl.u32 %v2529, %v2545
        %v2548 = vor.u32 %v2546, %v2547
        %v2549 = vsub.s32 4294967266, %v2544
        %v2550 = vadd.s32 %v2549, 127
        %v2551 = vshll.u32 %v2550, 23
        %v2552 = vor.u32 4788187, %v2551
        %v2553 = vand.u32 2147483647, %v2552
        %v2555 = vcvt.s32.f32 %v2548
        %v2556 = vmul.f32 %v2555, %v2553
        %v2557 = vxor.u32 %v2556, 2147483648
        %v2558 = vsel %vm2475, %v2557, %v2556
        %v2559 = vsub.s32 4, %v2535
        %v2560 = vsel %vm2475, %v2559, %v2535
        %v2561 = vsel %vm2474, %v284, %v2558
        %v2562 = vsel %vm2474, 0, %v2560
        %v2563 = vcosq.f32.pop %v2561
        %v2564 = vsinq.f32.pop %v2561
        %vm2565 = vweird.f32 %v284
        %v2566 = vand.u32 %v2562, 3
        %vm2567 = vcmp.lt.s32.totalorder %v2566, 2
        %vm2568 = vcmp.eq.s32.totalorder %v2566, 0
        %v2569 = vxor.u32 %v2564, 2147483648
        %v2570 = vsel %vm2568, %v2563, %v2569
        %vm2571 = vcmp.eq.s32.totalorder %v2566, 2
        %v2572 = vxor.u32 %v2563, 2147483648
        %v2573 = vsel %vm2571, %v2572, %v2564
        %v2574 = vsel %vm2567, %v2570, %v2573
        %v2575 = vsel %vm2565, nan, %v2574
        %v2576 = vand.u32 2147483647, %v285
        %vm2577 = vcmp.le.f32.partialorder %v2576, 0.7853982
        %vm2578 = vcmp.lt.s32.totalorder %v285, 0
        %v2579 = vand.u32 %v285, 2139095040
        %v2580 = vshrl.u32 %v2579, 23
        %v2581 = vsub.s32 %v2580, 127
        %v2582 = vand.u32 2147483647, %v285
        %v2583 = vand.u32 %v2582, 8388607
        %v2584 = vor.u32 %v2583, 8388608
        %v2585 = vsub.s32 0, %v2584
        %v2586 = vadd.s32 %v2581, 1
        %vm2587 = vcmp.gt.s32.totalorder %v2586, 0
        %v2588 = vsel %vm2587, %v2586, 0
        %v2589 = vshrl.u32 %v2588, 5
        %v2590 = vand.u32 %v2588, 31
        %v2591 = vsub.s32 32, %v2590
        %v2592 = vshrl.u32 683565275, %v2591
        %v2593 = vshll.u32 683565275, %v2590
        %v2594 = vshrl.u32 2475754826, %v2591
        %v2595 = vor.u32 %v2593, %v2594
        %v2596 = vshll.u32 2475754826, %v2590
        %v2597 = vshrl.u32 2131351028, %v2591
        %v2598 = vor.u32 %v2596, %v2597
        %v2599 = vshll.u32 2131351028, %v2590
        %v2600 = vshrl.u32 2102212464, %v2591
        %v2601 = vor.u32 %v2599, %v2600
        %v2602 = vshll.u32 2102212464, %v2590
        %v2603 = vshrl.u32 920167782, %v2591
        %v2604 = vor.u32 %v2602, %v2603
        %v2605 = vshll.u32 920167782, %v2590
        %v2606 = vshrl.u32 1326507024, %v2591
        %v2607 = vor.u32 %v2605, %v2606
        %vm2608 = vcmp.lt.s32.totalorder %v2589, 1
        %vm2609 = vcmp.lt.s32.totalorder %v2589, 2
        %vm2610 = vcmp.lt.s32.totalorder %v2589, 3
        %vm2611 = vcmp.lt.s32.totalorder %v2589, 4
        %v2612 = vsel %vm2608, %v2592, %v2595
        %v2613 = vsel %vm2611, %v2601, 2102212464
        %v2614 = vsel %vm2610, %v2598, %v2613
        %v2615 = vsel %vm2609, %v2612, %v2614
        %v2616 = vsel %vm2608, %v2595, %v2598
        %v2617 = vsel %vm2611, %v2604, 920167782
        %v2618 = vsel %vm2610, %v2601, %v2617
        %v2619 = vsel %vm2609, %v2616, %v2618
        %v2620 = vsel %vm2608, %v2598, %v2601
        %v2621 = vsel %vm2611, %v2607, 1326507024
        %v2622 = vsel %vm2610, %v2604, %v2621
        %v2623 = vsel %vm2609, %v2620, %v2622
        %v2624 = vshll.u32 %v2584, 8
        %v2625 = vmul.u32.u64.compose %v2624, %v2623
        %v2626 = vextract.low.u32 %v2625
        %v2627 = vextract.high.u32 %v2625
        %v2628 = vmul.u32.u64.compose %v2624, %v2619
        %v2629 = vextract.low.u32 %v2628
        %v2630 = vextract.high.u32 %v2628
        %v2631 = vmul.u32 %v2624, %v2615
        %v2632 = vadd.s32 %v2627, %v2629
        %vm2633 = vc.u32 %v2627, %v2629
        %v2634 = vadd.s32 %v2630, 1
        %v2635 = vsel %vm2633, %v2634, %v2630
        %v2636 = vadd.s32 %v2631, %v2635
        %v2637 = vadd.s32 %v2636, 536870912
        %v2638 = vshrl.u32 %v2637, 30
        %v2639 = vshll.u32 %v2638, 30
        %v2640 = vsub.s32 %v2636, %v2639
        %vm2641 = vcmp.lt.s32.totalorder %v2640, 0
        %v2642 = vsub.s32 0, %v2640
        %v2643 = vsel %vm2641, %v2642, %v2640
        %v2644 = vclz %v2643
        %v2645 = vsub.s32 %v2644, 2
        %vm2646 = vcmp.gt.s32.totalorder 0, %v2645
        %v2647 = vsel %vm2646, 0, %v2645
        %v2648 = vsub.s32 32, %v2647
        %v2649 = vshll.u32 %v2640, %v2647
        %v2650 = vshrl.u32 %v2632, %v2648
        %v2651 = vor.u32 %v2649, %v2650
        %v2652 = vsub.s32 4294967266, %v2647
        %v2653 = vadd.s32 %v2652, 127
        %v2654 = vshll.u32 %v2653, 23
        %v2655 = vor.u32 4788187, %v2654
        %v2656 = vand.u32 2147483647, %v2655
        %v2658 = vcvt.s32.f32 %v2651
        %v2659 = vmul.f32 %v2658, %v2656
        %v2660 = vxor.u32 %v2659, 2147483648
        %v2661 = vsel %vm2578, %v2660, %v2659
        %v2662 = vsub.s32 4, %v2638
        %v2663 = vsel %vm2578, %v2662, %v2638
        %v2664 = vsel %vm2577, %v285, %v2661
        %v2665 = vsel %vm2577, 0, %v2663
        %v2666 = vcosq.f32.pop %v2664
        %v2667 = vsinq.f32.pop %v2664
        %vm2668 = vweird.f32 %v285
        %v2669 = vand.u32 %v2665, 3
        %vm2670 = vcmp.lt.s32.totalorder %v2669, 2
        %vm2671 = vcmp.eq.s32.totalorder %v2669, 0
        %v2672 = vxor.u32 %v2667, 2147483648
        %v2673 = vsel %vm2671, %v2666, %v2672
        %vm2674 = vcmp.eq.s32.totalorder %v2669, 2
        %v2675 = vxor.u32 %v2666, 2147483648
        %v2676 = vsel %vm2674, %v2675, %v2667
        %v2677 = vsel %vm2670, %v2673, %v2676
        %v2678 = vsel %vm2668, nan, %v2677
        %v2679 = vand.u32 2147483647, %v286
        %vm2680 = vcmp.le.f32.partialorder %v2679, 0.7853982
        %vm2681 = vcmp.lt.s32.totalorder %v286, 0
        %v2682 = vand.u32 %v286, 2139095040
        %v2683 = vshrl.u32 %v2682, 23
        %v2684 = vsub.s32 %v2683, 127
        %v2685 = vand.u32 2147483647, %v286
        %v2686 = vand.u32 %v2685, 8388607
        %v2687 = vor.u32 %v2686, 8388608
        %v2688 = vsub.s32 0, %v2687
        %v2689 = vadd.s32 %v2684, 1
        %vm2690 = vcmp.gt.s32.totalorder %v2689, 0
        %v2691 = vsel %vm2690, %v2689, 0
        %v2692 = vshrl.u32 %v2691, 5
        %v2693 = vand.u32 %v2691, 31
        %v2694 = vsub.s32 32, %v2693
        %v2695 = vshrl.u32 683565275, %v2694
        %v2696 = vshll.u32 683565275, %v2693
        %v2697 = vshrl.u32 2475754826, %v2694
        %v2698 = vor.u32 %v2696, %v2697
        %v2699 = vshll.u32 2475754826, %v2693
        %v2700 = vshrl.u32 2131351028, %v2694
        %v2701 = vor.u32 %v2699, %v2700
        %v2702 = vshll.u32 2131351028, %v2693
        %v2703 = vshrl.u32 2102212464, %v2694
        %v2704 = vor.u32 %v2702, %v2703
        %v2705 = vshll.u32 2102212464, %v2693
        %v2706 = vshrl.u32 920167782, %v2694
        %v2707 = vor.u32 %v2705, %v2706
        %v2708 = vshll.u32 920167782, %v2693
        %v2709 = vshrl.u32 1326507024, %v2694
        %v2710 = vor.u32 %v2708, %v2709
        %vm2711 = vcmp.lt.s32.totalorder %v2692, 1
        %vm2712 = vcmp.lt.s32.totalorder %v2692, 2
        %vm2713 = vcmp.lt.s32.totalorder %v2692, 3
        %vm2714 = vcmp.lt.s32.totalorder %v2692, 4
        %v2715 = vsel %vm2711, %v2695, %v2698
        %v2716 = vsel %vm2714, %v2704, 2102212464
        %v2717 = vsel %vm2713, %v2701, %v2716
        %v2718 = vsel %vm2712, %v2715, %v2717
        %v2719 = vsel %vm2711, %v2698, %v2701
        %v2720 = vsel %vm2714, %v2707, 920167782
        %v2721 = vsel %vm2713, %v2704, %v2720
        %v2722 = vsel %vm2712, %v2719, %v2721
        %v2723 = vsel %vm2711, %v2701, %v2704
        %v2724 = vsel %vm2714, %v2710, 1326507024
        %v2725 = vsel %vm2713, %v2707, %v2724
        %v2726 = vsel %vm2712, %v2723, %v2725
        %v2727 = vshll.u32 %v2687, 8
        %v2728 = vmul.u32.u64.compose %v2727, %v2726
        %v2729 = vextract.low.u32 %v2728
        %v2730 = vextract.high.u32 %v2728
        %v2731 = vmul.u32.u64.compose %v2727, %v2722
        %v2732 = vextract.low.u32 %v2731
        %v2733 = vextract.high.u32 %v2731
        %v2734 = vmul.u32 %v2727, %v2718
        %v2735 = vadd.s32 %v2730, %v2732
        %vm2736 = vc.u32 %v2730, %v2732
        %v2737 = vadd.s32 %v2733, 1
        %v2738 = vsel %vm2736, %v2737, %v2733
        %v2739 = vadd.s32 %v2734, %v2738
        %v2740 = vadd.s32 %v2739, 536870912
        %v2741 = vshrl.u32 %v2740, 30
        %v2742 = vshll.u32 %v2741, 30
        %v2743 = vsub.s32 %v2739, %v2742
        %vm2744 = vcmp.lt.s32.totalorder %v2743, 0
        %v2745 = vsub.s32 0, %v2743
        %v2746 = vsel %vm2744, %v2745, %v2743
        %v2747 = vclz %v2746
        %v2748 = vsub.s32 %v2747, 2
        %vm2749 = vcmp.gt.s32.totalorder 0, %v2748
        %v2750 = vsel %vm2749, 0, %v2748
        %v2751 = vsub.s32 32, %v2750
        %v2752 = vshll.u32 %v2743, %v2750
        %v2753 = vshrl.u32 %v2735, %v2751
        %v2754 = vor.u32 %v2752, %v2753
        %v2755 = vsub.s32 4294967266, %v2750
        %v2756 = vadd.s32 %v2755, 127
        %v2757 = vshll.u32 %v2756, 23
        %v2758 = vor.u32 4788187, %v2757
        %v2759 = vand.u32 2147483647, %v2758
        %v2761 = vcvt.s32.f32 %v2754
        %v2762 = vmul.f32 %v2761, %v2759
        %v2763 = vxor.u32 %v2762, 2147483648
        %v2764 = vsel %vm2681, %v2763, %v2762
        %v2765 = vsub.s32 4, %v2741
        %v2766 = vsel %vm2681, %v2765, %v2741
        %v2767 = vsel %vm2680, %v286, %v2764
        %v2768 = vsel %vm2680, 0, %v2766
        %v2769 = vcosq.f32.pop %v2767
        %v2770 = vsinq.f32.pop %v2767
        %vm2771 = vweird.f32 %v286
        %v2772 = vand.u32 %v2768, 3
        %vm2773 = vcmp.lt.s32.totalorder %v2772, 2
        %vm2774 = vcmp.eq.s32.totalorder %v2772, 0
        %v2775 = vxor.u32 %v2770, 2147483648
        %v2776 = vsel %vm2774, %v2769, %v2775
        %vm2777 = vcmp.eq.s32.totalorder %v2772, 2
        %v2778 = vxor.u32 %v2769, 2147483648
        %v2779 = vsel %vm2777, %v2778, %v2770
        %v2780 = vsel %vm2773, %v2776, %v2779
        %v2781 = vsel %vm2771, nan, %v2780
        %v2782 = vand.u32 2147483647, %v287
        %vm2783 = vcmp.le.f32.partialorder %v2782, 0.7853982
        %vm2784 = vcmp.lt.s32.totalorder %v287, 0
        %v2785 = vand.u32 %v287, 2139095040
        %v2786 = vshrl.u32 %v2785, 23
        %v2787 = vsub.s32 %v2786, 127
        %v2788 = vand.u32 2147483647, %v287
        %v2789 = vand.u32 %v2788, 8388607
        %v2790 = vor.u32 %v2789, 8388608
        %v2791 = vsub.s32 0, %v2790
        %v2792 = vadd.s32 %v2787, 1
        %vm2793 = vcmp.gt.s32.totalorder %v2792, 0
        %v2794 = vsel %vm2793, %v2792, 0
        %v2795 = vshrl.u32 %v2794, 5
        %v2796 = vand.u32 %v2794, 31
        %v2797 = vsub.s32 32, %v2796
        %v2798 = vshrl.u32 683565275, %v2797
        %v2799 = vshll.u32 683565275, %v2796
        %v2800 = vshrl.u32 2475754826, %v2797
        %v2801 = vor.u32 %v2799, %v2800
        %v2802 = vshll.u32 2475754826, %v2796
        %v2803 = vshrl.u32 2131351028, %v2797
        %v2804 = vor.u32 %v2802, %v2803
        %v2805 = vshll.u32 2131351028, %v2796
        %v2806 = vshrl.u32 2102212464, %v2797
        %v2807 = vor.u32 %v2805, %v2806
        %v2808 = vshll.u32 2102212464, %v2796
        %v2809 = vshrl.u32 920167782, %v2797
        %v2810 = vor.u32 %v2808, %v2809
        %v2811 = vshll.u32 920167782, %v2796
        %v2812 = vshrl.u32 1326507024, %v2797
        %v2813 = vor.u32 %v2811, %v2812
        %vm2814 = vcmp.lt.s32.totalorder %v2795, 1
        %vm2815 = vcmp.lt.s32.totalorder %v2795, 2
        %vm2816 = vcmp.lt.s32.totalorder %v2795, 3
        %vm2817 = vcmp.lt.s32.totalorder %v2795, 4
        %v2818 = vsel %vm2814, %v2798, %v2801
        %v2819 = vsel %vm2817, %v2807, 2102212464
        %v2820 = vsel %vm2816, %v2804, %v2819
        %v2821 = vsel %vm2815, %v2818, %v2820
        %v2822 = vsel %vm2814, %v2801, %v2804
        %v2823 = vsel %vm2817, %v2810, 920167782
        %v2824 = vsel %vm2816, %v2807, %v2823
        %v2825 = vsel %vm2815, %v2822, %v2824
        %v2826 = vsel %vm2814, %v2804, %v2807
        %v2827 = vsel %vm2817, %v2813, 1326507024
        %v2828 = vsel %vm2816, %v2810, %v2827
        %v2829 = vsel %vm2815, %v2826, %v2828
        %v2830 = vshll.u32 %v2790, 8
        %v2831 = vmul.u32.u64.compose %v2830, %v2829
        %v2832 = vextract.low.u32 %v2831
        %v2833 = vextract.high.u32 %v2831
        %v2834 = vmul.u32.u64.compose %v2830, %v2825
        %v2835 = vextract.low.u32 %v2834
        %v2836 = vextract.high.u32 %v2834
        %v2837 = vmul.u32 %v2830, %v2821
        %v2838 = vadd.s32 %v2833, %v2835
        %vm2839 = vc.u32 %v2833, %v2835
        %v2840 = vadd.s32 %v2836, 1
        %v2841 = vsel %vm2839, %v2840, %v2836
        %v2842 = vadd.s32 %v2837, %v2841
        %v2843 = vadd.s32 %v2842, 536870912
        %v2844 = vshrl.u32 %v2843, 30
        %v2845 = vshll.u32 %v2844, 30
        %v2846 = vsub.s32 %v2842, %v2845
        %vm2847 = vcmp.lt.s32.totalorder %v2846, 0
        %v2848 = vsub.s32 0, %v2846
        %v2849 = vsel %vm2847, %v2848, %v2846
        %v2850 = vclz %v2849
        %v2851 = vsub.s32 %v2850, 2
        %vm2852 = vcmp.gt.s32.totalorder 0, %v2851
        %v2853 = vsel %vm2852, 0, %v2851
        %v2854 = vsub.s32 32, %v2853
        %v2855 = vshll.u32 %v2846, %v2853
        %v2856 = vshrl.u32 %v2838, %v2854
        %v2857 = vor.u32 %v2855, %v2856
        %v2858 = vsub.s32 4294967266, %v2853
        %v2859 = vadd.s32 %v2858, 127
        %v2860 = vshll.u32 %v2859, 23
        %v2861 = vor.u32 4788187, %v2860
        %v2862 = vand.u32 2147483647, %v2861
        %v2864 = vcvt.s32.f32 %v2857
        %v2865 = vmul.f32 %v2864, %v2862
        %v2866 = vxor.u32 %v2865, 2147483648
        %v2867 = vsel %vm2784, %v2866, %v2865
        %v2868 = vsub.s32 4, %v2844
        %v2869 = vsel %vm2784, %v2868, %v2844
        %v2870 = vsel %vm2783, %v287, %v2867
        %v2871 = vsel %vm2783, 0, %v2869
        %v2872 = vcosq.f32.pop %v2870
        %v2873 = vsinq.f32.pop %v2870
        %vm2874 = vweird.f32 %v287
        %v2875 = vand.u32 %v2871, 3
        %vm2876 = vcmp.lt.s32.totalorder %v2875, 2
        %vm2877 = vcmp.eq.s32.totalorder %v2875, 0
        %v2878 = vxor.u32 %v2873, 2147483648
        %v2879 = vsel %vm2877, %v2872, %v2878
        %vm2880 = vcmp.eq.s32.totalorder %v2875, 2
        %v2881 = vxor.u32 %v2872, 2147483648
        %v2882 = vsel %vm2880, %v2881, %v2873
        %v2883 = vsel %vm2876, %v2879, %v2882
        %v2884 = vsel %vm2874, nan, %v2883
        %v2885 = vand.u32 2147483647, %v288
        %vm2886 = vcmp.le.f32.partialorder %v2885, 0.7853982
        %vm2887 = vcmp.lt.s32.totalorder %v288, 0
        %v2888 = vand.u32 %v288, 2139095040
        %v2889 = vshrl.u32 %v2888, 23
        %v2890 = vsub.s32 %v2889, 127
        %v2891 = vand.u32 2147483647, %v288
        %v2892 = vand.u32 %v2891, 8388607
        %v2893 = vor.u32 %v2892, 8388608
        %v2894 = vsub.s32 0, %v2893
        %v2895 = vadd.s32 %v2890, 1
        %vm2896 = vcmp.gt.s32.totalorder %v2895, 0
        %v2897 = vsel %vm2896, %v2895, 0
        %v2898 = vshrl.u32 %v2897, 5
        %v2899 = vand.u32 %v2897, 31
        %v2900 = vsub.s32 32, %v2899
        %v2901 = vshrl.u32 683565275, %v2900
        %v2902 = vshll.u32 683565275, %v2899
        %v2903 = vshrl.u32 2475754826, %v2900
        %v2904 = vor.u32 %v2902, %v2903
        %v2905 = vshll.u32 2475754826, %v2899
        %v2906 = vshrl.u32 2131351028, %v2900
        %v2907 = vor.u32 %v2905, %v2906
        %v2908 = vshll.u32 2131351028, %v2899
        %v2909 = vshrl.u32 2102212464, %v2900
        %v2910 = vor.u32 %v2908, %v2909
        %v2911 = vshll.u32 2102212464, %v2899
        %v2912 = vshrl.u32 920167782, %v2900
        %v2913 = vor.u32 %v2911, %v2912
        %v2914 = vshll.u32 920167782, %v2899
        %v2915 = vshrl.u32 1326507024, %v2900
        %v2916 = vor.u32 %v2914, %v2915
        %vm2917 = vcmp.lt.s32.totalorder %v2898, 1
        %vm2918 = vcmp.lt.s32.totalorder %v2898, 2
        %vm2919 = vcmp.lt.s32.totalorder %v2898, 3
        %vm2920 = vcmp.lt.s32.totalorder %v2898, 4
        %v2921 = vsel %vm2917, %v2901, %v2904
        %v2922 = vsel %vm2920, %v2910, 2102212464
        %v2923 = vsel %vm2919, %v2907, %v2922
        %v2924 = vsel %vm2918, %v2921, %v2923
        %v2925 = vsel %vm2917, %v2904, %v2907
        %v2926 = vsel %vm2920, %v2913, 920167782
        %v2927 = vsel %vm2919, %v2910, %v2926
        %v2928 = vsel %vm2918, %v2925, %v2927
        %v2929 = vsel %vm2917, %v2907, %v2910
        %v2930 = vsel %vm2920, %v2916, 1326507024
        %v2931 = vsel %vm2919, %v2913, %v2930
        %v2932 = vsel %vm2918, %v2929, %v2931
        %v2933 = vshll.u32 %v2893, 8
        %v2934 = vmul.u32.u64.compose %v2933, %v2932
        %v2935 = vextract.low.u32 %v2934
        %v2936 = vextract.high.u32 %v2934
        %v2937 = vmul.u32.u64.compose %v2933, %v2928
        %v2938 = vextract.low.u32 %v2937
        %v2939 = vextract.high.u32 %v2937
        %v2940 = vmul.u32 %v2933, %v2924
        %v2941 = vadd.s32 %v2936, %v2938
        %vm2942 = vc.u32 %v2936, %v2938
        %v2943 = vadd.s32 %v2939, 1
        %v2944 = vsel %vm2942, %v2943, %v2939
        %v2945 = vadd.s32 %v2940, %v2944
        %v2946 = vadd.s32 %v2945, 536870912
        %v2947 = vshrl.u32 %v2946, 30
        %v2948 = vshll.u32 %v2947, 30
        %v2949 = vsub.s32 %v2945, %v2948
        %vm2950 = vcmp.lt.s32.totalorder %v2949, 0
        %v2951 = vsub.s32 0, %v2949
        %v2952 = vsel %vm2950, %v2951, %v2949
        %v2953 = vclz %v2952
        %v2954 = vsub.s32 %v2953, 2
        %vm2955 = vcmp.gt.s32.totalorder 0, %v2954
        %v2956 = vsel %vm2955, 0, %v2954
        %v2957 = vsub.s32 32, %v2956
        %v2958 = vshll.u32 %v2949, %v2956
        %v2959 = vshrl.u32 %v2941, %v2957
        %v2960 = vor.u32 %v2958, %v2959
        %v2961 = vsub.s32 4294967266, %v2956
        %v2962 = vadd.s32 %v2961, 127
        %v2963 = vshll.u32 %v2962, 23
        %v2964 = vor.u32 4788187, %v2963
        %v2965 = vand.u32 2147483647, %v2964
        %v2967 = vcvt.s32.f32 %v2960
        %v2968 = vmul.f32 %v2967, %v2965
        %v2969 = vxor.u32 %v2968, 2147483648
        %v2970 = vsel %vm2887, %v2969, %v2968
        %v2971 = vsub.s32 4, %v2947
        %v2972 = vsel %vm2887, %v2971, %v2947
        %v2973 = vsel %vm2886, %v288, %v2970
        %v2974 = vsel %vm2886, 0, %v2972
        %v2975 = vcosq.f32.pop %v2973
        %v2976 = vsinq.f32.pop %v2973
        %vm2977 = vweird.f32 %v288
        %v2978 = vand.u32 %v2974, 3
        %vm2979 = vcmp.lt.s32.totalorder %v2978, 2
        %vm2980 = vcmp.eq.s32.totalorder %v2978, 0
        %v2981 = vxor.u32 %v2976, 2147483648
        %v2982 = vsel %vm2980, %v2975, %v2981
        %vm2983 = vcmp.eq.s32.totalorder %v2978, 2
        %v2984 = vxor.u32 %v2975, 2147483648
        %v2985 = vsel %vm2983, %v2984, %v2976
        %v2986 = vsel %vm2979, %v2982, %v2985
        %v2987 = vsel %vm2977, nan, %v2986
        %v2988 = vand.u32 2147483647, %v289
        %vm2989 = vcmp.le.f32.partialorder %v2988, 0.7853982
        %vm2990 = vcmp.lt.s32.totalorder %v289, 0
        %v2991 = vand.u32 %v289, 2139095040
        %v2992 = vshrl.u32 %v2991, 23
        %v2993 = vsub.s32 %v2992, 127
        %v2994 = vand.u32 2147483647, %v289
        %v2995 = vand.u32 %v2994, 8388607
        %v2996 = vor.u32 %v2995, 8388608
        %v2997 = vsub.s32 0, %v2996
        %v2998 = vadd.s32 %v2993, 1
        %vm2999 = vcmp.gt.s32.totalorder %v2998, 0
        %v3000 = vsel %vm2999, %v2998, 0
        %v3001 = vshrl.u32 %v3000, 5
        %v3002 = vand.u32 %v3000, 31
        %v3003 = vsub.s32 32, %v3002
        %v3004 = vshrl.u32 683565275, %v3003
        %v3005 = vshll.u32 683565275, %v3002
        %v3006 = vshrl.u32 2475754826, %v3003
        %v3007 = vor.u32 %v3005, %v3006
        %v3008 = vshll.u32 2475754826, %v3002
        %v3009 = vshrl.u32 2131351028, %v3003
        %v3010 = vor.u32 %v3008, %v3009
        %v3011 = vshll.u32 2131351028, %v3002
        %v3012 = vshrl.u32 2102212464, %v3003
        %v3013 = vor.u32 %v3011, %v3012
        %v3014 = vshll.u32 2102212464, %v3002
        %v3015 = vshrl.u32 920167782, %v3003
        %v3016 = vor.u32 %v3014, %v3015
        %v3017 = vshll.u32 920167782, %v3002
        %v3018 = vshrl.u32 1326507024, %v3003
        %v3019 = vor.u32 %v3017, %v3018
        %vm3020 = vcmp.lt.s32.totalorder %v3001, 1
        %vm3021 = vcmp.lt.s32.totalorder %v3001, 2
        %vm3022 = vcmp.lt.s32.totalorder %v3001, 3
        %vm3023 = vcmp.lt.s32.totalorder %v3001, 4
        %v3024 = vsel %vm3020, %v3004, %v3007
        %v3025 = vsel %vm3023, %v3013, 2102212464
        %v3026 = vsel %vm3022, %v3010, %v3025
        %v3027 = vsel %vm3021, %v3024, %v3026
        %v3028 = vsel %vm3020, %v3007, %v3010
        %v3029 = vsel %vm3023, %v3016, 920167782
        %v3030 = vsel %vm3022, %v3013, %v3029
        %v3031 = vsel %vm3021, %v3028, %v3030
        %v3032 = vsel %vm3020, %v3010, %v3013
        %v3033 = vsel %vm3023, %v3019, 1326507024
        %v3034 = vsel %vm3022, %v3016, %v3033
        %v3035 = vsel %vm3021, %v3032, %v3034
        %v3036 = vshll.u32 %v2996, 8
        %v3037 = vmul.u32.u64.compose %v3036, %v3035
        %v3038 = vextract.low.u32 %v3037
        %v3039 = vextract.high.u32 %v3037
        %v3040 = vmul.u32.u64.compose %v3036, %v3031
        %v3041 = vextract.low.u32 %v3040
        %v3042 = vextract.high.u32 %v3040
        %v3043 = vmul.u32 %v3036, %v3027
        %v3044 = vadd.s32 %v3039, %v3041
        %vm3045 = vc.u32 %v3039, %v3041
        %v3046 = vadd.s32 %v3042, 1
        %v3047 = vsel %vm3045, %v3046, %v3042
        %v3048 = vadd.s32 %v3043, %v3047
        %v3049 = vadd.s32 %v3048, 536870912
        %v3050 = vshrl.u32 %v3049, 30
        %v3051 = vshll.u32 %v3050, 30
        %v3052 = vsub.s32 %v3048, %v3051
        %vm3053 = vcmp.lt.s32.totalorder %v3052, 0
        %v3054 = vsub.s32 0, %v3052
        %v3055 = vsel %vm3053, %v3054, %v3052
        %v3056 = vclz %v3055
        %v3057 = vsub.s32 %v3056, 2
        %vm3058 = vcmp.gt.s32.totalorder 0, %v3057
        %v3059 = vsel %vm3058, 0, %v3057
        %v3060 = vsub.s32 32, %v3059
        %v3061 = vshll.u32 %v3052, %v3059
        %v3062 = vshrl.u32 %v3044, %v3060
        %v3063 = vor.u32 %v3061, %v3062
        %v3064 = vsub.s32 4294967266, %v3059
        %v3065 = vadd.s32 %v3064, 127
        %v3066 = vshll.u32 %v3065, 23
        %v3067 = vor.u32 4788187, %v3066
        %v3068 = vand.u32 2147483647, %v3067
        %v3070 = vcvt.s32.f32 %v3063
        %v3071 = vmul.f32 %v3070, %v3068
        %v3072 = vxor.u32 %v3071, 2147483648
        %v3073 = vsel %vm2990, %v3072, %v3071
        %v3074 = vsub.s32 4, %v3050
        %v3075 = vsel %vm2990, %v3074, %v3050
        %v3076 = vsel %vm2989, %v289, %v3073
        %v3077 = vsel %vm2989, 0, %v3075
        %v3078 = vcosq.f32.pop %v3076
        %v3079 = vsinq.f32.pop %v3076
        %vm3080 = vweird.f32 %v289
        %v3081 = vand.u32 %v3077, 3
        %vm3082 = vcmp.lt.s32.totalorder %v3081, 2
        %vm3083 = vcmp.eq.s32.totalorder %v3081, 0
        %v3084 = vxor.u32 %v3079, 2147483648
        %v3085 = vsel %vm3083, %v3078, %v3084
        %vm3086 = vcmp.eq.s32.totalorder %v3081, 2
        %v3087 = vxor.u32 %v3078, 2147483648
        %v3088 = vsel %vm3086, %v3087, %v3079
        %v3089 = vsel %vm3082, %v3085, %v3088
        %v3090 = vsel %vm3080, nan, %v3089
        %v3091 = vand.u32 2147483647, %v290
        %vm3092 = vcmp.le.f32.partialorder %v3091, 0.7853982
        %vm3093 = vcmp.lt.s32.totalorder %v290, 0
        %v3094 = vand.u32 %v290, 2139095040
        %v3095 = vshrl.u32 %v3094, 23
        %v3096 = vsub.s32 %v3095, 127
        %v3097 = vand.u32 2147483647, %v290
        %v3098 = vand.u32 %v3097, 8388607
        %v3099 = vor.u32 %v3098, 8388608
        %v3100 = vsub.s32 0, %v3099
        %v3101 = vadd.s32 %v3096, 1
        %vm3102 = vcmp.gt.s32.totalorder %v3101, 0
        %v3103 = vsel %vm3102, %v3101, 0
        %v3104 = vshrl.u32 %v3103, 5
        %v3105 = vand.u32 %v3103, 31
        %v3106 = vsub.s32 32, %v3105
        %v3107 = vshrl.u32 683565275, %v3106
        %v3108 = vshll.u32 683565275, %v3105
        %v3109 = vshrl.u32 2475754826, %v3106
        %v3110 = vor.u32 %v3108, %v3109
        %v3111 = vshll.u32 2475754826, %v3105
        %v3112 = vshrl.u32 2131351028, %v3106
        %v3113 = vor.u32 %v3111, %v3112
        %v3114 = vshll.u32 2131351028, %v3105
        %v3115 = vshrl.u32 2102212464, %v3106
        %v3116 = vor.u32 %v3114, %v3115
        %v3117 = vshll.u32 2102212464, %v3105
        %v3118 = vshrl.u32 920167782, %v3106
        %v3119 = vor.u32 %v3117, %v3118
        %v3120 = vshll.u32 920167782, %v3105
        %v3121 = vshrl.u32 1326507024, %v3106
        %v3122 = vor.u32 %v3120, %v3121
        %vm3123 = vcmp.lt.s32.totalorder %v3104, 1
        %vm3124 = vcmp.lt.s32.totalorder %v3104, 2
        %vm3125 = vcmp.lt.s32.totalorder %v3104, 3
        %vm3126 = vcmp.lt.s32.totalorder %v3104, 4
        %v3127 = vsel %vm3123, %v3107, %v3110
        %v3128 = vsel %vm3126, %v3116, 2102212464
        %v3129 = vsel %vm3125, %v3113, %v3128
        %v3130 = vsel %vm3124, %v3127, %v3129
        %v3131 = vsel %vm3123, %v3110, %v3113
        %v3132 = vsel %vm3126, %v3119, 920167782
        %v3133 = vsel %vm3125, %v3116, %v3132
        %v3134 = vsel %vm3124, %v3131, %v3133
        %v3135 = vsel %vm3123, %v3113, %v3116
        %v3136 = vsel %vm3126, %v3122, 1326507024
        %v3137 = vsel %vm3125, %v3119, %v3136
        %v3138 = vsel %vm3124, %v3135, %v3137
        %v3139 = vshll.u32 %v3099, 8
        %v3140 = vmul.u32.u64.compose %v3139, %v3138
        %v3141 = vextract.low.u32 %v3140
        %v3142 = vextract.high.u32 %v3140
        %v3143 = vmul.u32.u64.compose %v3139, %v3134
        %v3144 = vextract.low.u32 %v3143
        %v3145 = vextract.high.u32 %v3143
        %v3146 = vmul.u32 %v3139, %v3130
        %v3147 = vadd.s32 %v3142, %v3144
        %vm3148 = vc.u32 %v3142, %v3144
        %v3149 = vadd.s32 %v3145, 1
        %v3150 = vsel %vm3148, %v3149, %v3145
        %v3151 = vadd.s32 %v3146, %v3150
        %v3152 = vadd.s32 %v3151, 536870912
        %v3153 = vshrl.u32 %v3152, 30
        %v3154 = vshll.u32 %v3153, 30
        %v3155 = vsub.s32 %v3151, %v3154
        %vm3156 = vcmp.lt.s32.totalorder %v3155, 0
        %v3157 = vsub.s32 0, %v3155
        %v3158 = vsel %vm3156, %v3157, %v3155
        %v3159 = vclz %v3158
        %v3160 = vsub.s32 %v3159, 2
        %vm3161 = vcmp.gt.s32.totalorder 0, %v3160
        %v3162 = vsel %vm3161, 0, %v3160
        %v3163 = vsub.s32 32, %v3162
        %v3164 = vshll.u32 %v3155, %v3162
        %v3165 = vshrl.u32 %v3147, %v3163
        %v3166 = vor.u32 %v3164, %v3165
        %v3167 = vsub.s32 4294967266, %v3162
        %v3168 = vadd.s32 %v3167, 127
        %v3169 = vshll.u32 %v3168, 23
        %v3170 = vor.u32 4788187, %v3169
        %v3171 = vand.u32 2147483647, %v3170
        %v3173 = vcvt.s32.f32 %v3166
        %v3174 = vmul.f32 %v3173, %v3171
        %v3175 = vxor.u32 %v3174, 2147483648
        %v3176 = vsel %vm3093, %v3175, %v3174
        %v3177 = vsub.s32 4, %v3153
        %v3178 = vsel %vm3093, %v3177, %v3153
        %v3179 = vsel %vm3092, %v290, %v3176
        %v3180 = vsel %vm3092, 0, %v3178
        %v3181 = vcosq.f32.pop %v3179
        %v3182 = vsinq.f32.pop %v3179
        %vm3183 = vweird.f32 %v290
        %v3184 = vand.u32 %v3180, 3
        %vm3185 = vcmp.lt.s32.totalorder %v3184, 2
        %vm3186 = vcmp.eq.s32.totalorder %v3184, 0
        %v3187 = vxor.u32 %v3182, 2147483648
        %v3188 = vsel %vm3186, %v3181, %v3187
        %vm3189 = vcmp.eq.s32.totalorder %v3184, 2
        %v3190 = vxor.u32 %v3181, 2147483648
        %v3191 = vsel %vm3189, %v3190, %v3182
        %v3192 = vsel %vm3185, %v3188, %v3191
        %v3193 = vsel %vm3183, nan, %v3192
        %v3194 = vand.u32 2147483647, %v291
        %vm3195 = vcmp.le.f32.partialorder %v3194, 0.7853982
        %vm3196 = vcmp.lt.s32.totalorder %v291, 0
        %v3197 = vand.u32 %v291, 2139095040
        %v3198 = vshrl.u32 %v3197, 23
        %v3199 = vsub.s32 %v3198, 127
        %v3200 = vand.u32 2147483647, %v291
        %v3201 = vand.u32 %v3200, 8388607
        %v3202 = vor.u32 %v3201, 8388608
        %v3203 = vsub.s32 0, %v3202
        %v3204 = vadd.s32 %v3199, 1
        %vm3205 = vcmp.gt.s32.totalorder %v3204, 0
        %v3206 = vsel %vm3205, %v3204, 0
        %v3207 = vshrl.u32 %v3206, 5
        %v3208 = vand.u32 %v3206, 31
        %v3209 = vsub.s32 32, %v3208
        %v3210 = vshrl.u32 683565275, %v3209
        %v3211 = vshll.u32 683565275, %v3208
        %v3212 = vshrl.u32 2475754826, %v3209
        %v3213 = vor.u32 %v3211, %v3212
        %v3214 = vshll.u32 2475754826, %v3208
        %v3215 = vshrl.u32 2131351028, %v3209
        %v3216 = vor.u32 %v3214, %v3215
        %v3217 = vshll.u32 2131351028, %v3208
        %v3218 = vshrl.u32 2102212464, %v3209
        %v3219 = vor.u32 %v3217, %v3218
        %v3220 = vshll.u32 2102212464, %v3208
        %v3221 = vshrl.u32 920167782, %v3209
        %v3222 = vor.u32 %v3220, %v3221
        %v3223 = vshll.u32 920167782, %v3208
        %v3224 = vshrl.u32 1326507024, %v3209
        %v3225 = vor.u32 %v3223, %v3224
        %vm3226 = vcmp.lt.s32.totalorder %v3207, 1
        %vm3227 = vcmp.lt.s32.totalorder %v3207, 2
        %vm3228 = vcmp.lt.s32.totalorder %v3207, 3
        %vm3229 = vcmp.lt.s32.totalorder %v3207, 4
        %v3230 = vsel %vm3226, %v3210, %v3213
        %v3231 = vsel %vm3229, %v3219, 2102212464
        %v3232 = vsel %vm3228, %v3216, %v3231
        %v3233 = vsel %vm3227, %v3230, %v3232
        %v3234 = vsel %vm3226, %v3213, %v3216
        %v3235 = vsel %vm3229, %v3222, 920167782
        %v3236 = vsel %vm3228, %v3219, %v3235
        %v3237 = vsel %vm3227, %v3234, %v3236
        %v3238 = vsel %vm3226, %v3216, %v3219
        %v3239 = vsel %vm3229, %v3225, 1326507024
        %v3240 = vsel %vm3228, %v3222, %v3239
        %v3241 = vsel %vm3227, %v3238, %v3240
        %v3242 = vshll.u32 %v3202, 8
        %v3243 = vmul.u32.u64.compose %v3242, %v3241
        %v3244 = vextract.low.u32 %v3243
        %v3245 = vextract.high.u32 %v3243
        %v3246 = vmul.u32.u64.compose %v3242, %v3237
        %v3247 = vextract.low.u32 %v3246
        %v3248 = vextract.high.u32 %v3246
        %v3249 = vmul.u32 %v3242, %v3233
        %v3250 = vadd.s32 %v3245, %v3247
        %vm3251 = vc.u32 %v3245, %v3247
        %v3252 = vadd.s32 %v3248, 1
        %v3253 = vsel %vm3251, %v3252, %v3248
        %v3254 = vadd.s32 %v3249, %v3253
        %v3255 = vadd.s32 %v3254, 536870912
        %v3256 = vshrl.u32 %v3255, 30
        %v3257 = vshll.u32 %v3256, 30
        %v3258 = vsub.s32 %v3254, %v3257
        %vm3259 = vcmp.lt.s32.totalorder %v3258, 0
        %v3260 = vsub.s32 0, %v3258
        %v3261 = vsel %vm3259, %v3260, %v3258
        %v3262 = vclz %v3261
        %v3263 = vsub.s32 %v3262, 2
        %vm3264 = vcmp.gt.s32.totalorder 0, %v3263
        %v3265 = vsel %vm3264, 0, %v3263
        %v3266 = vsub.s32 32, %v3265
        %v3267 = vshll.u32 %v3258, %v3265
        %v3268 = vshrl.u32 %v3250, %v3266
        %v3269 = vor.u32 %v3267, %v3268
        %v3270 = vsub.s32 4294967266, %v3265
        %v3271 = vadd.s32 %v3270, 127
        %v3272 = vshll.u32 %v3271, 23
        %v3273 = vor.u32 4788187, %v3272
        %v3274 = vand.u32 2147483647, %v3273
        %v3276 = vcvt.s32.f32 %v3269
        %v3277 = vmul.f32 %v3276, %v3274
        %v3278 = vxor.u32 %v3277, 2147483648
        %v3279 = vsel %vm3196, %v3278, %v3277
        %v3280 = vsub.s32 4, %v3256
        %v3281 = vsel %vm3196, %v3280, %v3256
        %v3282 = vsel %vm3195, %v291, %v3279
        %v3283 = vsel %vm3195, 0, %v3281
        %v3284 = vcosq.f32.pop %v3282
        %v3285 = vsinq.f32.pop %v3282
        %vm3286 = vweird.f32 %v291
        %v3287 = vand.u32 %v3283, 3
        %vm3288 = vcmp.lt.s32.totalorder %v3287, 2
        %vm3289 = vcmp.eq.s32.totalorder %v3287, 0
        %v3290 = vxor.u32 %v3285, 2147483648
        %v3291 = vsel %vm3289, %v3284, %v3290
        %vm3292 = vcmp.eq.s32.totalorder %v3287, 2
        %v3293 = vxor.u32 %v3284, 2147483648
        %v3294 = vsel %vm3292, %v3293, %v3285
        %v3295 = vsel %vm3288, %v3291, %v3294
        %v3296 = vsel %vm3286, nan, %v3295
        %v3297 = vand.u32 2147483647, %v292
        %vm3298 = vcmp.le.f32.partialorder %v3297, 0.7853982
        %vm3299 = vcmp.lt.s32.totalorder %v292, 0
        %v3300 = vand.u32 %v292, 2139095040
        %v3301 = vshrl.u32 %v3300, 23
        %v3302 = vsub.s32 %v3301, 127
        %v3303 = vand.u32 2147483647, %v292
        %v3304 = vand.u32 %v3303, 8388607
        %v3305 = vor.u32 %v3304, 8388608
        %v3306 = vsub.s32 0, %v3305
        %v3307 = vadd.s32 %v3302, 1
        %vm3308 = vcmp.gt.s32.totalorder %v3307, 0
        %v3309 = vsel %vm3308, %v3307, 0
        %v3310 = vshrl.u32 %v3309, 5
        %v3311 = vand.u32 %v3309, 31
        %v3312 = vsub.s32 32, %v3311
        %v3313 = vshrl.u32 683565275, %v3312
        %v3314 = vshll.u32 683565275, %v3311
        %v3315 = vshrl.u32 2475754826, %v3312
        %v3316 = vor.u32 %v3314, %v3315
        %v3317 = vshll.u32 2475754826, %v3311
        %v3318 = vshrl.u32 2131351028, %v3312
        %v3319 = vor.u32 %v3317, %v3318
        %v3320 = vshll.u32 2131351028, %v3311
        %v3321 = vshrl.u32 2102212464, %v3312
        %v3322 = vor.u32 %v3320, %v3321
        %v3323 = vshll.u32 2102212464, %v3311
        %v3324 = vshrl.u32 920167782, %v3312
        %v3325 = vor.u32 %v3323, %v3324
        %v3326 = vshll.u32 920167782, %v3311
        %v3327 = vshrl.u32 1326507024, %v3312
        %v3328 = vor.u32 %v3326, %v3327
        %vm3329 = vcmp.lt.s32.totalorder %v3310, 1
        %vm3330 = vcmp.lt.s32.totalorder %v3310, 2
        %vm3331 = vcmp.lt.s32.totalorder %v3310, 3
        %vm3332 = vcmp.lt.s32.totalorder %v3310, 4
        %v3333 = vsel %vm3329, %v3313, %v3316
        %v3334 = vsel %vm3332, %v3322, 2102212464
        %v3335 = vsel %vm3331, %v3319, %v3334
        %v3336 = vsel %vm3330, %v3333, %v3335
        %v3337 = vsel %vm3329, %v3316, %v3319
        %v3338 = vsel %vm3332, %v3325, 920167782
        %v3339 = vsel %vm3331, %v3322, %v3338
        %v3340 = vsel %vm3330, %v3337, %v3339
        %v3341 = vsel %vm3329, %v3319, %v3322
        %v3342 = vsel %vm3332, %v3328, 1326507024
        %v3343 = vsel %vm3331, %v3325, %v3342
        %v3344 = vsel %vm3330, %v3341, %v3343
        %v3345 = vshll.u32 %v3305, 8
        %v3346 = vmul.u32.u64.compose %v3345, %v3344
        %v3347 = vextract.low.u32 %v3346
        %v3348 = vextract.high.u32 %v3346
        %v3349 = vmul.u32.u64.compose %v3345, %v3340
        %v3350 = vextract.low.u32 %v3349
        %v3351 = vextract.high.u32 %v3349
        %v3352 = vmul.u32 %v3345, %v3336
        %v3353 = vadd.s32 %v3348, %v3350
        %vm3354 = vc.u32 %v3348, %v3350
        %v3355 = vadd.s32 %v3351, 1
        %v3356 = vsel %vm3354, %v3355, %v3351
        %v3357 = vadd.s32 %v3352, %v3356
        %v3358 = vadd.s32 %v3357, 536870912
        %v3359 = vshrl.u32 %v3358, 30
        %v3360 = vshll.u32 %v3359, 30
        %v3361 = vsub.s32 %v3357, %v3360
        %vm3362 = vcmp.lt.s32.totalorder %v3361, 0
        %v3363 = vsub.s32 0, %v3361
        %v3364 = vsel %vm3362, %v3363, %v3361
        %v3365 = vclz %v3364
        %v3366 = vsub.s32 %v3365, 2
        %vm3367 = vcmp.gt.s32.totalorder 0, %v3366
        %v3368 = vsel %vm3367, 0, %v3366
        %v3369 = vsub.s32 32, %v3368
        %v3370 = vshll.u32 %v3361, %v3368
        %v3371 = vshrl.u32 %v3353, %v3369
        %v3372 = vor.u32 %v3370, %v3371
        %v3373 = vsub.s32 4294967266, %v3368
        %v3374 = vadd.s32 %v3373, 127
        %v3375 = vshll.u32 %v3374, 23
        %v3376 = vor.u32 4788187, %v3375
        %v3377 = vand.u32 2147483647, %v3376
        %v3379 = vcvt.s32.f32 %v3372
        %v3380 = vmul.f32 %v3379, %v3377
        %v3381 = vxor.u32 %v3380, 2147483648
        %v3382 = vsel %vm3299, %v3381, %v3380
        %v3383 = vsub.s32 4, %v3359
        %v3384 = vsel %vm3299, %v3383, %v3359
        %v3385 = vsel %vm3298, %v292, %v3382
        %v3386 = vsel %vm3298, 0, %v3384
        %v3387 = vcosq.f32.pop %v3385
        %v3388 = vsinq.f32.pop %v3385
        %vm3389 = vweird.f32 %v292
        %v3390 = vand.u32 %v3386, 3
        %vm3391 = vcmp.lt.s32.totalorder %v3390, 2
        %vm3392 = vcmp.eq.s32.totalorder %v3390, 0
        %v3393 = vxor.u32 %v3388, 2147483648
        %v3394 = vsel %vm3392, %v3387, %v3393
        %vm3395 = vcmp.eq.s32.totalorder %v3390, 2
        %v3396 = vxor.u32 %v3387, 2147483648
        %v3397 = vsel %vm3395, %v3396, %v3388
        %v3398 = vsel %vm3391, %v3394, %v3397
        %v3399 = vsel %vm3389, nan, %v3398
        %v3400 = vand.u32 2147483647, %v293
        %vm3401 = vcmp.le.f32.partialorder %v3400, 0.7853982
        %vm3402 = vcmp.lt.s32.totalorder %v293, 0
        %v3403 = vand.u32 %v293, 2139095040
        %v3404 = vshrl.u32 %v3403, 23
        %v3405 = vsub.s32 %v3404, 127
        %v3406 = vand.u32 2147483647, %v293
        %v3407 = vand.u32 %v3406, 8388607
        %v3408 = vor.u32 %v3407, 8388608
        %v3409 = vsub.s32 0, %v3408
        %v3410 = vadd.s32 %v3405, 1
        %vm3411 = vcmp.gt.s32.totalorder %v3410, 0
        %v3412 = vsel %vm3411, %v3410, 0
        %v3413 = vshrl.u32 %v3412, 5
        %v3414 = vand.u32 %v3412, 31
        %v3415 = vsub.s32 32, %v3414
        %v3416 = vshrl.u32 683565275, %v3415
        %v3417 = vshll.u32 683565275, %v3414
        %v3418 = vshrl.u32 2475754826, %v3415
        %v3419 = vor.u32 %v3417, %v3418
        %v3420 = vshll.u32 2475754826, %v3414
        %v3421 = vshrl.u32 2131351028, %v3415
        %v3422 = vor.u32 %v3420, %v3421
        %v3423 = vshll.u32 2131351028, %v3414
        %v3424 = vshrl.u32 2102212464, %v3415
        %v3425 = vor.u32 %v3423, %v3424
        %v3426 = vshll.u32 2102212464, %v3414
        %v3427 = vshrl.u32 920167782, %v3415
        %v3428 = vor.u32 %v3426, %v3427
        %v3429 = vshll.u32 920167782, %v3414
        %v3430 = vshrl.u32 1326507024, %v3415
        %v3431 = vor.u32 %v3429, %v3430
        %vm3432 = vcmp.lt.s32.totalorder %v3413, 1
        %vm3433 = vcmp.lt.s32.totalorder %v3413, 2
        %vm3434 = vcmp.lt.s32.totalorder %v3413, 3
        %vm3435 = vcmp.lt.s32.totalorder %v3413, 4
        %v3436 = vsel %vm3432, %v3416, %v3419
        %v3437 = vsel %vm3435, %v3425, 2102212464
        %v3438 = vsel %vm3434, %v3422, %v3437
        %v3439 = vsel %vm3433, %v3436, %v3438
        %v3440 = vsel %vm3432, %v3419, %v3422
        %v3441 = vsel %vm3435, %v3428, 920167782
        %v3442 = vsel %vm3434, %v3425, %v3441
        %v3443 = vsel %vm3433, %v3440, %v3442
        %v3444 = vsel %vm3432, %v3422, %v3425
        %v3445 = vsel %vm3435, %v3431, 1326507024
        %v3446 = vsel %vm3434, %v3428, %v3445
        %v3447 = vsel %vm3433, %v3444, %v3446
        %v3448 = vshll.u32 %v3408, 8
        %v3449 = vmul.u32.u64.compose %v3448, %v3447
        %v3450 = vextract.low.u32 %v3449
        %v3451 = vextract.high.u32 %v3449
        %v3452 = vmul.u32.u64.compose %v3448, %v3443
        %v3453 = vextract.low.u32 %v3452
        %v3454 = vextract.high.u32 %v3452
        %v3455 = vmul.u32 %v3448, %v3439
        %v3456 = vadd.s32 %v3451, %v3453
        %vm3457 = vc.u32 %v3451, %v3453
        %v3458 = vadd.s32 %v3454, 1
        %v3459 = vsel %vm3457, %v3458, %v3454
        %v3460 = vadd.s32 %v3455, %v3459
        %v3461 = vadd.s32 %v3460, 536870912
        %v3462 = vshrl.u32 %v3461, 30
        %v3463 = vshll.u32 %v3462, 30
        %v3464 = vsub.s32 %v3460, %v3463
        %vm3465 = vcmp.lt.s32.totalorder %v3464, 0
        %v3466 = vsub.s32 0, %v3464
        %v3467 = vsel %vm3465, %v3466, %v3464
        %v3468 = vclz %v3467
        %v3469 = vsub.s32 %v3468, 2
        %vm3470 = vcmp.gt.s32.totalorder 0, %v3469
        %v3471 = vsel %vm3470, 0, %v3469
        %v3472 = vsub.s32 32, %v3471
        %v3473 = vshll.u32 %v3464, %v3471
        %v3474 = vshrl.u32 %v3456, %v3472
        %v3475 = vor.u32 %v3473, %v3474
        %v3476 = vsub.s32 4294967266, %v3471
        %v3477 = vadd.s32 %v3476, 127
        %v3478 = vshll.u32 %v3477, 23
        %v3479 = vor.u32 4788187, %v3478
        %v3480 = vand.u32 2147483647, %v3479
        %v3482 = vcvt.s32.f32 %v3475
        %v3483 = vmul.f32 %v3482, %v3480
        %v3484 = vxor.u32 %v3483, 2147483648
        %v3485 = vsel %vm3402, %v3484, %v3483
        %v3486 = vsub.s32 4, %v3462
        %v3487 = vsel %vm3402, %v3486, %v3462
        %v3488 = vsel %vm3401, %v293, %v3485
        %v3489 = vsel %vm3401, 0, %v3487
        %v3490 = vcosq.f32.pop %v3488
        %v3491 = vsinq.f32.pop %v3488
        %vm3492 = vweird.f32 %v293
        %v3493 = vand.u32 %v3489, 3
        %vm3494 = vcmp.lt.s32.totalorder %v3493, 2
        %vm3495 = vcmp.eq.s32.totalorder %v3493, 0
        %v3496 = vxor.u32 %v3491, 2147483648
        %v3497 = vsel %vm3495, %v3490, %v3496
        %vm3498 = vcmp.eq.s32.totalorder %v3493, 2
        %v3499 = vxor.u32 %v3490, 2147483648
        %v3500 = vsel %vm3498, %v3499, %v3491
        %v3501 = vsel %vm3494, %v3497, %v3500
        %v3502 = vsel %vm3492, nan, %v3501
        %v3503 = vand.u32 2147483647, %v294
        %vm3504 = vcmp.le.f32.partialorder %v3503, 0.7853982
        %vm3505 = vcmp.lt.s32.totalorder %v294, 0
        %v3506 = vand.u32 %v294, 2139095040
        %v3507 = vshrl.u32 %v3506, 23
        %v3508 = vsub.s32 %v3507, 127
        %v3509 = vand.u32 2147483647, %v294
        %v3510 = vand.u32 %v3509, 8388607
        %v3511 = vor.u32 %v3510, 8388608
        %v3512 = vsub.s32 0, %v3511
        %v3513 = vadd.s32 %v3508, 1
        %vm3514 = vcmp.gt.s32.totalorder %v3513, 0
        %v3515 = vsel %vm3514, %v3513, 0
        %v3516 = vshrl.u32 %v3515, 5
        %v3517 = vand.u32 %v3515, 31
        %v3518 = vsub.s32 32, %v3517
        %v3519 = vshrl.u32 683565275, %v3518
        %v3520 = vshll.u32 683565275, %v3517
        %v3521 = vshrl.u32 2475754826, %v3518
        %v3522 = vor.u32 %v3520, %v3521
        %v3523 = vshll.u32 2475754826, %v3517
        %v3524 = vshrl.u32 2131351028, %v3518
        %v3525 = vor.u32 %v3523, %v3524
        %v3526 = vshll.u32 2131351028, %v3517
        %v3527 = vshrl.u32 2102212464, %v3518
        %v3528 = vor.u32 %v3526, %v3527
        %v3529 = vshll.u32 2102212464, %v3517
        %v3530 = vshrl.u32 920167782, %v3518
        %v3531 = vor.u32 %v3529, %v3530
        %v3532 = vshll.u32 920167782, %v3517
        %v3533 = vshrl.u32 1326507024, %v3518
        %v3534 = vor.u32 %v3532, %v3533
        %vm3535 = vcmp.lt.s32.totalorder %v3516, 1
        %vm3536 = vcmp.lt.s32.totalorder %v3516, 2
        %vm3537 = vcmp.lt.s32.totalorder %v3516, 3
        %vm3538 = vcmp.lt.s32.totalorder %v3516, 4
        %v3539 = vsel %vm3535, %v3519, %v3522
        %v3540 = vsel %vm3538, %v3528, 2102212464
        %v3541 = vsel %vm3537, %v3525, %v3540
        %v3542 = vsel %vm3536, %v3539, %v3541
        %v3543 = vsel %vm3535, %v3522, %v3525
        %v3544 = vsel %vm3538, %v3531, 920167782
        %v3545 = vsel %vm3537, %v3528, %v3544
        %v3546 = vsel %vm3536, %v3543, %v3545
        %v3547 = vsel %vm3535, %v3525, %v3528
        %v3548 = vsel %vm3538, %v3534, 1326507024
        %v3549 = vsel %vm3537, %v3531, %v3548
        %v3550 = vsel %vm3536, %v3547, %v3549
        %v3551 = vshll.u32 %v3511, 8
        %v3552 = vmul.u32.u64.compose %v3551, %v3550
        %v3553 = vextract.low.u32 %v3552
        %v3554 = vextract.high.u32 %v3552
        %v3555 = vmul.u32.u64.compose %v3551, %v3546
        %v3556 = vextract.low.u32 %v3555
        %v3557 = vextract.high.u32 %v3555
        %v3558 = vmul.u32 %v3551, %v3542
        %v3559 = vadd.s32 %v3554, %v3556
        %vm3560 = vc.u32 %v3554, %v3556
        %v3561 = vadd.s32 %v3557, 1
        %v3562 = vsel %vm3560, %v3561, %v3557
        %v3563 = vadd.s32 %v3558, %v3562
        %v3564 = vadd.s32 %v3563, 536870912
        %v3565 = vshrl.u32 %v3564, 30
        %v3566 = vshll.u32 %v3565, 30
        %v3567 = vsub.s32 %v3563, %v3566
        %vm3568 = vcmp.lt.s32.totalorder %v3567, 0
        %v3569 = vsub.s32 0, %v3567
        %v3570 = vsel %vm3568, %v3569, %v3567
        %v3571 = vclz %v3570
        %v3572 = vsub.s32 %v3571, 2
        %vm3573 = vcmp.gt.s32.totalorder 0, %v3572
        %v3574 = vsel %vm3573, 0, %v3572
        %v3575 = vsub.s32 32, %v3574
        %v3576 = vshll.u32 %v3567, %v3574
        %v3577 = vshrl.u32 %v3559, %v3575
        %v3578 = vor.u32 %v3576, %v3577
        %v3579 = vsub.s32 4294967266, %v3574
        %v3580 = vadd.s32 %v3579, 127
        %v3581 = vshll.u32 %v3580, 23
        %v3582 = vor.u32 4788187, %v3581
        %v3583 = vand.u32 2147483647, %v3582
        %v3585 = vcvt.s32.f32 %v3578
        %v3586 = vmul.f32 %v3585, %v3583
        %v3587 = vxor.u32 %v3586, 2147483648
        %v3588 = vsel %vm3505, %v3587, %v3586
        %v3589 = vsub.s32 4, %v3565
        %v3590 = vsel %vm3505, %v3589, %v3565
        %v3591 = vsel %vm3504, %v294, %v3588
        %v3592 = vsel %vm3504, 0, %v3590
        %v3593 = vcosq.f32.pop %v3591
        %v3594 = vsinq.f32.pop %v3591
        %vm3595 = vweird.f32 %v294
        %v3596 = vand.u32 %v3592, 3
        %vm3597 = vcmp.lt.s32.totalorder %v3596, 2
        %vm3598 = vcmp.eq.s32.totalorder %v3596, 0
        %v3599 = vxor.u32 %v3594, 2147483648
        %v3600 = vsel %vm3598, %v3593, %v3599
        %vm3601 = vcmp.eq.s32.totalorder %v3596, 2
        %v3602 = vxor.u32 %v3593, 2147483648
        %v3603 = vsel %vm3601, %v3602, %v3594
        %v3604 = vsel %vm3597, %v3600, %v3603
        %v3605 = vsel %vm3595, nan, %v3604
        %v3606 = vand.u32 2147483647, %v295
        %vm3607 = vcmp.le.f32.partialorder %v3606, 0.7853982
        %vm3608 = vcmp.lt.s32.totalorder %v295, 0
        %v3609 = vand.u32 %v295, 2139095040
        %v3610 = vshrl.u32 %v3609, 23
        %v3611 = vsub.s32 %v3610, 127
        %v3612 = vand.u32 2147483647, %v295
        %v3613 = vand.u32 %v3612, 8388607
        %v3614 = vor.u32 %v3613, 8388608
        %v3615 = vsub.s32 0, %v3614
        %v3616 = vadd.s32 %v3611, 1
        %vm3617 = vcmp.gt.s32.totalorder %v3616, 0
        %v3618 = vsel %vm3617, %v3616, 0
        %v3619 = vshrl.u32 %v3618, 5
        %v3620 = vand.u32 %v3618, 31
        %v3621 = vsub.s32 32, %v3620
        %v3622 = vshrl.u32 683565275, %v3621
        %v3623 = vshll.u32 683565275, %v3620
        %v3624 = vshrl.u32 2475754826, %v3621
        %v3625 = vor.u32 %v3623, %v3624
        %v3626 = vshll.u32 2475754826, %v3620
        %v3627 = vshrl.u32 2131351028, %v3621
        %v3628 = vor.u32 %v3626, %v3627
        %v3629 = vshll.u32 2131351028, %v3620
        %v3630 = vshrl.u32 2102212464, %v3621
        %v3631 = vor.u32 %v3629, %v3630
        %v3632 = vshll.u32 2102212464, %v3620
        %v3633 = vshrl.u32 920167782, %v3621
        %v3634 = vor.u32 %v3632, %v3633
        %v3635 = vshll.u32 920167782, %v3620
        %v3636 = vshrl.u32 1326507024, %v3621
        %v3637 = vor.u32 %v3635, %v3636
        %vm3638 = vcmp.lt.s32.totalorder %v3619, 1
        %vm3639 = vcmp.lt.s32.totalorder %v3619, 2
        %vm3640 = vcmp.lt.s32.totalorder %v3619, 3
        %vm3641 = vcmp.lt.s32.totalorder %v3619, 4
        %v3642 = vsel %vm3638, %v3622, %v3625
        %v3643 = vsel %vm3641, %v3631, 2102212464
        %v3644 = vsel %vm3640, %v3628, %v3643
        %v3645 = vsel %vm3639, %v3642, %v3644
        %v3646 = vsel %vm3638, %v3625, %v3628
        %v3647 = vsel %vm3641, %v3634, 920167782
        %v3648 = vsel %vm3640, %v3631, %v3647
        %v3649 = vsel %vm3639, %v3646, %v3648
        %v3650 = vsel %vm3638, %v3628, %v3631
        %v3651 = vsel %vm3641, %v3637, 1326507024
        %v3652 = vsel %vm3640, %v3634, %v3651
        %v3653 = vsel %vm3639, %v3650, %v3652
        %v3654 = vshll.u32 %v3614, 8
        %v3655 = vmul.u32.u64.compose %v3654, %v3653
        %v3656 = vextract.low.u32 %v3655
        %v3657 = vextract.high.u32 %v3655
        %v3658 = vmul.u32.u64.compose %v3654, %v3649
        %v3659 = vextract.low.u32 %v3658
        %v3660 = vextract.high.u32 %v3658
        %v3661 = vmul.u32 %v3654, %v3645
        %v3662 = vadd.s32 %v3657, %v3659
        %vm3663 = vc.u32 %v3657, %v3659
        %v3664 = vadd.s32 %v3660, 1
        %v3665 = vsel %vm3663, %v3664, %v3660
        %v3666 = vadd.s32 %v3661, %v3665
        %v3667 = vadd.s32 %v3666, 536870912
        %v3668 = vshrl.u32 %v3667, 30
        %v3669 = vshll.u32 %v3668, 30
        %v3670 = vsub.s32 %v3666, %v3669
        %vm3671 = vcmp.lt.s32.totalorder %v3670, 0
        %v3672 = vsub.s32 0, %v3670
        %v3673 = vsel %vm3671, %v3672, %v3670
        %v3674 = vclz %v3673
        %v3675 = vsub.s32 %v3674, 2
        %vm3676 = vcmp.gt.s32.totalorder 0, %v3675
        %v3677 = vsel %vm3676, 0, %v3675
        %v3678 = vsub.s32 32, %v3677
        %v3679 = vshll.u32 %v3670, %v3677
        %v3680 = vshrl.u32 %v3662, %v3678
        %v3681 = vor.u32 %v3679, %v3680
        %v3682 = vsub.s32 4294967266, %v3677
        %v3683 = vadd.s32 %v3682, 127
        %v3684 = vshll.u32 %v3683, 23
        %v3685 = vor.u32 4788187, %v3684
        %v3686 = vand.u32 2147483647, %v3685
        %v3688 = vcvt.s32.f32 %v3681
        %v3689 = vmul.f32 %v3688, %v3686
        %v3690 = vxor.u32 %v3689, 2147483648
        %v3691 = vsel %vm3608, %v3690, %v3689
        %v3692 = vsub.s32 4, %v3668
        %v3693 = vsel %vm3608, %v3692, %v3668
        %v3694 = vsel %vm3607, %v295, %v3691
        %v3695 = vsel %vm3607, 0, %v3693
        %v3696 = vcosq.f32.pop %v3694
        %v3697 = vsinq.f32.pop %v3694
        %vm3698 = vweird.f32 %v295
        %v3699 = vand.u32 %v3695, 3
        %vm3700 = vcmp.lt.s32.totalorder %v3699, 2
        %vm3701 = vcmp.eq.s32.totalorder %v3699, 0
        %v3702 = vxor.u32 %v3697, 2147483648
        %v3703 = vsel %vm3701, %v3696, %v3702
        %vm3704 = vcmp.eq.s32.totalorder %v3699, 2
        %v3705 = vxor.u32 %v3696, 2147483648
        %v3706 = vsel %vm3704, %v3705, %v3697
        %v3707 = vsel %vm3700, %v3703, %v3706
        %v3708 = vsel %vm3698, nan, %v3707
        %v3709 = vld [vmem:[%s1 + $0x1] sm:$0x1]
        %3711 = vset.pattern.permute.xlu0 0
        %3712 = vperm.xlu0 %3711, %v2163
        %v3713 = vpop.permute.xlu0 %3712
        %3716 = vset.pattern.permute.xlu0 0
        %3717 = vperm.xlu0 %3716, %v2266
        %v3718 = vpop.permute.xlu0 %3717
        %3721 = vset.pattern.permute.xlu0 0
        %3722 = vperm.xlu0 %3721, %v2369
        %v3723 = vpop.permute.xlu0 %3722
        %3726 = vset.pattern.permute.xlu0 0
        %3727 = vperm.xlu0 %3726, %v2472
        %v3728 = vpop.permute.xlu0 %3727
        %3731 = vset.pattern.permute.xlu0 0
        %3732 = vperm.xlu0 %3731, %v2575
        %v3733 = vpop.permute.xlu0 %3732
        %3736 = vset.pattern.permute.xlu0 0
        %3737 = vperm.xlu0 %3736, %v2678
        %v3738 = vpop.permute.xlu0 %3737
        %3741 = vset.pattern.permute.xlu0 0
        %3742 = vperm.xlu0 %3741, %v2781
        %v3743 = vpop.permute.xlu0 %3742
        %3746 = vset.pattern.permute.xlu0 0
        %3747 = vperm.xlu0 %3746, %v2884
        %v3748 = vpop.permute.xlu0 %3747
        %3751 = vset.pattern.permute.xlu0 0
        %3752 = vperm.xlu0 %3751, %v2987
        %v3753 = vpop.permute.xlu0 %3752
        %3756 = vset.pattern.permute.xlu0 0
        %3757 = vperm.xlu0 %3756, %v3090
        %v3758 = vpop.permute.xlu0 %3757
        %3761 = vset.pattern.permute.xlu0 0
        %3762 = vperm.xlu0 %3761, %v3193
        %v3763 = vpop.permute.xlu0 %3762
        %3766 = vset.pattern.permute.xlu0 0
        %3767 = vperm.xlu0 %3766, %v3296
        %v3768 = vpop.permute.xlu0 %3767
        %3771 = vset.pattern.permute.xlu0 0
        %3772 = vperm.xlu0 %3771, %v3399
        %v3773 = vpop.permute.xlu0 %3772
        %3776 = vset.pattern.permute.xlu0 0
        %3777 = vperm.xlu0 %3776, %v3502
        %v3778 = vpop.permute.xlu0 %3777
        %3781 = vset.pattern.permute.xlu0 0
        %3782 = vperm.xlu0 %3781, %v3605
        %v3783 = vpop.permute.xlu0 %3782
        %3786 = vset.pattern.permute.xlu0 0
        %3787 = vperm.xlu0 %3786, %v3708
        %v3788 = vpop.permute.xlu0 %3787
        %v3790 = vlaneseq
        %v3791 = vshrl.u32 %v3790, 7
        %v3792 = vsub.s32 0, %v3791
        %v3793 = vrot.slane %v3709, %v3792
        %v3794 = vmul.f32 %v3713, %v3793
        %v3795 = vmul.f32 %v3718, %v3793
        %v3796 = vmul.f32 %v3723, %v3793
        %v3797 = vmul.f32 %v3728, %v3793
        %v3798 = vmul.f32 %v3733, %v3793
        %v3799 = vmul.f32 %v3738, %v3793
        %v3800 = vmul.f32 %v3743, %v3793
        %v3801 = vmul.f32 %v3748, %v3793
        %v3802 = vmul.f32 %v3753, %v3793
        %v3803 = vmul.f32 %v3758, %v3793
        %v3804 = vmul.f32 %v3763, %v3793
        %v3805 = vmul.f32 %v3768, %v3793
        %v3806 = vmul.f32 %v3773, %v3793
        %v3807 = vmul.f32 %v3778, %v3793
        %v3808 = vmul.f32 %v3783, %v3793
        %v3809 = vmul.f32 %v3788, %v3793
        %v3810 = vadd.f32 %v2045, %v3794
        %v3811 = vadd.f32 %v2046, %v3795
        %v3812 = vadd.f32 %v2047, %v3796
        %v3813 = vadd.f32 %v2048, %v3797
        %v3814 = vadd.f32 %v2049, %v3798
        %v3815 = vadd.f32 %v2050, %v3799
        %v3816 = vadd.f32 %v2051, %v3800
        %v3817 = vadd.f32 %v2052, %v3801
        %v3818 = vadd.f32 %v2053, %v3802
        %v3819 = vadd.f32 %v2054, %v3803
        %v3820 = vadd.f32 %v2055, %v3804
        %v3821 = vadd.f32 %v2056, %v3805
        %v3822 = vadd.f32 %v2057, %v3806
        %v3823 = vadd.f32 %v2058, %v3807
        %v3824 = vadd.f32 %v2059, %v3808
        %v3825 = vadd.f32 %v2060, %v3809
        %v3826 = vld [vmem:[%s2] sm:$0x1]
        %v3828 = vlaneseq
        %v3829 = vshrl.u32 %v3828, 7
        %v3830 = vsub.s32 0, %v3829
        %v3831 = vrot.slane %v3826, %v3830
        %v3833 = vadd.f32 %v3810, %v3831
        %v3834 = vadd.f32 %v3811, %v3831
        %v3835 = vadd.f32 %v3812, %v3831
        %v3836 = vadd.f32 %v3813, %v3831
        %v3837 = vadd.f32 %v3814, %v3831
        %v3838 = vadd.f32 %v3815, %v3831
        %v3839 = vadd.f32 %v3816, %v3831
        %v3840 = vadd.f32 %v3817, %v3831
        %v3841 = vadd.f32 %v3818, %v3831
        %v3842 = vadd.f32 %v3819, %v3831
        %v3843 = vadd.f32 %v3820, %v3831
        %v3844 = vadd.f32 %v3821, %v3831
        %v3845 = vadd.f32 %v3822, %v3831
        %v3846 = vadd.f32 %v3823, %v3831
        %v3847 = vadd.f32 %v3824, %v3831
        %v3848 = vadd.f32 %v3825, %v3831
        %v3849 = vand.u32 2147483647, %v3833
        %vm3850 = vcmp.le.f32.partialorder %v3849, 0.7853982
        %vm3851 = vcmp.lt.s32.totalorder %v3833, 0
        %v3852 = vand.u32 %v3833, 2139095040
        %v3853 = vshrl.u32 %v3852, 23
        %v3854 = vsub.s32 %v3853, 127
        %v3855 = vand.u32 2147483647, %v3833
        %v3856 = vand.u32 %v3855, 8388607
        %v3857 = vor.u32 %v3856, 8388608
        %v3858 = vsub.s32 0, %v3857
        %v3859 = vadd.s32 %v3854, 1
        %vm3860 = vcmp.gt.s32.totalorder %v3859, 0
        %v3861 = vsel %vm3860, %v3859, 0
        %v3862 = vshrl.u32 %v3861, 5
        %v3863 = vand.u32 %v3861, 31
        %v3864 = vsub.s32 32, %v3863
        %v3865 = vshrl.u32 683565275, %v3864
        %v3866 = vshll.u32 683565275, %v3863
        %v3867 = vshrl.u32 2475754826, %v3864
        %v3868 = vor.u32 %v3866, %v3867
        %v3869 = vshll.u32 2475754826, %v3863
        %v3870 = vshrl.u32 2131351028, %v3864
        %v3871 = vor.u32 %v3869, %v3870
        %v3872 = vshll.u32 2131351028, %v3863
        %v3873 = vshrl.u32 2102212464, %v3864
        %v3874 = vor.u32 %v3872, %v3873
        %v3875 = vshll.u32 2102212464, %v3863
        %v3876 = vshrl.u32 920167782, %v3864
        %v3877 = vor.u32 %v3875, %v3876
        %v3878 = vshll.u32 920167782, %v3863
        %v3879 = vshrl.u32 1326507024, %v3864
        %v3880 = vor.u32 %v3878, %v3879
        %vm3881 = vcmp.lt.s32.totalorder %v3862, 1
        %vm3882 = vcmp.lt.s32.totalorder %v3862, 2
        %vm3883 = vcmp.lt.s32.totalorder %v3862, 3
        %vm3884 = vcmp.lt.s32.totalorder %v3862, 4
        %v3885 = vsel %vm3881, %v3865, %v3868
        %v3886 = vsel %vm3884, %v3874, 2102212464
        %v3887 = vsel %vm3883, %v3871, %v3886
        %v3888 = vsel %vm3882, %v3885, %v3887
        %v3889 = vsel %vm3881, %v3868, %v3871
        %v3890 = vsel %vm3884, %v3877, 920167782
        %v3891 = vsel %vm3883, %v3874, %v3890
        %v3892 = vsel %vm3882, %v3889, %v3891
        %v3893 = vsel %vm3881, %v3871, %v3874
        %v3894 = vsel %vm3884, %v3880, 1326507024
        %v3895 = vsel %vm3883, %v3877, %v3894
        %v3896 = vsel %vm3882, %v3893, %v3895
        %v3897 = vshll.u32 %v3857, 8
        %v3898 = vmul.u32.u64.compose %v3897, %v3896
        %v3899 = vextract.low.u32 %v3898
        %v3900 = vextract.high.u32 %v3898
        %v3901 = vmul.u32.u64.compose %v3897, %v3892
        %v3902 = vextract.low.u32 %v3901
        %v3903 = vextract.high.u32 %v3901
        %v3904 = vmul.u32 %v3897, %v3888
        %v3905 = vadd.s32 %v3900, %v3902
        %vm3906 = vc.u32 %v3900, %v3902
        %v3907 = vadd.s32 %v3903, 1
        %v3908 = vsel %vm3906, %v3907, %v3903
        %v3909 = vadd.s32 %v3904, %v3908
        %v3910 = vadd.s32 %v3909, 536870912
        %v3911 = vshrl.u32 %v3910, 30
        %v3912 = vshll.u32 %v3911, 30
        %v3913 = vsub.s32 %v3909, %v3912
        %vm3914 = vcmp.lt.s32.totalorder %v3913, 0
        %v3915 = vsub.s32 0, %v3913
        %v3916 = vsel %vm3914, %v3915, %v3913
        %v3917 = vclz %v3916
        %v3918 = vsub.s32 %v3917, 2
        %vm3919 = vcmp.gt.s32.totalorder 0, %v3918
        %v3920 = vsel %vm3919, 0, %v3918
        %v3921 = vsub.s32 32, %v3920
        %v3922 = vshll.u32 %v3913, %v3920
        %v3923 = vshrl.u32 %v3905, %v3921
        %v3924 = vor.u32 %v3922, %v3923
        %v3925 = vsub.s32 4294967266, %v3920
        %v3926 = vadd.s32 %v3925, 127
        %v3927 = vshll.u32 %v3926, 23
        %v3928 = vor.u32 4788187, %v3927
        %v3929 = vand.u32 2147483647, %v3928
        %v3931 = vcvt.s32.f32 %v3924
        %v3932 = vmul.f32 %v3931, %v3929
        %v3933 = vxor.u32 %v3932, 2147483648
        %v3934 = vsel %vm3851, %v3933, %v3932
        %v3935 = vsub.s32 4, %v3911
        %v3936 = vsel %vm3851, %v3935, %v3911
        %v3937 = vsel %vm3850, %v3833, %v3934
        %v3938 = vsel %vm3850, 0, %v3936
        %v3939 = vcosq.f32.pop %v3937
        %v3940 = vsinq.f32.pop %v3937
        %vm3941 = vweird.f32 %v3833
        %v3942 = vand.u32 %v3938, 3
        %vm3943 = vcmp.lt.s32.totalorder %v3942, 2
        %vm3944 = vcmp.eq.s32.totalorder %v3942, 0
        %v3945 = vxor.u32 %v3940, 2147483648
        %v3946 = vsel %vm3944, %v3939, %v3945
        %vm3947 = vcmp.eq.s32.totalorder %v3942, 2
        %v3948 = vxor.u32 %v3939, 2147483648
        %v3949 = vsel %vm3947, %v3948, %v3940
        %v3950 = vsel %vm3943, %v3946, %v3949
        %v3951 = vsel %vm3941, nan, %v3950
        %v3952 = vand.u32 2147483647, %v3834
        %vm3953 = vcmp.le.f32.partialorder %v3952, 0.7853982
        %vm3954 = vcmp.lt.s32.totalorder %v3834, 0
        %v3955 = vand.u32 %v3834, 2139095040
        %v3956 = vshrl.u32 %v3955, 23
        %v3957 = vsub.s32 %v3956, 127
        %v3958 = vand.u32 2147483647, %v3834
        %v3959 = vand.u32 %v3958, 8388607
        %v3960 = vor.u32 %v3959, 8388608
        %v3961 = vsub.s32 0, %v3960
        %v3962 = vadd.s32 %v3957, 1
        %vm3963 = vcmp.gt.s32.totalorder %v3962, 0
        %v3964 = vsel %vm3963, %v3962, 0
        %v3965 = vshrl.u32 %v3964, 5
        %v3966 = vand.u32 %v3964, 31
        %v3967 = vsub.s32 32, %v3966
        %v3968 = vshrl.u32 683565275, %v3967
        %v3969 = vshll.u32 683565275, %v3966
        %v3970 = vshrl.u32 2475754826, %v3967
        %v3971 = vor.u32 %v3969, %v3970
        %v3972 = vshll.u32 2475754826, %v3966
        %v3973 = vshrl.u32 2131351028, %v3967
        %v3974 = vor.u32 %v3972, %v3973
        %v3975 = vshll.u32 2131351028, %v3966
        %v3976 = vshrl.u32 2102212464, %v3967
        %v3977 = vor.u32 %v3975, %v3976
        %v3978 = vshll.u32 2102212464, %v3966
        %v3979 = vshrl.u32 920167782, %v3967
        %v3980 = vor.u32 %v3978, %v3979
        %v3981 = vshll.u32 920167782, %v3966
        %v3982 = vshrl.u32 1326507024, %v3967
        %v3983 = vor.u32 %v3981, %v3982
        %vm3984 = vcmp.lt.s32.totalorder %v3965, 1
        %vm3985 = vcmp.lt.s32.totalorder %v3965, 2
        %vm3986 = vcmp.lt.s32.totalorder %v3965, 3
        %vm3987 = vcmp.lt.s32.totalorder %v3965, 4
        %v3988 = vsel %vm3984, %v3968, %v3971
        %v3989 = vsel %vm3987, %v3977, 2102212464
        %v3990 = vsel %vm3986, %v3974, %v3989
        %v3991 = vsel %vm3985, %v3988, %v3990
        %v3992 = vsel %vm3984, %v3971, %v3974
        %v3993 = vsel %vm3987, %v3980, 920167782
        %v3994 = vsel %vm3986, %v3977, %v3993
        %v3995 = vsel %vm3985, %v3992, %v3994
        %v3996 = vsel %vm3984, %v3974, %v3977
        %v3997 = vsel %vm3987, %v3983, 1326507024
        %v3998 = vsel %vm3986, %v3980, %v3997
        %v3999 = vsel %vm3985, %v3996, %v3998
        %v4000 = vshll.u32 %v3960, 8
        %v4001 = vmul.u32.u64.compose %v4000, %v3999
        %v4002 = vextract.low.u32 %v4001
        %v4003 = vextract.high.u32 %v4001
        %v4004 = vmul.u32.u64.compose %v4000, %v3995
        %v4005 = vextract.low.u32 %v4004
        %v4006 = vextract.high.u32 %v4004
        %v4007 = vmul.u32 %v4000, %v3991
        %v4008 = vadd.s32 %v4003, %v4005
        %vm4009 = vc.u32 %v4003, %v4005
        %v4010 = vadd.s32 %v4006, 1
        %v4011 = vsel %vm4009, %v4010, %v4006
        %v4012 = vadd.s32 %v4007, %v4011
        %v4013 = vadd.s32 %v4012, 536870912
        %v4014 = vshrl.u32 %v4013, 30
        %v4015 = vshll.u32 %v4014, 30
        %v4016 = vsub.s32 %v4012, %v4015
        %vm4017 = vcmp.lt.s32.totalorder %v4016, 0
        %v4018 = vsub.s32 0, %v4016
        %v4019 = vsel %vm4017, %v4018, %v4016
        %v4020 = vclz %v4019
        %v4021 = vsub.s32 %v4020, 2
        %vm4022 = vcmp.gt.s32.totalorder 0, %v4021
        %v4023 = vsel %vm4022, 0, %v4021
        %v4024 = vsub.s32 32, %v4023
        %v4025 = vshll.u32 %v4016, %v4023
        %v4026 = vshrl.u32 %v4008, %v4024
        %v4027 = vor.u32 %v4025, %v4026
        %v4028 = vsub.s32 4294967266, %v4023
        %v4029 = vadd.s32 %v4028, 127
        %v4030 = vshll.u32 %v4029, 23
        %v4031 = vor.u32 4788187, %v4030
        %v4032 = vand.u32 2147483647, %v4031
        %v4034 = vcvt.s32.f32 %v4027
        %v4035 = vmul.f32 %v4034, %v4032
        %v4036 = vxor.u32 %v4035, 2147483648
        %v4037 = vsel %vm3954, %v4036, %v4035
        %v4038 = vsub.s32 4, %v4014
        %v4039 = vsel %vm3954, %v4038, %v4014
        %v4040 = vsel %vm3953, %v3834, %v4037
        %v4041 = vsel %vm3953, 0, %v4039
        %v4042 = vcosq.f32.pop %v4040
        %v4043 = vsinq.f32.pop %v4040
        %vm4044 = vweird.f32 %v3834
        %v4045 = vand.u32 %v4041, 3
        %vm4046 = vcmp.lt.s32.totalorder %v4045, 2
        %vm4047 = vcmp.eq.s32.totalorder %v4045, 0
        %v4048 = vxor.u32 %v4043, 2147483648
        %v4049 = vsel %vm4047, %v4042, %v4048
        %vm4050 = vcmp.eq.s32.totalorder %v4045, 2
        %v4051 = vxor.u32 %v4042, 2147483648
        %v4052 = vsel %vm4050, %v4051, %v4043
        %v4053 = vsel %vm4046, %v4049, %v4052
        %v4054 = vsel %vm4044, nan, %v4053
        %v4055 = vand.u32 2147483647, %v3835
        %vm4056 = vcmp.le.f32.partialorder %v4055, 0.7853982
        %vm4057 = vcmp.lt.s32.totalorder %v3835, 0
        %v4058 = vand.u32 %v3835, 2139095040
        %v4059 = vshrl.u32 %v4058, 23
        %v4060 = vsub.s32 %v4059, 127
        %v4061 = vand.u32 2147483647, %v3835
        %v4062 = vand.u32 %v4061, 8388607
        %v4063 = vor.u32 %v4062, 8388608
        %v4064 = vsub.s32 0, %v4063
        %v4065 = vadd.s32 %v4060, 1
        %vm4066 = vcmp.gt.s32.totalorder %v4065, 0
        %v4067 = vsel %vm4066, %v4065, 0
        %v4068 = vshrl.u32 %v4067, 5
        %v4069 = vand.u32 %v4067, 31
        %v4070 = vsub.s32 32, %v4069
        %v4071 = vshrl.u32 683565275, %v4070
        %v4072 = vshll.u32 683565275, %v4069
        %v4073 = vshrl.u32 2475754826, %v4070
        %v4074 = vor.u32 %v4072, %v4073
        %v4075 = vshll.u32 2475754826, %v4069
        %v4076 = vshrl.u32 2131351028, %v4070
        %v4077 = vor.u32 %v4075, %v4076
        %v4078 = vshll.u32 2131351028, %v4069
        %v4079 = vshrl.u32 2102212464, %v4070
        %v4080 = vor.u32 %v4078, %v4079
        %v4081 = vshll.u32 2102212464, %v4069
        %v4082 = vshrl.u32 920167782, %v4070
        %v4083 = vor.u32 %v4081, %v4082
        %v4084 = vshll.u32 920167782, %v4069
        %v4085 = vshrl.u32 1326507024, %v4070
        %v4086 = vor.u32 %v4084, %v4085
        %vm4087 = vcmp.lt.s32.totalorder %v4068, 1
        %vm4088 = vcmp.lt.s32.totalorder %v4068, 2
        %vm4089 = vcmp.lt.s32.totalorder %v4068, 3
        %vm4090 = vcmp.lt.s32.totalorder %v4068, 4
        %v4091 = vsel %vm4087, %v4071, %v4074
        %v4092 = vsel %vm4090, %v4080, 2102212464
        %v4093 = vsel %vm4089, %v4077, %v4092
        %v4094 = vsel %vm4088, %v4091, %v4093
        %v4095 = vsel %vm4087, %v4074, %v4077
        %v4096 = vsel %vm4090, %v4083, 920167782
        %v4097 = vsel %vm4089, %v4080, %v4096
        %v4098 = vsel %vm4088, %v4095, %v4097
        %v4099 = vsel %vm4087, %v4077, %v4080
        %v4100 = vsel %vm4090, %v4086, 1326507024
        %v4101 = vsel %vm4089, %v4083, %v4100
        %v4102 = vsel %vm4088, %v4099, %v4101
        %v4103 = vshll.u32 %v4063, 8
        %v4104 = vmul.u32.u64.compose %v4103, %v4102
        %v4105 = vextract.low.u32 %v4104
        %v4106 = vextract.high.u32 %v4104
        %v4107 = vmul.u32.u64.compose %v4103, %v4098
        %v4108 = vextract.low.u32 %v4107
        %v4109 = vextract.high.u32 %v4107
        %v4110 = vmul.u32 %v4103, %v4094
        %v4111 = vadd.s32 %v4106, %v4108
        %vm4112 = vc.u32 %v4106, %v4108
        %v4113 = vadd.s32 %v4109, 1
        %v4114 = vsel %vm4112, %v4113, %v4109
        %v4115 = vadd.s32 %v4110, %v4114
        %v4116 = vadd.s32 %v4115, 536870912
        %v4117 = vshrl.u32 %v4116, 30
        %v4118 = vshll.u32 %v4117, 30
        %v4119 = vsub.s32 %v4115, %v4118
        %vm4120 = vcmp.lt.s32.totalorder %v4119, 0
        %v4121 = vsub.s32 0, %v4119
        %v4122 = vsel %vm4120, %v4121, %v4119
        %v4123 = vclz %v4122
        %v4124 = vsub.s32 %v4123, 2
        %vm4125 = vcmp.gt.s32.totalorder 0, %v4124
        %v4126 = vsel %vm4125, 0, %v4124
        %v4127 = vsub.s32 32, %v4126
        %v4128 = vshll.u32 %v4119, %v4126
        %v4129 = vshrl.u32 %v4111, %v4127
        %v4130 = vor.u32 %v4128, %v4129
        %v4131 = vsub.s32 4294967266, %v4126
        %v4132 = vadd.s32 %v4131, 127
        %v4133 = vshll.u32 %v4132, 23
        %v4134 = vor.u32 4788187, %v4133
        %v4135 = vand.u32 2147483647, %v4134
        %v4137 = vcvt.s32.f32 %v4130
        %v4138 = vmul.f32 %v4137, %v4135
        %v4139 = vxor.u32 %v4138, 2147483648
        %v4140 = vsel %vm4057, %v4139, %v4138
        %v4141 = vsub.s32 4, %v4117
        %v4142 = vsel %vm4057, %v4141, %v4117
        %v4143 = vsel %vm4056, %v3835, %v4140
        %v4144 = vsel %vm4056, 0, %v4142
        %v4145 = vcosq.f32.pop %v4143
        %v4146 = vsinq.f32.pop %v4143
        %vm4147 = vweird.f32 %v3835
        %v4148 = vand.u32 %v4144, 3
        %vm4149 = vcmp.lt.s32.totalorder %v4148, 2
        %vm4150 = vcmp.eq.s32.totalorder %v4148, 0
        %v4151 = vxor.u32 %v4146, 2147483648
        %v4152 = vsel %vm4150, %v4145, %v4151
        %vm4153 = vcmp.eq.s32.totalorder %v4148, 2
        %v4154 = vxor.u32 %v4145, 2147483648
        %v4155 = vsel %vm4153, %v4154, %v4146
        %v4156 = vsel %vm4149, %v4152, %v4155
        %v4157 = vsel %vm4147, nan, %v4156
        %v4158 = vand.u32 2147483647, %v3836
        %vm4159 = vcmp.le.f32.partialorder %v4158, 0.7853982
        %vm4160 = vcmp.lt.s32.totalorder %v3836, 0
        %v4161 = vand.u32 %v3836, 2139095040
        %v4162 = vshrl.u32 %v4161, 23
        %v4163 = vsub.s32 %v4162, 127
        %v4164 = vand.u32 2147483647, %v3836
        %v4165 = vand.u32 %v4164, 8388607
        %v4166 = vor.u32 %v4165, 8388608
        %v4167 = vsub.s32 0, %v4166
        %v4168 = vadd.s32 %v4163, 1
        %vm4169 = vcmp.gt.s32.totalorder %v4168, 0
        %v4170 = vsel %vm4169, %v4168, 0
        %v4171 = vshrl.u32 %v4170, 5
        %v4172 = vand.u32 %v4170, 31
        %v4173 = vsub.s32 32, %v4172
        %v4174 = vshrl.u32 683565275, %v4173
        %v4175 = vshll.u32 683565275, %v4172
        %v4176 = vshrl.u32 2475754826, %v4173
        %v4177 = vor.u32 %v4175, %v4176
        %v4178 = vshll.u32 2475754826, %v4172
        %v4179 = vshrl.u32 2131351028, %v4173
        %v4180 = vor.u32 %v4178, %v4179
        %v4181 = vshll.u32 2131351028, %v4172
        %v4182 = vshrl.u32 2102212464, %v4173
        %v4183 = vor.u32 %v4181, %v4182
        %v4184 = vshll.u32 2102212464, %v4172
        %v4185 = vshrl.u32 920167782, %v4173
        %v4186 = vor.u32 %v4184, %v4185
        %v4187 = vshll.u32 920167782, %v4172
        %v4188 = vshrl.u32 1326507024, %v4173
        %v4189 = vor.u32 %v4187, %v4188
        %vm4190 = vcmp.lt.s32.totalorder %v4171, 1
        %vm4191 = vcmp.lt.s32.totalorder %v4171, 2
        %vm4192 = vcmp.lt.s32.totalorder %v4171, 3
        %vm4193 = vcmp.lt.s32.totalorder %v4171, 4
        %v4194 = vsel %vm4190, %v4174, %v4177
        %v4195 = vsel %vm4193, %v4183, 2102212464
        %v4196 = vsel %vm4192, %v4180, %v4195
        %v4197 = vsel %vm4191, %v4194, %v4196
        %v4198 = vsel %vm4190, %v4177, %v4180
        %v4199 = vsel %vm4193, %v4186, 920167782
        %v4200 = vsel %vm4192, %v4183, %v4199
        %v4201 = vsel %vm4191, %v4198, %v4200
        %v4202 = vsel %vm4190, %v4180, %v4183
        %v4203 = vsel %vm4193, %v4189, 1326507024
        %v4204 = vsel %vm4192, %v4186, %v4203
        %v4205 = vsel %vm4191, %v4202, %v4204
        %v4206 = vshll.u32 %v4166, 8
        %v4207 = vmul.u32.u64.compose %v4206, %v4205
        %v4208 = vextract.low.u32 %v4207
        %v4209 = vextract.high.u32 %v4207
        %v4210 = vmul.u32.u64.compose %v4206, %v4201
        %v4211 = vextract.low.u32 %v4210
        %v4212 = vextract.high.u32 %v4210
        %v4213 = vmul.u32 %v4206, %v4197
        %v4214 = vadd.s32 %v4209, %v4211
        %vm4215 = vc.u32 %v4209, %v4211
        %v4216 = vadd.s32 %v4212, 1
        %v4217 = vsel %vm4215, %v4216, %v4212
        %v4218 = vadd.s32 %v4213, %v4217
        %v4219 = vadd.s32 %v4218, 536870912
        %v4220 = vshrl.u32 %v4219, 30
        %v4221 = vshll.u32 %v4220, 30
        %v4222 = vsub.s32 %v4218, %v4221
        %vm4223 = vcmp.lt.s32.totalorder %v4222, 0
        %v4224 = vsub.s32 0, %v4222
        %v4225 = vsel %vm4223, %v4224, %v4222
        %v4226 = vclz %v4225
        %v4227 = vsub.s32 %v4226, 2
        %vm4228 = vcmp.gt.s32.totalorder 0, %v4227
        %v4229 = vsel %vm4228, 0, %v4227
        %v4230 = vsub.s32 32, %v4229
        %v4231 = vshll.u32 %v4222, %v4229
        %v4232 = vshrl.u32 %v4214, %v4230
        %v4233 = vor.u32 %v4231, %v4232
        %v4234 = vsub.s32 4294967266, %v4229
        %v4235 = vadd.s32 %v4234, 127
        %v4236 = vshll.u32 %v4235, 23
        %v4237 = vor.u32 4788187, %v4236
        %v4238 = vand.u32 2147483647, %v4237
        %v4240 = vcvt.s32.f32 %v4233
        %v4241 = vmul.f32 %v4240, %v4238
        %v4242 = vxor.u32 %v4241, 2147483648
        %v4243 = vsel %vm4160, %v4242, %v4241
        %v4244 = vsub.s32 4, %v4220
        %v4245 = vsel %vm4160, %v4244, %v4220
        %v4246 = vsel %vm4159, %v3836, %v4243
        %v4247 = vsel %vm4159, 0, %v4245
        %v4248 = vcosq.f32.pop %v4246
        %v4249 = vsinq.f32.pop %v4246
        %vm4250 = vweird.f32 %v3836
        %v4251 = vand.u32 %v4247, 3
        %vm4252 = vcmp.lt.s32.totalorder %v4251, 2
        %vm4253 = vcmp.eq.s32.totalorder %v4251, 0
        %v4254 = vxor.u32 %v4249, 2147483648
        %v4255 = vsel %vm4253, %v4248, %v4254
        %vm4256 = vcmp.eq.s32.totalorder %v4251, 2
        %v4257 = vxor.u32 %v4248, 2147483648
        %v4258 = vsel %vm4256, %v4257, %v4249
        %v4259 = vsel %vm4252, %v4255, %v4258
        %v4260 = vsel %vm4250, nan, %v4259
        %v4261 = vand.u32 2147483647, %v3837
        %vm4262 = vcmp.le.f32.partialorder %v4261, 0.7853982
        %vm4263 = vcmp.lt.s32.totalorder %v3837, 0
        %v4264 = vand.u32 %v3837, 2139095040
        %v4265 = vshrl.u32 %v4264, 23
        %v4266 = vsub.s32 %v4265, 127
        %v4267 = vand.u32 2147483647, %v3837
        %v4268 = vand.u32 %v4267, 8388607
        %v4269 = vor.u32 %v4268, 8388608
        %v4270 = vsub.s32 0, %v4269
        %v4271 = vadd.s32 %v4266, 1
        %vm4272 = vcmp.gt.s32.totalorder %v4271, 0
        %v4273 = vsel %vm4272, %v4271, 0
        %v4274 = vshrl.u32 %v4273, 5
        %v4275 = vand.u32 %v4273, 31
        %v4276 = vsub.s32 32, %v4275
        %v4277 = vshrl.u32 683565275, %v4276
        %v4278 = vshll.u32 683565275, %v4275
        %v4279 = vshrl.u32 2475754826, %v4276
        %v4280 = vor.u32 %v4278, %v4279
        %v4281 = vshll.u32 2475754826, %v4275
        %v4282 = vshrl.u32 2131351028, %v4276
        %v4283 = vor.u32 %v4281, %v4282
        %v4284 = vshll.u32 2131351028, %v4275
        %v4285 = vshrl.u32 2102212464, %v4276
        %v4286 = vor.u32 %v4284, %v4285
        %v4287 = vshll.u32 2102212464, %v4275
        %v4288 = vshrl.u32 920167782, %v4276
        %v4289 = vor.u32 %v4287, %v4288
        %v4290 = vshll.u32 920167782, %v4275
        %v4291 = vshrl.u32 1326507024, %v4276
        %v4292 = vor.u32 %v4290, %v4291
        %vm4293 = vcmp.lt.s32.totalorder %v4274, 1
        %vm4294 = vcmp.lt.s32.totalorder %v4274, 2
        %vm4295 = vcmp.lt.s32.totalorder %v4274, 3
        %vm4296 = vcmp.lt.s32.totalorder %v4274, 4
        %v4297 = vsel %vm4293, %v4277, %v4280
        %v4298 = vsel %vm4296, %v4286, 2102212464
        %v4299 = vsel %vm4295, %v4283, %v4298
        %v4300 = vsel %vm4294, %v4297, %v4299
        %v4301 = vsel %vm4293, %v4280, %v4283
        %v4302 = vsel %vm4296, %v4289, 920167782
        %v4303 = vsel %vm4295, %v4286, %v4302
        %v4304 = vsel %vm4294, %v4301, %v4303
        %v4305 = vsel %vm4293, %v4283, %v4286
        %v4306 = vsel %vm4296, %v4292, 1326507024
        %v4307 = vsel %vm4295, %v4289, %v4306
        %v4308 = vsel %vm4294, %v4305, %v4307
        %v4309 = vshll.u32 %v4269, 8
        %v4310 = vmul.u32.u64.compose %v4309, %v4308
        %v4311 = vextract.low.u32 %v4310
        %v4312 = vextract.high.u32 %v4310
        %v4313 = vmul.u32.u64.compose %v4309, %v4304
        %v4314 = vextract.low.u32 %v4313
        %v4315 = vextract.high.u32 %v4313
        %v4316 = vmul.u32 %v4309, %v4300
        %v4317 = vadd.s32 %v4312, %v4314
        %vm4318 = vc.u32 %v4312, %v4314
        %v4319 = vadd.s32 %v4315, 1
        %v4320 = vsel %vm4318, %v4319, %v4315
        %v4321 = vadd.s32 %v4316, %v4320
        %v4322 = vadd.s32 %v4321, 536870912
        %v4323 = vshrl.u32 %v4322, 30
        %v4324 = vshll.u32 %v4323, 30
        %v4325 = vsub.s32 %v4321, %v4324
        %vm4326 = vcmp.lt.s32.totalorder %v4325, 0
        %v4327 = vsub.s32 0, %v4325
        %v4328 = vsel %vm4326, %v4327, %v4325
        %v4329 = vclz %v4328
        %v4330 = vsub.s32 %v4329, 2
        %vm4331 = vcmp.gt.s32.totalorder 0, %v4330
        %v4332 = vsel %vm4331, 0, %v4330
        %v4333 = vsub.s32 32, %v4332
        %v4334 = vshll.u32 %v4325, %v4332
        %v4335 = vshrl.u32 %v4317, %v4333
        %v4336 = vor.u32 %v4334, %v4335
        %v4337 = vsub.s32 4294967266, %v4332
        %v4338 = vadd.s32 %v4337, 127
        %v4339 = vshll.u32 %v4338, 23
        %v4340 = vor.u32 4788187, %v4339
        %v4341 = vand.u32 2147483647, %v4340
        %v4343 = vcvt.s32.f32 %v4336
        %v4344 = vmul.f32 %v4343, %v4341
        %v4345 = vxor.u32 %v4344, 2147483648
        %v4346 = vsel %vm4263, %v4345, %v4344
        %v4347 = vsub.s32 4, %v4323
        %v4348 = vsel %vm4263, %v4347, %v4323
        %v4349 = vsel %vm4262, %v3837, %v4346
        %v4350 = vsel %vm4262, 0, %v4348
        %v4351 = vcosq.f32.pop %v4349
        %v4352 = vsinq.f32.pop %v4349
        %vm4353 = vweird.f32 %v3837
        %v4354 = vand.u32 %v4350, 3
        %vm4355 = vcmp.lt.s32.totalorder %v4354, 2
        %vm4356 = vcmp.eq.s32.totalorder %v4354, 0
        %v4357 = vxor.u32 %v4352, 2147483648
        %v4358 = vsel %vm4356, %v4351, %v4357
        %vm4359 = vcmp.eq.s32.totalorder %v4354, 2
        %v4360 = vxor.u32 %v4351, 2147483648
        %v4361 = vsel %vm4359, %v4360, %v4352
        %v4362 = vsel %vm4355, %v4358, %v4361
        %v4363 = vsel %vm4353, nan, %v4362
        %v4364 = vand.u32 2147483647, %v3838
        %vm4365 = vcmp.le.f32.partialorder %v4364, 0.7853982
        %vm4366 = vcmp.lt.s32.totalorder %v3838, 0
        %v4367 = vand.u32 %v3838, 2139095040
        %v4368 = vshrl.u32 %v4367, 23
        %v4369 = vsub.s32 %v4368, 127
        %v4370 = vand.u32 2147483647, %v3838
        %v4371 = vand.u32 %v4370, 8388607
        %v4372 = vor.u32 %v4371, 8388608
        %v4373 = vsub.s32 0, %v4372
        %v4374 = vadd.s32 %v4369, 1
        %vm4375 = vcmp.gt.s32.totalorder %v4374, 0
        %v4376 = vsel %vm4375, %v4374, 0
        %v4377 = vshrl.u32 %v4376, 5
        %v4378 = vand.u32 %v4376, 31
        %v4379 = vsub.s32 32, %v4378
        %v4380 = vshrl.u32 683565275, %v4379
        %v4381 = vshll.u32 683565275, %v4378
        %v4382 = vshrl.u32 2475754826, %v4379
        %v4383 = vor.u32 %v4381, %v4382
        %v4384 = vshll.u32 2475754826, %v4378
        %v4385 = vshrl.u32 2131351028, %v4379
        %v4386 = vor.u32 %v4384, %v4385
        %v4387 = vshll.u32 2131351028, %v4378
        %v4388 = vshrl.u32 2102212464, %v4379
        %v4389 = vor.u32 %v4387, %v4388
        %v4390 = vshll.u32 2102212464, %v4378
        %v4391 = vshrl.u32 920167782, %v4379
        %v4392 = vor.u32 %v4390, %v4391
        %v4393 = vshll.u32 920167782, %v4378
        %v4394 = vshrl.u32 1326507024, %v4379
        %v4395 = vor.u32 %v4393, %v4394
        %vm4396 = vcmp.lt.s32.totalorder %v4377, 1
        %vm4397 = vcmp.lt.s32.totalorder %v4377, 2
        %vm4398 = vcmp.lt.s32.totalorder %v4377, 3
        %vm4399 = vcmp.lt.s32.totalorder %v4377, 4
        %v4400 = vsel %vm4396, %v4380, %v4383
        %v4401 = vsel %vm4399, %v4389, 2102212464
        %v4402 = vsel %vm4398, %v4386, %v4401
        %v4403 = vsel %vm4397, %v4400, %v4402
        %v4404 = vsel %vm4396, %v4383, %v4386
        %v4405 = vsel %vm4399, %v4392, 920167782
        %v4406 = vsel %vm4398, %v4389, %v4405
        %v4407 = vsel %vm4397, %v4404, %v4406
        %v4408 = vsel %vm4396, %v4386, %v4389
        %v4409 = vsel %vm4399, %v4395, 1326507024
        %v4410 = vsel %vm4398, %v4392, %v4409
        %v4411 = vsel %vm4397, %v4408, %v4410
        %v4412 = vshll.u32 %v4372, 8
        %v4413 = vmul.u32.u64.compose %v4412, %v4411
        %v4414 = vextract.low.u32 %v4413
        %v4415 = vextract.high.u32 %v4413
        %v4416 = vmul.u32.u64.compose %v4412, %v4407
        %v4417 = vextract.low.u32 %v4416
        %v4418 = vextract.high.u32 %v4416
        %v4419 = vmul.u32 %v4412, %v4403
        %v4420 = vadd.s32 %v4415, %v4417
        %vm4421 = vc.u32 %v4415, %v4417
        %v4422 = vadd.s32 %v4418, 1
        %v4423 = vsel %vm4421, %v4422, %v4418
        %v4424 = vadd.s32 %v4419, %v4423
        %v4425 = vadd.s32 %v4424, 536870912
        %v4426 = vshrl.u32 %v4425, 30
        %v4427 = vshll.u32 %v4426, 30
        %v4428 = vsub.s32 %v4424, %v4427
        %vm4429 = vcmp.lt.s32.totalorder %v4428, 0
        %v4430 = vsub.s32 0, %v4428
        %v4431 = vsel %vm4429, %v4430, %v4428
        %v4432 = vclz %v4431
        %v4433 = vsub.s32 %v4432, 2
        %vm4434 = vcmp.gt.s32.totalorder 0, %v4433
        %v4435 = vsel %vm4434, 0, %v4433
        %v4436 = vsub.s32 32, %v4435
        %v4437 = vshll.u32 %v4428, %v4435
        %v4438 = vshrl.u32 %v4420, %v4436
        %v4439 = vor.u32 %v4437, %v4438
        %v4440 = vsub.s32 4294967266, %v4435
        %v4441 = vadd.s32 %v4440, 127
        %v4442 = vshll.u32 %v4441, 23
        %v4443 = vor.u32 4788187, %v4442
        %v4444 = vand.u32 2147483647, %v4443
        %v4446 = vcvt.s32.f32 %v4439
        %v4447 = vmul.f32 %v4446, %v4444
        %v4448 = vxor.u32 %v4447, 2147483648
        %v4449 = vsel %vm4366, %v4448, %v4447
        %v4450 = vsub.s32 4, %v4426
        %v4451 = vsel %vm4366, %v4450, %v4426
        %v4452 = vsel %vm4365, %v3838, %v4449
        %v4453 = vsel %vm4365, 0, %v4451
        %v4454 = vcosq.f32.pop %v4452
        %v4455 = vsinq.f32.pop %v4452
        %vm4456 = vweird.f32 %v3838
        %v4457 = vand.u32 %v4453, 3
        %vm4458 = vcmp.lt.s32.totalorder %v4457, 2
        %vm4459 = vcmp.eq.s32.totalorder %v4457, 0
        %v4460 = vxor.u32 %v4455, 2147483648
        %v4461 = vsel %vm4459, %v4454, %v4460
        %vm4462 = vcmp.eq.s32.totalorder %v4457, 2
        %v4463 = vxor.u32 %v4454, 2147483648
        %v4464 = vsel %vm4462, %v4463, %v4455
        %v4465 = vsel %vm4458, %v4461, %v4464
        %v4466 = vsel %vm4456, nan, %v4465
        %v4467 = vand.u32 2147483647, %v3839
        %vm4468 = vcmp.le.f32.partialorder %v4467, 0.7853982
        %vm4469 = vcmp.lt.s32.totalorder %v3839, 0
        %v4470 = vand.u32 %v3839, 2139095040
        %v4471 = vshrl.u32 %v4470, 23
        %v4472 = vsub.s32 %v4471, 127
        %v4473 = vand.u32 2147483647, %v3839
        %v4474 = vand.u32 %v4473, 8388607
        %v4475 = vor.u32 %v4474, 8388608
        %v4476 = vsub.s32 0, %v4475
        %v4477 = vadd.s32 %v4472, 1
        %vm4478 = vcmp.gt.s32.totalorder %v4477, 0
        %v4479 = vsel %vm4478, %v4477, 0
        %v4480 = vshrl.u32 %v4479, 5
        %v4481 = vand.u32 %v4479, 31
        %v4482 = vsub.s32 32, %v4481
        %v4483 = vshrl.u32 683565275, %v4482
        %v4484 = vshll.u32 683565275, %v4481
        %v4485 = vshrl.u32 2475754826, %v4482
        %v4486 = vor.u32 %v4484, %v4485
        %v4487 = vshll.u32 2475754826, %v4481
        %v4488 = vshrl.u32 2131351028, %v4482
        %v4489 = vor.u32 %v4487, %v4488
        %v4490 = vshll.u32 2131351028, %v4481
        %v4491 = vshrl.u32 2102212464, %v4482
        %v4492 = vor.u32 %v4490, %v4491
        %v4493 = vshll.u32 2102212464, %v4481
        %v4494 = vshrl.u32 920167782, %v4482
        %v4495 = vor.u32 %v4493, %v4494
        %v4496 = vshll.u32 920167782, %v4481
        %v4497 = vshrl.u32 1326507024, %v4482
        %v4498 = vor.u32 %v4496, %v4497
        %vm4499 = vcmp.lt.s32.totalorder %v4480, 1
        %vm4500 = vcmp.lt.s32.totalorder %v4480, 2
        %vm4501 = vcmp.lt.s32.totalorder %v4480, 3
        %vm4502 = vcmp.lt.s32.totalorder %v4480, 4
        %v4503 = vsel %vm4499, %v4483, %v4486
        %v4504 = vsel %vm4502, %v4492, 2102212464
        %v4505 = vsel %vm4501, %v4489, %v4504
        %v4506 = vsel %vm4500, %v4503, %v4505
        %v4507 = vsel %vm4499, %v4486, %v4489
        %v4508 = vsel %vm4502, %v4495, 920167782
        %v4509 = vsel %vm4501, %v4492, %v4508
        %v4510 = vsel %vm4500, %v4507, %v4509
        %v4511 = vsel %vm4499, %v4489, %v4492
        %v4512 = vsel %vm4502, %v4498, 1326507024
        %v4513 = vsel %vm4501, %v4495, %v4512
        %v4514 = vsel %vm4500, %v4511, %v4513
        %v4515 = vshll.u32 %v4475, 8
        %v4516 = vmul.u32.u64.compose %v4515, %v4514
        %v4517 = vextract.low.u32 %v4516
        %v4518 = vextract.high.u32 %v4516
        %v4519 = vmul.u32.u64.compose %v4515, %v4510
        %v4520 = vextract.low.u32 %v4519
        %v4521 = vextract.high.u32 %v4519
        %v4522 = vmul.u32 %v4515, %v4506
        %v4523 = vadd.s32 %v4518, %v4520
        %vm4524 = vc.u32 %v4518, %v4520
        %v4525 = vadd.s32 %v4521, 1
        %v4526 = vsel %vm4524, %v4525, %v4521
        %v4527 = vadd.s32 %v4522, %v4526
        %v4528 = vadd.s32 %v4527, 536870912
        %v4529 = vshrl.u32 %v4528, 30
        %v4530 = vshll.u32 %v4529, 30
        %v4531 = vsub.s32 %v4527, %v4530
        %vm4532 = vcmp.lt.s32.totalorder %v4531, 0
        %v4533 = vsub.s32 0, %v4531
        %v4534 = vsel %vm4532, %v4533, %v4531
        %v4535 = vclz %v4534
        %v4536 = vsub.s32 %v4535, 2
        %vm4537 = vcmp.gt.s32.totalorder 0, %v4536
        %v4538 = vsel %vm4537, 0, %v4536
        %v4539 = vsub.s32 32, %v4538
        %v4540 = vshll.u32 %v4531, %v4538
        %v4541 = vshrl.u32 %v4523, %v4539
        %v4542 = vor.u32 %v4540, %v4541
        %v4543 = vsub.s32 4294967266, %v4538
        %v4544 = vadd.s32 %v4543, 127
        %v4545 = vshll.u32 %v4544, 23
        %v4546 = vor.u32 4788187, %v4545
        %v4547 = vand.u32 2147483647, %v4546
        %v4549 = vcvt.s32.f32 %v4542
        %v4550 = vmul.f32 %v4549, %v4547
        %v4551 = vxor.u32 %v4550, 2147483648
        %v4552 = vsel %vm4469, %v4551, %v4550
        %v4553 = vsub.s32 4, %v4529
        %v4554 = vsel %vm4469, %v4553, %v4529
        %v4555 = vsel %vm4468, %v3839, %v4552
        %v4556 = vsel %vm4468, 0, %v4554
        %v4557 = vcosq.f32.pop %v4555
        %v4558 = vsinq.f32.pop %v4555
        %vm4559 = vweird.f32 %v3839
        %v4560 = vand.u32 %v4556, 3
        %vm4561 = vcmp.lt.s32.totalorder %v4560, 2
        %vm4562 = vcmp.eq.s32.totalorder %v4560, 0
        %v4563 = vxor.u32 %v4558, 2147483648
        %v4564 = vsel %vm4562, %v4557, %v4563
        %vm4565 = vcmp.eq.s32.totalorder %v4560, 2
        %v4566 = vxor.u32 %v4557, 2147483648
        %v4567 = vsel %vm4565, %v4566, %v4558
        %v4568 = vsel %vm4561, %v4564, %v4567
        %v4569 = vsel %vm4559, nan, %v4568
        %v4570 = vand.u32 2147483647, %v3840
        %vm4571 = vcmp.le.f32.partialorder %v4570, 0.7853982
        %vm4572 = vcmp.lt.s32.totalorder %v3840, 0
        %v4573 = vand.u32 %v3840, 2139095040
        %v4574 = vshrl.u32 %v4573, 23
        %v4575 = vsub.s32 %v4574, 127
        %v4576 = vand.u32 2147483647, %v3840
        %v4577 = vand.u32 %v4576, 8388607
        %v4578 = vor.u32 %v4577, 8388608
        %v4579 = vsub.s32 0, %v4578
        %v4580 = vadd.s32 %v4575, 1
        %vm4581 = vcmp.gt.s32.totalorder %v4580, 0
        %v4582 = vsel %vm4581, %v4580, 0
        %v4583 = vshrl.u32 %v4582, 5
        %v4584 = vand.u32 %v4582, 31
        %v4585 = vsub.s32 32, %v4584
        %v4586 = vshrl.u32 683565275, %v4585
        %v4587 = vshll.u32 683565275, %v4584
        %v4588 = vshrl.u32 2475754826, %v4585
        %v4589 = vor.u32 %v4587, %v4588
        %v4590 = vshll.u32 2475754826, %v4584
        %v4591 = vshrl.u32 2131351028, %v4585
        %v4592 = vor.u32 %v4590, %v4591
        %v4593 = vshll.u32 2131351028, %v4584
        %v4594 = vshrl.u32 2102212464, %v4585
        %v4595 = vor.u32 %v4593, %v4594
        %v4596 = vshll.u32 2102212464, %v4584
        %v4597 = vshrl.u32 920167782, %v4585
        %v4598 = vor.u32 %v4596, %v4597
        %v4599 = vshll.u32 920167782, %v4584
        %v4600 = vshrl.u32 1326507024, %v4585
        %v4601 = vor.u32 %v4599, %v4600
        %vm4602 = vcmp.lt.s32.totalorder %v4583, 1
        %vm4603 = vcmp.lt.s32.totalorder %v4583, 2
        %vm4604 = vcmp.lt.s32.totalorder %v4583, 3
        %vm4605 = vcmp.lt.s32.totalorder %v4583, 4
        %v4606 = vsel %vm4602, %v4586, %v4589
        %v4607 = vsel %vm4605, %v4595, 2102212464
        %v4608 = vsel %vm4604, %v4592, %v4607
        %v4609 = vsel %vm4603, %v4606, %v4608
        %v4610 = vsel %vm4602, %v4589, %v4592
        %v4611 = vsel %vm4605, %v4598, 920167782
        %v4612 = vsel %vm4604, %v4595, %v4611
        %v4613 = vsel %vm4603, %v4610, %v4612
        %v4614 = vsel %vm4602, %v4592, %v4595
        %v4615 = vsel %vm4605, %v4601, 1326507024
        %v4616 = vsel %vm4604, %v4598, %v4615
        %v4617 = vsel %vm4603, %v4614, %v4616
        %v4618 = vshll.u32 %v4578, 8
        %v4619 = vmul.u32.u64.compose %v4618, %v4617
        %v4620 = vextract.low.u32 %v4619
        %v4621 = vextract.high.u32 %v4619
        %v4622 = vmul.u32.u64.compose %v4618, %v4613
        %v4623 = vextract.low.u32 %v4622
        %v4624 = vextract.high.u32 %v4622
        %v4625 = vmul.u32 %v4618, %v4609
        %v4626 = vadd.s32 %v4621, %v4623
        %vm4627 = vc.u32 %v4621, %v4623
        %v4628 = vadd.s32 %v4624, 1
        %v4629 = vsel %vm4627, %v4628, %v4624
        %v4630 = vadd.s32 %v4625, %v4629
        %v4631 = vadd.s32 %v4630, 536870912
        %v4632 = vshrl.u32 %v4631, 30
        %v4633 = vshll.u32 %v4632, 30
        %v4634 = vsub.s32 %v4630, %v4633
        %vm4635 = vcmp.lt.s32.totalorder %v4634, 0
        %v4636 = vsub.s32 0, %v4634
        %v4637 = vsel %vm4635, %v4636, %v4634
        %v4638 = vclz %v4637
        %v4639 = vsub.s32 %v4638, 2
        %vm4640 = vcmp.gt.s32.totalorder 0, %v4639
        %v4641 = vsel %vm4640, 0, %v4639
        %v4642 = vsub.s32 32, %v4641
        %v4643 = vshll.u32 %v4634, %v4641
        %v4644 = vshrl.u32 %v4626, %v4642
        %v4645 = vor.u32 %v4643, %v4644
        %v4646 = vsub.s32 4294967266, %v4641
        %v4647 = vadd.s32 %v4646, 127
        %v4648 = vshll.u32 %v4647, 23
        %v4649 = vor.u32 4788187, %v4648
        %v4650 = vand.u32 2147483647, %v4649
        %v4652 = vcvt.s32.f32 %v4645
        %v4653 = vmul.f32 %v4652, %v4650
        %v4654 = vxor.u32 %v4653, 2147483648
        %v4655 = vsel %vm4572, %v4654, %v4653
        %v4656 = vsub.s32 4, %v4632
        %v4657 = vsel %vm4572, %v4656, %v4632
        %v4658 = vsel %vm4571, %v3840, %v4655
        %v4659 = vsel %vm4571, 0, %v4657
        %v4660 = vcosq.f32.pop %v4658
        %v4661 = vsinq.f32.pop %v4658
        %vm4662 = vweird.f32 %v3840
        %v4663 = vand.u32 %v4659, 3
        %vm4664 = vcmp.lt.s32.totalorder %v4663, 2
        %vm4665 = vcmp.eq.s32.totalorder %v4663, 0
        %v4666 = vxor.u32 %v4661, 2147483648
        %v4667 = vsel %vm4665, %v4660, %v4666
        %vm4668 = vcmp.eq.s32.totalorder %v4663, 2
        %v4669 = vxor.u32 %v4660, 2147483648
        %v4670 = vsel %vm4668, %v4669, %v4661
        %v4671 = vsel %vm4664, %v4667, %v4670
        %v4672 = vsel %vm4662, nan, %v4671
        %v4673 = vand.u32 2147483647, %v3841
        %vm4674 = vcmp.le.f32.partialorder %v4673, 0.7853982
        %vm4675 = vcmp.lt.s32.totalorder %v3841, 0
        %v4676 = vand.u32 %v3841, 2139095040
        %v4677 = vshrl.u32 %v4676, 23
        %v4678 = vsub.s32 %v4677, 127
        %v4679 = vand.u32 2147483647, %v3841
        %v4680 = vand.u32 %v4679, 8388607
        %v4681 = vor.u32 %v4680, 8388608
        %v4682 = vsub.s32 0, %v4681
        %v4683 = vadd.s32 %v4678, 1
        %vm4684 = vcmp.gt.s32.totalorder %v4683, 0
        %v4685 = vsel %vm4684, %v4683, 0
        %v4686 = vshrl.u32 %v4685, 5
        %v4687 = vand.u32 %v4685, 31
        %v4688 = vsub.s32 32, %v4687
        %v4689 = vshrl.u32 683565275, %v4688
        %v4690 = vshll.u32 683565275, %v4687
        %v4691 = vshrl.u32 2475754826, %v4688
        %v4692 = vor.u32 %v4690, %v4691
        %v4693 = vshll.u32 2475754826, %v4687
        %v4694 = vshrl.u32 2131351028, %v4688
        %v4695 = vor.u32 %v4693, %v4694
        %v4696 = vshll.u32 2131351028, %v4687
        %v4697 = vshrl.u32 2102212464, %v4688
        %v4698 = vor.u32 %v4696, %v4697
        %v4699 = vshll.u32 2102212464, %v4687
        %v4700 = vshrl.u32 920167782, %v4688
        %v4701 = vor.u32 %v4699, %v4700
        %v4702 = vshll.u32 920167782, %v4687
        %v4703 = vshrl.u32 1326507024, %v4688
        %v4704 = vor.u32 %v4702, %v4703
        %vm4705 = vcmp.lt.s32.totalorder %v4686, 1
        %vm4706 = vcmp.lt.s32.totalorder %v4686, 2
        %vm4707 = vcmp.lt.s32.totalorder %v4686, 3
        %vm4708 = vcmp.lt.s32.totalorder %v4686, 4
        %v4709 = vsel %vm4705, %v4689, %v4692
        %v4710 = vsel %vm4708, %v4698, 2102212464
        %v4711 = vsel %vm4707, %v4695, %v4710
        %v4712 = vsel %vm4706, %v4709, %v4711
        %v4713 = vsel %vm4705, %v4692, %v4695
        %v4714 = vsel %vm4708, %v4701, 920167782
        %v4715 = vsel %vm4707, %v4698, %v4714
        %v4716 = vsel %vm4706, %v4713, %v4715
        %v4717 = vsel %vm4705, %v4695, %v4698
        %v4718 = vsel %vm4708, %v4704, 1326507024
        %v4719 = vsel %vm4707, %v4701, %v4718
        %v4720 = vsel %vm4706, %v4717, %v4719
        %v4721 = vshll.u32 %v4681, 8
        %v4722 = vmul.u32.u64.compose %v4721, %v4720
        %v4723 = vextract.low.u32 %v4722
        %v4724 = vextract.high.u32 %v4722
        %v4725 = vmul.u32.u64.compose %v4721, %v4716
        %v4726 = vextract.low.u32 %v4725
        %v4727 = vextract.high.u32 %v4725
        %v4728 = vmul.u32 %v4721, %v4712
        %v4729 = vadd.s32 %v4724, %v4726
        %vm4730 = vc.u32 %v4724, %v4726
        %v4731 = vadd.s32 %v4727, 1
        %v4732 = vsel %vm4730, %v4731, %v4727
        %v4733 = vadd.s32 %v4728, %v4732
        %v4734 = vadd.s32 %v4733, 536870912
        %v4735 = vshrl.u32 %v4734, 30
        %v4736 = vshll.u32 %v4735, 30
        %v4737 = vsub.s32 %v4733, %v4736
        %vm4738 = vcmp.lt.s32.totalorder %v4737, 0
        %v4739 = vsub.s32 0, %v4737
        %v4740 = vsel %vm4738, %v4739, %v4737
        %v4741 = vclz %v4740
        %v4742 = vsub.s32 %v4741, 2
        %vm4743 = vcmp.gt.s32.totalorder 0, %v4742
        %v4744 = vsel %vm4743, 0, %v4742
        %v4745 = vsub.s32 32, %v4744
        %v4746 = vshll.u32 %v4737, %v4744
        %v4747 = vshrl.u32 %v4729, %v4745
        %v4748 = vor.u32 %v4746, %v4747
        %v4749 = vsub.s32 4294967266, %v4744
        %v4750 = vadd.s32 %v4749, 127
        %v4751 = vshll.u32 %v4750, 23
        %v4752 = vor.u32 4788187, %v4751
        %v4753 = vand.u32 2147483647, %v4752
        %v4755 = vcvt.s32.f32 %v4748
        %v4756 = vmul.f32 %v4755, %v4753
        %v4757 = vxor.u32 %v4756, 2147483648
        %v4758 = vsel %vm4675, %v4757, %v4756
        %v4759 = vsub.s32 4, %v4735
        %v4760 = vsel %vm4675, %v4759, %v4735
        %v4761 = vsel %vm4674, %v3841, %v4758
        %v4762 = vsel %vm4674, 0, %v4760
        %v4763 = vcosq.f32.pop %v4761
        %v4764 = vsinq.f32.pop %v4761
        %vm4765 = vweird.f32 %v3841
        %v4766 = vand.u32 %v4762, 3
        %vm4767 = vcmp.lt.s32.totalorder %v4766, 2
        %vm4768 = vcmp.eq.s32.totalorder %v4766, 0
        %v4769 = vxor.u32 %v4764, 2147483648
        %v4770 = vsel %vm4768, %v4763, %v4769
        %vm4771 = vcmp.eq.s32.totalorder %v4766, 2
        %v4772 = vxor.u32 %v4763, 2147483648
        %v4773 = vsel %vm4771, %v4772, %v4764
        %v4774 = vsel %vm4767, %v4770, %v4773
        %v4775 = vsel %vm4765, nan, %v4774
        %v4776 = vand.u32 2147483647, %v3842
        %vm4777 = vcmp.le.f32.partialorder %v4776, 0.7853982
        %vm4778 = vcmp.lt.s32.totalorder %v3842, 0
        %v4779 = vand.u32 %v3842, 2139095040
        %v4780 = vshrl.u32 %v4779, 23
        %v4781 = vsub.s32 %v4780, 127
        %v4782 = vand.u32 2147483647, %v3842
        %v4783 = vand.u32 %v4782, 8388607
        %v4784 = vor.u32 %v4783, 8388608
        %v4785 = vsub.s32 0, %v4784
        %v4786 = vadd.s32 %v4781, 1
        %vm4787 = vcmp.gt.s32.totalorder %v4786, 0
        %v4788 = vsel %vm4787, %v4786, 0
        %v4789 = vshrl.u32 %v4788, 5
        %v4790 = vand.u32 %v4788, 31
        %v4791 = vsub.s32 32, %v4790
        %v4792 = vshrl.u32 683565275, %v4791
        %v4793 = vshll.u32 683565275, %v4790
        %v4794 = vshrl.u32 2475754826, %v4791
        %v4795 = vor.u32 %v4793, %v4794
        %v4796 = vshll.u32 2475754826, %v4790
        %v4797 = vshrl.u32 2131351028, %v4791
        %v4798 = vor.u32 %v4796, %v4797
        %v4799 = vshll.u32 2131351028, %v4790
        %v4800 = vshrl.u32 2102212464, %v4791
        %v4801 = vor.u32 %v4799, %v4800
        %v4802 = vshll.u32 2102212464, %v4790
        %v4803 = vshrl.u32 920167782, %v4791
        %v4804 = vor.u32 %v4802, %v4803
        %v4805 = vshll.u32 920167782, %v4790
        %v4806 = vshrl.u32 1326507024, %v4791
        %v4807 = vor.u32 %v4805, %v4806
        %vm4808 = vcmp.lt.s32.totalorder %v4789, 1
        %vm4809 = vcmp.lt.s32.totalorder %v4789, 2
        %vm4810 = vcmp.lt.s32.totalorder %v4789, 3
        %vm4811 = vcmp.lt.s32.totalorder %v4789, 4
        %v4812 = vsel %vm4808, %v4792, %v4795
        %v4813 = vsel %vm4811, %v4801, 2102212464
        %v4814 = vsel %vm4810, %v4798, %v4813
        %v4815 = vsel %vm4809, %v4812, %v4814
        %v4816 = vsel %vm4808, %v4795, %v4798
        %v4817 = vsel %vm4811, %v4804, 920167782
        %v4818 = vsel %vm4810, %v4801, %v4817
        %v4819 = vsel %vm4809, %v4816, %v4818
        %v4820 = vsel %vm4808, %v4798, %v4801
        %v4821 = vsel %vm4811, %v4807, 1326507024
        %v4822 = vsel %vm4810, %v4804, %v4821
        %v4823 = vsel %vm4809, %v4820, %v4822
        %v4824 = vshll.u32 %v4784, 8
        %v4825 = vmul.u32.u64.compose %v4824, %v4823
        %v4826 = vextract.low.u32 %v4825
        %v4827 = vextract.high.u32 %v4825
        %v4828 = vmul.u32.u64.compose %v4824, %v4819
        %v4829 = vextract.low.u32 %v4828
        %v4830 = vextract.high.u32 %v4828
        %v4831 = vmul.u32 %v4824, %v4815
        %v4832 = vadd.s32 %v4827, %v4829
        %vm4833 = vc.u32 %v4827, %v4829
        %v4834 = vadd.s32 %v4830, 1
        %v4835 = vsel %vm4833, %v4834, %v4830
        %v4836 = vadd.s32 %v4831, %v4835
        %v4837 = vadd.s32 %v4836, 536870912
        %v4838 = vshrl.u32 %v4837, 30
        %v4839 = vshll.u32 %v4838, 30
        %v4840 = vsub.s32 %v4836, %v4839
        %vm4841 = vcmp.lt.s32.totalorder %v4840, 0
        %v4842 = vsub.s32 0, %v4840
        %v4843 = vsel %vm4841, %v4842, %v4840
        %v4844 = vclz %v4843
        %v4845 = vsub.s32 %v4844, 2
        %vm4846 = vcmp.gt.s32.totalorder 0, %v4845
        %v4847 = vsel %vm4846, 0, %v4845
        %v4848 = vsub.s32 32, %v4847
        %v4849 = vshll.u32 %v4840, %v4847
        %v4850 = vshrl.u32 %v4832, %v4848
        %v4851 = vor.u32 %v4849, %v4850
        %v4852 = vsub.s32 4294967266, %v4847
        %v4853 = vadd.s32 %v4852, 127
        %v4854 = vshll.u32 %v4853, 23
        %v4855 = vor.u32 4788187, %v4854
        %v4856 = vand.u32 2147483647, %v4855
        %v4858 = vcvt.s32.f32 %v4851
        %v4859 = vmul.f32 %v4858, %v4856
        %v4860 = vxor.u32 %v4859, 2147483648
        %v4861 = vsel %vm4778, %v4860, %v4859
        %v4862 = vsub.s32 4, %v4838
        %v4863 = vsel %vm4778, %v4862, %v4838
        %v4864 = vsel %vm4777, %v3842, %v4861
        %v4865 = vsel %vm4777, 0, %v4863
        %v4866 = vcosq.f32.pop %v4864
        %v4867 = vsinq.f32.pop %v4864
        %vm4868 = vweird.f32 %v3842
        %v4869 = vand.u32 %v4865, 3
        %vm4870 = vcmp.lt.s32.totalorder %v4869, 2
        %vm4871 = vcmp.eq.s32.totalorder %v4869, 0
        %v4872 = vxor.u32 %v4867, 2147483648
        %v4873 = vsel %vm4871, %v4866, %v4872
        %vm4874 = vcmp.eq.s32.totalorder %v4869, 2
        %v4875 = vxor.u32 %v4866, 2147483648
        %v4876 = vsel %vm4874, %v4875, %v4867
        %v4877 = vsel %vm4870, %v4873, %v4876
        %v4878 = vsel %vm4868, nan, %v4877
        %v4879 = vand.u32 2147483647, %v3843
        %vm4880 = vcmp.le.f32.partialorder %v4879, 0.7853982
        %vm4881 = vcmp.lt.s32.totalorder %v3843, 0
        %v4882 = vand.u32 %v3843, 2139095040
        %v4883 = vshrl.u32 %v4882, 23
        %v4884 = vsub.s32 %v4883, 127
        %v4885 = vand.u32 2147483647, %v3843
        %v4886 = vand.u32 %v4885, 8388607
        %v4887 = vor.u32 %v4886, 8388608
        %v4888 = vsub.s32 0, %v4887
        %v4889 = vadd.s32 %v4884, 1
        %vm4890 = vcmp.gt.s32.totalorder %v4889, 0
        %v4891 = vsel %vm4890, %v4889, 0
        %v4892 = vshrl.u32 %v4891, 5
        %v4893 = vand.u32 %v4891, 31
        %v4894 = vsub.s32 32, %v4893
        %v4895 = vshrl.u32 683565275, %v4894
        %v4896 = vshll.u32 683565275, %v4893
        %v4897 = vshrl.u32 2475754826, %v4894
        %v4898 = vor.u32 %v4896, %v4897
        %v4899 = vshll.u32 2475754826, %v4893
        %v4900 = vshrl.u32 2131351028, %v4894
        %v4901 = vor.u32 %v4899, %v4900
        %v4902 = vshll.u32 2131351028, %v4893
        %v4903 = vshrl.u32 2102212464, %v4894
        %v4904 = vor.u32 %v4902, %v4903
        %v4905 = vshll.u32 2102212464, %v4893
        %v4906 = vshrl.u32 920167782, %v4894
        %v4907 = vor.u32 %v4905, %v4906
        %v4908 = vshll.u32 920167782, %v4893
        %v4909 = vshrl.u32 1326507024, %v4894
        %v4910 = vor.u32 %v4908, %v4909
        %vm4911 = vcmp.lt.s32.totalorder %v4892, 1
        %vm4912 = vcmp.lt.s32.totalorder %v4892, 2
        %vm4913 = vcmp.lt.s32.totalorder %v4892, 3
        %vm4914 = vcmp.lt.s32.totalorder %v4892, 4
        %v4915 = vsel %vm4911, %v4895, %v4898
        %v4916 = vsel %vm4914, %v4904, 2102212464
        %v4917 = vsel %vm4913, %v4901, %v4916
        %v4918 = vsel %vm4912, %v4915, %v4917
        %v4919 = vsel %vm4911, %v4898, %v4901
        %v4920 = vsel %vm4914, %v4907, 920167782
        %v4921 = vsel %vm4913, %v4904, %v4920
        %v4922 = vsel %vm4912, %v4919, %v4921
        %v4923 = vsel %vm4911, %v4901, %v4904
        %v4924 = vsel %vm4914, %v4910, 1326507024
        %v4925 = vsel %vm4913, %v4907, %v4924
        %v4926 = vsel %vm4912, %v4923, %v4925
        %v4927 = vshll.u32 %v4887, 8
        %v4928 = vmul.u32.u64.compose %v4927, %v4926
        %v4929 = vextract.low.u32 %v4928
        %v4930 = vextract.high.u32 %v4928
        %v4931 = vmul.u32.u64.compose %v4927, %v4922
        %v4932 = vextract.low.u32 %v4931
        %v4933 = vextract.high.u32 %v4931
        %v4934 = vmul.u32 %v4927, %v4918
        %v4935 = vadd.s32 %v4930, %v4932
        %vm4936 = vc.u32 %v4930, %v4932
        %v4937 = vadd.s32 %v4933, 1
        %v4938 = vsel %vm4936, %v4937, %v4933
        %v4939 = vadd.s32 %v4934, %v4938
        %v4940 = vadd.s32 %v4939, 536870912
        %v4941 = vshrl.u32 %v4940, 30
        %v4942 = vshll.u32 %v4941, 30
        %v4943 = vsub.s32 %v4939, %v4942
        %vm4944 = vcmp.lt.s32.totalorder %v4943, 0
        %v4945 = vsub.s32 0, %v4943
        %v4946 = vsel %vm4944, %v4945, %v4943
        %v4947 = vclz %v4946
        %v4948 = vsub.s32 %v4947, 2
        %vm4949 = vcmp.gt.s32.totalorder 0, %v4948
        %v4950 = vsel %vm4949, 0, %v4948
        %v4951 = vsub.s32 32, %v4950
        %v4952 = vshll.u32 %v4943, %v4950
        %v4953 = vshrl.u32 %v4935, %v4951
        %v4954 = vor.u32 %v4952, %v4953
        %v4955 = vsub.s32 4294967266, %v4950
        %v4956 = vadd.s32 %v4955, 127
        %v4957 = vshll.u32 %v4956, 23
        %v4958 = vor.u32 4788187, %v4957
        %v4959 = vand.u32 2147483647, %v4958
        %v4961 = vcvt.s32.f32 %v4954
        %v4962 = vmul.f32 %v4961, %v4959
        %v4963 = vxor.u32 %v4962, 2147483648
        %v4964 = vsel %vm4881, %v4963, %v4962
        %v4965 = vsub.s32 4, %v4941
        %v4966 = vsel %vm4881, %v4965, %v4941
        %v4967 = vsel %vm4880, %v3843, %v4964
        %v4968 = vsel %vm4880, 0, %v4966
        %v4969 = vcosq.f32.pop %v4967
        %v4970 = vsinq.f32.pop %v4967
        %vm4971 = vweird.f32 %v3843
        %v4972 = vand.u32 %v4968, 3
        %vm4973 = vcmp.lt.s32.totalorder %v4972, 2
        %vm4974 = vcmp.eq.s32.totalorder %v4972, 0
        %v4975 = vxor.u32 %v4970, 2147483648
        %v4976 = vsel %vm4974, %v4969, %v4975
        %vm4977 = vcmp.eq.s32.totalorder %v4972, 2
        %v4978 = vxor.u32 %v4969, 2147483648
        %v4979 = vsel %vm4977, %v4978, %v4970
        %v4980 = vsel %vm4973, %v4976, %v4979
        %v4981 = vsel %vm4971, nan, %v4980
        %v4982 = vand.u32 2147483647, %v3844
        %vm4983 = vcmp.le.f32.partialorder %v4982, 0.7853982
        %vm4984 = vcmp.lt.s32.totalorder %v3844, 0
        %v4985 = vand.u32 %v3844, 2139095040
        %v4986 = vshrl.u32 %v4985, 23
        %v4987 = vsub.s32 %v4986, 127
        %v4988 = vand.u32 2147483647, %v3844
        %v4989 = vand.u32 %v4988, 8388607
        %v4990 = vor.u32 %v4989, 8388608
        %v4991 = vsub.s32 0, %v4990
        %v4992 = vadd.s32 %v4987, 1
        %vm4993 = vcmp.gt.s32.totalorder %v4992, 0
        %v4994 = vsel %vm4993, %v4992, 0
        %v4995 = vshrl.u32 %v4994, 5
        %v4996 = vand.u32 %v4994, 31
        %v4997 = vsub.s32 32, %v4996
        %v4998 = vshrl.u32 683565275, %v4997
        %v4999 = vshll.u32 683565275, %v4996
        %v5000 = vshrl.u32 2475754826, %v4997
        %v5001 = vor.u32 %v4999, %v5000
        %v5002 = vshll.u32 2475754826, %v4996
        %v5003 = vshrl.u32 2131351028, %v4997
        %v5004 = vor.u32 %v5002, %v5003
        %v5005 = vshll.u32 2131351028, %v4996
        %v5006 = vshrl.u32 2102212464, %v4997
        %v5007 = vor.u32 %v5005, %v5006
        %v5008 = vshll.u32 2102212464, %v4996
        %v5009 = vshrl.u32 920167782, %v4997
        %v5010 = vor.u32 %v5008, %v5009
        %v5011 = vshll.u32 920167782, %v4996
        %v5012 = vshrl.u32 1326507024, %v4997
        %v5013 = vor.u32 %v5011, %v5012
        %vm5014 = vcmp.lt.s32.totalorder %v4995, 1
        %vm5015 = vcmp.lt.s32.totalorder %v4995, 2
        %vm5016 = vcmp.lt.s32.totalorder %v4995, 3
        %vm5017 = vcmp.lt.s32.totalorder %v4995, 4
        %v5018 = vsel %vm5014, %v4998, %v5001
        %v5019 = vsel %vm5017, %v5007, 2102212464
        %v5020 = vsel %vm5016, %v5004, %v5019
        %v5021 = vsel %vm5015, %v5018, %v5020
        %v5022 = vsel %vm5014, %v5001, %v5004
        %v5023 = vsel %vm5017, %v5010, 920167782
        %v5024 = vsel %vm5016, %v5007, %v5023
        %v5025 = vsel %vm5015, %v5022, %v5024
        %v5026 = vsel %vm5014, %v5004, %v5007
        %v5027 = vsel %vm5017, %v5013, 1326507024
        %v5028 = vsel %vm5016, %v5010, %v5027
        %v5029 = vsel %vm5015, %v5026, %v5028
        %v5030 = vshll.u32 %v4990, 8
        %v5031 = vmul.u32.u64.compose %v5030, %v5029
        %v5032 = vextract.low.u32 %v5031
        %v5033 = vextract.high.u32 %v5031
        %v5034 = vmul.u32.u64.compose %v5030, %v5025
        %v5035 = vextract.low.u32 %v5034
        %v5036 = vextract.high.u32 %v5034
        %v5037 = vmul.u32 %v5030, %v5021
        %v5038 = vadd.s32 %v5033, %v5035
        %vm5039 = vc.u32 %v5033, %v5035
        %v5040 = vadd.s32 %v5036, 1
        %v5041 = vsel %vm5039, %v5040, %v5036
        %v5042 = vadd.s32 %v5037, %v5041
        %v5043 = vadd.s32 %v5042, 536870912
        %v5044 = vshrl.u32 %v5043, 30
        %v5045 = vshll.u32 %v5044, 30
        %v5046 = vsub.s32 %v5042, %v5045
        %vm5047 = vcmp.lt.s32.totalorder %v5046, 0
        %v5048 = vsub.s32 0, %v5046
        %v5049 = vsel %vm5047, %v5048, %v5046
        %v5050 = vclz %v5049
        %v5051 = vsub.s32 %v5050, 2
        %vm5052 = vcmp.gt.s32.totalorder 0, %v5051
        %v5053 = vsel %vm5052, 0, %v5051
        %v5054 = vsub.s32 32, %v5053
        %v5055 = vshll.u32 %v5046, %v5053
        %v5056 = vshrl.u32 %v5038, %v5054
        %v5057 = vor.u32 %v5055, %v5056
        %v5058 = vsub.s32 4294967266, %v5053
        %v5059 = vadd.s32 %v5058, 127
        %v5060 = vshll.u32 %v5059, 23
        %v5061 = vor.u32 4788187, %v5060
        %v5062 = vand.u32 2147483647, %v5061
        %v5064 = vcvt.s32.f32 %v5057
        %v5065 = vmul.f32 %v5064, %v5062
        %v5066 = vxor.u32 %v5065, 2147483648
        %v5067 = vsel %vm4984, %v5066, %v5065
        %v5068 = vsub.s32 4, %v5044
        %v5069 = vsel %vm4984, %v5068, %v5044
        %v5070 = vsel %vm4983, %v3844, %v5067
        %v5071 = vsel %vm4983, 0, %v5069
        %v5072 = vcosq.f32.pop %v5070
        %v5073 = vsinq.f32.pop %v5070
        %vm5074 = vweird.f32 %v3844
        %v5075 = vand.u32 %v5071, 3
        %vm5076 = vcmp.lt.s32.totalorder %v5075, 2
        %vm5077 = vcmp.eq.s32.totalorder %v5075, 0
        %v5078 = vxor.u32 %v5073, 2147483648
        %v5079 = vsel %vm5077, %v5072, %v5078
        %vm5080 = vcmp.eq.s32.totalorder %v5075, 2
        %v5081 = vxor.u32 %v5072, 2147483648
        %v5082 = vsel %vm5080, %v5081, %v5073
        %v5083 = vsel %vm5076, %v5079, %v5082
        %v5084 = vsel %vm5074, nan, %v5083
        %v5085 = vand.u32 2147483647, %v3845
        %vm5086 = vcmp.le.f32.partialorder %v5085, 0.7853982
        %vm5087 = vcmp.lt.s32.totalorder %v3845, 0
        %v5088 = vand.u32 %v3845, 2139095040
        %v5089 = vshrl.u32 %v5088, 23
        %v5090 = vsub.s32 %v5089, 127
        %v5091 = vand.u32 2147483647, %v3845
        %v5092 = vand.u32 %v5091, 8388607
        %v5093 = vor.u32 %v5092, 8388608
        %v5094 = vsub.s32 0, %v5093
        %v5095 = vadd.s32 %v5090, 1
        %vm5096 = vcmp.gt.s32.totalorder %v5095, 0
        %v5097 = vsel %vm5096, %v5095, 0
        %v5098 = vshrl.u32 %v5097, 5
        %v5099 = vand.u32 %v5097, 31
        %v5100 = vsub.s32 32, %v5099
        %v5101 = vshrl.u32 683565275, %v5100
        %v5102 = vshll.u32 683565275, %v5099
        %v5103 = vshrl.u32 2475754826, %v5100
        %v5104 = vor.u32 %v5102, %v5103
        %v5105 = vshll.u32 2475754826, %v5099
        %v5106 = vshrl.u32 2131351028, %v5100
        %v5107 = vor.u32 %v5105, %v5106
        %v5108 = vshll.u32 2131351028, %v5099
        %v5109 = vshrl.u32 2102212464, %v5100
        %v5110 = vor.u32 %v5108, %v5109
        %v5111 = vshll.u32 2102212464, %v5099
        %v5112 = vshrl.u32 920167782, %v5100
        %v5113 = vor.u32 %v5111, %v5112
        %v5114 = vshll.u32 920167782, %v5099
        %v5115 = vshrl.u32 1326507024, %v5100
        %v5116 = vor.u32 %v5114, %v5115
        %vm5117 = vcmp.lt.s32.totalorder %v5098, 1
        %vm5118 = vcmp.lt.s32.totalorder %v5098, 2
        %vm5119 = vcmp.lt.s32.totalorder %v5098, 3
        %vm5120 = vcmp.lt.s32.totalorder %v5098, 4
        %v5121 = vsel %vm5117, %v5101, %v5104
        %v5122 = vsel %vm5120, %v5110, 2102212464
        %v5123 = vsel %vm5119, %v5107, %v5122
        %v5124 = vsel %vm5118, %v5121, %v5123
        %v5125 = vsel %vm5117, %v5104, %v5107
        %v5126 = vsel %vm5120, %v5113, 920167782
        %v5127 = vsel %vm5119, %v5110, %v5126
        %v5128 = vsel %vm5118, %v5125, %v5127
        %v5129 = vsel %vm5117, %v5107, %v5110
        %v5130 = vsel %vm5120, %v5116, 1326507024
        %v5131 = vsel %vm5119, %v5113, %v5130
        %v5132 = vsel %vm5118, %v5129, %v5131
        %v5133 = vshll.u32 %v5093, 8
        %v5134 = vmul.u32.u64.compose %v5133, %v5132
        %v5135 = vextract.low.u32 %v5134
        %v5136 = vextract.high.u32 %v5134
        %v5137 = vmul.u32.u64.compose %v5133, %v5128
        %v5138 = vextract.low.u32 %v5137
        %v5139 = vextract.high.u32 %v5137
        %v5140 = vmul.u32 %v5133, %v5124
        %v5141 = vadd.s32 %v5136, %v5138
        %vm5142 = vc.u32 %v5136, %v5138
        %v5143 = vadd.s32 %v5139, 1
        %v5144 = vsel %vm5142, %v5143, %v5139
        %v5145 = vadd.s32 %v5140, %v5144
        %v5146 = vadd.s32 %v5145, 536870912
        %v5147 = vshrl.u32 %v5146, 30
        %v5148 = vshll.u32 %v5147, 30
        %v5149 = vsub.s32 %v5145, %v5148
        %vm5150 = vcmp.lt.s32.totalorder %v5149, 0
        %v5151 = vsub.s32 0, %v5149
        %v5152 = vsel %vm5150, %v5151, %v5149
        %v5153 = vclz %v5152
        %v5154 = vsub.s32 %v5153, 2
        %vm5155 = vcmp.gt.s32.totalorder 0, %v5154
        %v5156 = vsel %vm5155, 0, %v5154
        %v5157 = vsub.s32 32, %v5156
        %v5158 = vshll.u32 %v5149, %v5156
        %v5159 = vshrl.u32 %v5141, %v5157
        %v5160 = vor.u32 %v5158, %v5159
        %v5161 = vsub.s32 4294967266, %v5156
        %v5162 = vadd.s32 %v5161, 127
        %v5163 = vshll.u32 %v5162, 23
        %v5164 = vor.u32 4788187, %v5163
        %v5165 = vand.u32 2147483647, %v5164
        %v5167 = vcvt.s32.f32 %v5160
        %v5168 = vmul.f32 %v5167, %v5165
        %v5169 = vxor.u32 %v5168, 2147483648
        %v5170 = vsel %vm5087, %v5169, %v5168
        %v5171 = vsub.s32 4, %v5147
        %v5172 = vsel %vm5087, %v5171, %v5147
        %v5173 = vsel %vm5086, %v3845, %v5170
        %v5174 = vsel %vm5086, 0, %v5172
        %v5175 = vcosq.f32.pop %v5173
        %v5176 = vsinq.f32.pop %v5173
        %vm5177 = vweird.f32 %v3845
        %v5178 = vand.u32 %v5174, 3
        %vm5179 = vcmp.lt.s32.totalorder %v5178, 2
        %vm5180 = vcmp.eq.s32.totalorder %v5178, 0
        %v5181 = vxor.u32 %v5176, 2147483648
        %v5182 = vsel %vm5180, %v5175, %v5181
        %vm5183 = vcmp.eq.s32.totalorder %v5178, 2
        %v5184 = vxor.u32 %v5175, 2147483648
        %v5185 = vsel %vm5183, %v5184, %v5176
        %v5186 = vsel %vm5179, %v5182, %v5185
        %v5187 = vsel %vm5177, nan, %v5186
        %v5188 = vand.u32 2147483647, %v3846
        %vm5189 = vcmp.le.f32.partialorder %v5188, 0.7853982
        %vm5190 = vcmp.lt.s32.totalorder %v3846, 0
        %v5191 = vand.u32 %v3846, 2139095040
        %v5192 = vshrl.u32 %v5191, 23
        %v5193 = vsub.s32 %v5192, 127
        %v5194 = vand.u32 2147483647, %v3846
        %v5195 = vand.u32 %v5194, 8388607
        %v5196 = vor.u32 %v5195, 8388608
        %v5197 = vsub.s32 0, %v5196
        %v5198 = vadd.s32 %v5193, 1
        %vm5199 = vcmp.gt.s32.totalorder %v5198, 0
        %v5200 = vsel %vm5199, %v5198, 0
        %v5201 = vshrl.u32 %v5200, 5
        %v5202 = vand.u32 %v5200, 31
        %v5203 = vsub.s32 32, %v5202
        %v5204 = vshrl.u32 683565275, %v5203
        %v5205 = vshll.u32 683565275, %v5202
        %v5206 = vshrl.u32 2475754826, %v5203
        %v5207 = vor.u32 %v5205, %v5206
        %v5208 = vshll.u32 2475754826, %v5202
        %v5209 = vshrl.u32 2131351028, %v5203
        %v5210 = vor.u32 %v5208, %v5209
        %v5211 = vshll.u32 2131351028, %v5202
        %v5212 = vshrl.u32 2102212464, %v5203
        %v5213 = vor.u32 %v5211, %v5212
        %v5214 = vshll.u32 2102212464, %v5202
        %v5215 = vshrl.u32 920167782, %v5203
        %v5216 = vor.u32 %v5214, %v5215
        %v5217 = vshll.u32 920167782, %v5202
        %v5218 = vshrl.u32 1326507024, %v5203
        %v5219 = vor.u32 %v5217, %v5218
        %vm5220 = vcmp.lt.s32.totalorder %v5201, 1
        %vm5221 = vcmp.lt.s32.totalorder %v5201, 2
        %vm5222 = vcmp.lt.s32.totalorder %v5201, 3
        %vm5223 = vcmp.lt.s32.totalorder %v5201, 4
        %v5224 = vsel %vm5220, %v5204, %v5207
        %v5225 = vsel %vm5223, %v5213, 2102212464
        %v5226 = vsel %vm5222, %v5210, %v5225
        %v5227 = vsel %vm5221, %v5224, %v5226
        %v5228 = vsel %vm5220, %v5207, %v5210
        %v5229 = vsel %vm5223, %v5216, 920167782
        %v5230 = vsel %vm5222, %v5213, %v5229
        %v5231 = vsel %vm5221, %v5228, %v5230
        %v5232 = vsel %vm5220, %v5210, %v5213
        %v5233 = vsel %vm5223, %v5219, 1326507024
        %v5234 = vsel %vm5222, %v5216, %v5233
        %v5235 = vsel %vm5221, %v5232, %v5234
        %v5236 = vshll.u32 %v5196, 8
        %v5237 = vmul.u32.u64.compose %v5236, %v5235
        %v5238 = vextract.low.u32 %v5237
        %v5239 = vextract.high.u32 %v5237
        %v5240 = vmul.u32.u64.compose %v5236, %v5231
        %v5241 = vextract.low.u32 %v5240
        %v5242 = vextract.high.u32 %v5240
        %v5243 = vmul.u32 %v5236, %v5227
        %v5244 = vadd.s32 %v5239, %v5241
        %vm5245 = vc.u32 %v5239, %v5241
        %v5246 = vadd.s32 %v5242, 1
        %v5247 = vsel %vm5245, %v5246, %v5242
        %v5248 = vadd.s32 %v5243, %v5247
        %v5249 = vadd.s32 %v5248, 536870912
        %v5250 = vshrl.u32 %v5249, 30
        %v5251 = vshll.u32 %v5250, 30
        %v5252 = vsub.s32 %v5248, %v5251
        %vm5253 = vcmp.lt.s32.totalorder %v5252, 0
        %v5254 = vsub.s32 0, %v5252
        %v5255 = vsel %vm5253, %v5254, %v5252
        %v5256 = vclz %v5255
        %v5257 = vsub.s32 %v5256, 2
        %vm5258 = vcmp.gt.s32.totalorder 0, %v5257
        %v5259 = vsel %vm5258, 0, %v5257
        %v5260 = vsub.s32 32, %v5259
        %v5261 = vshll.u32 %v5252, %v5259
        %v5262 = vshrl.u32 %v5244, %v5260
        %v5263 = vor.u32 %v5261, %v5262
        %v5264 = vsub.s32 4294967266, %v5259
        %v5265 = vadd.s32 %v5264, 127
        %v5266 = vshll.u32 %v5265, 23
        %v5267 = vor.u32 4788187, %v5266
        %v5268 = vand.u32 2147483647, %v5267
        %v5270 = vcvt.s32.f32 %v5263
        %v5271 = vmul.f32 %v5270, %v5268
        %v5272 = vxor.u32 %v5271, 2147483648
        %v5273 = vsel %vm5190, %v5272, %v5271
        %v5274 = vsub.s32 4, %v5250
        %v5275 = vsel %vm5190, %v5274, %v5250
        %v5276 = vsel %vm5189, %v3846, %v5273
        %v5277 = vsel %vm5189, 0, %v5275
        %v5278 = vcosq.f32.pop %v5276
        %v5279 = vsinq.f32.pop %v5276
        %vm5280 = vweird.f32 %v3846
        %v5281 = vand.u32 %v5277, 3
        %vm5282 = vcmp.lt.s32.totalorder %v5281, 2
        %vm5283 = vcmp.eq.s32.totalorder %v5281, 0
        %v5284 = vxor.u32 %v5279, 2147483648
        %v5285 = vsel %vm5283, %v5278, %v5284
        %vm5286 = vcmp.eq.s32.totalorder %v5281, 2
        %v5287 = vxor.u32 %v5278, 2147483648
        %v5288 = vsel %vm5286, %v5287, %v5279
        %v5289 = vsel %vm5282, %v5285, %v5288
        %v5290 = vsel %vm5280, nan, %v5289
        %v5291 = vand.u32 2147483647, %v3847
        %vm5292 = vcmp.le.f32.partialorder %v5291, 0.7853982
        %vm5293 = vcmp.lt.s32.totalorder %v3847, 0
        %v5294 = vand.u32 %v3847, 2139095040
        %v5295 = vshrl.u32 %v5294, 23
        %v5296 = vsub.s32 %v5295, 127
        %v5297 = vand.u32 2147483647, %v3847
        %v5298 = vand.u32 %v5297, 8388607
        %v5299 = vor.u32 %v5298, 8388608
        %v5300 = vsub.s32 0, %v5299
        %v5301 = vadd.s32 %v5296, 1
        %vm5302 = vcmp.gt.s32.totalorder %v5301, 0
        %v5303 = vsel %vm5302, %v5301, 0
        %v5304 = vshrl.u32 %v5303, 5
        %v5305 = vand.u32 %v5303, 31
        %v5306 = vsub.s32 32, %v5305
        %v5307 = vshrl.u32 683565275, %v5306
        %v5308 = vshll.u32 683565275, %v5305
        %v5309 = vshrl.u32 2475754826, %v5306
        %v5310 = vor.u32 %v5308, %v5309
        %v5311 = vshll.u32 2475754826, %v5305
        %v5312 = vshrl.u32 2131351028, %v5306
        %v5313 = vor.u32 %v5311, %v5312
        %v5314 = vshll.u32 2131351028, %v5305
        %v5315 = vshrl.u32 2102212464, %v5306
        %v5316 = vor.u32 %v5314, %v5315
        %v5317 = vshll.u32 2102212464, %v5305
        %v5318 = vshrl.u32 920167782, %v5306
        %v5319 = vor.u32 %v5317, %v5318
        %v5320 = vshll.u32 920167782, %v5305
        %v5321 = vshrl.u32 1326507024, %v5306
        %v5322 = vor.u32 %v5320, %v5321
        %vm5323 = vcmp.lt.s32.totalorder %v5304, 1
        %vm5324 = vcmp.lt.s32.totalorder %v5304, 2
        %vm5325 = vcmp.lt.s32.totalorder %v5304, 3
        %vm5326 = vcmp.lt.s32.totalorder %v5304, 4
        %v5327 = vsel %vm5323, %v5307, %v5310
        %v5328 = vsel %vm5326, %v5316, 2102212464
        %v5329 = vsel %vm5325, %v5313, %v5328
        %v5330 = vsel %vm5324, %v5327, %v5329
        %v5331 = vsel %vm5323, %v5310, %v5313
        %v5332 = vsel %vm5326, %v5319, 920167782
        %v5333 = vsel %vm5325, %v5316, %v5332
        %v5334 = vsel %vm5324, %v5331, %v5333
        %v5335 = vsel %vm5323, %v5313, %v5316
        %v5336 = vsel %vm5326, %v5322, 1326507024
        %v5337 = vsel %vm5325, %v5319, %v5336
        %v5338 = vsel %vm5324, %v5335, %v5337
        %v5339 = vshll.u32 %v5299, 8
        %v5340 = vmul.u32.u64.compose %v5339, %v5338
        %v5341 = vextract.low.u32 %v5340
        %v5342 = vextract.high.u32 %v5340
        %v5343 = vmul.u32.u64.compose %v5339, %v5334
        %v5344 = vextract.low.u32 %v5343
        %v5345 = vextract.high.u32 %v5343
        %v5346 = vmul.u32 %v5339, %v5330
        %v5347 = vadd.s32 %v5342, %v5344
        %vm5348 = vc.u32 %v5342, %v5344
        %v5349 = vadd.s32 %v5345, 1
        %v5350 = vsel %vm5348, %v5349, %v5345
        %v5351 = vadd.s32 %v5346, %v5350
        %v5352 = vadd.s32 %v5351, 536870912
        %v5353 = vshrl.u32 %v5352, 30
        %v5354 = vshll.u32 %v5353, 30
        %v5355 = vsub.s32 %v5351, %v5354
        %vm5356 = vcmp.lt.s32.totalorder %v5355, 0
        %v5357 = vsub.s32 0, %v5355
        %v5358 = vsel %vm5356, %v5357, %v5355
        %v5359 = vclz %v5358
        %v5360 = vsub.s32 %v5359, 2
        %vm5361 = vcmp.gt.s32.totalorder 0, %v5360
        %v5362 = vsel %vm5361, 0, %v5360
        %v5363 = vsub.s32 32, %v5362
        %v5364 = vshll.u32 %v5355, %v5362
        %v5365 = vshrl.u32 %v5347, %v5363
        %v5366 = vor.u32 %v5364, %v5365
        %v5367 = vsub.s32 4294967266, %v5362
        %v5368 = vadd.s32 %v5367, 127
        %v5369 = vshll.u32 %v5368, 23
        %v5370 = vor.u32 4788187, %v5369
        %v5371 = vand.u32 2147483647, %v5370
        %v5373 = vcvt.s32.f32 %v5366
        %v5374 = vmul.f32 %v5373, %v5371
        %v5375 = vxor.u32 %v5374, 2147483648
        %v5376 = vsel %vm5293, %v5375, %v5374
        %v5377 = vsub.s32 4, %v5353
        %v5378 = vsel %vm5293, %v5377, %v5353
        %v5379 = vsel %vm5292, %v3847, %v5376
        %v5380 = vsel %vm5292, 0, %v5378
        %v5381 = vcosq.f32.pop %v5379
        %v5382 = vsinq.f32.pop %v5379
        %vm5383 = vweird.f32 %v3847
        %v5384 = vand.u32 %v5380, 3
        %vm5385 = vcmp.lt.s32.totalorder %v5384, 2
        %vm5386 = vcmp.eq.s32.totalorder %v5384, 0
        %v5387 = vxor.u32 %v5382, 2147483648
        %v5388 = vsel %vm5386, %v5381, %v5387
        %vm5389 = vcmp.eq.s32.totalorder %v5384, 2
        %v5390 = vxor.u32 %v5381, 2147483648
        %v5391 = vsel %vm5389, %v5390, %v5382
        %v5392 = vsel %vm5385, %v5388, %v5391
        %v5393 = vsel %vm5383, nan, %v5392
        %v5394 = vand.u32 2147483647, %v3848
        %vm5395 = vcmp.le.f32.partialorder %v5394, 0.7853982
        %vm5396 = vcmp.lt.s32.totalorder %v3848, 0
        %v5397 = vand.u32 %v3848, 2139095040
        %v5398 = vshrl.u32 %v5397, 23
        %v5399 = vsub.s32 %v5398, 127
        %v5400 = vand.u32 2147483647, %v3848
        %v5401 = vand.u32 %v5400, 8388607
        %v5402 = vor.u32 %v5401, 8388608
        %v5403 = vsub.s32 0, %v5402
        %v5404 = vadd.s32 %v5399, 1
        %vm5405 = vcmp.gt.s32.totalorder %v5404, 0
        %v5406 = vsel %vm5405, %v5404, 0
        %v5407 = vshrl.u32 %v5406, 5
        %v5408 = vand.u32 %v5406, 31
        %v5409 = vsub.s32 32, %v5408
        %v5410 = vshrl.u32 683565275, %v5409
        %v5411 = vshll.u32 683565275, %v5408
        %v5412 = vshrl.u32 2475754826, %v5409
        %v5413 = vor.u32 %v5411, %v5412
        %v5414 = vshll.u32 2475754826, %v5408
        %v5415 = vshrl.u32 2131351028, %v5409
        %v5416 = vor.u32 %v5414, %v5415
        %v5417 = vshll.u32 2131351028, %v5408
        %v5418 = vshrl.u32 2102212464, %v5409
        %v5419 = vor.u32 %v5417, %v5418
        %v5420 = vshll.u32 2102212464, %v5408
        %v5421 = vshrl.u32 920167782, %v5409
        %v5422 = vor.u32 %v5420, %v5421
        %v5423 = vshll.u32 920167782, %v5408
        %v5424 = vshrl.u32 1326507024, %v5409
        %v5425 = vor.u32 %v5423, %v5424
        %vm5426 = vcmp.lt.s32.totalorder %v5407, 1
        %vm5427 = vcmp.lt.s32.totalorder %v5407, 2
        %vm5428 = vcmp.lt.s32.totalorder %v5407, 3
        %vm5429 = vcmp.lt.s32.totalorder %v5407, 4
        %v5430 = vsel %vm5426, %v5410, %v5413
        %v5431 = vsel %vm5429, %v5419, 2102212464
        %v5432 = vsel %vm5428, %v5416, %v5431
        %v5433 = vsel %vm5427, %v5430, %v5432
        %v5434 = vsel %vm5426, %v5413, %v5416
        %v5435 = vsel %vm5429, %v5422, 920167782
        %v5436 = vsel %vm5428, %v5419, %v5435
        %v5437 = vsel %vm5427, %v5434, %v5436
        %v5438 = vsel %vm5426, %v5416, %v5419
        %v5439 = vsel %vm5429, %v5425, 1326507024
        %v5440 = vsel %vm5428, %v5422, %v5439
        %v5441 = vsel %vm5427, %v5438, %v5440
        %v5442 = vshll.u32 %v5402, 8
        %v5443 = vmul.u32.u64.compose %v5442, %v5441
        %v5444 = vextract.low.u32 %v5443
        %v5445 = vextract.high.u32 %v5443
        %v5446 = vmul.u32.u64.compose %v5442, %v5437
        %v5447 = vextract.low.u32 %v5446
        %v5448 = vextract.high.u32 %v5446
        %v5449 = vmul.u32 %v5442, %v5433
        %v5450 = vadd.s32 %v5445, %v5447
        %vm5451 = vc.u32 %v5445, %v5447
        %v5452 = vadd.s32 %v5448, 1
        %v5453 = vsel %vm5451, %v5452, %v5448
        %v5454 = vadd.s32 %v5449, %v5453
        %v5455 = vadd.s32 %v5454, 536870912
        %v5456 = vshrl.u32 %v5455, 30
        %v5457 = vshll.u32 %v5456, 30
        %v5458 = vsub.s32 %v5454, %v5457
        %vm5459 = vcmp.lt.s32.totalorder %v5458, 0
        %v5460 = vsub.s32 0, %v5458
        %v5461 = vsel %vm5459, %v5460, %v5458
        %v5462 = vclz %v5461
        %v5463 = vsub.s32 %v5462, 2
        %vm5464 = vcmp.gt.s32.totalorder 0, %v5463
        %v5465 = vsel %vm5464, 0, %v5463
        %v5466 = vsub.s32 32, %v5465
        %v5467 = vshll.u32 %v5458, %v5465
        %v5468 = vshrl.u32 %v5450, %v5466
        %v5469 = vor.u32 %v5467, %v5468
        %v5470 = vsub.s32 4294967266, %v5465
        %v5471 = vadd.s32 %v5470, 127
        %v5472 = vshll.u32 %v5471, 23
        %v5473 = vor.u32 4788187, %v5472
        %v5474 = vand.u32 2147483647, %v5473
        %v5476 = vcvt.s32.f32 %v5469
        %v5477 = vmul.f32 %v5476, %v5474
        %v5478 = vxor.u32 %v5477, 2147483648
        %v5479 = vsel %vm5396, %v5478, %v5477
        %v5480 = vsub.s32 4, %v5456
        %v5481 = vsel %vm5396, %v5480, %v5456
        %v5482 = vsel %vm5395, %v3848, %v5479
        %v5483 = vsel %vm5395, 0, %v5481
        %v5484 = vcosq.f32.pop %v5482
        %v5485 = vsinq.f32.pop %v5482
        %vm5486 = vweird.f32 %v3848
        %v5487 = vand.u32 %v5483, 3
        %vm5488 = vcmp.lt.s32.totalorder %v5487, 2
        %vm5489 = vcmp.eq.s32.totalorder %v5487, 0
        %v5490 = vxor.u32 %v5485, 2147483648
        %v5491 = vsel %vm5489, %v5484, %v5490
        %vm5492 = vcmp.eq.s32.totalorder %v5487, 2
        %v5493 = vxor.u32 %v5484, 2147483648
        %v5494 = vsel %vm5492, %v5493, %v5485
        %v5495 = vsel %vm5488, %v5491, %v5494
        %v5496 = vsel %vm5486, nan, %v5495
        %v5497 = vld [vmem:[%s3] sm:$0xff]
        %v5498 = vld [vmem:[%s3 + $0x8] sm:$0xff]
        %v5499 = vld [vmem:[%s3 + $0x10] sm:$0xff]
        %v5500 = vld [vmem:[%s3 + $0x18] sm:$0xff]
        %v5501 = vld [vmem:[%s3 + $0x20] sm:$0xff]
        %v5502 = vld [vmem:[%s3 + $0x28] sm:$0xff]
        %v5503 = vld [vmem:[%s3 + $0x30] sm:$0xff]
        %v5504 = vld [vmem:[%s3 + $0x38] sm:$0xff]
        %v5505 = vld [vmem:[%s4] sm:$0x1]
        %v5507 = vlaneseq
        %v5508 = vshrl.u32 %v5507, 7
        %v5509 = vsub.s32 0, %v5508
        %v5510 = vrot.slane %v5505, %v5509
        %vm5512 = vcmask 523264
        %v5514 = vsel %vm5512, %v3951, 0
        %v5517 = vsel %vm5512, %v4054, 0
        %v5520 = vsel %vm5512, %v4157, 0
        %v5523 = vsel %vm5512, %v4260, 0
        %v5526 = vsel %vm5512, %v4363, 0
        %v5529 = vsel %vm5512, %v4466, 0
        %v5532 = vsel %vm5512, %v4569, 0
        %v5535 = vsel %vm5512, %v4672, 0
        %v5538 = vsel %vm5512, %v4775, 0
        %v5541 = vsel %vm5512, %v4878, 0
        %v5544 = vsel %vm5512, %v4981, 0
        %v5547 = vsel %vm5512, %v5084, 0
        %v5550 = vsel %vm5512, %v5187, 0
        %v5553 = vsel %vm5512, %v5290, 0
        %v5556 = vsel %vm5512, %v5393, 0
        %v5559 = vsel %vm5512, %v5496, 0
        %5561 = vmatprep.subr.mxu0 0.0
        %5562 = vmatpush1.msra.mxu0 %v5497
        %5563 = vmatprep.subr.mxu0 0.0
        %5564 = vmatpush1.msra.mxu0 %v5498
        %5565 = vmatprep.subr.mxu0 0.0
        %5566 = vmatpush1.msra.mxu0 %v5499
        %5567 = vmatprep.subr.mxu0 0.0
        %5568 = vmatpush1.msra.mxu0 %v5500
        %5569 = vmatprep.subr.mxu0 0.0
        %5570 = vmatpush1.msra.mxu0 %v5501
        %5571 = vmatprep.subr.mxu0 0.0
        %5572 = vmatpush1.msra.mxu0 %v5502
        %5573 = vmatprep.subr.mxu0 0.0
        %5574 = vmatpush1.msra.mxu0 %v5503
        %5575 = vmatprep.subr.mxu0 0.0
        %5576 = vmatpush1.msra.mxu0 %v5504
        %5577 = vmatprep.subr.mxu0 0.0
        %5578 = vmatpush1.msra.mxu0 0.0
        %5579 = vmatprep.subr.mxu0 0.0
        %5580 = vmatpush1.msra.mxu0 0.0
        %5581 = vmatprep.subr.mxu0 0.0
        %5582 = vmatpush1.msra.mxu0 0.0
        %5583 = vmatprep.subr.mxu0 0.0
        %5584 = vmatpush1.msra.mxu0 0.0
        %5585 = vmatprep.subr.mxu0 0.0
        %5586 = vmatpush1.msra.mxu0 0.0
        %5587 = vmatprep.subr.mxu0 0.0
        %5588 = vmatpush1.msra.mxu0 0.0
        %5589 = vmatprep.subr.mxu0 0.0
        %5590 = vmatpush1.msra.mxu0 0.0
        %5591 = vmatprep.subr.mxu0 0.0
        %5592 = vmatpush1.msra.mxu0 0.0
        %5593 = vmatprep.subr.mxu0 0.0
        %5594 = vmatpush1.msra.mxu0 0.0
        %5595 = vmatprep.subr.mxu0 0.0
        %5596 = vmatpush1.msra.mxu0 0.0
        %5597 = vmatprep.subr.mxu0 0.0
        %5598 = vmatpush1.msra.mxu0 0.0
        %5599 = vmatprep.subr.mxu0 0.0
        %5600 = vmatpush1.msra.mxu0 0.0
        %5601 = vmatprep.subr.mxu0 0.0
        %5602 = vmatpush1.msra.mxu0 0.0
        %5603 = vmatprep.subr.mxu0 0.0
        %5604 = vmatpush1.msra.mxu0 0.0
        %5605 = vmatprep.subr.mxu0 0.0
        %5606 = vmatpush1.msra.mxu0 0.0
        %5607 = vmatprep.subr.mxu0 0.0
        %5608 = vmatpush1.msra.mxu0 0.0
        %5609 = vmatprep.subr.mxu0 0.0
        %5610 = vmatpush1.msra.mxu0 0.0
        %5611 = vmatprep.subr.mxu0 0.0
        %5612 = vmatpush1.msra.mxu0 0.0
        %5613 = vmatprep.subr.mxu0 0.0
        %5614 = vmatpush1.msra.mxu0 0.0
        %5615 = vmatprep.subr.mxu0 0.0
        %5616 = vmatpush1.msra.mxu0 0.0
        %5617 = vmatprep.subr.mxu0 0.0
        %5618 = vmatpush1.msra.mxu0 0.0
        %5619 = vmatprep.subr.mxu0 0.0
        %5620 = vmatpush1.msra.mxu0 0.0
        %5621 = vmatprep.subr.mxu0 0.0
        %5622 = vmatpush1.msra.mxu0 0.0
        %5623 = vmatprep.subr.mxu0 0.0
        %5624 = vmatpush1.msra.mxu0 0.0
        %5625 = vmatprep.mubr.f32.mxu0 0.0
        %5626 = vmatmul.mubr.f32.gmra.mrb[0].mxu0 %v5514
        %v5627 = vpop.f32.mrb[0].mxu0
        %v5628 = vadd.f32 %v5510, %v5627
        %v5629 = vpop.f32.mrb[0].mxu0
        %5630 = vmatprep.mubr.f32.mxu0 0.0
        %5631 = vmatmul.mubr.f32.gmra.mrb[0].mxu0 %v5517
        %v5632 = vpop.f32.mrb[0].mxu0
        %v5633 = vadd.f32 %v5510, %v5632
        %v5634 = vpop.f32.mrb[0].mxu0
        %5635 = vmatprep.mubr.f32.mxu0 0.0
        %5636 = vmatmul.mubr.f32.gmra.mrb[0].mxu0 %v5520
        %v5637 = vpop.f32.mrb[0].mxu0
        %v5638 = vadd.f32 %v5510, %v5637
        %v5639 = vpop.f32.mrb[0].mxu0
        %5640 = vmatprep.mubr.f32.mxu0 0.0
        %5641 = vmatmul.mubr.f32.gmra.mrb[0].mxu0 %v5523
        %v5642 = vpop.f32.mrb[0].mxu0
        %v5643 = vadd.f32 %v5510, %v5642
        %v5644 = vpop.f32.mrb[0].mxu0
        %5645 = vmatprep.mubr.f32.mxu0 0.0
        %5646 = vmatmul.mubr.f32.gmra.mrb[0].mxu0 %v5526
        %v5647 = vpop.f32.mrb[0].mxu0
        %v5648 = vadd.f32 %v5510, %v5647
        %v5649 = vpop.f32.mrb[0].mxu0
        %5650 = vmatprep.mubr.f32.mxu0 0.0
        %5651 = vmatmul.mubr.f32.gmra.mrb[0].mxu0 %v5529
        %v5652 = vpop.f32.mrb[0].mxu0
        %v5653 = vadd.f32 %v5510, %v5652
        %v5654 = vpop.f32.mrb[0].mxu0
        %5655 = vmatprep.mubr.f32.mxu0 0.0
        %5656 = vmatmul.mubr.f32.gmra.mrb[0].mxu0 %v5532
        %v5657 = vpop.f32.mrb[0].mxu0
        %v5658 = vadd.f32 %v5510, %v5657
        %v5659 = vpop.f32.mrb[0].mxu0
        %5660 = vmatprep.mubr.f32.mxu0 0.0
        %5661 = vmatmul.mubr.f32.gmra.mrb[0].mxu0 %v5535
        %v5662 = vpop.f32.mrb[0].mxu0
        %v5663 = vadd.f32 %v5510, %v5662
        %v5664 = vpop.f32.mrb[0].mxu0
        %5665 = vmatprep.mubr.f32.mxu0 0.0
        %5666 = vmatmul.mubr.f32.gmra.mrb[0].mxu0 %v5538
        %v5667 = vpop.f32.mrb[0].mxu0
        %v5668 = vadd.f32 %v5510, %v5667
        %v5669 = vpop.f32.mrb[0].mxu0
        %5670 = vmatprep.mubr.f32.mxu0 0.0
        %5671 = vmatmul.mubr.f32.gmra.mrb[0].mxu0 %v5541
        %v5672 = vpop.f32.mrb[0].mxu0
        %v5673 = vadd.f32 %v5510, %v5672
        %v5674 = vpop.f32.mrb[0].mxu0
        %5675 = vmatprep.mubr.f32.mxu0 0.0
        %5676 = vmatmul.mubr.f32.gmra.mrb[0].mxu0 %v5544
        %v5677 = vpop.f32.mrb[0].mxu0
        %v5678 = vadd.f32 %v5510, %v5677
        %v5679 = vpop.f32.mrb[0].mxu0
        %5680 = vmatprep.mubr.f32.mxu0 0.0
        %5681 = vmatmul.mubr.f32.gmra.mrb[0].mxu0 %v5547
        %v5682 = vpop.f32.mrb[0].mxu0
        %v5683 = vadd.f32 %v5510, %v5682
        %v5684 = vpop.f32.mrb[0].mxu0
        %5685 = vmatprep.mubr.f32.mxu0 0.0
        %5686 = vmatmul.mubr.f32.gmra.mrb[0].mxu0 %v5550
        %v5687 = vpop.f32.mrb[0].mxu0
        %v5688 = vadd.f32 %v5510, %v5687
        %v5689 = vpop.f32.mrb[0].mxu0
        %5690 = vmatprep.mubr.f32.mxu0 0.0
        %5691 = vmatmul.mubr.f32.gmra.mrb[0].mxu0 %v5553
        %v5692 = vpop.f32.mrb[0].mxu0
        %v5693 = vadd.f32 %v5510, %v5692
        %v5694 = vpop.f32.mrb[0].mxu0
        %5695 = vmatprep.mubr.f32.mxu0 0.0
        %5696 = vmatmul.mubr.f32.gmra.mrb[0].mxu0 %v5556
        %v5697 = vpop.f32.mrb[0].mxu0
        %v5698 = vadd.f32 %v5510, %v5697
        %v5699 = vpop.f32.mrb[0].mxu0
        %5700 = vmatprep.mubr.f32.mxu0 0.0
        %5701 = vmatmul.mubr.f32.gmra.mrb[0].mxu0 %v5559
        %v5702 = vpop.f32.mrb[0].mxu0
        %v5703 = vadd.f32 %v5510, %v5702
        %v5704 = vpop.f32.mrb[0].mxu0
        %5705 = vdwg.mxu0
        %v5706 = vand.u32 2147483647, %v5628
        %vm5707 = vcmp.le.f32.partialorder %v5706, 0.7853982
        %vm5708 = vcmp.lt.s32.totalorder %v5628, 0
        %v5709 = vand.u32 %v5628, 2139095040
        %v5710 = vshrl.u32 %v5709, 23
        %v5711 = vsub.s32 %v5710, 127
        %v5712 = vand.u32 2147483647, %v5628
        %v5713 = vand.u32 %v5712, 8388607
        %v5714 = vor.u32 %v5713, 8388608
        %v5715 = vsub.s32 0, %v5714
        %v5716 = vadd.s32 %v5711, 1
        %vm5717 = vcmp.gt.s32.totalorder %v5716, 0
        %v5718 = vsel %vm5717, %v5716, 0
        %v5719 = vshrl.u32 %v5718, 5
        %v5720 = vand.u32 %v5718, 31
        %v5721 = vsub.s32 32, %v5720
        %v5722 = vshrl.u32 683565275, %v5721
        %v5723 = vshll.u32 683565275, %v5720
        %v5724 = vshrl.u32 2475754826, %v5721
        %v5725 = vor.u32 %v5723, %v5724
        %v5726 = vshll.u32 2475754826, %v5720
        %v5727 = vshrl.u32 2131351028, %v5721
        %v5728 = vor.u32 %v5726, %v5727
        %v5729 = vshll.u32 2131351028, %v5720
        %v5730 = vshrl.u32 2102212464, %v5721
        %v5731 = vor.u32 %v5729, %v5730
        %v5732 = vshll.u32 2102212464, %v5720
        %v5733 = vshrl.u32 920167782, %v5721
        %v5734 = vor.u32 %v5732, %v5733
        %v5735 = vshll.u32 920167782, %v5720
        %v5736 = vshrl.u32 1326507024, %v5721
        %v5737 = vor.u32 %v5735, %v5736
        %vm5738 = vcmp.lt.s32.totalorder %v5719, 1
        %vm5739 = vcmp.lt.s32.totalorder %v5719, 2
        %vm5740 = vcmp.lt.s32.totalorder %v5719, 3
        %vm5741 = vcmp.lt.s32.totalorder %v5719, 4
        %v5742 = vsel %vm5738, %v5722, %v5725
        %v5743 = vsel %vm5741, %v5731, 2102212464
        %v5744 = vsel %vm5740, %v5728, %v5743
        %v5745 = vsel %vm5739, %v5742, %v5744
        %v5746 = vsel %vm5738, %v5725, %v5728
        %v5747 = vsel %vm5741, %v5734, 920167782
        %v5748 = vsel %vm5740, %v5731, %v5747
        %v5749 = vsel %vm5739, %v5746, %v5748
        %v5750 = vsel %vm5738, %v5728, %v5731
        %v5751 = vsel %vm5741, %v5737, 1326507024
        %v5752 = vsel %vm5740, %v5734, %v5751
        %v5753 = vsel %vm5739, %v5750, %v5752
        %v5754 = vshll.u32 %v5714, 8
        %v5755 = vmul.u32.u64.compose %v5754, %v5753
        %v5756 = vextract.low.u32 %v5755
        %v5757 = vextract.high.u32 %v5755
        %v5758 = vmul.u32.u64.compose %v5754, %v5749
        %v5759 = vextract.low.u32 %v5758
        %v5760 = vextract.high.u32 %v5758
        %v5761 = vmul.u32 %v5754, %v5745
        %v5762 = vadd.s32 %v5757, %v5759
        %vm5763 = vc.u32 %v5757, %v5759
        %v5764 = vadd.s32 %v5760, 1
        %v5765 = vsel %vm5763, %v5764, %v5760
        %v5766 = vadd.s32 %v5761, %v5765
        %v5767 = vadd.s32 %v5766, 536870912
        %v5768 = vshrl.u32 %v5767, 30
        %v5769 = vshll.u32 %v5768, 30
        %v5770 = vsub.s32 %v5766, %v5769
        %vm5771 = vcmp.lt.s32.totalorder %v5770, 0
        %v5772 = vsub.s32 0, %v5770
        %v5773 = vsel %vm5771, %v5772, %v5770
        %v5774 = vclz %v5773
        %v5775 = vsub.s32 %v5774, 2
        %vm5776 = vcmp.gt.s32.totalorder 0, %v5775
        %v5777 = vsel %vm5776, 0, %v5775
        %v5778 = vsub.s32 32, %v5777
        %v5779 = vshll.u32 %v5770, %v5777
        %v5780 = vshrl.u32 %v5762, %v5778
        %v5781 = vor.u32 %v5779, %v5780
        %v5782 = vsub.s32 4294967266, %v5777
        %v5783 = vadd.s32 %v5782, 127
        %v5784 = vshll.u32 %v5783, 23
        %v5785 = vor.u32 4788187, %v5784
        %v5786 = vand.u32 2147483647, %v5785
        %v5788 = vcvt.s32.f32 %v5781
        %v5789 = vmul.f32 %v5788, %v5786
        %v5790 = vxor.u32 %v5789, 2147483648
        %v5791 = vsel %vm5708, %v5790, %v5789
        %v5792 = vsub.s32 4, %v5768
        %v5793 = vsel %vm5708, %v5792, %v5768
        %v5794 = vsel %vm5707, %v5628, %v5791
        %v5795 = vsel %vm5707, 0, %v5793
        %v5796 = vcosq.f32.pop %v5794
        %v5797 = vsinq.f32.pop %v5794
        %vm5798 = vweird.f32 %v5628
        %v5799 = vand.u32 %v5795, 3
        %vm5800 = vcmp.lt.s32.totalorder %v5799, 2
        %vm5801 = vcmp.eq.s32.totalorder %v5799, 0
        %v5802 = vxor.u32 %v5797, 2147483648
        %v5803 = vsel %vm5801, %v5796, %v5802
        %vm5804 = vcmp.eq.s32.totalorder %v5799, 2
        %v5805 = vxor.u32 %v5796, 2147483648
        %v5806 = vsel %vm5804, %v5805, %v5797
        %v5807 = vsel %vm5800, %v5803, %v5806
        %v5808 = vsel %vm5798, nan, %v5807
        %v5809 = vand.u32 2147483647, %v5633
        %vm5810 = vcmp.le.f32.partialorder %v5809, 0.7853982
        %vm5811 = vcmp.lt.s32.totalorder %v5633, 0
        %v5812 = vand.u32 %v5633, 2139095040
        %v5813 = vshrl.u32 %v5812, 23
        %v5814 = vsub.s32 %v5813, 127
        %v5815 = vand.u32 2147483647, %v5633
        %v5816 = vand.u32 %v5815, 8388607
        %v5817 = vor.u32 %v5816, 8388608
        %v5818 = vsub.s32 0, %v5817
        %v5819 = vadd.s32 %v5814, 1
        %vm5820 = vcmp.gt.s32.totalorder %v5819, 0
        %v5821 = vsel %vm5820, %v5819, 0
        %v5822 = vshrl.u32 %v5821, 5
        %v5823 = vand.u32 %v5821, 31
        %v5824 = vsub.s32 32, %v5823
        %v5825 = vshrl.u32 683565275, %v5824
        %v5826 = vshll.u32 683565275, %v5823
        %v5827 = vshrl.u32 2475754826, %v5824
        %v5828 = vor.u32 %v5826, %v5827
        %v5829 = vshll.u32 2475754826, %v5823
        %v5830 = vshrl.u32 2131351028, %v5824
        %v5831 = vor.u32 %v5829, %v5830
        %v5832 = vshll.u32 2131351028, %v5823
        %v5833 = vshrl.u32 2102212464, %v5824
        %v5834 = vor.u32 %v5832, %v5833
        %v5835 = vshll.u32 2102212464, %v5823
        %v5836 = vshrl.u32 920167782, %v5824
        %v5837 = vor.u32 %v5835, %v5836
        %v5838 = vshll.u32 920167782, %v5823
        %v5839 = vshrl.u32 1326507024, %v5824
        %v5840 = vor.u32 %v5838, %v5839
        %vm5841 = vcmp.lt.s32.totalorder %v5822, 1
        %vm5842 = vcmp.lt.s32.totalorder %v5822, 2
        %vm5843 = vcmp.lt.s32.totalorder %v5822, 3
        %vm5844 = vcmp.lt.s32.totalorder %v5822, 4
        %v5845 = vsel %vm5841, %v5825, %v5828
        %v5846 = vsel %vm5844, %v5834, 2102212464
        %v5847 = vsel %vm5843, %v5831, %v5846
        %v5848 = vsel %vm5842, %v5845, %v5847
        %v5849 = vsel %vm5841, %v5828, %v5831
        %v5850 = vsel %vm5844, %v5837, 920167782
        %v5851 = vsel %vm5843, %v5834, %v5850
        %v5852 = vsel %vm5842, %v5849, %v5851
        %v5853 = vsel %vm5841, %v5831, %v5834
        %v5854 = vsel %vm5844, %v5840, 1326507024
        %v5855 = vsel %vm5843, %v5837, %v5854
        %v5856 = vsel %vm5842, %v5853, %v5855
        %v5857 = vshll.u32 %v5817, 8
        %v5858 = vmul.u32.u64.compose %v5857, %v5856
        %v5859 = vextract.low.u32 %v5858
        %v5860 = vextract.high.u32 %v5858
        %v5861 = vmul.u32.u64.compose %v5857, %v5852
        %v5862 = vextract.low.u32 %v5861
        %v5863 = vextract.high.u32 %v5861
        %v5864 = vmul.u32 %v5857, %v5848
        %v5865 = vadd.s32 %v5860, %v5862
        %vm5866 = vc.u32 %v5860, %v5862
        %v5867 = vadd.s32 %v5863, 1
        %v5868 = vsel %vm5866, %v5867, %v5863
        %v5869 = vadd.s32 %v5864, %v5868
        %v5870 = vadd.s32 %v5869, 536870912
        %v5871 = vshrl.u32 %v5870, 30
        %v5872 = vshll.u32 %v5871, 30
        %v5873 = vsub.s32 %v5869, %v5872
        %vm5874 = vcmp.lt.s32.totalorder %v5873, 0
        %v5875 = vsub.s32 0, %v5873
        %v5876 = vsel %vm5874, %v5875, %v5873
        %v5877 = vclz %v5876
        %v5878 = vsub.s32 %v5877, 2
        %vm5879 = vcmp.gt.s32.totalorder 0, %v5878
        %v5880 = vsel %vm5879, 0, %v5878
        %v5881 = vsub.s32 32, %v5880
        %v5882 = vshll.u32 %v5873, %v5880
        %v5883 = vshrl.u32 %v5865, %v5881
        %v5884 = vor.u32 %v5882, %v5883
        %v5885 = vsub.s32 4294967266, %v5880
        %v5886 = vadd.s32 %v5885, 127
        %v5887 = vshll.u32 %v5886, 23
        %v5888 = vor.u32 4788187, %v5887
        %v5889 = vand.u32 2147483647, %v5888
        %v5891 = vcvt.s32.f32 %v5884
        %v5892 = vmul.f32 %v5891, %v5889
        %v5893 = vxor.u32 %v5892, 2147483648
        %v5894 = vsel %vm5811, %v5893, %v5892
        %v5895 = vsub.s32 4, %v5871
        %v5896 = vsel %vm5811, %v5895, %v5871
        %v5897 = vsel %vm5810, %v5633, %v5894
        %v5898 = vsel %vm5810, 0, %v5896
        %v5899 = vcosq.f32.pop %v5897
        %v5900 = vsinq.f32.pop %v5897
        %vm5901 = vweird.f32 %v5633
        %v5902 = vand.u32 %v5898, 3
        %vm5903 = vcmp.lt.s32.totalorder %v5902, 2
        %vm5904 = vcmp.eq.s32.totalorder %v5902, 0
        %v5905 = vxor.u32 %v5900, 2147483648
        %v5906 = vsel %vm5904, %v5899, %v5905
        %vm5907 = vcmp.eq.s32.totalorder %v5902, 2
        %v5908 = vxor.u32 %v5899, 2147483648
        %v5909 = vsel %vm5907, %v5908, %v5900
        %v5910 = vsel %vm5903, %v5906, %v5909
        %v5911 = vsel %vm5901, nan, %v5910
        %v5912 = vand.u32 2147483647, %v5638
        %vm5913 = vcmp.le.f32.partialorder %v5912, 0.7853982
        %vm5914 = vcmp.lt.s32.totalorder %v5638, 0
        %v5915 = vand.u32 %v5638, 2139095040
        %v5916 = vshrl.u32 %v5915, 23
        %v5917 = vsub.s32 %v5916, 127
        %v5918 = vand.u32 2147483647, %v5638
        %v5919 = vand.u32 %v5918, 8388607
        %v5920 = vor.u32 %v5919, 8388608
        %v5921 = vsub.s32 0, %v5920
        %v5922 = vadd.s32 %v5917, 1
        %vm5923 = vcmp.gt.s32.totalorder %v5922, 0
        %v5924 = vsel %vm5923, %v5922, 0
        %v5925 = vshrl.u32 %v5924, 5
        %v5926 = vand.u32 %v5924, 31
        %v5927 = vsub.s32 32, %v5926
        %v5928 = vshrl.u32 683565275, %v5927
        %v5929 = vshll.u32 683565275, %v5926
        %v5930 = vshrl.u32 2475754826, %v5927
        %v5931 = vor.u32 %v5929, %v5930
        %v5932 = vshll.u32 2475754826, %v5926
        %v5933 = vshrl.u32 2131351028, %v5927
        %v5934 = vor.u32 %v5932, %v5933
        %v5935 = vshll.u32 2131351028, %v5926
        %v5936 = vshrl.u32 2102212464, %v5927
        %v5937 = vor.u32 %v5935, %v5936
        %v5938 = vshll.u32 2102212464, %v5926
        %v5939 = vshrl.u32 920167782, %v5927
        %v5940 = vor.u32 %v5938, %v5939
        %v5941 = vshll.u32 920167782, %v5926
        %v5942 = vshrl.u32 1326507024, %v5927
        %v5943 = vor.u32 %v5941, %v5942
        %vm5944 = vcmp.lt.s32.totalorder %v5925, 1
        %vm5945 = vcmp.lt.s32.totalorder %v5925, 2
        %vm5946 = vcmp.lt.s32.totalorder %v5925, 3
        %vm5947 = vcmp.lt.s32.totalorder %v5925, 4
        %v5948 = vsel %vm5944, %v5928, %v5931
        %v5949 = vsel %vm5947, %v5937, 2102212464
        %v5950 = vsel %vm5946, %v5934, %v5949
        %v5951 = vsel %vm5945, %v5948, %v5950
        %v5952 = vsel %vm5944, %v5931, %v5934
        %v5953 = vsel %vm5947, %v5940, 920167782
        %v5954 = vsel %vm5946, %v5937, %v5953
        %v5955 = vsel %vm5945, %v5952, %v5954
        %v5956 = vsel %vm5944, %v5934, %v5937
        %v5957 = vsel %vm5947, %v5943, 1326507024
        %v5958 = vsel %vm5946, %v5940, %v5957
        %v5959 = vsel %vm5945, %v5956, %v5958
        %v5960 = vshll.u32 %v5920, 8
        %v5961 = vmul.u32.u64.compose %v5960, %v5959
        %v5962 = vextract.low.u32 %v5961
        %v5963 = vextract.high.u32 %v5961
        %v5964 = vmul.u32.u64.compose %v5960, %v5955
        %v5965 = vextract.low.u32 %v5964
        %v5966 = vextract.high.u32 %v5964
        %v5967 = vmul.u32 %v5960, %v5951
        %v5968 = vadd.s32 %v5963, %v5965
        %vm5969 = vc.u32 %v5963, %v5965
        %v5970 = vadd.s32 %v5966, 1
        %v5971 = vsel %vm5969, %v5970, %v5966
        %v5972 = vadd.s32 %v5967, %v5971
        %v5973 = vadd.s32 %v5972, 536870912
        %v5974 = vshrl.u32 %v5973, 30
        %v5975 = vshll.u32 %v5974, 30
        %v5976 = vsub.s32 %v5972, %v5975
        %vm5977 = vcmp.lt.s32.totalorder %v5976, 0
        %v5978 = vsub.s32 0, %v5976
        %v5979 = vsel %vm5977, %v5978, %v5976
        %v5980 = vclz %v5979
        %v5981 = vsub.s32 %v5980, 2
        %vm5982 = vcmp.gt.s32.totalorder 0, %v5981
        %v5983 = vsel %vm5982, 0, %v5981
        %v5984 = vsub.s32 32, %v5983
        %v5985 = vshll.u32 %v5976, %v5983
        %v5986 = vshrl.u32 %v5968, %v5984
        %v5987 = vor.u32 %v5985, %v5986
        %v5988 = vsub.s32 4294967266, %v5983
        %v5989 = vadd.s32 %v5988, 127
        %v5990 = vshll.u32 %v5989, 23
        %v5991 = vor.u32 4788187, %v5990
        %v5992 = vand.u32 2147483647, %v5991
        %v5994 = vcvt.s32.f32 %v5987
        %v5995 = vmul.f32 %v5994, %v5992
        %v5996 = vxor.u32 %v5995, 2147483648
        %v5997 = vsel %vm5914, %v5996, %v5995
        %v5998 = vsub.s32 4, %v5974
        %v5999 = vsel %vm5914, %v5998, %v5974
        %v6000 = vsel %vm5913, %v5638, %v5997
        %v6001 = vsel %vm5913, 0, %v5999
        %v6002 = vcosq.f32.pop %v6000
        %v6003 = vsinq.f32.pop %v6000
        %vm6004 = vweird.f32 %v5638
        %v6005 = vand.u32 %v6001, 3
        %vm6006 = vcmp.lt.s32.totalorder %v6005, 2
        %vm6007 = vcmp.eq.s32.totalorder %v6005, 0
        %v6008 = vxor.u32 %v6003, 2147483648
        %v6009 = vsel %vm6007, %v6002, %v6008
        %vm6010 = vcmp.eq.s32.totalorder %v6005, 2
        %v6011 = vxor.u32 %v6002, 2147483648
        %v6012 = vsel %vm6010, %v6011, %v6003
        %v6013 = vsel %vm6006, %v6009, %v6012
        %v6014 = vsel %vm6004, nan, %v6013
        %v6015 = vand.u32 2147483647, %v5643
        %vm6016 = vcmp.le.f32.partialorder %v6015, 0.7853982
        %vm6017 = vcmp.lt.s32.totalorder %v5643, 0
        %v6018 = vand.u32 %v5643, 2139095040
        %v6019 = vshrl.u32 %v6018, 23
        %v6020 = vsub.s32 %v6019, 127
        %v6021 = vand.u32 2147483647, %v5643
        %v6022 = vand.u32 %v6021, 8388607
        %v6023 = vor.u32 %v6022, 8388608
        %v6024 = vsub.s32 0, %v6023
        %v6025 = vadd.s32 %v6020, 1
        %vm6026 = vcmp.gt.s32.totalorder %v6025, 0
        %v6027 = vsel %vm6026, %v6025, 0
        %v6028 = vshrl.u32 %v6027, 5
        %v6029 = vand.u32 %v6027, 31
        %v6030 = vsub.s32 32, %v6029
        %v6031 = vshrl.u32 683565275, %v6030
        %v6032 = vshll.u32 683565275, %v6029
        %v6033 = vshrl.u32 2475754826, %v6030
        %v6034 = vor.u32 %v6032, %v6033
        %v6035 = vshll.u32 2475754826, %v6029
        %v6036 = vshrl.u32 2131351028, %v6030
        %v6037 = vor.u32 %v6035, %v6036
        %v6038 = vshll.u32 2131351028, %v6029
        %v6039 = vshrl.u32 2102212464, %v6030
        %v6040 = vor.u32 %v6038, %v6039
        %v6041 = vshll.u32 2102212464, %v6029
        %v6042 = vshrl.u32 920167782, %v6030
        %v6043 = vor.u32 %v6041, %v6042
        %v6044 = vshll.u32 920167782, %v6029
        %v6045 = vshrl.u32 1326507024, %v6030
        %v6046 = vor.u32 %v6044, %v6045
        %vm6047 = vcmp.lt.s32.totalorder %v6028, 1
        %vm6048 = vcmp.lt.s32.totalorder %v6028, 2
        %vm6049 = vcmp.lt.s32.totalorder %v6028, 3
        %vm6050 = vcmp.lt.s32.totalorder %v6028, 4
        %v6051 = vsel %vm6047, %v6031, %v6034
        %v6052 = vsel %vm6050, %v6040, 2102212464
        %v6053 = vsel %vm6049, %v6037, %v6052
        %v6054 = vsel %vm6048, %v6051, %v6053
        %v6055 = vsel %vm6047, %v6034, %v6037
        %v6056 = vsel %vm6050, %v6043, 920167782
        %v6057 = vsel %vm6049, %v6040, %v6056
        %v6058 = vsel %vm6048, %v6055, %v6057
        %v6059 = vsel %vm6047, %v6037, %v6040
        %v6060 = vsel %vm6050, %v6046, 1326507024
        %v6061 = vsel %vm6049, %v6043, %v6060
        %v6062 = vsel %vm6048, %v6059, %v6061
        %v6063 = vshll.u32 %v6023, 8
        %v6064 = vmul.u32.u64.compose %v6063, %v6062
        %v6065 = vextract.low.u32 %v6064
        %v6066 = vextract.high.u32 %v6064
        %v6067 = vmul.u32.u64.compose %v6063, %v6058
        %v6068 = vextract.low.u32 %v6067
        %v6069 = vextract.high.u32 %v6067
        %v6070 = vmul.u32 %v6063, %v6054
        %v6071 = vadd.s32 %v6066, %v6068
        %vm6072 = vc.u32 %v6066, %v6068
        %v6073 = vadd.s32 %v6069, 1
        %v6074 = vsel %vm6072, %v6073, %v6069
        %v6075 = vadd.s32 %v6070, %v6074
        %v6076 = vadd.s32 %v6075, 536870912
        %v6077 = vshrl.u32 %v6076, 30
        %v6078 = vshll.u32 %v6077, 30
        %v6079 = vsub.s32 %v6075, %v6078
        %vm6080 = vcmp.lt.s32.totalorder %v6079, 0
        %v6081 = vsub.s32 0, %v6079
        %v6082 = vsel %vm6080, %v6081, %v6079
        %v6083 = vclz %v6082
        %v6084 = vsub.s32 %v6083, 2
        %vm6085 = vcmp.gt.s32.totalorder 0, %v6084
        %v6086 = vsel %vm6085, 0, %v6084
        %v6087 = vsub.s32 32, %v6086
        %v6088 = vshll.u32 %v6079, %v6086
        %v6089 = vshrl.u32 %v6071, %v6087
        %v6090 = vor.u32 %v6088, %v6089
        %v6091 = vsub.s32 4294967266, %v6086
        %v6092 = vadd.s32 %v6091, 127
        %v6093 = vshll.u32 %v6092, 23
        %v6094 = vor.u32 4788187, %v6093
        %v6095 = vand.u32 2147483647, %v6094
        %v6097 = vcvt.s32.f32 %v6090
        %v6098 = vmul.f32 %v6097, %v6095
        %v6099 = vxor.u32 %v6098, 2147483648
        %v6100 = vsel %vm6017, %v6099, %v6098
        %v6101 = vsub.s32 4, %v6077
        %v6102 = vsel %vm6017, %v6101, %v6077
        %v6103 = vsel %vm6016, %v5643, %v6100
        %v6104 = vsel %vm6016, 0, %v6102
        %v6105 = vcosq.f32.pop %v6103
        %v6106 = vsinq.f32.pop %v6103
        %vm6107 = vweird.f32 %v5643
        %v6108 = vand.u32 %v6104, 3
        %vm6109 = vcmp.lt.s32.totalorder %v6108, 2
        %vm6110 = vcmp.eq.s32.totalorder %v6108, 0
        %v6111 = vxor.u32 %v6106, 2147483648
        %v6112 = vsel %vm6110, %v6105, %v6111
        %vm6113 = vcmp.eq.s32.totalorder %v6108, 2
        %v6114 = vxor.u32 %v6105, 2147483648
        %v6115 = vsel %vm6113, %v6114, %v6106
        %v6116 = vsel %vm6109, %v6112, %v6115
        %v6117 = vsel %vm6107, nan, %v6116
        %v6118 = vand.u32 2147483647, %v5648
        %vm6119 = vcmp.le.f32.partialorder %v6118, 0.7853982
        %vm6120 = vcmp.lt.s32.totalorder %v5648, 0
        %v6121 = vand.u32 %v5648, 2139095040
        %v6122 = vshrl.u32 %v6121, 23
        %v6123 = vsub.s32 %v6122, 127
        %v6124 = vand.u32 2147483647, %v5648
        %v6125 = vand.u32 %v6124, 8388607
        %v6126 = vor.u32 %v6125, 8388608
        %v6127 = vsub.s32 0, %v6126
        %v6128 = vadd.s32 %v6123, 1
        %vm6129 = vcmp.gt.s32.totalorder %v6128, 0
        %v6130 = vsel %vm6129, %v6128, 0
        %v6131 = vshrl.u32 %v6130, 5
        %v6132 = vand.u32 %v6130, 31
        %v6133 = vsub.s32 32, %v6132
        %v6134 = vshrl.u32 683565275, %v6133
        %v6135 = vshll.u32 683565275, %v6132
        %v6136 = vshrl.u32 2475754826, %v6133
        %v6137 = vor.u32 %v6135, %v6136
        %v6138 = vshll.u32 2475754826, %v6132
        %v6139 = vshrl.u32 2131351028, %v6133
        %v6140 = vor.u32 %v6138, %v6139
        %v6141 = vshll.u32 2131351028, %v6132
        %v6142 = vshrl.u32 2102212464, %v6133
        %v6143 = vor.u32 %v6141, %v6142
        %v6144 = vshll.u32 2102212464, %v6132
        %v6145 = vshrl.u32 920167782, %v6133
        %v6146 = vor.u32 %v6144, %v6145
        %v6147 = vshll.u32 920167782, %v6132
        %v6148 = vshrl.u32 1326507024, %v6133
        %v6149 = vor.u32 %v6147, %v6148
        %vm6150 = vcmp.lt.s32.totalorder %v6131, 1
        %vm6151 = vcmp.lt.s32.totalorder %v6131, 2
        %vm6152 = vcmp.lt.s32.totalorder %v6131, 3
        %vm6153 = vcmp.lt.s32.totalorder %v6131, 4
        %v6154 = vsel %vm6150, %v6134, %v6137
        %v6155 = vsel %vm6153, %v6143, 2102212464
        %v6156 = vsel %vm6152, %v6140, %v6155
        %v6157 = vsel %vm6151, %v6154, %v6156
        %v6158 = vsel %vm6150, %v6137, %v6140
        %v6159 = vsel %vm6153, %v6146, 920167782
        %v6160 = vsel %vm6152, %v6143, %v6159
        %v6161 = vsel %vm6151, %v6158, %v6160
        %v6162 = vsel %vm6150, %v6140, %v6143
        %v6163 = vsel %vm6153, %v6149, 1326507024
        %v6164 = vsel %vm6152, %v6146, %v6163
        %v6165 = vsel %vm6151, %v6162, %v6164
        %v6166 = vshll.u32 %v6126, 8
        %v6167 = vmul.u32.u64.compose %v6166, %v6165
        %v6168 = vextract.low.u32 %v6167
        %v6169 = vextract.high.u32 %v6167
        %v6170 = vmul.u32.u64.compose %v6166, %v6161
        %v6171 = vextract.low.u32 %v6170
        %v6172 = vextract.high.u32 %v6170
        %v6173 = vmul.u32 %v6166, %v6157
        %v6174 = vadd.s32 %v6169, %v6171
        %vm6175 = vc.u32 %v6169, %v6171
        %v6176 = vadd.s32 %v6172, 1
        %v6177 = vsel %vm6175, %v6176, %v6172
        %v6178 = vadd.s32 %v6173, %v6177
        %v6179 = vadd.s32 %v6178, 536870912
        %v6180 = vshrl.u32 %v6179, 30
        %v6181 = vshll.u32 %v6180, 30
        %v6182 = vsub.s32 %v6178, %v6181
        %vm6183 = vcmp.lt.s32.totalorder %v6182, 0
        %v6184 = vsub.s32 0, %v6182
        %v6185 = vsel %vm6183, %v6184, %v6182
        %v6186 = vclz %v6185
        %v6187 = vsub.s32 %v6186, 2
        %vm6188 = vcmp.gt.s32.totalorder 0, %v6187
        %v6189 = vsel %vm6188, 0, %v6187
        %v6190 = vsub.s32 32, %v6189
        %v6191 = vshll.u32 %v6182, %v6189
        %v6192 = vshrl.u32 %v6174, %v6190
        %v6193 = vor.u32 %v6191, %v6192
        %v6194 = vsub.s32 4294967266, %v6189
        %v6195 = vadd.s32 %v6194, 127
        %v6196 = vshll.u32 %v6195, 23
        %v6197 = vor.u32 4788187, %v6196
        %v6198 = vand.u32 2147483647, %v6197
        %v6200 = vcvt.s32.f32 %v6193
        %v6201 = vmul.f32 %v6200, %v6198
        %v6202 = vxor.u32 %v6201, 2147483648
        %v6203 = vsel %vm6120, %v6202, %v6201
        %v6204 = vsub.s32 4, %v6180
        %v6205 = vsel %vm6120, %v6204, %v6180
        %v6206 = vsel %vm6119, %v5648, %v6203
        %v6207 = vsel %vm6119, 0, %v6205
        %v6208 = vcosq.f32.pop %v6206
        %v6209 = vsinq.f32.pop %v6206
        %vm6210 = vweird.f32 %v5648
        %v6211 = vand.u32 %v6207, 3
        %vm6212 = vcmp.lt.s32.totalorder %v6211, 2
        %vm6213 = vcmp.eq.s32.totalorder %v6211, 0
        %v6214 = vxor.u32 %v6209, 2147483648
        %v6215 = vsel %vm6213, %v6208, %v6214
        %vm6216 = vcmp.eq.s32.totalorder %v6211, 2
        %v6217 = vxor.u32 %v6208, 2147483648
        %v6218 = vsel %vm6216, %v6217, %v6209
        %v6219 = vsel %vm6212, %v6215, %v6218
        %v6220 = vsel %vm6210, nan, %v6219
        %v6221 = vand.u32 2147483647, %v5653
        %vm6222 = vcmp.le.f32.partialorder %v6221, 0.7853982
        %vm6223 = vcmp.lt.s32.totalorder %v5653, 0
        %v6224 = vand.u32 %v5653, 2139095040
        %v6225 = vshrl.u32 %v6224, 23
        %v6226 = vsub.s32 %v6225, 127
        %v6227 = vand.u32 2147483647, %v5653
        %v6228 = vand.u32 %v6227, 8388607
        %v6229 = vor.u32 %v6228, 8388608
        %v6230 = vsub.s32 0, %v6229
        %v6231 = vadd.s32 %v6226, 1
        %vm6232 = vcmp.gt.s32.totalorder %v6231, 0
        %v6233 = vsel %vm6232, %v6231, 0
        %v6234 = vshrl.u32 %v6233, 5
        %v6235 = vand.u32 %v6233, 31
        %v6236 = vsub.s32 32, %v6235
        %v6237 = vshrl.u32 683565275, %v6236
        %v6238 = vshll.u32 683565275, %v6235
        %v6239 = vshrl.u32 2475754826, %v6236
        %v6240 = vor.u32 %v6238, %v6239
        %v6241 = vshll.u32 2475754826, %v6235
        %v6242 = vshrl.u32 2131351028, %v6236
        %v6243 = vor.u32 %v6241, %v6242
        %v6244 = vshll.u32 2131351028, %v6235
        %v6245 = vshrl.u32 2102212464, %v6236
        %v6246 = vor.u32 %v6244, %v6245
        %v6247 = vshll.u32 2102212464, %v6235
        %v6248 = vshrl.u32 920167782, %v6236
        %v6249 = vor.u32 %v6247, %v6248
        %v6250 = vshll.u32 920167782, %v6235
        %v6251 = vshrl.u32 1326507024, %v6236
        %v6252 = vor.u32 %v6250, %v6251
        %vm6253 = vcmp.lt.s32.totalorder %v6234, 1
        %vm6254 = vcmp.lt.s32.totalorder %v6234, 2
        %vm6255 = vcmp.lt.s32.totalorder %v6234, 3
        %vm6256 = vcmp.lt.s32.totalorder %v6234, 4
        %v6257 = vsel %vm6253, %v6237, %v6240
        %v6258 = vsel %vm6256, %v6246, 2102212464
        %v6259 = vsel %vm6255, %v6243, %v6258
        %v6260 = vsel %vm6254, %v6257, %v6259
        %v6261 = vsel %vm6253, %v6240, %v6243
        %v6262 = vsel %vm6256, %v6249, 920167782
        %v6263 = vsel %vm6255, %v6246, %v6262
        %v6264 = vsel %vm6254, %v6261, %v6263
        %v6265 = vsel %vm6253, %v6243, %v6246
        %v6266 = vsel %vm6256, %v6252, 1326507024
        %v6267 = vsel %vm6255, %v6249, %v6266
        %v6268 = vsel %vm6254, %v6265, %v6267
        %v6269 = vshll.u32 %v6229, 8
        %v6270 = vmul.u32.u64.compose %v6269, %v6268
        %v6271 = vextract.low.u32 %v6270
        %v6272 = vextract.high.u32 %v6270
        %v6273 = vmul.u32.u64.compose %v6269, %v6264
        %v6274 = vextract.low.u32 %v6273
        %v6275 = vextract.high.u32 %v6273
        %v6276 = vmul.u32 %v6269, %v6260
        %v6277 = vadd.s32 %v6272, %v6274
        %vm6278 = vc.u32 %v6272, %v6274
        %v6279 = vadd.s32 %v6275, 1
        %v6280 = vsel %vm6278, %v6279, %v6275
        %v6281 = vadd.s32 %v6276, %v6280
        %v6282 = vadd.s32 %v6281, 536870912
        %v6283 = vshrl.u32 %v6282, 30
        %v6284 = vshll.u32 %v6283, 30
        %v6285 = vsub.s32 %v6281, %v6284
        %vm6286 = vcmp.lt.s32.totalorder %v6285, 0
        %v6287 = vsub.s32 0, %v6285
        %v6288 = vsel %vm6286, %v6287, %v6285
        %v6289 = vclz %v6288
        %v6290 = vsub.s32 %v6289, 2
        %vm6291 = vcmp.gt.s32.totalorder 0, %v6290
        %v6292 = vsel %vm6291, 0, %v6290
        %v6293 = vsub.s32 32, %v6292
        %v6294 = vshll.u32 %v6285, %v6292
        %v6295 = vshrl.u32 %v6277, %v6293
        %v6296 = vor.u32 %v6294, %v6295
        %v6297 = vsub.s32 4294967266, %v6292
        %v6298 = vadd.s32 %v6297, 127
        %v6299 = vshll.u32 %v6298, 23
        %v6300 = vor.u32 4788187, %v6299
        %v6301 = vand.u32 2147483647, %v6300
        %v6303 = vcvt.s32.f32 %v6296
        %v6304 = vmul.f32 %v6303, %v6301
        %v6305 = vxor.u32 %v6304, 2147483648
        %v6306 = vsel %vm6223, %v6305, %v6304
        %v6307 = vsub.s32 4, %v6283
        %v6308 = vsel %vm6223, %v6307, %v6283
        %v6309 = vsel %vm6222, %v5653, %v6306
        %v6310 = vsel %vm6222, 0, %v6308
        %v6311 = vcosq.f32.pop %v6309
        %v6312 = vsinq.f32.pop %v6309
        %vm6313 = vweird.f32 %v5653
        %v6314 = vand.u32 %v6310, 3
        %vm6315 = vcmp.lt.s32.totalorder %v6314, 2
        %vm6316 = vcmp.eq.s32.totalorder %v6314, 0
        %v6317 = vxor.u32 %v6312, 2147483648
        %v6318 = vsel %vm6316, %v6311, %v6317
        %vm6319 = vcmp.eq.s32.totalorder %v6314, 2
        %v6320 = vxor.u32 %v6311, 2147483648
        %v6321 = vsel %vm6319, %v6320, %v6312
        %v6322 = vsel %vm6315, %v6318, %v6321
        %v6323 = vsel %vm6313, nan, %v6322
        %v6324 = vand.u32 2147483647, %v5658
        %vm6325 = vcmp.le.f32.partialorder %v6324, 0.7853982
        %vm6326 = vcmp.lt.s32.totalorder %v5658, 0
        %v6327 = vand.u32 %v5658, 2139095040
        %v6328 = vshrl.u32 %v6327, 23
        %v6329 = vsub.s32 %v6328, 127
        %v6330 = vand.u32 2147483647, %v5658
        %v6331 = vand.u32 %v6330, 8388607
        %v6332 = vor.u32 %v6331, 8388608
        %v6333 = vsub.s32 0, %v6332
        %v6334 = vadd.s32 %v6329, 1
        %vm6335 = vcmp.gt.s32.totalorder %v6334, 0
        %v6336 = vsel %vm6335, %v6334, 0
        %v6337 = vshrl.u32 %v6336, 5
        %v6338 = vand.u32 %v6336, 31
        %v6339 = vsub.s32 32, %v6338
        %v6340 = vshrl.u32 683565275, %v6339
        %v6341 = vshll.u32 683565275, %v6338
        %v6342 = vshrl.u32 2475754826, %v6339
        %v6343 = vor.u32 %v6341, %v6342
        %v6344 = vshll.u32 2475754826, %v6338
        %v6345 = vshrl.u32 2131351028, %v6339
        %v6346 = vor.u32 %v6344, %v6345
        %v6347 = vshll.u32 2131351028, %v6338
        %v6348 = vshrl.u32 2102212464, %v6339
        %v6349 = vor.u32 %v6347, %v6348
        %v6350 = vshll.u32 2102212464, %v6338
        %v6351 = vshrl.u32 920167782, %v6339
        %v6352 = vor.u32 %v6350, %v6351
        %v6353 = vshll.u32 920167782, %v6338
        %v6354 = vshrl.u32 1326507024, %v6339
        %v6355 = vor.u32 %v6353, %v6354
        %vm6356 = vcmp.lt.s32.totalorder %v6337, 1
        %vm6357 = vcmp.lt.s32.totalorder %v6337, 2
        %vm6358 = vcmp.lt.s32.totalorder %v6337, 3
        %vm6359 = vcmp.lt.s32.totalorder %v6337, 4
        %v6360 = vsel %vm6356, %v6340, %v6343
        %v6361 = vsel %vm6359, %v6349, 2102212464
        %v6362 = vsel %vm6358, %v6346, %v6361
        %v6363 = vsel %vm6357, %v6360, %v6362
        %v6364 = vsel %vm6356, %v6343, %v6346
        %v6365 = vsel %vm6359, %v6352, 920167782
        %v6366 = vsel %vm6358, %v6349, %v6365
        %v6367 = vsel %vm6357, %v6364, %v6366
        %v6368 = vsel %vm6356, %v6346, %v6349
        %v6369 = vsel %vm6359, %v6355, 1326507024
        %v6370 = vsel %vm6358, %v6352, %v6369
        %v6371 = vsel %vm6357, %v6368, %v6370
        %v6372 = vshll.u32 %v6332, 8
        %v6373 = vmul.u32.u64.compose %v6372, %v6371
        %v6374 = vextract.low.u32 %v6373
        %v6375 = vextract.high.u32 %v6373
        %v6376 = vmul.u32.u64.compose %v6372, %v6367
        %v6377 = vextract.low.u32 %v6376
        %v6378 = vextract.high.u32 %v6376
        %v6379 = vmul.u32 %v6372, %v6363
        %v6380 = vadd.s32 %v6375, %v6377
        %vm6381 = vc.u32 %v6375, %v6377
        %v6382 = vadd.s32 %v6378, 1
        %v6383 = vsel %vm6381, %v6382, %v6378
        %v6384 = vadd.s32 %v6379, %v6383
        %v6385 = vadd.s32 %v6384, 536870912
        %v6386 = vshrl.u32 %v6385, 30
        %v6387 = vshll.u32 %v6386, 30
        %v6388 = vsub.s32 %v6384, %v6387
        %vm6389 = vcmp.lt.s32.totalorder %v6388, 0
        %v6390 = vsub.s32 0, %v6388
        %v6391 = vsel %vm6389, %v6390, %v6388
        %v6392 = vclz %v6391
        %v6393 = vsub.s32 %v6392, 2
        %vm6394 = vcmp.gt.s32.totalorder 0, %v6393
        %v6395 = vsel %vm6394, 0, %v6393
        %v6396 = vsub.s32 32, %v6395
        %v6397 = vshll.u32 %v6388, %v6395
        %v6398 = vshrl.u32 %v6380, %v6396
        %v6399 = vor.u32 %v6397, %v6398
        %v6400 = vsub.s32 4294967266, %v6395
        %v6401 = vadd.s32 %v6400, 127
        %v6402 = vshll.u32 %v6401, 23
        %v6403 = vor.u32 4788187, %v6402
        %v6404 = vand.u32 2147483647, %v6403
        %v6406 = vcvt.s32.f32 %v6399
        %v6407 = vmul.f32 %v6406, %v6404
        %v6408 = vxor.u32 %v6407, 2147483648
        %v6409 = vsel %vm6326, %v6408, %v6407
        %v6410 = vsub.s32 4, %v6386
        %v6411 = vsel %vm6326, %v6410, %v6386
        %v6412 = vsel %vm6325, %v5658, %v6409
        %v6413 = vsel %vm6325, 0, %v6411
        %v6414 = vcosq.f32.pop %v6412
        %v6415 = vsinq.f32.pop %v6412
        %vm6416 = vweird.f32 %v5658
        %v6417 = vand.u32 %v6413, 3
        %vm6418 = vcmp.lt.s32.totalorder %v6417, 2
        %vm6419 = vcmp.eq.s32.totalorder %v6417, 0
        %v6420 = vxor.u32 %v6415, 2147483648
        %v6421 = vsel %vm6419, %v6414, %v6420
        %vm6422 = vcmp.eq.s32.totalorder %v6417, 2
        %v6423 = vxor.u32 %v6414, 2147483648
        %v6424 = vsel %vm6422, %v6423, %v6415
        %v6425 = vsel %vm6418, %v6421, %v6424
        %v6426 = vsel %vm6416, nan, %v6425
        %v6427 = vand.u32 2147483647, %v5663
        %vm6428 = vcmp.le.f32.partialorder %v6427, 0.7853982
        %vm6429 = vcmp.lt.s32.totalorder %v5663, 0
        %v6430 = vand.u32 %v5663, 2139095040
        %v6431 = vshrl.u32 %v6430, 23
        %v6432 = vsub.s32 %v6431, 127
        %v6433 = vand.u32 2147483647, %v5663
        %v6434 = vand.u32 %v6433, 8388607
        %v6435 = vor.u32 %v6434, 8388608
        %v6436 = vsub.s32 0, %v6435
        %v6437 = vadd.s32 %v6432, 1
        %vm6438 = vcmp.gt.s32.totalorder %v6437, 0
        %v6439 = vsel %vm6438, %v6437, 0
        %v6440 = vshrl.u32 %v6439, 5
        %v6441 = vand.u32 %v6439, 31
        %v6442 = vsub.s32 32, %v6441
        %v6443 = vshrl.u32 683565275, %v6442
        %v6444 = vshll.u32 683565275, %v6441
        %v6445 = vshrl.u32 2475754826, %v6442
        %v6446 = vor.u32 %v6444, %v6445
        %v6447 = vshll.u32 2475754826, %v6441
        %v6448 = vshrl.u32 2131351028, %v6442
        %v6449 = vor.u32 %v6447, %v6448
        %v6450 = vshll.u32 2131351028, %v6441
        %v6451 = vshrl.u32 2102212464, %v6442
        %v6452 = vor.u32 %v6450, %v6451
        %v6453 = vshll.u32 2102212464, %v6441
        %v6454 = vshrl.u32 920167782, %v6442
        %v6455 = vor.u32 %v6453, %v6454
        %v6456 = vshll.u32 920167782, %v6441
        %v6457 = vshrl.u32 1326507024, %v6442
        %v6458 = vor.u32 %v6456, %v6457
        %vm6459 = vcmp.lt.s32.totalorder %v6440, 1
        %vm6460 = vcmp.lt.s32.totalorder %v6440, 2
        %vm6461 = vcmp.lt.s32.totalorder %v6440, 3
        %vm6462 = vcmp.lt.s32.totalorder %v6440, 4
        %v6463 = vsel %vm6459, %v6443, %v6446
        %v6464 = vsel %vm6462, %v6452, 2102212464
        %v6465 = vsel %vm6461, %v6449, %v6464
        %v6466 = vsel %vm6460, %v6463, %v6465
        %v6467 = vsel %vm6459, %v6446, %v6449
        %v6468 = vsel %vm6462, %v6455, 920167782
        %v6469 = vsel %vm6461, %v6452, %v6468
        %v6470 = vsel %vm6460, %v6467, %v6469
        %v6471 = vsel %vm6459, %v6449, %v6452
        %v6472 = vsel %vm6462, %v6458, 1326507024
        %v6473 = vsel %vm6461, %v6455, %v6472
        %v6474 = vsel %vm6460, %v6471, %v6473
        %v6475 = vshll.u32 %v6435, 8
        %v6476 = vmul.u32.u64.compose %v6475, %v6474
        %v6477 = vextract.low.u32 %v6476
        %v6478 = vextract.high.u32 %v6476
        %v6479 = vmul.u32.u64.compose %v6475, %v6470
        %v6480 = vextract.low.u32 %v6479
        %v6481 = vextract.high.u32 %v6479
        %v6482 = vmul.u32 %v6475, %v6466
        %v6483 = vadd.s32 %v6478, %v6480
        %vm6484 = vc.u32 %v6478, %v6480
        %v6485 = vadd.s32 %v6481, 1
        %v6486 = vsel %vm6484, %v6485, %v6481
        %v6487 = vadd.s32 %v6482, %v6486
        %v6488 = vadd.s32 %v6487, 536870912
        %v6489 = vshrl.u32 %v6488, 30
        %v6490 = vshll.u32 %v6489, 30
        %v6491 = vsub.s32 %v6487, %v6490
        %vm6492 = vcmp.lt.s32.totalorder %v6491, 0
        %v6493 = vsub.s32 0, %v6491
        %v6494 = vsel %vm6492, %v6493, %v6491
        %v6495 = vclz %v6494
        %v6496 = vsub.s32 %v6495, 2
        %vm6497 = vcmp.gt.s32.totalorder 0, %v6496
        %v6498 = vsel %vm6497, 0, %v6496
        %v6499 = vsub.s32 32, %v6498
        %v6500 = vshll.u32 %v6491, %v6498
        %v6501 = vshrl.u32 %v6483, %v6499
        %v6502 = vor.u32 %v6500, %v6501
        %v6503 = vsub.s32 4294967266, %v6498
        %v6504 = vadd.s32 %v6503, 127
        %v6505 = vshll.u32 %v6504, 23
        %v6506 = vor.u32 4788187, %v6505
        %v6507 = vand.u32 2147483647, %v6506
        %v6509 = vcvt.s32.f32 %v6502
        %v6510 = vmul.f32 %v6509, %v6507
        %v6511 = vxor.u32 %v6510, 2147483648
        %v6512 = vsel %vm6429, %v6511, %v6510
        %v6513 = vsub.s32 4, %v6489
        %v6514 = vsel %vm6429, %v6513, %v6489
        %v6515 = vsel %vm6428, %v5663, %v6512
        %v6516 = vsel %vm6428, 0, %v6514
        %v6517 = vcosq.f32.pop %v6515
        %v6518 = vsinq.f32.pop %v6515
        %vm6519 = vweird.f32 %v5663
        %v6520 = vand.u32 %v6516, 3
        %vm6521 = vcmp.lt.s32.totalorder %v6520, 2
        %vm6522 = vcmp.eq.s32.totalorder %v6520, 0
        %v6523 = vxor.u32 %v6518, 2147483648
        %v6524 = vsel %vm6522, %v6517, %v6523
        %vm6525 = vcmp.eq.s32.totalorder %v6520, 2
        %v6526 = vxor.u32 %v6517, 2147483648
        %v6527 = vsel %vm6525, %v6526, %v6518
        %v6528 = vsel %vm6521, %v6524, %v6527
        %v6529 = vsel %vm6519, nan, %v6528
        %v6530 = vand.u32 2147483647, %v5668
        %vm6531 = vcmp.le.f32.partialorder %v6530, 0.7853982
        %vm6532 = vcmp.lt.s32.totalorder %v5668, 0
        %v6533 = vand.u32 %v5668, 2139095040
        %v6534 = vshrl.u32 %v6533, 23
        %v6535 = vsub.s32 %v6534, 127
        %v6536 = vand.u32 2147483647, %v5668
        %v6537 = vand.u32 %v6536, 8388607
        %v6538 = vor.u32 %v6537, 8388608
        %v6539 = vsub.s32 0, %v6538
        %v6540 = vadd.s32 %v6535, 1
        %vm6541 = vcmp.gt.s32.totalorder %v6540, 0
        %v6542 = vsel %vm6541, %v6540, 0
        %v6543 = vshrl.u32 %v6542, 5
        %v6544 = vand.u32 %v6542, 31
        %v6545 = vsub.s32 32, %v6544
        %v6546 = vshrl.u32 683565275, %v6545
        %v6547 = vshll.u32 683565275, %v6544
        %v6548 = vshrl.u32 2475754826, %v6545
        %v6549 = vor.u32 %v6547, %v6548
        %v6550 = vshll.u32 2475754826, %v6544
        %v6551 = vshrl.u32 2131351028, %v6545
        %v6552 = vor.u32 %v6550, %v6551
        %v6553 = vshll.u32 2131351028, %v6544
        %v6554 = vshrl.u32 2102212464, %v6545
        %v6555 = vor.u32 %v6553, %v6554
        %v6556 = vshll.u32 2102212464, %v6544
        %v6557 = vshrl.u32 920167782, %v6545
        %v6558 = vor.u32 %v6556, %v6557
        %v6559 = vshll.u32 920167782, %v6544
        %v6560 = vshrl.u32 1326507024, %v6545
        %v6561 = vor.u32 %v6559, %v6560
        %vm6562 = vcmp.lt.s32.totalorder %v6543, 1
        %vm6563 = vcmp.lt.s32.totalorder %v6543, 2
        %vm6564 = vcmp.lt.s32.totalorder %v6543, 3
        %vm6565 = vcmp.lt.s32.totalorder %v6543, 4
        %v6566 = vsel %vm6562, %v6546, %v6549
        %v6567 = vsel %vm6565, %v6555, 2102212464
        %v6568 = vsel %vm6564, %v6552, %v6567
        %v6569 = vsel %vm6563, %v6566, %v6568
        %v6570 = vsel %vm6562, %v6549, %v6552
        %v6571 = vsel %vm6565, %v6558, 920167782
        %v6572 = vsel %vm6564, %v6555, %v6571
        %v6573 = vsel %vm6563, %v6570, %v6572
        %v6574 = vsel %vm6562, %v6552, %v6555
        %v6575 = vsel %vm6565, %v6561, 1326507024
        %v6576 = vsel %vm6564, %v6558, %v6575
        %v6577 = vsel %vm6563, %v6574, %v6576
        %v6578 = vshll.u32 %v6538, 8
        %v6579 = vmul.u32.u64.compose %v6578, %v6577
        %v6580 = vextract.low.u32 %v6579
        %v6581 = vextract.high.u32 %v6579
        %v6582 = vmul.u32.u64.compose %v6578, %v6573
        %v6583 = vextract.low.u32 %v6582
        %v6584 = vextract.high.u32 %v6582
        %v6585 = vmul.u32 %v6578, %v6569
        %v6586 = vadd.s32 %v6581, %v6583
        %vm6587 = vc.u32 %v6581, %v6583
        %v6588 = vadd.s32 %v6584, 1
        %v6589 = vsel %vm6587, %v6588, %v6584
        %v6590 = vadd.s32 %v6585, %v6589
        %v6591 = vadd.s32 %v6590, 536870912
        %v6592 = vshrl.u32 %v6591, 30
        %v6593 = vshll.u32 %v6592, 30
        %v6594 = vsub.s32 %v6590, %v6593
        %vm6595 = vcmp.lt.s32.totalorder %v6594, 0
        %v6596 = vsub.s32 0, %v6594
        %v6597 = vsel %vm6595, %v6596, %v6594
        %v6598 = vclz %v6597
        %v6599 = vsub.s32 %v6598, 2
        %vm6600 = vcmp.gt.s32.totalorder 0, %v6599
        %v6601 = vsel %vm6600, 0, %v6599
        %v6602 = vsub.s32 32, %v6601
        %v6603 = vshll.u32 %v6594, %v6601
        %v6604 = vshrl.u32 %v6586, %v6602
        %v6605 = vor.u32 %v6603, %v6604
        %v6606 = vsub.s32 4294967266, %v6601
        %v6607 = vadd.s32 %v6606, 127
        %v6608 = vshll.u32 %v6607, 23
        %v6609 = vor.u32 4788187, %v6608
        %v6610 = vand.u32 2147483647, %v6609
        %v6612 = vcvt.s32.f32 %v6605
        %v6613 = vmul.f32 %v6612, %v6610
        %v6614 = vxor.u32 %v6613, 2147483648
        %v6615 = vsel %vm6532, %v6614, %v6613
        %v6616 = vsub.s32 4, %v6592
        %v6617 = vsel %vm6532, %v6616, %v6592
        %v6618 = vsel %vm6531, %v5668, %v6615
        %v6619 = vsel %vm6531, 0, %v6617
        %v6620 = vcosq.f32.pop %v6618
        %v6621 = vsinq.f32.pop %v6618
        %vm6622 = vweird.f32 %v5668
        %v6623 = vand.u32 %v6619, 3
        %vm6624 = vcmp.lt.s32.totalorder %v6623, 2
        %vm6625 = vcmp.eq.s32.totalorder %v6623, 0
        %v6626 = vxor.u32 %v6621, 2147483648
        %v6627 = vsel %vm6625, %v6620, %v6626
        %vm6628 = vcmp.eq.s32.totalorder %v6623, 2
        %v6629 = vxor.u32 %v6620, 2147483648
        %v6630 = vsel %vm6628, %v6629, %v6621
        %v6631 = vsel %vm6624, %v6627, %v6630
        %v6632 = vsel %vm6622, nan, %v6631
        %v6633 = vand.u32 2147483647, %v5673
        %vm6634 = vcmp.le.f32.partialorder %v6633, 0.7853982
        %vm6635 = vcmp.lt.s32.totalorder %v5673, 0
        %v6636 = vand.u32 %v5673, 2139095040
        %v6637 = vshrl.u32 %v6636, 23
        %v6638 = vsub.s32 %v6637, 127
        %v6639 = vand.u32 2147483647, %v5673
        %v6640 = vand.u32 %v6639, 8388607
        %v6641 = vor.u32 %v6640, 8388608
        %v6642 = vsub.s32 0, %v6641
        %v6643 = vadd.s32 %v6638, 1
        %vm6644 = vcmp.gt.s32.totalorder %v6643, 0
        %v6645 = vsel %vm6644, %v6643, 0
        %v6646 = vshrl.u32 %v6645, 5
        %v6647 = vand.u32 %v6645, 31
        %v6648 = vsub.s32 32, %v6647
        %v6649 = vshrl.u32 683565275, %v6648
        %v6650 = vshll.u32 683565275, %v6647
        %v6651 = vshrl.u32 2475754826, %v6648
        %v6652 = vor.u32 %v6650, %v6651
        %v6653 = vshll.u32 2475754826, %v6647
        %v6654 = vshrl.u32 2131351028, %v6648
        %v6655 = vor.u32 %v6653, %v6654
        %v6656 = vshll.u32 2131351028, %v6647
        %v6657 = vshrl.u32 2102212464, %v6648
        %v6658 = vor.u32 %v6656, %v6657
        %v6659 = vshll.u32 2102212464, %v6647
        %v6660 = vshrl.u32 920167782, %v6648
        %v6661 = vor.u32 %v6659, %v6660
        %v6662 = vshll.u32 920167782, %v6647
        %v6663 = vshrl.u32 1326507024, %v6648
        %v6664 = vor.u32 %v6662, %v6663
        %vm6665 = vcmp.lt.s32.totalorder %v6646, 1
        %vm6666 = vcmp.lt.s32.totalorder %v6646, 2
        %vm6667 = vcmp.lt.s32.totalorder %v6646, 3
        %vm6668 = vcmp.lt.s32.totalorder %v6646, 4
        %v6669 = vsel %vm6665, %v6649, %v6652
        %v6670 = vsel %vm6668, %v6658, 2102212464
        %v6671 = vsel %vm6667, %v6655, %v6670
        %v6672 = vsel %vm6666, %v6669, %v6671
        %v6673 = vsel %vm6665, %v6652, %v6655
        %v6674 = vsel %vm6668, %v6661, 920167782
        %v6675 = vsel %vm6667, %v6658, %v6674
        %v6676 = vsel %vm6666, %v6673, %v6675
        %v6677 = vsel %vm6665, %v6655, %v6658
        %v6678 = vsel %vm6668, %v6664, 1326507024
        %v6679 = vsel %vm6667, %v6661, %v6678
        %v6680 = vsel %vm6666, %v6677, %v6679
        %v6681 = vshll.u32 %v6641, 8
        %v6682 = vmul.u32.u64.compose %v6681, %v6680
        %v6683 = vextract.low.u32 %v6682
        %v6684 = vextract.high.u32 %v6682
        %v6685 = vmul.u32.u64.compose %v6681, %v6676
        %v6686 = vextract.low.u32 %v6685
        %v6687 = vextract.high.u32 %v6685
        %v6688 = vmul.u32 %v6681, %v6672
        %v6689 = vadd.s32 %v6684, %v6686
        %vm6690 = vc.u32 %v6684, %v6686
        %v6691 = vadd.s32 %v6687, 1
        %v6692 = vsel %vm6690, %v6691, %v6687
        %v6693 = vadd.s32 %v6688, %v6692
        %v6694 = vadd.s32 %v6693, 536870912
        %v6695 = vshrl.u32 %v6694, 30
        %v6696 = vshll.u32 %v6695, 30
        %v6697 = vsub.s32 %v6693, %v6696
        %vm6698 = vcmp.lt.s32.totalorder %v6697, 0
        %v6699 = vsub.s32 0, %v6697
        %v6700 = vsel %vm6698, %v6699, %v6697
        %v6701 = vclz %v6700
        %v6702 = vsub.s32 %v6701, 2
        %vm6703 = vcmp.gt.s32.totalorder 0, %v6702
        %v6704 = vsel %vm6703, 0, %v6702
        %v6705 = vsub.s32 32, %v6704
        %v6706 = vshll.u32 %v6697, %v6704
        %v6707 = vshrl.u32 %v6689, %v6705
        %v6708 = vor.u32 %v6706, %v6707
        %v6709 = vsub.s32 4294967266, %v6704
        %v6710 = vadd.s32 %v6709, 127
        %v6711 = vshll.u32 %v6710, 23
        %v6712 = vor.u32 4788187, %v6711
        %v6713 = vand.u32 2147483647, %v6712
        %v6715 = vcvt.s32.f32 %v6708
        %v6716 = vmul.f32 %v6715, %v6713
        %v6717 = vxor.u32 %v6716, 2147483648
        %v6718 = vsel %vm6635, %v6717, %v6716
        %v6719 = vsub.s32 4, %v6695
        %v6720 = vsel %vm6635, %v6719, %v6695
        %v6721 = vsel %vm6634, %v5673, %v6718
        %v6722 = vsel %vm6634, 0, %v6720
        %v6723 = vcosq.f32.pop %v6721
        %v6724 = vsinq.f32.pop %v6721
        %vm6725 = vweird.f32 %v5673
        %v6726 = vand.u32 %v6722, 3
        %vm6727 = vcmp.lt.s32.totalorder %v6726, 2
        %vm6728 = vcmp.eq.s32.totalorder %v6726, 0
        %v6729 = vxor.u32 %v6724, 2147483648
        %v6730 = vsel %vm6728, %v6723, %v6729
        %vm6731 = vcmp.eq.s32.totalorder %v6726, 2
        %v6732 = vxor.u32 %v6723, 2147483648
        %v6733 = vsel %vm6731, %v6732, %v6724
        %v6734 = vsel %vm6727, %v6730, %v6733
        %v6735 = vsel %vm6725, nan, %v6734
        %v6736 = vand.u32 2147483647, %v5678
        %vm6737 = vcmp.le.f32.partialorder %v6736, 0.7853982
        %vm6738 = vcmp.lt.s32.totalorder %v5678, 0
        %v6739 = vand.u32 %v5678, 2139095040
        %v6740 = vshrl.u32 %v6739, 23
        %v6741 = vsub.s32 %v6740, 127
        %v6742 = vand.u32 2147483647, %v5678
        %v6743 = vand.u32 %v6742, 8388607
        %v6744 = vor.u32 %v6743, 8388608
        %v6745 = vsub.s32 0, %v6744
        %v6746 = vadd.s32 %v6741, 1
        %vm6747 = vcmp.gt.s32.totalorder %v6746, 0
        %v6748 = vsel %vm6747, %v6746, 0
        %v6749 = vshrl.u32 %v6748, 5
        %v6750 = vand.u32 %v6748, 31
        %v6751 = vsub.s32 32, %v6750
        %v6752 = vshrl.u32 683565275, %v6751
        %v6753 = vshll.u32 683565275, %v6750
        %v6754 = vshrl.u32 2475754826, %v6751
        %v6755 = vor.u32 %v6753, %v6754
        %v6756 = vshll.u32 2475754826, %v6750
        %v6757 = vshrl.u32 2131351028, %v6751
        %v6758 = vor.u32 %v6756, %v6757
        %v6759 = vshll.u32 2131351028, %v6750
        %v6760 = vshrl.u32 2102212464, %v6751
        %v6761 = vor.u32 %v6759, %v6760
        %v6762 = vshll.u32 2102212464, %v6750
        %v6763 = vshrl.u32 920167782, %v6751
        %v6764 = vor.u32 %v6762, %v6763
        %v6765 = vshll.u32 920167782, %v6750
        %v6766 = vshrl.u32 1326507024, %v6751
        %v6767 = vor.u32 %v6765, %v6766
        %vm6768 = vcmp.lt.s32.totalorder %v6749, 1
        %vm6769 = vcmp.lt.s32.totalorder %v6749, 2
        %vm6770 = vcmp.lt.s32.totalorder %v6749, 3
        %vm6771 = vcmp.lt.s32.totalorder %v6749, 4
        %v6772 = vsel %vm6768, %v6752, %v6755
        %v6773 = vsel %vm6771, %v6761, 2102212464
        %v6774 = vsel %vm6770, %v6758, %v6773
        %v6775 = vsel %vm6769, %v6772, %v6774
        %v6776 = vsel %vm6768, %v6755, %v6758
        %v6777 = vsel %vm6771, %v6764, 920167782
        %v6778 = vsel %vm6770, %v6761, %v6777
        %v6779 = vsel %vm6769, %v6776, %v6778
        %v6780 = vsel %vm6768, %v6758, %v6761
        %v6781 = vsel %vm6771, %v6767, 1326507024
        %v6782 = vsel %vm6770, %v6764, %v6781
        %v6783 = vsel %vm6769, %v6780, %v6782
        %v6784 = vshll.u32 %v6744, 8
        %v6785 = vmul.u32.u64.compose %v6784, %v6783
        %v6786 = vextract.low.u32 %v6785
        %v6787 = vextract.high.u32 %v6785
        %v6788 = vmul.u32.u64.compose %v6784, %v6779
        %v6789 = vextract.low.u32 %v6788
        %v6790 = vextract.high.u32 %v6788
        %v6791 = vmul.u32 %v6784, %v6775
        %v6792 = vadd.s32 %v6787, %v6789
        %vm6793 = vc.u32 %v6787, %v6789
        %v6794 = vadd.s32 %v6790, 1
        %v6795 = vsel %vm6793, %v6794, %v6790
        %v6796 = vadd.s32 %v6791, %v6795
        %v6797 = vadd.s32 %v6796, 536870912
        %v6798 = vshrl.u32 %v6797, 30
        %v6799 = vshll.u32 %v6798, 30
        %v6800 = vsub.s32 %v6796, %v6799
        %vm6801 = vcmp.lt.s32.totalorder %v6800, 0
        %v6802 = vsub.s32 0, %v6800
        %v6803 = vsel %vm6801, %v6802, %v6800
        %v6804 = vclz %v6803
        %v6805 = vsub.s32 %v6804, 2
        %vm6806 = vcmp.gt.s32.totalorder 0, %v6805
        %v6807 = vsel %vm6806, 0, %v6805
        %v6808 = vsub.s32 32, %v6807
        %v6809 = vshll.u32 %v6800, %v6807
        %v6810 = vshrl.u32 %v6792, %v6808
        %v6811 = vor.u32 %v6809, %v6810
        %v6812 = vsub.s32 4294967266, %v6807
        %v6813 = vadd.s32 %v6812, 127
        %v6814 = vshll.u32 %v6813, 23
        %v6815 = vor.u32 4788187, %v6814
        %v6816 = vand.u32 2147483647, %v6815
        %v6818 = vcvt.s32.f32 %v6811
        %v6819 = vmul.f32 %v6818, %v6816
        %v6820 = vxor.u32 %v6819, 2147483648
        %v6821 = vsel %vm6738, %v6820, %v6819
        %v6822 = vsub.s32 4, %v6798
        %v6823 = vsel %vm6738, %v6822, %v6798
        %v6824 = vsel %vm6737, %v5678, %v6821
        %v6825 = vsel %vm6737, 0, %v6823
        %v6826 = vcosq.f32.pop %v6824
        %v6827 = vsinq.f32.pop %v6824
        %vm6828 = vweird.f32 %v5678
        %v6829 = vand.u32 %v6825, 3
        %vm6830 = vcmp.lt.s32.totalorder %v6829, 2
        %vm6831 = vcmp.eq.s32.totalorder %v6829, 0
        %v6832 = vxor.u32 %v6827, 2147483648
        %v6833 = vsel %vm6831, %v6826, %v6832
        %vm6834 = vcmp.eq.s32.totalorder %v6829, 2
        %v6835 = vxor.u32 %v6826, 2147483648
        %v6836 = vsel %vm6834, %v6835, %v6827
        %v6837 = vsel %vm6830, %v6833, %v6836
        %v6838 = vsel %vm6828, nan, %v6837
        %v6839 = vand.u32 2147483647, %v5683
        %vm6840 = vcmp.le.f32.partialorder %v6839, 0.7853982
        %vm6841 = vcmp.lt.s32.totalorder %v5683, 0
        %v6842 = vand.u32 %v5683, 2139095040
        %v6843 = vshrl.u32 %v6842, 23
        %v6844 = vsub.s32 %v6843, 127
        %v6845 = vand.u32 2147483647, %v5683
        %v6846 = vand.u32 %v6845, 8388607
        %v6847 = vor.u32 %v6846, 8388608
        %v6848 = vsub.s32 0, %v6847
        %v6849 = vadd.s32 %v6844, 1
        %vm6850 = vcmp.gt.s32.totalorder %v6849, 0
        %v6851 = vsel %vm6850, %v6849, 0
        %v6852 = vshrl.u32 %v6851, 5
        %v6853 = vand.u32 %v6851, 31
        %v6854 = vsub.s32 32, %v6853
        %v6855 = vshrl.u32 683565275, %v6854
        %v6856 = vshll.u32 683565275, %v6853
        %v6857 = vshrl.u32 2475754826, %v6854
        %v6858 = vor.u32 %v6856, %v6857
        %v6859 = vshll.u32 2475754826, %v6853
        %v6860 = vshrl.u32 2131351028, %v6854
        %v6861 = vor.u32 %v6859, %v6860
        %v6862 = vshll.u32 2131351028, %v6853
        %v6863 = vshrl.u32 2102212464, %v6854
        %v6864 = vor.u32 %v6862, %v6863
        %v6865 = vshll.u32 2102212464, %v6853
        %v6866 = vshrl.u32 920167782, %v6854
        %v6867 = vor.u32 %v6865, %v6866
        %v6868 = vshll.u32 920167782, %v6853
        %v6869 = vshrl.u32 1326507024, %v6854
        %v6870 = vor.u32 %v6868, %v6869
        %vm6871 = vcmp.lt.s32.totalorder %v6852, 1
        %vm6872 = vcmp.lt.s32.totalorder %v6852, 2
        %vm6873 = vcmp.lt.s32.totalorder %v6852, 3
        %vm6874 = vcmp.lt.s32.totalorder %v6852, 4
        %v6875 = vsel %vm6871, %v6855, %v6858
        %v6876 = vsel %vm6874, %v6864, 2102212464
        %v6877 = vsel %vm6873, %v6861, %v6876
        %v6878 = vsel %vm6872, %v6875, %v6877
        %v6879 = vsel %vm6871, %v6858, %v6861
        %v6880 = vsel %vm6874, %v6867, 920167782
        %v6881 = vsel %vm6873, %v6864, %v6880
        %v6882 = vsel %vm6872, %v6879, %v6881
        %v6883 = vsel %vm6871, %v6861, %v6864
        %v6884 = vsel %vm6874, %v6870, 1326507024
        %v6885 = vsel %vm6873, %v6867, %v6884
        %v6886 = vsel %vm6872, %v6883, %v6885
        %v6887 = vshll.u32 %v6847, 8
        %v6888 = vmul.u32.u64.compose %v6887, %v6886
        %v6889 = vextract.low.u32 %v6888
        %v6890 = vextract.high.u32 %v6888
        %v6891 = vmul.u32.u64.compose %v6887, %v6882
        %v6892 = vextract.low.u32 %v6891
        %v6893 = vextract.high.u32 %v6891
        %v6894 = vmul.u32 %v6887, %v6878
        %v6895 = vadd.s32 %v6890, %v6892
        %vm6896 = vc.u32 %v6890, %v6892
        %v6897 = vadd.s32 %v6893, 1
        %v6898 = vsel %vm6896, %v6897, %v6893
        %v6899 = vadd.s32 %v6894, %v6898
        %v6900 = vadd.s32 %v6899, 536870912
        %v6901 = vshrl.u32 %v6900, 30
        %v6902 = vshll.u32 %v6901, 30
        %v6903 = vsub.s32 %v6899, %v6902
        %vm6904 = vcmp.lt.s32.totalorder %v6903, 0
        %v6905 = vsub.s32 0, %v6903
        %v6906 = vsel %vm6904, %v6905, %v6903
        %v6907 = vclz %v6906
        %v6908 = vsub.s32 %v6907, 2
        %vm6909 = vcmp.gt.s32.totalorder 0, %v6908
        %v6910 = vsel %vm6909, 0, %v6908
        %v6911 = vsub.s32 32, %v6910
        %v6912 = vshll.u32 %v6903, %v6910
        %v6913 = vshrl.u32 %v6895, %v6911
        %v6914 = vor.u32 %v6912, %v6913
        %v6915 = vsub.s32 4294967266, %v6910
        %v6916 = vadd.s32 %v6915, 127
        %v6917 = vshll.u32 %v6916, 23
        %v6918 = vor.u32 4788187, %v6917
        %v6919 = vand.u32 2147483647, %v6918
        %v6921 = vcvt.s32.f32 %v6914
        %v6922 = vmul.f32 %v6921, %v6919
        %v6923 = vxor.u32 %v6922, 2147483648
        %v6924 = vsel %vm6841, %v6923, %v6922
        %v6925 = vsub.s32 4, %v6901
        %v6926 = vsel %vm6841, %v6925, %v6901
        %v6927 = vsel %vm6840, %v5683, %v6924
        %v6928 = vsel %vm6840, 0, %v6926
        %v6929 = vcosq.f32.pop %v6927
        %v6930 = vsinq.f32.pop %v6927
        %vm6931 = vweird.f32 %v5683
        %v6932 = vand.u32 %v6928, 3
        %vm6933 = vcmp.lt.s32.totalorder %v6932, 2
        %vm6934 = vcmp.eq.s32.totalorder %v6932, 0
        %v6935 = vxor.u32 %v6930, 2147483648
        %v6936 = vsel %vm6934, %v6929, %v6935
        %vm6937 = vcmp.eq.s32.totalorder %v6932, 2
        %v6938 = vxor.u32 %v6929, 2147483648
        %v6939 = vsel %vm6937, %v6938, %v6930
        %v6940 = vsel %vm6933, %v6936, %v6939
        %v6941 = vsel %vm6931, nan, %v6940
        %v6942 = vand.u32 2147483647, %v5688
        %vm6943 = vcmp.le.f32.partialorder %v6942, 0.7853982
        %vm6944 = vcmp.lt.s32.totalorder %v5688, 0
        %v6945 = vand.u32 %v5688, 2139095040
        %v6946 = vshrl.u32 %v6945, 23
        %v6947 = vsub.s32 %v6946, 127
        %v6948 = vand.u32 2147483647, %v5688
        %v6949 = vand.u32 %v6948, 8388607
        %v6950 = vor.u32 %v6949, 8388608
        %v6951 = vsub.s32 0, %v6950
        %v6952 = vadd.s32 %v6947, 1
        %vm6953 = vcmp.gt.s32.totalorder %v6952, 0
        %v6954 = vsel %vm6953, %v6952, 0
        %v6955 = vshrl.u32 %v6954, 5
        %v6956 = vand.u32 %v6954, 31
        %v6957 = vsub.s32 32, %v6956
        %v6958 = vshrl.u32 683565275, %v6957
        %v6959 = vshll.u32 683565275, %v6956
        %v6960 = vshrl.u32 2475754826, %v6957
        %v6961 = vor.u32 %v6959, %v6960
        %v6962 = vshll.u32 2475754826, %v6956
        %v6963 = vshrl.u32 2131351028, %v6957
        %v6964 = vor.u32 %v6962, %v6963
        %v6965 = vshll.u32 2131351028, %v6956
        %v6966 = vshrl.u32 2102212464, %v6957
        %v6967 = vor.u32 %v6965, %v6966
        %v6968 = vshll.u32 2102212464, %v6956
        %v6969 = vshrl.u32 920167782, %v6957
        %v6970 = vor.u32 %v6968, %v6969
        %v6971 = vshll.u32 920167782, %v6956
        %v6972 = vshrl.u32 1326507024, %v6957
        %v6973 = vor.u32 %v6971, %v6972
        %vm6974 = vcmp.lt.s32.totalorder %v6955, 1
        %vm6975 = vcmp.lt.s32.totalorder %v6955, 2
        %vm6976 = vcmp.lt.s32.totalorder %v6955, 3
        %vm6977 = vcmp.lt.s32.totalorder %v6955, 4
        %v6978 = vsel %vm6974, %v6958, %v6961
        %v6979 = vsel %vm6977, %v6967, 2102212464
        %v6980 = vsel %vm6976, %v6964, %v6979
        %v6981 = vsel %vm6975, %v6978, %v6980
        %v6982 = vsel %vm6974, %v6961, %v6964
        %v6983 = vsel %vm6977, %v6970, 920167782
        %v6984 = vsel %vm6976, %v6967, %v6983
        %v6985 = vsel %vm6975, %v6982, %v6984
        %v6986 = vsel %vm6974, %v6964, %v6967
        %v6987 = vsel %vm6977, %v6973, 1326507024
        %v6988 = vsel %vm6976, %v6970, %v6987
        %v6989 = vsel %vm6975, %v6986, %v6988
        %v6990 = vshll.u32 %v6950, 8
        %v6991 = vmul.u32.u64.compose %v6990, %v6989
        %v6992 = vextract.low.u32 %v6991
        %v6993 = vextract.high.u32 %v6991
        %v6994 = vmul.u32.u64.compose %v6990, %v6985
        %v6995 = vextract.low.u32 %v6994
        %v6996 = vextract.high.u32 %v6994
        %v6997 = vmul.u32 %v6990, %v6981
        %v6998 = vadd.s32 %v6993, %v6995
        %vm6999 = vc.u32 %v6993, %v6995
        %v7000 = vadd.s32 %v6996, 1
        %v7001 = vsel %vm6999, %v7000, %v6996
        %v7002 = vadd.s32 %v6997, %v7001
        %v7003 = vadd.s32 %v7002, 536870912
        %v7004 = vshrl.u32 %v7003, 30
        %v7005 = vshll.u32 %v7004, 30
        %v7006 = vsub.s32 %v7002, %v7005
        %vm7007 = vcmp.lt.s32.totalorder %v7006, 0
        %v7008 = vsub.s32 0, %v7006
        %v7009 = vsel %vm7007, %v7008, %v7006
        %v7010 = vclz %v7009
        %v7011 = vsub.s32 %v7010, 2
        %vm7012 = vcmp.gt.s32.totalorder 0, %v7011
        %v7013 = vsel %vm7012, 0, %v7011
        %v7014 = vsub.s32 32, %v7013
        %v7015 = vshll.u32 %v7006, %v7013
        %v7016 = vshrl.u32 %v6998, %v7014
        %v7017 = vor.u32 %v7015, %v7016
        %v7018 = vsub.s32 4294967266, %v7013
        %v7019 = vadd.s32 %v7018, 127
        %v7020 = vshll.u32 %v7019, 23
        %v7021 = vor.u32 4788187, %v7020
        %v7022 = vand.u32 2147483647, %v7021
        %v7024 = vcvt.s32.f32 %v7017
        %v7025 = vmul.f32 %v7024, %v7022
        %v7026 = vxor.u32 %v7025, 2147483648
        %v7027 = vsel %vm6944, %v7026, %v7025
        %v7028 = vsub.s32 4, %v7004
        %v7029 = vsel %vm6944, %v7028, %v7004
        %v7030 = vsel %vm6943, %v5688, %v7027
        %v7031 = vsel %vm6943, 0, %v7029
        %v7032 = vcosq.f32.pop %v7030
        %v7033 = vsinq.f32.pop %v7030
        %vm7034 = vweird.f32 %v5688
        %v7035 = vand.u32 %v7031, 3
        %vm7036 = vcmp.lt.s32.totalorder %v7035, 2
        %vm7037 = vcmp.eq.s32.totalorder %v7035, 0
        %v7038 = vxor.u32 %v7033, 2147483648
        %v7039 = vsel %vm7037, %v7032, %v7038
        %vm7040 = vcmp.eq.s32.totalorder %v7035, 2
        %v7041 = vxor.u32 %v7032, 2147483648
        %v7042 = vsel %vm7040, %v7041, %v7033
        %v7043 = vsel %vm7036, %v7039, %v7042
        %v7044 = vsel %vm7034, nan, %v7043
        %v7045 = vand.u32 2147483647, %v5693
        %vm7046 = vcmp.le.f32.partialorder %v7045, 0.7853982
        %vm7047 = vcmp.lt.s32.totalorder %v5693, 0
        %v7048 = vand.u32 %v5693, 2139095040
        %v7049 = vshrl.u32 %v7048, 23
        %v7050 = vsub.s32 %v7049, 127
        %v7051 = vand.u32 2147483647, %v5693
        %v7052 = vand.u32 %v7051, 8388607
        %v7053 = vor.u32 %v7052, 8388608
        %v7054 = vsub.s32 0, %v7053
        %v7055 = vadd.s32 %v7050, 1
        %vm7056 = vcmp.gt.s32.totalorder %v7055, 0
        %v7057 = vsel %vm7056, %v7055, 0
        %v7058 = vshrl.u32 %v7057, 5
        %v7059 = vand.u32 %v7057, 31
        %v7060 = vsub.s32 32, %v7059
        %v7061 = vshrl.u32 683565275, %v7060
        %v7062 = vshll.u32 683565275, %v7059
        %v7063 = vshrl.u32 2475754826, %v7060
        %v7064 = vor.u32 %v7062, %v7063
        %v7065 = vshll.u32 2475754826, %v7059
        %v7066 = vshrl.u32 2131351028, %v7060
        %v7067 = vor.u32 %v7065, %v7066
        %v7068 = vshll.u32 2131351028, %v7059
        %v7069 = vshrl.u32 2102212464, %v7060
        %v7070 = vor.u32 %v7068, %v7069
        %v7071 = vshll.u32 2102212464, %v7059
        %v7072 = vshrl.u32 920167782, %v7060
        %v7073 = vor.u32 %v7071, %v7072
        %v7074 = vshll.u32 920167782, %v7059
        %v7075 = vshrl.u32 1326507024, %v7060
        %v7076 = vor.u32 %v7074, %v7075
        %vm7077 = vcmp.lt.s32.totalorder %v7058, 1
        %vm7078 = vcmp.lt.s32.totalorder %v7058, 2
        %vm7079 = vcmp.lt.s32.totalorder %v7058, 3
        %vm7080 = vcmp.lt.s32.totalorder %v7058, 4
        %v7081 = vsel %vm7077, %v7061, %v7064
        %v7082 = vsel %vm7080, %v7070, 2102212464
        %v7083 = vsel %vm7079, %v7067, %v7082
        %v7084 = vsel %vm7078, %v7081, %v7083
        %v7085 = vsel %vm7077, %v7064, %v7067
        %v7086 = vsel %vm7080, %v7073, 920167782
        %v7087 = vsel %vm7079, %v7070, %v7086
        %v7088 = vsel %vm7078, %v7085, %v7087
        %v7089 = vsel %vm7077, %v7067, %v7070
        %v7090 = vsel %vm7080, %v7076, 1326507024
        %v7091 = vsel %vm7079, %v7073, %v7090
        %v7092 = vsel %vm7078, %v7089, %v7091
        %v7093 = vshll.u32 %v7053, 8
        %v7094 = vmul.u32.u64.compose %v7093, %v7092
        %v7095 = vextract.low.u32 %v7094
        %v7096 = vextract.high.u32 %v7094
        %v7097 = vmul.u32.u64.compose %v7093, %v7088
        %v7098 = vextract.low.u32 %v7097
        %v7099 = vextract.high.u32 %v7097
        %v7100 = vmul.u32 %v7093, %v7084
        %v7101 = vadd.s32 %v7096, %v7098
        %vm7102 = vc.u32 %v7096, %v7098
        %v7103 = vadd.s32 %v7099, 1
        %v7104 = vsel %vm7102, %v7103, %v7099
        %v7105 = vadd.s32 %v7100, %v7104
        %v7106 = vadd.s32 %v7105, 536870912
        %v7107 = vshrl.u32 %v7106, 30
        %v7108 = vshll.u32 %v7107, 30
        %v7109 = vsub.s32 %v7105, %v7108
        %vm7110 = vcmp.lt.s32.totalorder %v7109, 0
        %v7111 = vsub.s32 0, %v7109
        %v7112 = vsel %vm7110, %v7111, %v7109
        %v7113 = vclz %v7112
        %v7114 = vsub.s32 %v7113, 2
        %vm7115 = vcmp.gt.s32.totalorder 0, %v7114
        %v7116 = vsel %vm7115, 0, %v7114
        %v7117 = vsub.s32 32, %v7116
        %v7118 = vshll.u32 %v7109, %v7116
        %v7119 = vshrl.u32 %v7101, %v7117
        %v7120 = vor.u32 %v7118, %v7119
        %v7121 = vsub.s32 4294967266, %v7116
        %v7122 = vadd.s32 %v7121, 127
        %v7123 = vshll.u32 %v7122, 23
        %v7124 = vor.u32 4788187, %v7123
        %v7125 = vand.u32 2147483647, %v7124
        %v7127 = vcvt.s32.f32 %v7120
        %v7128 = vmul.f32 %v7127, %v7125
        %v7129 = vxor.u32 %v7128, 2147483648
        %v7130 = vsel %vm7047, %v7129, %v7128
        %v7131 = vsub.s32 4, %v7107
        %v7132 = vsel %vm7047, %v7131, %v7107
        %v7133 = vsel %vm7046, %v5693, %v7130
        %v7134 = vsel %vm7046, 0, %v7132
        %v7135 = vcosq.f32.pop %v7133
        %v7136 = vsinq.f32.pop %v7133
        %vm7137 = vweird.f32 %v5693
        %v7138 = vand.u32 %v7134, 3
        %vm7139 = vcmp.lt.s32.totalorder %v7138, 2
        %vm7140 = vcmp.eq.s32.totalorder %v7138, 0
        %v7141 = vxor.u32 %v7136, 2147483648
        %v7142 = vsel %vm7140, %v7135, %v7141
        %vm7143 = vcmp.eq.s32.totalorder %v7138, 2
        %v7144 = vxor.u32 %v7135, 2147483648
        %v7145 = vsel %vm7143, %v7144, %v7136
        %v7146 = vsel %vm7139, %v7142, %v7145
        %v7147 = vsel %vm7137, nan, %v7146
        %v7148 = vand.u32 2147483647, %v5698
        %vm7149 = vcmp.le.f32.partialorder %v7148, 0.7853982
        %vm7150 = vcmp.lt.s32.totalorder %v5698, 0
        %v7151 = vand.u32 %v5698, 2139095040
        %v7152 = vshrl.u32 %v7151, 23
        %v7153 = vsub.s32 %v7152, 127
        %v7154 = vand.u32 2147483647, %v5698
        %v7155 = vand.u32 %v7154, 8388607
        %v7156 = vor.u32 %v7155, 8388608
        %v7157 = vsub.s32 0, %v7156
        %v7158 = vadd.s32 %v7153, 1
        %vm7159 = vcmp.gt.s32.totalorder %v7158, 0
        %v7160 = vsel %vm7159, %v7158, 0
        %v7161 = vshrl.u32 %v7160, 5
        %v7162 = vand.u32 %v7160, 31
        %v7163 = vsub.s32 32, %v7162
        %v7164 = vshrl.u32 683565275, %v7163
        %v7165 = vshll.u32 683565275, %v7162
        %v7166 = vshrl.u32 2475754826, %v7163
        %v7167 = vor.u32 %v7165, %v7166
        %v7168 = vshll.u32 2475754826, %v7162
        %v7169 = vshrl.u32 2131351028, %v7163
        %v7170 = vor.u32 %v7168, %v7169
        %v7171 = vshll.u32 2131351028, %v7162
        %v7172 = vshrl.u32 2102212464, %v7163
        %v7173 = vor.u32 %v7171, %v7172
        %v7174 = vshll.u32 2102212464, %v7162
        %v7175 = vshrl.u32 920167782, %v7163
        %v7176 = vor.u32 %v7174, %v7175
        %v7177 = vshll.u32 920167782, %v7162
        %v7178 = vshrl.u32 1326507024, %v7163
        %v7179 = vor.u32 %v7177, %v7178
        %vm7180 = vcmp.lt.s32.totalorder %v7161, 1
        %vm7181 = vcmp.lt.s32.totalorder %v7161, 2
        %vm7182 = vcmp.lt.s32.totalorder %v7161, 3
        %vm7183 = vcmp.lt.s32.totalorder %v7161, 4
        %v7184 = vsel %vm7180, %v7164, %v7167
        %v7185 = vsel %vm7183, %v7173, 2102212464
        %v7186 = vsel %vm7182, %v7170, %v7185
        %v7187 = vsel %vm7181, %v7184, %v7186
        %v7188 = vsel %vm7180, %v7167, %v7170
        %v7189 = vsel %vm7183, %v7176, 920167782
        %v7190 = vsel %vm7182, %v7173, %v7189
        %v7191 = vsel %vm7181, %v7188, %v7190
        %v7192 = vsel %vm7180, %v7170, %v7173
        %v7193 = vsel %vm7183, %v7179, 1326507024
        %v7194 = vsel %vm7182, %v7176, %v7193
        %v7195 = vsel %vm7181, %v7192, %v7194
        %v7196 = vshll.u32 %v7156, 8
        %v7197 = vmul.u32.u64.compose %v7196, %v7195
        %v7198 = vextract.low.u32 %v7197
        %v7199 = vextract.high.u32 %v7197
        %v7200 = vmul.u32.u64.compose %v7196, %v7191
        %v7201 = vextract.low.u32 %v7200
        %v7202 = vextract.high.u32 %v7200
        %v7203 = vmul.u32 %v7196, %v7187
        %v7204 = vadd.s32 %v7199, %v7201
        %vm7205 = vc.u32 %v7199, %v7201
        %v7206 = vadd.s32 %v7202, 1
        %v7207 = vsel %vm7205, %v7206, %v7202
        %v7208 = vadd.s32 %v7203, %v7207
        %v7209 = vadd.s32 %v7208, 536870912
        %v7210 = vshrl.u32 %v7209, 30
        %v7211 = vshll.u32 %v7210, 30
        %v7212 = vsub.s32 %v7208, %v7211
        %vm7213 = vcmp.lt.s32.totalorder %v7212, 0
        %v7214 = vsub.s32 0, %v7212
        %v7215 = vsel %vm7213, %v7214, %v7212
        %v7216 = vclz %v7215
        %v7217 = vsub.s32 %v7216, 2
        %vm7218 = vcmp.gt.s32.totalorder 0, %v7217
        %v7219 = vsel %vm7218, 0, %v7217
        %v7220 = vsub.s32 32, %v7219
        %v7221 = vshll.u32 %v7212, %v7219
        %v7222 = vshrl.u32 %v7204, %v7220
        %v7223 = vor.u32 %v7221, %v7222
        %v7224 = vsub.s32 4294967266, %v7219
        %v7225 = vadd.s32 %v7224, 127
        %v7226 = vshll.u32 %v7225, 23
        %v7227 = vor.u32 4788187, %v7226
        %v7228 = vand.u32 2147483647, %v7227
        %v7230 = vcvt.s32.f32 %v7223
        %v7231 = vmul.f32 %v7230, %v7228
        %v7232 = vxor.u32 %v7231, 2147483648
        %v7233 = vsel %vm7150, %v7232, %v7231
        %v7234 = vsub.s32 4, %v7210
        %v7235 = vsel %vm7150, %v7234, %v7210
        %v7236 = vsel %vm7149, %v5698, %v7233
        %v7237 = vsel %vm7149, 0, %v7235
        %v7238 = vcosq.f32.pop %v7236
        %v7239 = vsinq.f32.pop %v7236
        %vm7240 = vweird.f32 %v5698
        %v7241 = vand.u32 %v7237, 3
        %vm7242 = vcmp.lt.s32.totalorder %v7241, 2
        %vm7243 = vcmp.eq.s32.totalorder %v7241, 0
        %v7244 = vxor.u32 %v7239, 2147483648
        %v7245 = vsel %vm7243, %v7238, %v7244
        %vm7246 = vcmp.eq.s32.totalorder %v7241, 2
        %v7247 = vxor.u32 %v7238, 2147483648
        %v7248 = vsel %vm7246, %v7247, %v7239
        %v7249 = vsel %vm7242, %v7245, %v7248
        %v7250 = vsel %vm7240, nan, %v7249
        %v7251 = vand.u32 2147483647, %v5703
        %vm7252 = vcmp.le.f32.partialorder %v7251, 0.7853982
        %vm7253 = vcmp.lt.s32.totalorder %v5703, 0
        %v7254 = vand.u32 %v5703, 2139095040
        %v7255 = vshrl.u32 %v7254, 23
        %v7256 = vsub.s32 %v7255, 127
        %v7257 = vand.u32 2147483647, %v5703
        %v7258 = vand.u32 %v7257, 8388607
        %v7259 = vor.u32 %v7258, 8388608
        %v7260 = vsub.s32 0, %v7259
        %v7261 = vadd.s32 %v7256, 1
        %vm7262 = vcmp.gt.s32.totalorder %v7261, 0
        %v7263 = vsel %vm7262, %v7261, 0
        %v7264 = vshrl.u32 %v7263, 5
        %v7265 = vand.u32 %v7263, 31
        %v7266 = vsub.s32 32, %v7265
        %v7267 = vshrl.u32 683565275, %v7266
        %v7268 = vshll.u32 683565275, %v7265
        %v7269 = vshrl.u32 2475754826, %v7266
        %v7270 = vor.u32 %v7268, %v7269
        %v7271 = vshll.u32 2475754826, %v7265
        %v7272 = vshrl.u32 2131351028, %v7266
        %v7273 = vor.u32 %v7271, %v7272
        %v7274 = vshll.u32 2131351028, %v7265
        %v7275 = vshrl.u32 2102212464, %v7266
        %v7276 = vor.u32 %v7274, %v7275
        %v7277 = vshll.u32 2102212464, %v7265
        %v7278 = vshrl.u32 920167782, %v7266
        %v7279 = vor.u32 %v7277, %v7278
        %v7280 = vshll.u32 920167782, %v7265
        %v7281 = vshrl.u32 1326507024, %v7266
        %v7282 = vor.u32 %v7280, %v7281
        %vm7283 = vcmp.lt.s32.totalorder %v7264, 1
        %vm7284 = vcmp.lt.s32.totalorder %v7264, 2
        %vm7285 = vcmp.lt.s32.totalorder %v7264, 3
        %vm7286 = vcmp.lt.s32.totalorder %v7264, 4
        %v7287 = vsel %vm7283, %v7267, %v7270
        %v7288 = vsel %vm7286, %v7276, 2102212464
        %v7289 = vsel %vm7285, %v7273, %v7288
        %v7290 = vsel %vm7284, %v7287, %v7289
        %v7291 = vsel %vm7283, %v7270, %v7273
        %v7292 = vsel %vm7286, %v7279, 920167782
        %v7293 = vsel %vm7285, %v7276, %v7292
        %v7294 = vsel %vm7284, %v7291, %v7293
        %v7295 = vsel %vm7283, %v7273, %v7276
        %v7296 = vsel %vm7286, %v7282, 1326507024
        %v7297 = vsel %vm7285, %v7279, %v7296
        %v7298 = vsel %vm7284, %v7295, %v7297
        %v7299 = vshll.u32 %v7259, 8
        %v7300 = vmul.u32.u64.compose %v7299, %v7298
        %v7301 = vextract.low.u32 %v7300
        %v7302 = vextract.high.u32 %v7300
        %v7303 = vmul.u32.u64.compose %v7299, %v7294
        %v7304 = vextract.low.u32 %v7303
        %v7305 = vextract.high.u32 %v7303
        %v7306 = vmul.u32 %v7299, %v7290
        %v7307 = vadd.s32 %v7302, %v7304
        %vm7308 = vc.u32 %v7302, %v7304
        %v7309 = vadd.s32 %v7305, 1
        %v7310 = vsel %vm7308, %v7309, %v7305
        %v7311 = vadd.s32 %v7306, %v7310
        %v7312 = vadd.s32 %v7311, 536870912
        %v7313 = vshrl.u32 %v7312, 30
        %v7314 = vshll.u32 %v7313, 30
        %v7315 = vsub.s32 %v7311, %v7314
        %vm7316 = vcmp.lt.s32.totalorder %v7315, 0
        %v7317 = vsub.s32 0, %v7315
        %v7318 = vsel %vm7316, %v7317, %v7315
        %v7319 = vclz %v7318
        %v7320 = vsub.s32 %v7319, 2
        %vm7321 = vcmp.gt.s32.totalorder 0, %v7320
        %v7322 = vsel %vm7321, 0, %v7320
        %v7323 = vsub.s32 32, %v7322
        %v7324 = vshll.u32 %v7315, %v7322
        %v7325 = vshrl.u32 %v7307, %v7323
        %v7326 = vor.u32 %v7324, %v7325
        %v7327 = vsub.s32 4294967266, %v7322
        %v7328 = vadd.s32 %v7327, 127
        %v7329 = vshll.u32 %v7328, 23
        %v7330 = vor.u32 4788187, %v7329
        %v7331 = vand.u32 2147483647, %v7330
        %v7333 = vcvt.s32.f32 %v7326
        %v7334 = vmul.f32 %v7333, %v7331
        %v7335 = vxor.u32 %v7334, 2147483648
        %v7336 = vsel %vm7253, %v7335, %v7334
        %v7337 = vsub.s32 4, %v7313
        %v7338 = vsel %vm7253, %v7337, %v7313
        %v7339 = vsel %vm7252, %v5703, %v7336
        %v7340 = vsel %vm7252, 0, %v7338
        %v7341 = vcosq.f32.pop %v7339
        %v7342 = vsinq.f32.pop %v7339
        %vm7343 = vweird.f32 %v5703
        %v7344 = vand.u32 %v7340, 3
        %vm7345 = vcmp.lt.s32.totalorder %v7344, 2
        %vm7346 = vcmp.eq.s32.totalorder %v7344, 0
        %v7347 = vxor.u32 %v7342, 2147483648
        %v7348 = vsel %vm7346, %v7341, %v7347
        %vm7349 = vcmp.eq.s32.totalorder %v7344, 2
        %v7350 = vxor.u32 %v7341, 2147483648
        %v7351 = vsel %vm7349, %v7350, %v7342
        %v7352 = vsel %vm7345, %v7348, %v7351
        %v7353 = vsel %vm7343, nan, %v7352
        %v7354 = vld [vmem:[%s5] sm:$0xff]
        %v7355 = vld [vmem:[%s5 + $0x8] sm:$0xff]
        %v7356 = vld [vmem:[%s5 + $0x10] sm:$0xff]
        %v7357 = vld [vmem:[%s5 + $0x18] sm:$0xff]
        %v7358 = vld [vmem:[%s5 + $0x20] sm:$0xff]
        %v7359 = vld [vmem:[%s5 + $0x28] sm:$0xff]
        %v7360 = vld [vmem:[%s5 + $0x30] sm:$0xff]
        %v7361 = vld [vmem:[%s5 + $0x38] sm:$0xff]
        %v7362 = vld [vmem:[%s6] sm:$0x1]
        %v7364 = vlaneseq
        %v7365 = vshrl.u32 %v7364, 7
        %v7366 = vsub.s32 0, %v7365
        %v7367 = vrot.slane %v7362, %v7366
        %v7370 = vsel %vm5512, %v5808, 0
        %v7373 = vsel %vm5512, %v5911, 0
        %v7376 = vsel %vm5512, %v6014, 0
        %v7379 = vsel %vm5512, %v6117, 0
        %v7382 = vsel %vm5512, %v6220, 0
        %v7385 = vsel %vm5512, %v6323, 0
        %v7388 = vsel %vm5512, %v6426, 0
        %v7391 = vsel %vm5512, %v6529, 0
        %v7394 = vsel %vm5512, %v6632, 0
        %v7397 = vsel %vm5512, %v6735, 0
        %v7400 = vsel %vm5512, %v6838, 0
        %v7403 = vsel %vm5512, %v6941, 0
        %v7406 = vsel %vm5512, %v7044, 0
        %v7409 = vsel %vm5512, %v7147, 0
        %v7412 = vsel %vm5512, %v7250, 0
        %v7415 = vsel %vm5512, %v7353, 0
        %7417 = vmatprep.subr.mxu0 0.0
        %7418 = vmatpush1.msra.mxu0 %v7354
        %7419 = vmatprep.subr.mxu0 0.0
        %7420 = vmatpush1.msra.mxu0 %v7355
        %7421 = vmatprep.subr.mxu0 0.0
        %7422 = vmatpush1.msra.mxu0 %v7356
        %7423 = vmatprep.subr.mxu0 0.0
        %7424 = vmatpush1.msra.mxu0 %v7357
        %7425 = vmatprep.subr.mxu0 0.0
        %7426 = vmatpush1.msra.mxu0 %v7358
        %7427 = vmatprep.subr.mxu0 0.0
        %7428 = vmatpush1.msra.mxu0 %v7359
        %7429 = vmatprep.subr.mxu0 0.0
        %7430 = vmatpush1.msra.mxu0 %v7360
        %7431 = vmatprep.subr.mxu0 0.0
        %7432 = vmatpush1.msra.mxu0 %v7361
        %7433 = vmatprep.subr.mxu0 0.0
        %7434 = vmatpush1.msra.mxu0 0.0
        %7435 = vmatprep.subr.mxu0 0.0
        %7436 = vmatpush1.msra.mxu0 0.0
        %7437 = vmatprep.subr.mxu0 0.0
        %7438 = vmatpush1.msra.mxu0 0.0
        %7439 = vmatprep.subr.mxu0 0.0
        %7440 = vmatpush1.msra.mxu0 0.0
        %7441 = vmatprep.subr.mxu0 0.0
        %7442 = vmatpush1.msra.mxu0 0.0
        %7443 = vmatprep.subr.mxu0 0.0
        %7444 = vmatpush1.msra.mxu0 0.0
        %7445 = vmatprep.subr.mxu0 0.0
        %7446 = vmatpush1.msra.mxu0 0.0
        %7447 = vmatprep.subr.mxu0 0.0
        %7448 = vmatpush1.msra.mxu0 0.0
        %7449 = vmatprep.subr.mxu0 0.0
        %7450 = vmatpush1.msra.mxu0 0.0
        %7451 = vmatprep.subr.mxu0 0.0
        %7452 = vmatpush1.msra.mxu0 0.0
        %7453 = vmatprep.subr.mxu0 0.0
        %7454 = vmatpush1.msra.mxu0 0.0
        %7455 = vmatprep.subr.mxu0 0.0
        %7456 = vmatpush1.msra.mxu0 0.0
        %7457 = vmatprep.subr.mxu0 0.0
        %7458 = vmatpush1.msra.mxu0 0.0
        %7459 = vmatprep.subr.mxu0 0.0
        %7460 = vmatpush1.msra.mxu0 0.0
        %7461 = vmatprep.subr.mxu0 0.0
        %7462 = vmatpush1.msra.mxu0 0.0
        %7463 = vmatprep.subr.mxu0 0.0
        %7464 = vmatpush1.msra.mxu0 0.0
        %7465 = vmatprep.subr.mxu0 0.0
        %7466 = vmatpush1.msra.mxu0 0.0
        %7467 = vmatprep.subr.mxu0 0.0
        %7468 = vmatpush1.msra.mxu0 0.0
        %7469 = vmatprep.subr.mxu0 0.0
        %7470 = vmatpush1.msra.mxu0 0.0
        %7471 = vmatprep.subr.mxu0 0.0
        %7472 = vmatpush1.msra.mxu0 0.0
        %7473 = vmatprep.subr.mxu0 0.0
        %7474 = vmatpush1.msra.mxu0 0.0
        %7475 = vmatprep.subr.mxu0 0.0
        %7476 = vmatpush1.msra.mxu0 0.0
        %7477 = vmatprep.subr.mxu0 0.0
        %7478 = vmatpush1.msra.mxu0 0.0
        %7479 = vmatprep.subr.mxu0 0.0
        %7480 = vmatpush1.msra.mxu0 0.0
        %7481 = vmatprep.mubr.f32.mxu0 0.0
        %7482 = vmatmul.mubr.f32.gmra.mrb[0].mxu0 %v7370
        %v7483 = vpop.f32.mrb[0].mxu0
        %v7484 = vadd.f32 %v7367, %v7483
        %v7485 = vpop.f32.mrb[0].mxu0
        %7486 = vmatprep.mubr.f32.mxu0 0.0
        %7487 = vmatmul.mubr.f32.gmra.mrb[0].mxu0 %v7373
        %v7488 = vpop.f32.mrb[0].mxu0
        %v7489 = vadd.f32 %v7367, %v7488
        %v7490 = vpop.f32.mrb[0].mxu0
        %7491 = vmatprep.mubr.f32.mxu0 0.0
        %7492 = vmatmul.mubr.f32.gmra.mrb[0].mxu0 %v7376
        %v7493 = vpop.f32.mrb[0].mxu0
        %v7494 = vadd.f32 %v7367, %v7493
        %v7495 = vpop.f32.mrb[0].mxu0
        %7496 = vmatprep.mubr.f32.mxu0 0.0
        %7497 = vmatmul.mubr.f32.gmra.mrb[0].mxu0 %v7379
        %v7498 = vpop.f32.mrb[0].mxu0
        %v7499 = vadd.f32 %v7367, %v7498
        %v7500 = vpop.f32.mrb[0].mxu0
        %7501 = vmatprep.mubr.f32.mxu0 0.0
        %7502 = vmatmul.mubr.f32.gmra.mrb[0].mxu0 %v7382
        %v7503 = vpop.f32.mrb[0].mxu0
        %v7504 = vadd.f32 %v7367, %v7503
        %v7505 = vpop.f32.mrb[0].mxu0
        %7506 = vmatprep.mubr.f32.mxu0 0.0
        %7507 = vmatmul.mubr.f32.gmra.mrb[0].mxu0 %v7385
        %v7508 = vpop.f32.mrb[0].mxu0
        %v7509 = vadd.f32 %v7367, %v7508
        %v7510 = vpop.f32.mrb[0].mxu0
        %7511 = vmatprep.mubr.f32.mxu0 0.0
        %7512 = vmatmul.mubr.f32.gmra.mrb[0].mxu0 %v7388
        %v7513 = vpop.f32.mrb[0].mxu0
        %v7514 = vadd.f32 %v7367, %v7513
        %v7515 = vpop.f32.mrb[0].mxu0
        %7516 = vmatprep.mubr.f32.mxu0 0.0
        %7517 = vmatmul.mubr.f32.gmra.mrb[0].mxu0 %v7391
        %v7518 = vpop.f32.mrb[0].mxu0
        %v7519 = vadd.f32 %v7367, %v7518
        %v7520 = vpop.f32.mrb[0].mxu0
        %7521 = vmatprep.mubr.f32.mxu0 0.0
        %7522 = vmatmul.mubr.f32.gmra.mrb[0].mxu0 %v7394
        %v7523 = vpop.f32.mrb[0].mxu0
        %v7524 = vadd.f32 %v7367, %v7523
        %v7525 = vpop.f32.mrb[0].mxu0
        %7526 = vmatprep.mubr.f32.mxu0 0.0
        %7527 = vmatmul.mubr.f32.gmra.mrb[0].mxu0 %v7397
        %v7528 = vpop.f32.mrb[0].mxu0
        %v7529 = vadd.f32 %v7367, %v7528
        %v7530 = vpop.f32.mrb[0].mxu0
        %7531 = vmatprep.mubr.f32.mxu0 0.0
        %7532 = vmatmul.mubr.f32.gmra.mrb[0].mxu0 %v7400
        %v7533 = vpop.f32.mrb[0].mxu0
        %v7534 = vadd.f32 %v7367, %v7533
        %v7535 = vpop.f32.mrb[0].mxu0
        %7536 = vmatprep.mubr.f32.mxu0 0.0
        %7537 = vmatmul.mubr.f32.gmra.mrb[0].mxu0 %v7403
        %v7538 = vpop.f32.mrb[0].mxu0
        %v7539 = vadd.f32 %v7367, %v7538
        %v7540 = vpop.f32.mrb[0].mxu0
        %7541 = vmatprep.mubr.f32.mxu0 0.0
        %7542 = vmatmul.mubr.f32.gmra.mrb[0].mxu0 %v7406
        %v7543 = vpop.f32.mrb[0].mxu0
        %v7544 = vadd.f32 %v7367, %v7543
        %v7545 = vpop.f32.mrb[0].mxu0
        %7546 = vmatprep.mubr.f32.mxu0 0.0
        %7547 = vmatmul.mubr.f32.gmra.mrb[0].mxu0 %v7409
        %v7548 = vpop.f32.mrb[0].mxu0
        %v7549 = vadd.f32 %v7367, %v7548
        %v7550 = vpop.f32.mrb[0].mxu0
        %7551 = vmatprep.mubr.f32.mxu0 0.0
        %7552 = vmatmul.mubr.f32.gmra.mrb[0].mxu0 %v7412
        %v7553 = vpop.f32.mrb[0].mxu0
        %v7554 = vadd.f32 %v7367, %v7553
        %v7555 = vpop.f32.mrb[0].mxu0
        %7556 = vmatprep.mubr.f32.mxu0 0.0
        %7557 = vmatmul.mubr.f32.gmra.mrb[0].mxu0 %v7415
        %v7558 = vpop.f32.mrb[0].mxu0
        %v7559 = vadd.f32 %v7367, %v7558
        %v7560 = vpop.f32.mrb[0].mxu0
        %7561 = vdwg.mxu0
        %7562 = vst [vmem:[%s272] sm:$0xff] %v7484
        %7563 = vst [vmem:[%s272 + $0x8] sm:$0xff] %v7489
        %7564 = vst [vmem:[%s272 + $0x10] sm:$0xff] %v7494
        %7565 = vst [vmem:[%s272 + $0x18] sm:$0xff] %v7499
        %7566 = vst [vmem:[%s272 + $0x20] sm:$0xff] %v7504
        %7567 = vst [vmem:[%s272 + $0x28] sm:$0xff] %v7509
        %7568 = vst [vmem:[%s272 + $0x30] sm:$0xff] %v7514
        %7569 = vst [vmem:[%s272 + $0x38] sm:$0xff] %v7519
        %7570 = vst [vmem:[%s272 + $0x40] sm:$0xff] %v7524
        %7571 = vst [vmem:[%s272 + $0x48] sm:$0xff] %v7529
        %7572 = vst [vmem:[%s272 + $0x50] sm:$0xff] %v7534
        %7573 = vst [vmem:[%s272 + $0x58] sm:$0xff] %v7539
        %7574 = vst [vmem:[%s272 + $0x60] sm:$0xff] %v7544
        %7575 = vst [vmem:[%s272 + $0x68] sm:$0xff] %v7549
        %7576 = vst [vmem:[%s272 + $0x70] sm:$0xff] %v7554
        %7577 = vst [vmem:[%s272 + $0x78] sm:$0xff] %v7559
        %s7578 = sand.u32 %s181, 1
        %s7579 = scalar_lea.sflag [#allocation3], %s7578
        %s7580 = sand.u32 %s181, 1
        %s7581 = smul.addr %s7580, 128
        %s7582 = scalar_lea.vmem [#allocation2], %s7581
        // Predicated region
        $region49: #{tpu_custom_call.1} parent=47 // pred_check
          %p7583 = pneg %p191
        $region50: #{tpu_custom_call.1} parent=47 // pred_check_branch
          %7585 = sbr.rel (%p7583) target = $region52
        $region51: #{tpu_custom_call.1} parent=47 // pred_region
          %s7586 = smul.u32 16, %s21
          %s7588 = ssub.s32 2048, 2048
          %7589 = vsyncadd %s7579, %s7588
          %s7590 = smul.addr %s7586, 128
          %s7591 = scalar_lea.hbm %s7, %s7590
          %s7592 = sshll.u32 %s7582, 4
          %s7593 = int_to_ptr.vmem [resolvable:$true] %s7592
          %7598 = dma.vmem_to_hbm [thread:$0]  %s7593, 2048, %s7591, %s7579, 128, 128, 8
        $region52: #{tpu_custom_call.1} parent=47 // pred_fallthru
          _
      $region48: #{tpu_custom_call.1} parent=5 // pred_fallthru
        _
      %p7599 = scmp.le.s32.totalorder 2, %s16
      // Predicated region
      $region53: #{tpu_custom_call.1} parent=5 // pred_check
        %p7600 = pneg %p7599
      $region54: #{tpu_custom_call.1} parent=5 // pred_check_branch
        %7602 = sbr.rel (%p7600) target = $region56
      $region55: #{tpu_custom_call.1} parent=5 // pred_region
        %s7603 = ssub.s32 %s16, 2
        // Predicated region
        $region57: #{tpu_custom_call.1} parent=55 // pred_check
          %p7604 = pneg %p197
        $region58: #{tpu_custom_call.1} parent=55 // pred_check_branch
          %7606 = sbr.rel (%p7604) target = $region60
        $region59: #{tpu_custom_call.1} parent=55 // pred_region
          %s7607 = sand.u32 %s182, 1
          %s7608 = scalar_lea.sflag [#allocation3], %s7607
          %s7609 = sand.u32 %s182, 1
          %s7610 = smul.addr %s7609, 128
          %s7611 = scalar_lea.vmem [#allocation2], %s7610
          %7612 = dma.done %s7608, 2048
        $region60: #{tpu_custom_call.1} parent=55 // pred_fallthru
          _
      $region56: #{tpu_custom_call.1} parent=5 // pred_fallthru
        _
    $region6: #{tpu_custom_call.1} parent=1 // loop_footer
      %s20 = sadd.s32 1, %s16
    $region7: #{tpu_custom_call.1} parent=1 // loop_footer_branch
      %15 = sbr.rel target = $region3
    $region8: #{tpu_custom_call.1} parent=1 // loop_exit
      _
    %7613 = vsyncpa [#allocation3], 1
    %s7614 = scalar_lea.sflag [#allocation3], 1
    %7615 = vsyncpa %s7614, 1

</llo_original>
